<compile_context>
chip_gen: v7x
topology: tpu7x:2x2x1
jax: 0.10.0
libtpu: 0.0.40
codegen_flags: <defaults>
</compile_context>

<pallas_src>
import jax
import jax.numpy as jnp
from jax import lax
from jax.experimental import pallas as pl
from jax.experimental.pallas import tpu as pltpu

HAS_BN = False
USE_SRELU = True
HAS_RES_MULTIPLIER = True
RES_MULTIPLIER = 1.0

LANE = 128
OFFW = 8          # left-halo width inside a tape row (keeps the interior sublane-aligned)


def _round_up(v, m):
    return (v + m - 1) // m * m


def _conv_b_tap_weights(wb, cb_p):
    """(3, 3, G, cpg, cpg) grouped conv weights -> (9, cb_p, cb_p) block-diag per tap."""
    _, _, g, cpg, _ = wb.shape
    bd = jnp.zeros((3, 3, cb_p, cb_p), wb.dtype)
    for gi in range(g):
        lo = gi * cpg
        bd = bd.at[:, :, lo:lo + cpg, lo:lo + cpg].set(wb[:, :, gi])
    return bd.reshape(9, cb_p, cb_p)


def bottleneck_transform(x_nhwc, params, *, stride, num_gs):
    """Fused bottleneck transform. x_nhwc: (N, H, W, Cin) f32 -> (N, Ho, Wo, Cout)."""
    N, H, W, Cin = x_nhwc.shape
    wa, ba = params["wa"], params["ba"]          # (Cin, Cb), (1, Cb)
    wb, bb = params["wb"], params["bb"]          # (3, 3, G, Cb/G, Cb/G), (1, Cb)
    wc, scale = params["wc"], params["scale"]    # (Cb, Cout), (1, 1)
    Cb = wa.shape[1]
    Cout = wc.shape[1]
    Ho = (H + 2 - 3) // stride + 1
    Wo = (W + 2 - 3) // stride + 1

    Cb_p = _round_up(Cb, LANE)
    Cout_p = _round_up(Cout, LANE)

    # Flat activation "tape": row pitch WT (multiple of 8), interior columns start
    # at OFFW.  The right halo of each image row is either the in-row padding
    # (W % 8 != 0) or the next row's left halo (W % 8 == 0) -> always zero.
    WT = OFFW + _round_up(W, 8)
    MT = Ho * WT                                   # matmul M for conv_b / conv_c
    start_max = 2 * WT + OFFW + 1                  # largest tap start offset
    TAPE_M = _round_up(max((H + 2) * WT, start_max + (MT - 1) * stride + 1), 8)

    # ---- wrapper-side layout plumbing (weights only; input stays raw f32) ----
    x_flat = x_nhwc.reshape(N, H * W, Cin)
    wa_p = jnp.pad(wa, ((0, 0), (0, Cb_p - Cb))).astype(jnp.bfloat16)
    ba_p = jnp.pad(ba, ((0, 0), (0, Cb_p - Cb))).astype(jnp.float32)
    wb9 = _conv_b_tap_weights(wb, Cb_p).astype(jnp.bfloat16)          # (9, Cb_p, Cb_p)
    bb_p = jnp.pad(bb, ((0, 0), (0, Cb_p - Cb))).astype(jnp.float32)
    # channel-shared residual multiplier folded into conv_c weights
    wc_p = (jnp.pad(wc, ((0, Cb_p - Cb), (0, Cout_p - Cout)))
            * scale[0, 0]).astype(jnp.bfloat16)

    def kernel(x_ref, wa_ref, ba_ref, wb_ref, bb_ref, wc_ref, o_ref,
               tape_ref, acc_ref):
        # ---- conv_a: 1x1 conv == matmul over channels, then SReLU == max(x, b) ----
        xa = x_ref[...].astype(jnp.bfloat16)                       # (H*W, Cin)
        ha = jnp.dot(xa, wa_ref[...], preferred_element_type=jnp.float32)
        ha = jnp.maximum(ha, ba_ref[...]).astype(jnp.bfloat16)     # (H*W, Cb_p) bf16

        # ---- zero only the halo strips of the bf16 tape (re-done per step so
        #      megacore batch sharding stays correct; interior is overwritten) ----
        tape_ref[pl.ds(0, WT + OFFW), :] = jnp.zeros((WT + OFFW, Cb_p), jnp.bfloat16)
        for h in range(H - 1):
            s0 = (h + 1) * WT + OFFW + W
            tape_ref[pl.ds(s0, WT - W), :] = jnp.zeros((WT - W, Cb_p), jnp.bfloat16)
        tail = H * WT + OFFW + W
        tape_ref[pl.ds(tail, TAPE_M - tail), :] = (
            jnp.zeros((TAPE_M - tail, Cb_p), jnp.bfloat16))

        # ---- scatter SReLU(conv_a) rows into the tape interior (aligned stores) ----
        for h in range(H):
            tape_ref[pl.ds((h + 1) * WT + OFFW, W), :] = ha[h * W:(h + 1) * W, :]

        # ---- conv_b: 3x3 grouped conv as 9 accumulating tap matmuls, each tap
        #      streaming a contiguous (stride=1) / strided (stride>1) tape slice ----
        for t in range(9):
            dy, dx = t // 3, t % 3
            start = dy * WT + dx - 1 + OFFW
            if stride == 1:
                lhs = tape_ref[pl.ds(start, MT), :]
            else:
                lhs = tape_ref[pl.ds(start, MT, stride=stride), :]
            part = jnp.dot(lhs, wb_ref[t], preferred_element_type=jnp.float32)
            if t == 0:
                acc_ref[...] = part
            else:
                acc_ref[...] += part

        # ---- SReLU, then conv_c (1x1) with the shared scale pre-folded into wc ----
        hb = jnp.maximum(acc_ref[...], bb_ref[...]).astype(jnp.bfloat16)
        hc = jnp.dot(hb, wc_ref[...], preferred_element_type=jnp.float32)
        # drop the per-row junk columns of the flat tape, lane-dense store
        o_ref[...] = hc.reshape(Ho, WT, Cout_p)[:, :Wo, :].astype(o_ref.dtype)

    # per-step VMEM budget (double-buffered blocked operands + scratch + headroom)
    vmem_bytes = (2 * (H * W * Cin * 4
                       + (Cin * Cb_p + 9 * Cb_p * Cb_p + Cb_p * Cout_p) * 2
                       + 2 * Cb_p * 4
                       + Ho * Wo * Cout_p * 4)
                  + TAPE_M * Cb_p * 2 + MT * Cb_p * 4
                  + (8 << 20))
    vmem_bytes = int(min(vmem_bytes, 64 << 20))

    grid_spec = pltpu.PrefetchScalarGridSpec(
        num_scalar_prefetch=0,
        grid=(N,),
        in_specs=[
            pl.BlockSpec((None, H * W, Cin), lambda n: (n, 0, 0)),
            pl.BlockSpec((Cin, Cb_p), lambda n: (0, 0)),
            pl.BlockSpec((1, Cb_p), lambda n: (0, 0)),
            pl.BlockSpec((9, Cb_p, Cb_p), lambda n: (0, 0, 0)),
            pl.BlockSpec((1, Cb_p), lambda n: (0, 0)),
            pl.BlockSpec((Cb_p, Cout_p), lambda n: (0, 0)),
        ],
        out_specs=pl.BlockSpec((None, Ho, Wo, Cout_p), lambda n: (n, 0, 0, 0)),
        scratch_shapes=[
            pltpu.VMEM((TAPE_M, Cb_p), jnp.bfloat16),   # flat zero-halo activation tape
            pltpu.VMEM((MT, Cb_p), jnp.float32),        # conv_b tap accumulator
        ],
    )
    out = pl.pallas_call(
        kernel,
        out_shape=jax.ShapeDtypeStruct((N, Ho, Wo, Cout_p), jnp.float32),
        grid_spec=grid_spec,
        compiler_params=pltpu.CompilerParams(
            dimension_semantics=("parallel",),
            vmem_limit_bytes=vmem_bytes),
    )(x_flat, wa_p, ba_p, wb9, bb_p, wc_p)

    # strip channel padding (no-op when Cout is already a multiple of 128)
    return out[..., :Cout].astype(x_nhwc.dtype)


def reference(x_nhwc, params, *, stride, num_gs):
    """Pure-JAX f32 reference of the same forward pass (for correctness check)."""
    wa, ba = params["wa"], params["ba"]
    wb, bb = params["wb"], params["bb"]
    wc, scale = params["wc"], params["scale"]
    Cin, Cb = wa.shape
    Cout = wc.shape[1]
    cpg = Cb // num_gs
    dn = ("NHWC", "HWIO", "NHWC")

    ya = lax.conv_general_dilated(x_nhwc, wa.reshape(1, 1, Cin, Cb),
                                  (1, 1), "VALID", dimension_numbers=dn)
    ya = jnp.maximum(ya - ba.reshape(1, 1, 1, Cb), 0.0) + ba.reshape(1, 1, 1, Cb)

    # (3,3,g,i,o) -> HWIO (3,3,i, g*cpg+o)
    wb_hwio = jnp.transpose(wb, (0, 1, 3, 2, 4)).reshape(3, 3, cpg, Cb)
    yb = lax.conv_general_dilated(ya, wb_hwio, (stride, stride), ((1, 1), (1, 1)),
                                  dimension_numbers=dn, feature_group_count=num_gs)
    yb = jnp.maximum(yb - bb.reshape(1, 1, 1, Cb), 0.0) + bb.reshape(1, 1, 1, Cb)

    yc = lax.conv_general_dilated(yb, wc.reshape(1, 1, Cb, Cout),
                                  (1, 1), "VALID", dimension_numbers=dn)
    return yc * scale[0, 0]


if __name__ == "__main__":
    key = jax.random.PRNGKey(0)
    N, w_in, w_b, w_out = 2, 16, 16, 32
    H = W = 16
    stride, num_gs = 1, 2
    cpg = w_b // num_gs

    k1, k2, k3, k4 = jax.random.split(key, 4)
    params = {
        "wa": jax.random.normal(k1, (w_in, w_b), jnp.float32) * 0.1,
        "ba": jnp.full((1, w_b), -1.0, jnp.float32),          # SReLU bias init -1.0
        "wb": jax.random.normal(k2, (3, 3, num_gs, cpg, cpg), jnp.float32) * 0.1,
        "bb": jnp.full((1, w_b), -1.0, jnp.float32),          # SReLU bias init -1.0
        "wc": jax.random.normal(k3, (w_b, w_out), jnp.float32) * 0.1,
        "scale": jnp.full((1, 1), RES_MULTIPLIER, jnp.float32),
    }

    # PyTorch-style NCHW input; convert to NHWC for the kernel and back.
    x_nchw = jax.random.normal(k4, (N, w_in, H, W), jnp.float32)
    x_nhwc = jnp.transpose(x_nchw, (0, 2, 3, 1))

    out_nhwc = bottleneck_transform(x_nhwc, params, stride=stride, num_gs=num_gs)
    out_nchw = jnp.transpose(out_nhwc, (0, 3, 1, 2))
    jax.block_until_ready(out_nchw)

    ref_nchw = jnp.transpose(reference(x_nhwc, params, stride=stride, num_gs=num_gs),
                             (0, 3, 1, 2))
    # Kernel uses bf16 MXU operands with f32 accumulation; tolerance reflects bf16.
    max_err = float(jnp.max(jnp.abs(out_nchw - ref_nchw)))
    assert jnp.allclose(out_nchw, ref_nchw, atol=5e-2, rtol=5e-2), max_err

    print("KERNEL_OK")
</pallas_src>

<mosaic_0001>
module attributes {stable_mosaic.version = 11 : i64} {
  func.func @kernel(%arg0: i32, %arg1: memref<1x256x16xf32, #tpu.memory_space<vmem>>, %arg2: memref<16x128xbf16, #tpu.memory_space<vmem>>, %arg3: memref<1x128xf32, #tpu.memory_space<vmem>>, %arg4: memref<9x128x128xbf16, #tpu.memory_space<vmem>>, %arg5: memref<1x128xf32, #tpu.memory_space<vmem>>, %arg6: memref<128x128xbf16, #tpu.memory_space<vmem>>, %arg7: memref<1x16x16x128xf32, #tpu.memory_space<vmem>>, %arg8: memref<448x128xbf16, #tpu.memory_space<vmem>>, %arg9: memref<384x128xf32, #tpu.memory_space<vmem>>) attributes {dimension_semantics = [#tpu.dimension_semantics<parallel>], iteration_bounds = array<i64: 2>, scalar_prefetch = 0 : i64, scratch_operands = 2 : i64, tpu.core_type = #tpu.core_type<tc>, window_params = [{transform_indices = @transform_0, window_bounds = array<i64: 1, 256, 16>}, {pipeline_mode = #tpu.pipeline_mode<synchronous>, transform_indices = @transform_1, window_bounds = array<i64: 16, 128>}, {pipeline_mode = #tpu.pipeline_mode<synchronous>, transform_indices = @transform_2, window_bounds = array<i64: 1, 128>}, {pipeline_mode = #tpu.pipeline_mode<synchronous>, transform_indices = @transform_3, window_bounds = array<i64: 9, 128, 128>}, {pipeline_mode = #tpu.pipeline_mode<synchronous>, transform_indices = @transform_4, window_bounds = array<i64: 1, 128>}, {pipeline_mode = #tpu.pipeline_mode<synchronous>, transform_indices = @transform_5, window_bounds = array<i64: 128, 128>}, {transform_indices = @transform_6, window_bounds = array<i64: 1, 16, 16, 128>}]} {
    %c0 = arith.constant 0 : index
    %c0_0 = arith.constant 0 : index
    %c0_1 = arith.constant 0 : index
    %0 = vector.load %arg1[%c0, %c0_0, %c0_1] : memref<1x256x16xf32, #tpu.memory_space<vmem>>, vector<1x256x16xf32>
    %1 = vector.shape_cast %0 : vector<1x256x16xf32> to vector<256x16xf32>
    %2 = arith.truncf %1 : vector<256x16xf32> to vector<256x16xbf16>
    %c0_2 = arith.constant 0 : index
    %c0_3 = arith.constant 0 : index
    %3 = vector.load %arg2[%c0_2, %c0_3] : memref<16x128xbf16, #tpu.memory_space<vmem>>, vector<16x128xbf16>
    %cst = arith.constant dense<0.000000e+00> : vector<256x128xf32>
    %4 = tpu.matmul %2, %3, %cst {dimension_numbers = #tpu.dot_dimension_numbers<[1], [0], [0], [1], [0, 0, 1, 1], [], []>} : vector<256x16xbf16>, vector<16x128xbf16>, vector<256x128xf32> -> vector<256x128xf32>
    %c0_4 = arith.constant 0 : index
    %c0_5 = arith.constant 0 : index
    %5 = vector.load %arg3[%c0_4, %c0_5] : memref<1x128xf32, #tpu.memory_space<vmem>>, vector<1x128xf32>
    %6 = vector.broadcast %5 : vector<1x128xf32> to vector<256x128xf32>
    %7 = arith.maximumf %4, %6 : vector<256x128xf32>
    %8 = arith.truncf %7 : vector<256x128xf32> to vector<256x128xbf16>
    %cst_6 = arith.constant 0.000000e+00 : bf16
    %9 = vector.broadcast %cst_6 : bf16 to vector<32x128xbf16>
    %c0_7 = arith.constant 0 : index
    %c0_8 = arith.constant 0 : index
    %10 = vector.load %arg8[%c0_7, %c0_8] : memref<448x128xbf16, #tpu.memory_space<vmem>>, vector<32x128xbf16>
    tpu.vector_store %arg8[%c0_7, %c0_8], %9 {strides = array<i32>} : memref<448x128xbf16, #tpu.memory_space<vmem>>, vector<32x128xbf16>,
    %cst_9 = arith.constant 0.000000e+00 : bf16
    %11 = vector.broadcast %cst_9 : bf16 to vector<8x128xbf16>
    %c48 = arith.constant 48 : index
    %c0_10 = arith.constant 0 : index
    %12 = vector.load %arg8[%c48, %c0_10] : memref<448x128xbf16, #tpu.memory_space<vmem>>, vector<8x128xbf16>
    tpu.vector_store %arg8[%c48, %c0_10], %11 {strides = array<i32>} : memref<448x128xbf16, #tpu.memory_space<vmem>>, vector<8x128xbf16>,
    %cst_11 = arith.constant 0.000000e+00 : bf16
    %13 = vector.broadcast %cst_11 : bf16 to vector<8x128xbf16>
    %c72 = arith.constant 72 : index
    %c0_12 = arith.constant 0 : index
    %14 = vector.load %arg8[%c72, %c0_12] : memref<448x128xbf16, #tpu.memory_space<vmem>>, vector<8x128xbf16>
    tpu.vector_store %arg8[%c72, %c0_12], %13 {strides = array<i32>} : memref<448x128xbf16, #tpu.memory_space<vmem>>, vector<8x128xbf16>,
    %cst_13 = arith.constant 0.000000e+00 : bf16
    %15 = vector.broadcast %cst_13 : bf16 to vector<8x128xbf16>
    %c96 = arith.constant 96 : index
    %c0_14 = arith.constant 0 : index
    %16 = vector.load %arg8[%c96, %c0_14] : memref<448x128xbf16, #tpu.memory_space<vmem>>, vector<8x128xbf16>
    tpu.vector_store %arg8[%c96, %c0_14], %15 {strides = array<i32>} : memref<448x128xbf16, #tpu.memory_space<vmem>>, vector<8x128xbf16>,
    %cst_15 = arith.constant 0.000000e+00 : bf16
    %17 = vector.broadcast %cst_15 : bf16 to vector<8x128xbf16>
    %c120 = arith.constant 120 : index
    %c0_16 = arith.constant 0 : index
    %18 = vector.load %arg8[%c120, %c0_16] : memref<448x128xbf16, #tpu.memory_space<vmem>>, vector<8x128xbf16>
    tpu.vector_store %arg8[%c120, %c0_16], %17 {strides = array<i32>} : memref<448x128xbf16, #tpu.memory_space<vmem>>, vector<8x128xbf16>,
    %cst_17 = arith.constant 0.000000e+00 : bf16
    %19 = vector.broadcast %cst_17 : bf16 to vector<8x128xbf16>
    %c144 = arith.constant 144 : index
    %c0_18 = arith.constant 0 : index
    %20 = vector.load %arg8[%c144, %c0_18] : memref<448x128xbf16, #tpu.memory_space<vmem>>, vector<8x128xbf16>
    tpu.vector_store %arg8[%c144, %c0_18], %19 {strides = array<i32>} : memref<448x128xbf16, #tpu.memory_space<vmem>>, vector<8x128xbf16>,
    %cst_19 = arith.constant 0.000000e+00 : bf16
    %21 = vector.broadcast %cst_19 : bf16 to vector<8x128xbf16>
    %c168 = arith.constant 168 : index
    %c0_20 = arith.constant 0 : index
    %22 = vector.load %arg8[%c168, %c0_20] : memref<448x128xbf16, #tpu.memory_space<vmem>>, vector<8x128xbf16>
    tpu.vector_store %arg8[%c168, %c0_20], %21 {strides = array<i32>} : memref<448x128xbf16, #tpu.memory_space<vmem>>, vector<8x128xbf16>,
    %cst_21 = arith.constant 0.000000e+00 : bf16
    %23 = vector.broadcast %cst_21 : bf16 to vector<8x128xbf16>
    %c192 = arith.constant 192 : index
    %c0_22 = arith.constant 0 : index
    %24 = vector.load %arg8[%c192, %c0_22] : memref<448x128xbf16, #tpu.memory_space<vmem>>, vector<8x128xbf16>
    tpu.vector_store %arg8[%c192, %c0_22], %23 {strides = array<i32>} : memref<448x128xbf16, #tpu.memory_space<vmem>>, vector<8x128xbf16>,
    %cst_23 = arith.constant 0.000000e+00 : bf16
    %25 = vector.broadcast %cst_23 : bf16 to vector<8x128xbf16>
    %c216 = arith.constant 216 : index
    %c0_24 = arith.constant 0 : index
    %26 = vector.load %arg8[%c216, %c0_24] : memref<448x128xbf16, #tpu.memory_space<vmem>>, vector<8x128xbf16>
    tpu.vector_store %arg8[%c216, %c0_24], %25 {strides = array<i32>} : memref<448x128xbf16, #tpu.memory_space<vmem>>, vector<8x128xbf16>,
    %cst_25 = arith.constant 0.000000e+00 : bf16
    %27 = vector.broadcast %cst_25 : bf16 to vector<8x128xbf16>
    %c240 = arith.constant 240 : index
    %c0_26 = arith.constant 0 : index
    %28 = vector.load %arg8[%c240, %c0_26] : memref<448x128xbf16, #tpu.memory_space<vmem>>, vector<8x128xbf16>
    tpu.vector_store %arg8[%c240, %c0_26], %27 {strides = array<i32>} : memref<448x128xbf16, #tpu.memory_space<vmem>>, vector<8x128xbf16>,
    %cst_27 = arith.constant 0.000000e+00 : bf16
    %29 = vector.broadcast %cst_27 : bf16 to vector<8x128xbf16>
    %c264 = arith.constant 264 : index
    %c0_28 = arith.constant 0 : index
    %30 = vector.load %arg8[%c264, %c0_28] : memref<448x128xbf16, #tpu.memory_space<vmem>>, vector<8x128xbf16>
    tpu.vector_store %arg8[%c264, %c0_28], %29 {strides = array<i32>} : memref<448x128xbf16, #tpu.memory_space<vmem>>, vector<8x128xbf16>,
    %cst_29 = arith.constant 0.000000e+00 : bf16
    %31 = vector.broadcast %cst_29 : bf16 to vector<8x128xbf16>
    %c288 = arith.constant 288 : index
    %c0_30 = arith.constant 0 : index
    %32 = vector.load %arg8[%c288, %c0_30] : memref<448x128xbf16, #tpu.memory_space<vmem>>, vector<8x128xbf16>
    tpu.vector_store %arg8[%c288, %c0_30], %31 {strides = array<i32>} : memref<448x128xbf16, #tpu.memory_space<vmem>>, vector<8x128xbf16>,
    %cst_31 = arith.constant 0.000000e+00 : bf16
    %33 = vector.broadcast %cst_31 : bf16 to vector<8x128xbf16>
    %c312 = arith.constant 312 : index
    %c0_32 = arith.constant 0 : index
    %34 = vector.load %arg8[%c312, %c0_32] : memref<448x128xbf16, #tpu.memory_space<vmem>>, vector<8x128xbf16>
    tpu.vector_store %arg8[%c312, %c0_32], %33 {strides = array<i32>} : memref<448x128xbf16, #tpu.memory_space<vmem>>, vector<8x128xbf16>,
    %cst_33 = arith.constant 0.000000e+00 : bf16
    %35 = vector.broadcast %cst_33 : bf16 to vector<8x128xbf16>
    %c336 = arith.constant 336 : index
    %c0_34 = arith.constant 0 : index
    %36 = vector.load %arg8[%c336, %c0_34] : memref<448x128xbf16, #tpu.memory_space<vmem>>, vector<8x128xbf16>
    tpu.vector_store %arg8[%c336, %c0_34], %35 {strides = array<i32>} : memref<448x128xbf16, #tpu.memory_space<vmem>>, vector<8x128xbf16>,
    %cst_35 = arith.constant 0.000000e+00 : bf16
    %37 = vector.broadcast %cst_35 : bf16 to vector<8x128xbf16>
    %c360 = arith.constant 360 : index
    %c0_36 = arith.constant 0 : index
    %38 = vector.load %arg8[%c360, %c0_36] : memref<448x128xbf16, #tpu.memory_space<vmem>>, vector<8x128xbf16>
    tpu.vector_store %arg8[%c360, %c0_36], %37 {strides = array<i32>} : memref<448x128xbf16, #tpu.memory_space<vmem>>, vector<8x128xbf16>,
    %cst_37 = arith.constant 0.000000e+00 : bf16
    %39 = vector.broadcast %cst_37 : bf16 to vector<8x128xbf16>
    %c384 = arith.constant 384 : index
    %c0_38 = arith.constant 0 : index
    %40 = vector.load %arg8[%c384, %c0_38] : memref<448x128xbf16, #tpu.memory_space<vmem>>, vector<8x128xbf16>
    tpu.vector_store %arg8[%c384, %c0_38], %39 {strides = array<i32>} : memref<448x128xbf16, #tpu.memory_space<vmem>>, vector<8x128xbf16>,
    %cst_39 = arith.constant 0.000000e+00 : bf16
    %41 = vector.broadcast %cst_39 : bf16 to vector<40x128xbf16>
    %c408 = arith.constant 408 : index
    %c0_40 = arith.constant 0 : index
    %42 = vector.load %arg8[%c408, %c0_40] : memref<448x128xbf16, #tpu.memory_space<vmem>>, vector<40x128xbf16>
    tpu.vector_store %arg8[%c408, %c0_40], %41 {strides = array<i32>} : memref<448x128xbf16, #tpu.memory_space<vmem>>, vector<40x128xbf16>,
    %43 = vector.extract_strided_slice %8 {offsets = [0, 0], sizes = [16, 128], strides = [1, 1]} : vector<256x128xbf16> to vector<16x128xbf16>
    %c32 = arith.constant 32 : index
    %c0_41 = arith.constant 0 : index
    %44 = vector.load %arg8[%c32, %c0_41] : memref<448x128xbf16, #tpu.memory_space<vmem>>, vector<16x128xbf16>
    tpu.vector_store %arg8[%c32, %c0_41], %43 {strides = array<i32>} : memref<448x128xbf16, #tpu.memory_space<vmem>>, vector<16x128xbf16>,
    %45 = vector.extract_strided_slice %8 {offsets = [16, 0], sizes = [16, 128], strides = [1, 1]} : vector<256x128xbf16> to vector<16x128xbf16>
    %c56 = arith.constant 56 : index
    %c0_42 = arith.constant 0 : index
    %46 = vector.load %arg8[%c56, %c0_42] : memref<448x128xbf16, #tpu.memory_space<vmem>>, vector<16x128xbf16>
    tpu.vector_store %arg8[%c56, %c0_42], %45 {strides = array<i32>} : memref<448x128xbf16, #tpu.memory_space<vmem>>, vector<16x128xbf16>,
    %47 = vector.extract_strided_slice %8 {offsets = [32, 0], sizes = [16, 128], strides = [1, 1]} : vector<256x128xbf16> to vector<16x128xbf16>
    %c80 = arith.constant 80 : index
    %c0_43 = arith.constant 0 : index
    %48 = vector.load %arg8[%c80, %c0_43] : memref<448x128xbf16, #tpu.memory_space<vmem>>, vector<16x128xbf16>
    tpu.vector_store %arg8[%c80, %c0_43], %47 {strides = array<i32>} : memref<448x128xbf16, #tpu.memory_space<vmem>>, vector<16x128xbf16>,
    %49 = vector.extract_strided_slice %8 {offsets = [48, 0], sizes = [16, 128], strides = [1, 1]} : vector<256x128xbf16> to vector<16x128xbf16>
    %c104 = arith.constant 104 : index
    %c0_44 = arith.constant 0 : index
    %50 = vector.load %arg8[%c104, %c0_44] : memref<448x128xbf16, #tpu.memory_space<vmem>>, vector<16x128xbf16>
    tpu.vector_store %arg8[%c104, %c0_44], %49 {strides = array<i32>} : memref<448x128xbf16, #tpu.memory_space<vmem>>, vector<16x128xbf16>,
    %51 = vector.extract_strided_slice %8 {offsets = [64, 0], sizes = [16, 128], strides = [1, 1]} : vector<256x128xbf16> to vector<16x128xbf16>
    %c128 = arith.constant 128 : index
    %c0_45 = arith.constant 0 : index
    %52 = vector.load %arg8[%c128, %c0_45] : memref<448x128xbf16, #tpu.memory_space<vmem>>, vector<16x128xbf16>
    tpu.vector_store %arg8[%c128, %c0_45], %51 {strides = array<i32>} : memref<448x128xbf16, #tpu.memory_space<vmem>>, vector<16x128xbf16>,
    %53 = vector.extract_strided_slice %8 {offsets = [80, 0], sizes = [16, 128], strides = [1, 1]} : vector<256x128xbf16> to vector<16x128xbf16>
    %c152 = arith.constant 152 : index
    %c0_46 = arith.constant 0 : index
    %54 = vector.load %arg8[%c152, %c0_46] : memref<448x128xbf16, #tpu.memory_space<vmem>>, vector<16x128xbf16>
    tpu.vector_store %arg8[%c152, %c0_46], %53 {strides = array<i32>} : memref<448x128xbf16, #tpu.memory_space<vmem>>, vector<16x128xbf16>,
    %55 = vector.extract_strided_slice %8 {offsets = [96, 0], sizes = [16, 128], strides = [1, 1]} : vector<256x128xbf16> to vector<16x128xbf16>
    %c176 = arith.constant 176 : index
    %c0_47 = arith.constant 0 : index
    %56 = vector.load %arg8[%c176, %c0_47] : memref<448x128xbf16, #tpu.memory_space<vmem>>, vector<16x128xbf16>
    tpu.vector_store %arg8[%c176, %c0_47], %55 {strides = array<i32>} : memref<448x128xbf16, #tpu.memory_space<vmem>>, vector<16x128xbf16>,
    %57 = vector.extract_strided_slice %8 {offsets = [112, 0], sizes = [16, 128], strides = [1, 1]} : vector<256x128xbf16> to vector<16x128xbf16>
    %c200 = arith.constant 200 : index
    %c0_48 = arith.constant 0 : index
    %58 = vector.load %arg8[%c200, %c0_48] : memref<448x128xbf16, #tpu.memory_space<vmem>>, vector<16x128xbf16>
    tpu.vector_store %arg8[%c200, %c0_48], %57 {strides = array<i32>} : memref<448x128xbf16, #tpu.memory_space<vmem>>, vector<16x128xbf16>,
    %59 = vector.extract_strided_slice %8 {offsets = [128, 0], sizes = [16, 128], strides = [1, 1]} : vector<256x128xbf16> to vector<16x128xbf16>
    %c224 = arith.constant 224 : index
    %c0_49 = arith.constant 0 : index
    %60 = vector.load %arg8[%c224, %c0_49] : memref<448x128xbf16, #tpu.memory_space<vmem>>, vector<16x128xbf16>
    tpu.vector_store %arg8[%c224, %c0_49], %59 {strides = array<i32>} : memref<448x128xbf16, #tpu.memory_space<vmem>>, vector<16x128xbf16>,
    %61 = vector.extract_strided_slice %8 {offsets = [144, 0], sizes = [16, 128], strides = [1, 1]} : vector<256x128xbf16> to vector<16x128xbf16>
    %c248 = arith.constant 248 : index
    %c0_50 = arith.constant 0 : index
    %62 = vector.load %arg8[%c248, %c0_50] : memref<448x128xbf16, #tpu.memory_space<vmem>>, vector<16x128xbf16>
    tpu.vector_store %arg8[%c248, %c0_50], %61 {strides = array<i32>} : memref<448x128xbf16, #tpu.memory_space<vmem>>, vector<16x128xbf16>,
    %63 = vector.extract_strided_slice %8 {offsets = [160, 0], sizes = [16, 128], strides = [1, 1]} : vector<256x128xbf16> to vector<16x128xbf16>
    %c272 = arith.constant 272 : index
    %c0_51 = arith.constant 0 : index
    %64 = vector.load %arg8[%c272, %c0_51] : memref<448x128xbf16, #tpu.memory_space<vmem>>, vector<16x128xbf16>
    tpu.vector_store %arg8[%c272, %c0_51], %63 {strides = array<i32>} : memref<448x128xbf16, #tpu.memory_space<vmem>>, vector<16x128xbf16>,
    %65 = vector.extract_strided_slice %8 {offsets = [176, 0], sizes = [16, 128], strides = [1, 1]} : vector<256x128xbf16> to vector<16x128xbf16>
    %c296 = arith.constant 296 : index
    %c0_52 = arith.constant 0 : index
    %66 = vector.load %arg8[%c296, %c0_52] : memref<448x128xbf16, #tpu.memory_space<vmem>>, vector<16x128xbf16>
    tpu.vector_store %arg8[%c296, %c0_52], %65 {strides = array<i32>} : memref<448x128xbf16, #tpu.memory_space<vmem>>, vector<16x128xbf16>,
    %67 = vector.extract_strided_slice %8 {offsets = [192, 0], sizes = [16, 128], strides = [1, 1]} : vector<256x128xbf16> to vector<16x128xbf16>
    %c320 = arith.constant 320 : index
    %c0_53 = arith.constant 0 : index
    %68 = vector.load %arg8[%c320, %c0_53] : memref<448x128xbf16, #tpu.memory_space<vmem>>, vector<16x128xbf16>
    tpu.vector_store %arg8[%c320, %c0_53], %67 {strides = array<i32>} : memref<448x128xbf16, #tpu.memory_space<vmem>>, vector<16x128xbf16>,
    %69 = vector.extract_strided_slice %8 {offsets = [208, 0], sizes = [16, 128], strides = [1, 1]} : vector<256x128xbf16> to vector<16x128xbf16>
    %c344 = arith.constant 344 : index
    %c0_54 = arith.constant 0 : index
    %70 = vector.load %arg8[%c344, %c0_54] : memref<448x128xbf16, #tpu.memory_space<vmem>>, vector<16x128xbf16>
    tpu.vector_store %arg8[%c344, %c0_54], %69 {strides = array<i32>} : memref<448x128xbf16, #tpu.memory_space<vmem>>, vector<16x128xbf16>,
    %71 = vector.extract_strided_slice %8 {offsets = [224, 0], sizes = [16, 128], strides = [1, 1]} : vector<256x128xbf16> to vector<16x128xbf16>
    %c368 = arith.constant 368 : index
    %c0_55 = arith.constant 0 : index
    %72 = vector.load %arg8[%c368, %c0_55] : memref<448x128xbf16, #tpu.memory_space<vmem>>, vector<16x128xbf16>
    tpu.vector_store %arg8[%c368, %c0_55], %71 {strides = array<i32>} : memref<448x128xbf16, #tpu.memory_space<vmem>>, vector<16x128xbf16>,
    %73 = vector.extract_strided_slice %8 {offsets = [240, 0], sizes = [16, 128], strides = [1, 1]} : vector<256x128xbf16> to vector<16x128xbf16>
    %c392 = arith.constant 392 : index
    %c0_56 = arith.constant 0 : index
    %74 = vector.load %arg8[%c392, %c0_56] : memref<448x128xbf16, #tpu.memory_space<vmem>>, vector<16x128xbf16>
    tpu.vector_store %arg8[%c392, %c0_56], %73 {strides = array<i32>} : memref<448x128xbf16, #tpu.memory_space<vmem>>, vector<16x128xbf16>,
    %c7 = arith.constant 7 : index
    %c0_57 = arith.constant 0 : index
    %75 = vector.load %arg8[%c7, %c0_57] : memref<448x128xbf16, #tpu.memory_space<vmem>>, vector<384x128xbf16>
    %c0_58 = arith.constant 0 : index
    %c0_59 = arith.constant 0 : index
    %c0_60 = arith.constant 0 : index
    %76 = vector.load %arg4[%c0_58, %c0_59, %c0_60] : memref<9x128x128xbf16, #tpu.memory_space<vmem>>, vector<1x128x128xbf16>
    %77 = vector.shape_cast %76 : vector<1x128x128xbf16> to vector<128x128xbf16>
    %cst_61 = arith.constant dense<0.000000e+00> : vector<384x128xf32>
    %78 = tpu.matmul %75, %77, %cst_61 {dimension_numbers = #tpu.dot_dimension_numbers<[1], [0], [0], [1], [0, 0, 1, 1], [], []>} : vector<384x128xbf16>, vector<128x128xbf16>, vector<384x128xf32> -> vector<384x128xf32>
    %c0_62 = arith.constant 0 : index
    %c0_63 = arith.constant 0 : index
    %79 = vector.load %arg9[%c0_62, %c0_63] : memref<384x128xf32, #tpu.memory_space<vmem>>, vector<384x128xf32>
    tpu.vector_store %arg9[%c0_62, %c0_63], %78 {strides = array<i32>} : memref<384x128xf32, #tpu.memory_space<vmem>>, vector<384x128xf32>,
    %c8 = arith.constant 8 : index
    %c0_64 = arith.constant 0 : index
    %80 = vector.load %arg8[%c8, %c0_64] : memref<448x128xbf16, #tpu.memory_space<vmem>>, vector<384x128xbf16>
    %c1 = arith.constant 1 : index
    %c0_65 = arith.constant 0 : index
    %c0_66 = arith.constant 0 : index
    %81 = vector.load %arg4[%c1, %c0_65, %c0_66] : memref<9x128x128xbf16, #tpu.memory_space<vmem>>, vector<1x128x128xbf16>
    %82 = vector.shape_cast %81 : vector<1x128x128xbf16> to vector<128x128xbf16>
    %cst_67 = arith.constant dense<0.000000e+00> : vector<384x128xf32>
    %83 = tpu.matmul %80, %82, %cst_67 {dimension_numbers = #tpu.dot_dimension_numbers<[1], [0], [0], [1], [0, 0, 1, 1], [], []>} : vector<384x128xbf16>, vector<128x128xbf16>, vector<384x128xf32> -> vector<384x128xf32>
    %c0_68 = arith.constant 0 : index
    %c0_69 = arith.constant 0 : index
    %84 = vector.load %arg9[%c0_68, %c0_69] : memref<384x128xf32, #tpu.memory_space<vmem>>, vector<384x128xf32>
    %85 = arith.addf %84, %83 : vector<384x128xf32>
    %c0_70 = arith.constant 0 : index
    %c0_71 = arith.constant 0 : index
    %86 = vector.load %arg9[%c0_70, %c0_71] : memref<384x128xf32, #tpu.memory_space<vmem>>, vector<384x128xf32>
    tpu.vector_store %arg9[%c0_70, %c0_71], %85 {strides = array<i32>} : memref<384x128xf32, #tpu.memory_space<vmem>>, vector<384x128xf32>,
    %c9 = arith.constant 9 : index
    %c0_72 = arith.constant 0 : index
    %87 = vector.load %arg8[%c9, %c0_72] : memref<448x128xbf16, #tpu.memory_space<vmem>>, vector<384x128xbf16>
    %c2 = arith.constant 2 : index
    %c0_73 = arith.constant 0 : index
    %c0_74 = arith.constant 0 : index
    %88 = vector.load %arg4[%c2, %c0_73, %c0_74] : memref<9x128x128xbf16, #tpu.memory_space<vmem>>, vector<1x128x128xbf16>
    %89 = vector.shape_cast %88 : vector<1x128x128xbf16> to vector<128x128xbf16>
    %cst_75 = arith.constant dense<0.000000e+00> : vector<384x128xf32>
    %90 = tpu.matmul %87, %89, %cst_75 {dimension_numbers = #tpu.dot_dimension_numbers<[1], [0], [0], [1], [0, 0, 1, 1], [], []>} : vector<384x128xbf16>, vector<128x128xbf16>, vector<384x128xf32> -> vector<384x128xf32>
    %c0_76 = arith.constant 0 : index
    %c0_77 = arith.constant 0 : index
    %91 = vector.load %arg9[%c0_76, %c0_77] : memref<384x128xf32, #tpu.memory_space<vmem>>, vector<384x128xf32>
    %92 = arith.addf %91, %90 : vector<384x128xf32>
    %c0_78 = arith.constant 0 : index
    %c0_79 = arith.constant 0 : index
    %93 = vector.load %arg9[%c0_78, %c0_79] : memref<384x128xf32, #tpu.memory_space<vmem>>, vector<384x128xf32>
    tpu.vector_store %arg9[%c0_78, %c0_79], %92 {strides = array<i32>} : memref<384x128xf32, #tpu.memory_space<vmem>>, vector<384x128xf32>,
    %c31 = arith.constant 31 : index
    %c0_80 = arith.constant 0 : index
    %94 = vector.load %arg8[%c31, %c0_80] : memref<448x128xbf16, #tpu.memory_space<vmem>>, vector<384x128xbf16>
    %c3 = arith.constant 3 : index
    %c0_81 = arith.constant 0 : index
    %c0_82 = arith.constant 0 : index
    %95 = vector.load %arg4[%c3, %c0_81, %c0_82] : memref<9x128x128xbf16, #tpu.memory_space<vmem>>, vector<1x128x128xbf16>
    %96 = vector.shape_cast %95 : vector<1x128x128xbf16> to vector<128x128xbf16>
    %cst_83 = arith.constant dense<0.000000e+00> : vector<384x128xf32>
    %97 = tpu.matmul %94, %96, %cst_83 {dimension_numbers = #tpu.dot_dimension_numbers<[1], [0], [0], [1], [0, 0, 1, 1], [], []>} : vector<384x128xbf16>, vector<128x128xbf16>, vector<384x128xf32> -> vector<384x128xf32>
    %c0_84 = arith.constant 0 : index
    %c0_85 = arith.constant 0 : index
    %98 = vector.load %arg9[%c0_84, %c0_85] : memref<384x128xf32, #tpu.memory_space<vmem>>, vector<384x128xf32>
    %99 = arith.addf %98, %97 : vector<384x128xf32>
    %c0_86 = arith.constant 0 : index
    %c0_87 = arith.constant 0 : index
    %100 = vector.load %arg9[%c0_86, %c0_87] : memref<384x128xf32, #tpu.memory_space<vmem>>, vector<384x128xf32>
    tpu.vector_store %arg9[%c0_86, %c0_87], %99 {strides = array<i32>} : memref<384x128xf32, #tpu.memory_space<vmem>>, vector<384x128xf32>,
    %c32_88 = arith.constant 32 : index
    %c0_89 = arith.constant 0 : index
    %101 = vector.load %arg8[%c32_88, %c0_89] : memref<448x128xbf16, #tpu.memory_space<vmem>>, vector<384x128xbf16>
    %c4 = arith.constant 4 : index
    %c0_90 = arith.constant 0 : index
    %c0_91 = arith.constant 0 : index
    %102 = vector.load %arg4[%c4, %c0_90, %c0_91] : memref<9x128x128xbf16, #tpu.memory_space<vmem>>, vector<1x128x128xbf16>
    %103 = vector.shape_cast %102 : vector<1x128x128xbf16> to vector<128x128xbf16>
    %cst_92 = arith.constant dense<0.000000e+00> : vector<384x128xf32>
    %104 = tpu.matmul %101, %103, %cst_92 {dimension_numbers = #tpu.dot_dimension_numbers<[1], [0], [0], [1], [0, 0, 1, 1], [], []>} : vector<384x128xbf16>, vector<128x128xbf16>, vector<384x128xf32> -> vector<384x128xf32>
    %c0_93 = arith.constant 0 : index
    %c0_94 = arith.constant 0 : index
    %105 = vector.load %arg9[%c0_93, %c0_94] : memref<384x128xf32, #tpu.memory_space<vmem>>, vector<384x128xf32>
    %106 = arith.addf %105, %104 : vector<384x128xf32>
    %c0_95 = arith.constant 0 : index
    %c0_96 = arith.constant 0 : index
    %107 = vector.load %arg9[%c0_95, %c0_96] : memref<384x128xf32, #tpu.memory_space<vmem>>, vector<384x128xf32>
    tpu.vector_store %arg9[%c0_95, %c0_96], %106 {strides = array<i32>} : memref<384x128xf32, #tpu.memory_space<vmem>>, vector<384x128xf32>,
    %c33 = arith.constant 33 : index
    %c0_97 = arith.constant 0 : index
    %108 = vector.load %arg8[%c33, %c0_97] : memref<448x128xbf16, #tpu.memory_space<vmem>>, vector<384x128xbf16>
    %c5 = arith.constant 5 : index
    %c0_98 = arith.constant 0 : index
    %c0_99 = arith.constant 0 : index
    %109 = vector.load %arg4[%c5, %c0_98, %c0_99] : memref<9x128x128xbf16, #tpu.memory_space<vmem>>, vector<1x128x128xbf16>
    %110 = vector.shape_cast %109 : vector<1x128x128xbf16> to vector<128x128xbf16>
    %cst_100 = arith.constant dense<0.000000e+00> : vector<384x128xf32>
    %111 = tpu.matmul %108, %110, %cst_100 {dimension_numbers = #tpu.dot_dimension_numbers<[1], [0], [0], [1], [0, 0, 1, 1], [], []>} : vector<384x128xbf16>, vector<128x128xbf16>, vector<384x128xf32> -> vector<384x128xf32>
    %c0_101 = arith.constant 0 : index
    %c0_102 = arith.constant 0 : index
    %112 = vector.load %arg9[%c0_101, %c0_102] : memref<384x128xf32, #tpu.memory_space<vmem>>, vector<384x128xf32>
    %113 = arith.addf %112, %111 : vector<384x128xf32>
    %c0_103 = arith.constant 0 : index
    %c0_104 = arith.constant 0 : index
    %114 = vector.load %arg9[%c0_103, %c0_104] : memref<384x128xf32, #tpu.memory_space<vmem>>, vector<384x128xf32>
    tpu.vector_store %arg9[%c0_103, %c0_104], %113 {strides = array<i32>} : memref<384x128xf32, #tpu.memory_space<vmem>>, vector<384x128xf32>,
    %c55 = arith.constant 55 : index
    %c0_105 = arith.constant 0 : index
    %115 = vector.load %arg8[%c55, %c0_105] : memref<448x128xbf16, #tpu.memory_space<vmem>>, vector<384x128xbf16>
    %c6 = arith.constant 6 : index
    %c0_106 = arith.constant 0 : index
    %c0_107 = arith.constant 0 : index
    %116 = vector.load %arg4[%c6, %c0_106, %c0_107] : memref<9x128x128xbf16, #tpu.memory_space<vmem>>, vector<1x128x128xbf16>
    %117 = vector.shape_cast %116 : vector<1x128x128xbf16> to vector<128x128xbf16>
    %cst_108 = arith.constant dense<0.000000e+00> : vector<384x128xf32>
    %118 = tpu.matmul %115, %117, %cst_108 {dimension_numbers = #tpu.dot_dimension_numbers<[1], [0], [0], [1], [0, 0, 1, 1], [], []>} : vector<384x128xbf16>, vector<128x128xbf16>, vector<384x128xf32> -> vector<384x128xf32>
    %c0_109 = arith.constant 0 : index
    %c0_110 = arith.constant 0 : index
    %119 = vector.load %arg9[%c0_109, %c0_110] : memref<384x128xf32, #tpu.memory_space<vmem>>, vector<384x128xf32>
    %120 = arith.addf %119, %118 : vector<384x128xf32>
    %c0_111 = arith.constant 0 : index
    %c0_112 = arith.constant 0 : index
    %121 = vector.load %arg9[%c0_111, %c0_112] : memref<384x128xf32, #tpu.memory_space<vmem>>, vector<384x128xf32>
    tpu.vector_store %arg9[%c0_111, %c0_112], %120 {strides = array<i32>} : memref<384x128xf32, #tpu.memory_space<vmem>>, vector<384x128xf32>,
    %c56_113 = arith.constant 56 : index
    %c0_114 = arith.constant 0 : index
    %122 = vector.load %arg8[%c56_113, %c0_114] : memref<448x128xbf16, #tpu.memory_space<vmem>>, vector<384x128xbf16>
    %c7_115 = arith.constant 7 : index
    %c0_116 = arith.constant 0 : index
    %c0_117 = arith.constant 0 : index
    %123 = vector.load %arg4[%c7_115, %c0_116, %c0_117] : memref<9x128x128xbf16, #tpu.memory_space<vmem>>, vector<1x128x128xbf16>
    %124 = vector.shape_cast %123 : vector<1x128x128xbf16> to vector<128x128xbf16>
    %cst_118 = arith.constant dense<0.000000e+00> : vector<384x128xf32>
    %125 = tpu.matmul %122, %124, %cst_118 {dimension_numbers = #tpu.dot_dimension_numbers<[1], [0], [0], [1], [0, 0, 1, 1], [], []>} : vector<384x128xbf16>, vector<128x128xbf16>, vector<384x128xf32> -> vector<384x128xf32>
    %c0_119 = arith.constant 0 : index
    %c0_120 = arith.constant 0 : index
    %126 = vector.load %arg9[%c0_119, %c0_120] : memref<384x128xf32, #tpu.memory_space<vmem>>, vector<384x128xf32>
    %127 = arith.addf %126, %125 : vector<384x128xf32>
    %c0_121 = arith.constant 0 : index
    %c0_122 = arith.constant 0 : index
    %128 = vector.load %arg9[%c0_121, %c0_122] : memref<384x128xf32, #tpu.memory_space<vmem>>, vector<384x128xf32>
    tpu.vector_store %arg9[%c0_121, %c0_122], %127 {strides = array<i32>} : memref<384x128xf32, #tpu.memory_space<vmem>>, vector<384x128xf32>,
    %c57 = arith.constant 57 : index
    %c0_123 = arith.constant 0 : index
    %129 = vector.load %arg8[%c57, %c0_123] : memref<448x128xbf16, #tpu.memory_space<vmem>>, vector<384x128xbf16>
    %c8_124 = arith.constant 8 : index
    %c0_125 = arith.constant 0 : index
    %c0_126 = arith.constant 0 : index
    %130 = vector.load %arg4[%c8_124, %c0_125, %c0_126] : memref<9x128x128xbf16, #tpu.memory_space<vmem>>, vector<1x128x128xbf16>
    %131 = vector.shape_cast %130 : vector<1x128x128xbf16> to vector<128x128xbf16>
    %cst_127 = arith.constant dense<0.000000e+00> : vector<384x128xf32>
    %132 = tpu.matmul %129, %131, %cst_127 {dimension_numbers = #tpu.dot_dimension_numbers<[1], [0], [0], [1], [0, 0, 1, 1], [], []>} : vector<384x128xbf16>, vector<128x128xbf16>, vector<384x128xf32> -> vector<384x128xf32>
    %c0_128 = arith.constant 0 : index
    %c0_129 = arith.constant 0 : index
    %133 = vector.load %arg9[%c0_128, %c0_129] : memref<384x128xf32, #tpu.memory_space<vmem>>, vector<384x128xf32>
    %134 = arith.addf %133, %132 : vector<384x128xf32>
    %c0_130 = arith.constant 0 : index
    %c0_131 = arith.constant 0 : index
    %135 = vector.load %arg9[%c0_130, %c0_131] : memref<384x128xf32, #tpu.memory_space<vmem>>, vector<384x128xf32>
    tpu.vector_store %arg9[%c0_130, %c0_131], %134 {strides = array<i32>} : memref<384x128xf32, #tpu.memory_space<vmem>>, vector<384x128xf32>,
    %c0_132 = arith.constant 0 : index
    %c0_133 = arith.constant 0 : index
    %136 = vector.load %arg9[%c0_132, %c0_133] : memref<384x128xf32, #tpu.memory_space<vmem>>, vector<384x128xf32>
    %c0_134 = arith.constant 0 : index
    %c0_135 = arith.constant 0 : index
    %137 = vector.load %arg5[%c0_134, %c0_135] : memref<1x128xf32, #tpu.memory_space<vmem>>, vector<1x128xf32>
    %138 = vector.broadcast %137 : vector<1x128xf32> to vector<384x128xf32>
    %139 = arith.maximumf %136, %138 : vector<384x128xf32>
    %140 = arith.truncf %139 : vector<384x128xf32> to vector<384x128xbf16>
    %c0_136 = arith.constant 0 : index
    %c0_137 = arith.constant 0 : index
    %141 = vector.load %arg6[%c0_136, %c0_137] : memref<128x128xbf16, #tpu.memory_space<vmem>>, vector<128x128xbf16>
    %cst_138 = arith.constant dense<0.000000e+00> : vector<384x128xf32>
    %142 = tpu.matmul %140, %141, %cst_138 {dimension_numbers = #tpu.dot_dimension_numbers<[1], [0], [0], [1], [0, 0, 1, 1], [], []>} : vector<384x128xbf16>, vector<128x128xbf16>, vector<384x128xf32> -> vector<384x128xf32>
    %143 = vector.shape_cast %142 : vector<384x128xf32> to vector<16x24x128xf32>
    %144 = vector.extract_strided_slice %143 {offsets = [0, 0, 0], sizes = [16, 16, 128], strides = [1, 1, 1]} : vector<16x24x128xf32> to vector<16x16x128xf32>
    %c0_139 = arith.constant 0 : index
    %c0_140 = arith.constant 0 : index
    %c0_141 = arith.constant 0 : index
    %c0_142 = arith.constant 0 : index
    %145 = vector.load %arg7[%c0_139, %c0_140, %c0_141, %c0_142] : memref<1x16x16x128xf32, #tpu.memory_space<vmem>>, vector<1x16x16x128xf32>
    %146 = vector.shape_cast %145 : vector<1x16x16x128xf32> to vector<16x16x128xf32>
    %147 = vector.shape_cast %144 : vector<16x16x128xf32> to vector<1x16x16x128xf32>
    tpu.vector_store %arg7[%c0_139, %c0_140, %c0_141, %c0_142], %147 {strides = array<i32>} : memref<1x16x16x128xf32, #tpu.memory_space<vmem>>, vector<1x16x16x128xf32>,
    return
  }
  func.func @transform_0(%arg0: i32) -> (i32, i32, i32) {
    %c0_i32 = arith.constant 0 : i32
    %c0_i32_0 = arith.constant 0 : i32
    %c0_i32_1 = arith.constant 0 : i32
    return %arg0, %c0_i32, %c0_i32_0 : i32, i32, i32
  }
  func.func @transform_1(%arg0: i32) -> (i32, i32) {
    %c0_i32 = arith.constant 0 : i32
    %c0_i32_0 = arith.constant 0 : i32
    %c0_i32_1 = arith.constant 0 : i32
    return %c0_i32, %c0_i32_0 : i32, i32
  }
  func.func @transform_2(%arg0: i32) -> (i32, i32) {
    %c0_i32 = arith.constant 0 : i32
    %c0_i32_0 = arith.constant 0 : i32
    %c0_i32_1 = arith.constant 0 : i32
    return %c0_i32, %c0_i32_0 : i32, i32
  }
  func.func @transform_3(%arg0: i32) -> (i32, i32, i32) {
    %c0_i32 = arith.constant 0 : i32
    %c0_i32_0 = arith.constant 0 : i32
    %c0_i32_1 = arith.constant 0 : i32
    %c0_i32_2 = arith.constant 0 : i32
    return %c0_i32, %c0_i32_0, %c0_i32_1 : i32, i32, i32
  }
  func.func @transform_4(%arg0: i32) -> (i32, i32) {
    %c0_i32 = arith.constant 0 : i32
    %c0_i32_0 = arith.constant 0 : i32
    %c0_i32_1 = arith.constant 0 : i32
    return %c0_i32, %c0_i32_0 : i32, i32
  }
  func.func @transform_5(%arg0: i32) -> (i32, i32) {
    %c0_i32 = arith.constant 0 : i32
    %c0_i32_0 = arith.constant 0 : i32
    %c0_i32_1 = arith.constant 0 : i32
    return %c0_i32, %c0_i32_0 : i32, i32
  }
  func.func @transform_6(%arg0: i32) -> (i32, i32, i32, i32) {
    %c0_i32 = arith.constant 0 : i32
    %c0_i32_0 = arith.constant 0 : i32
    %c0_i32_1 = arith.constant 0 : i32
    %c0_i32_2 = arith.constant 0 : i32
    return %arg0, %c0_i32, %c0_i32_0, %c0_i32_1 : i32, i32, i32, i32
  }
}

</mosaic_0001>

<llo_original>
// kernel: tpu_custom_call.1
$region0: #{tpu_custom_call.1}
  #allocation0 [shape = 'u32[]', space=smem, size = 0x4, offset = 0x4, fixed_abs, tag = 'smem constant byte address 0x4 - core index']
  #allocation1 [shape = 'u32[144,128]{1,0:T(1,128)}', space=vmem, size = 0x12000, scoped, tag = 'internal scratch']
  #allocation2 [shape = 'bf16[448,128]{1,0:T(16,128)(2,1)}', space=vmem, size = 0x1c000, scoped, tag = 'scratch operand']
  #allocation3 [shape = 'f32[384,128]{1,0:T(8,128)}', space=vmem, size = 0x30000, scoped, tag = 'scratch operand']
  %s0 = inlined_call_operand.vmem [shape: f32[2,256,16], index: 0, kind: input, shape index: {}]
  %s1 = inlined_call_operand.vmem [shape: bf16[16,128], index: 1, kind: input, shape index: {}]
  %s2 = inlined_call_operand.vmem [shape: f32[1,128], index: 2, kind: input, shape index: {}]
  %s3 = inlined_call_operand.vmem [shape: bf16[9,128,128], index: 3, kind: input, shape index: {}]
  %s4 = inlined_call_operand.vmem [shape: f32[1,128], index: 4, kind: input, shape index: {}]
  %s5 = inlined_call_operand.hbm [shape: bf16[128,128], index: 5, kind: input, shape index: {}]
  %s6 = inlined_call_operand.hbm [shape: f32[2,16,16,128], index: 6, kind: output, shape index: {}]
  %s7 = sld [smem:[#allocation0]]
  $region61: #{tpu_custom_call.1} parent=0
    _
  %s9 = ssub.s32 1, %s7
  %s10 = scalar_select 0, %s9, %s7
  $region1: #{tpu_custom_call.1} parent=0
    #allocation4 [shape = 'u8[32768]{0}', space=vmem, size = 0x8000, scoped, tag = 'input window, operand 5, single buffered']
    #allocation5 [shape = 's32[2]{0}', space=sflag, size = 0x8, scoped, tag = 'scoped memory for tpu_custom_call.1']
    #allocation6 [shape = 's32[2]{0}', space=sflag, size = 0x8, scoped, tag = 'scoped memory for tpu_custom_call.1']
    #allocation7 [shape = 'u8[262144]{0}', space=vmem, size = 0x40000, scoped, tag = 'output window, operand 0']
    %11 = vsyncpa [#allocation5], 0
    %12 = vsyncpa [#allocation6], 0
    %s13 = scalar_lea.sflag [#allocation6], 1
    %14 = vsyncpa %s13, 0
    loop: start=0, step=1, limit=4
    $region2: #{tpu_custom_call.1} parent=1 // loop_pre_header
      _
    $region3: #{tpu_custom_call.1} parent=1 // loop_header
      %s16 = sphi 0, %s20
      %p17 = scmp.ge.s32.totalorder %s16, 4
      %s26 = sphi 0, %s28
      %s29 = sphi 0, %s26
      %s30 = sphi 0, %s29
      %s46 = sphi 0, %s30
      %s50 = sphi 0, %s50
      %s52 = sphi 0, %s50
      %s53 = sphi 0, %s52
      %s67 = sphi 0, %s53
      %s71 = sphi 0, %s71
      %s73 = sphi 0, %s71
      %s74 = sphi 0, %s73
      %s88 = sphi 0, %s74
      %s92 = sphi 0, %s92
      %s94 = sphi 0, %s92
      %s95 = sphi 0, %s94
      %s109 = sphi 0, %s95
      %s113 = sphi 0, %s113
      %s115 = sphi 0, %s113
      %s116 = sphi 0, %s115
      %s130 = sphi 0, %s116
      %s134 = sphi 0, %s134
      %s136 = sphi 0, %s134
      %s137 = sphi 0, %s136
      %s151 = sphi 0, %s137
      %s157 = sphi 0, %s159
      %s160 = sphi 0, %s157
      %s161 = sphi 0, %s160
      %s177 = sphi 0, %s161
    $region4: #{tpu_custom_call.1} parent=1 // loop_header_branch
      %19 = sbr.rel (%p17) target = $region8
    $region5: #{tpu_custom_call.1} parent=1 // loop_body
      %s21 = ssub.s32 %s16, 1
      %s22 = ssub.s32 %s16, 2
      %s23 = sadd.s32 %s16, 1
      %s24 = ssub.s32 %s16, %s23
      %p25 = scmp.eq.s32.totalorder %s24, 0
      %s27 = sadd.s32 %s26, 1
      %s28 = scalar_select %p25, %s26, %s27
      %p31 = pneg %p25
      %p32 = scmp.eq.s32.totalorder %s16, 1
      %p33 = por %p31, %p32
      %p34 = scmp.ne.s32.totalorder %s26, %s29
      %p35 = scmp.eq.s32.totalorder %s16, 0
      %p36 = por %p34, %p35
      %p37 = scmp.ne.s32.totalorder %s26, %s29
      %p38 = scmp.eq.s32.totalorder %s21, 1
      %p39 = por %p37, %p38
      %p40 = scmp.ne.s32.totalorder %s29, %s30
      %p41 = scmp.eq.s32.totalorder %s21, 0
      %p42 = por %p40, %p41
      %p43 = scmp.ne.s32.totalorder %s29, %s30
      %p44 = scmp.eq.s32.totalorder %s22, 1
      %p45 = por %p43, %p44
      %p47 = scmp.ne.s32.totalorder %s30, %s46
      %p48 = scmp.eq.s32.totalorder %s22, 0
      %p49 = por %p47, %p48
      %s51 = sadd.s32 %s50, 1
      %p54 = scmp.eq.s32.totalorder %s16, 1
      %p55 = scmp.ne.s32.totalorder %s50, %s52
      %p56 = scmp.eq.s32.totalorder %s16, 0
      %p57 = por %p55, %p56
      %p58 = scmp.ne.s32.totalorder %s50, %s52
      %p59 = scmp.eq.s32.totalorder %s21, 1
      %p60 = por %p58, %p59
      %p61 = scmp.ne.s32.totalorder %s52, %s53
      %p62 = scmp.eq.s32.totalorder %s21, 0
      %p63 = por %p61, %p62
      %p64 = scmp.ne.s32.totalorder %s52, %s53
      %p65 = scmp.eq.s32.totalorder %s22, 1
      %p66 = por %p64, %p65
      %p68 = scmp.ne.s32.totalorder %s53, %s67
      %p69 = scmp.eq.s32.totalorder %s22, 0
      %p70 = por %p68, %p69
      %s72 = sadd.s32 %s71, 1
      %p75 = scmp.eq.s32.totalorder %s16, 1
      %p76 = scmp.ne.s32.totalorder %s71, %s73
      %p77 = scmp.eq.s32.totalorder %s16, 0
      %p78 = por %p76, %p77
      %p79 = scmp.ne.s32.totalorder %s71, %s73
      %p80 = scmp.eq.s32.totalorder %s21, 1
      %p81 = por %p79, %p80
      %p82 = scmp.ne.s32.totalorder %s73, %s74
      %p83 = scmp.eq.s32.totalorder %s21, 0
      %p84 = por %p82, %p83
      %p85 = scmp.ne.s32.totalorder %s73, %s74
      %p86 = scmp.eq.s32.totalorder %s22, 1
      %p87 = por %p85, %p86
      %p89 = scmp.ne.s32.totalorder %s74, %s88
      %p90 = scmp.eq.s32.totalorder %s22, 0
      %p91 = por %p89, %p90
      %s93 = sadd.s32 %s92, 1
      %p96 = scmp.eq.s32.totalorder %s16, 1
      %p97 = scmp.ne.s32.totalorder %s92, %s94
      %p98 = scmp.eq.s32.totalorder %s16, 0
      %p99 = por %p97, %p98
      %p100 = scmp.ne.s32.totalorder %s92, %s94
      %p101 = scmp.eq.s32.totalorder %s21, 1
      %p102 = por %p100, %p101
      %p103 = scmp.ne.s32.totalorder %s94, %s95
      %p104 = scmp.eq.s32.totalorder %s21, 0
      %p105 = por %p103, %p104
      %p106 = scmp.ne.s32.totalorder %s94, %s95
      %p107 = scmp.eq.s32.totalorder %s22, 1
      %p108 = por %p106, %p107
      %p110 = scmp.ne.s32.totalorder %s95, %s109
      %p111 = scmp.eq.s32.totalorder %s22, 0
      %p112 = por %p110, %p111
      %s114 = sadd.s32 %s113, 1
      %p117 = scmp.eq.s32.totalorder %s16, 1
      %p118 = scmp.ne.s32.totalorder %s113, %s115
      %p119 = scmp.eq.s32.totalorder %s16, 0
      %p120 = por %p118, %p119
      %p121 = scmp.ne.s32.totalorder %s113, %s115
      %p122 = scmp.eq.s32.totalorder %s21, 1
      %p123 = por %p121, %p122
      %p124 = scmp.ne.s32.totalorder %s115, %s116
      %p125 = scmp.eq.s32.totalorder %s21, 0
      %p126 = por %p124, %p125
      %p127 = scmp.ne.s32.totalorder %s115, %s116
      %p128 = scmp.eq.s32.totalorder %s22, 1
      %p129 = por %p127, %p128
      %p131 = scmp.ne.s32.totalorder %s116, %s130
      %p132 = scmp.eq.s32.totalorder %s22, 0
      %p133 = por %p131, %p132
      %s135 = sadd.s32 %s134, 1
      %p138 = scmp.eq.s32.totalorder %s16, 1
      %p139 = scmp.ne.s32.totalorder %s134, %s136
      %p140 = scmp.eq.s32.totalorder %s16, 0
      %p141 = por %p139, %p140
      %p142 = scmp.ne.s32.totalorder %s134, %s136
      %p143 = scmp.eq.s32.totalorder %s21, 1
      %p144 = por %p142, %p143
      %p145 = scmp.ne.s32.totalorder %s136, %s137
      %p146 = scmp.eq.s32.totalorder %s21, 0
      %p147 = por %p145, %p146
      %p148 = scmp.ne.s32.totalorder %s136, %s137
      %p149 = scmp.eq.s32.totalorder %s22, 1
      %p150 = por %p148, %p149
      %p152 = scmp.ne.s32.totalorder %s137, %s151
      %p153 = scmp.eq.s32.totalorder %s22, 0
      %p154 = por %p152, %p153
      %s155 = ssub.s32 %s16, %s23
      %p156 = scmp.eq.s32.totalorder %s155, 0
      %s158 = sadd.s32 %s157, 1
      %s159 = scalar_select %p156, %s157, %s158
      %p162 = pneg %p156
      %p163 = scmp.eq.s32.totalorder %s16, 1
      %p164 = por %p162, %p163
      %p165 = scmp.ne.s32.totalorder %s157, %s160
      %p166 = scmp.eq.s32.totalorder %s16, 0
      %p167 = por %p165, %p166
      %p168 = scmp.ne.s32.totalorder %s157, %s160
      %p169 = scmp.eq.s32.totalorder %s21, 1
      %p170 = por %p168, %p169
      %p171 = scmp.ne.s32.totalorder %s160, %s161
      %p172 = scmp.eq.s32.totalorder %s21, 0
      %p173 = por %p171, %p172
      %p174 = scmp.ne.s32.totalorder %s160, %s161
      %p175 = scmp.eq.s32.totalorder %s22, 1
      %p176 = por %p174, %p175
      %p178 = scmp.ne.s32.totalorder %s161, %s177
      %p179 = scmp.eq.s32.totalorder %s22, 0
      %p180 = por %p178, %p179
      %p181 = scmp.le.s32.totalorder 1, %s16
      %p182 = scmp.lt.s32.totalorder %s16, 3
      %p183 = pnand %p181, %p182
      %p184 = pneg %p183
      // Predicated region
      $region9: #{tpu_custom_call.1} parent=5 // pred_check
        _
      $region10: #{tpu_custom_call.1} parent=5 // pred_check_branch
        %186 = sbr.rel (%p183) target = $region12
      $region11: #{tpu_custom_call.1} parent=5 // pred_region
        %s187 = ssub.s32 %s16, 1
        // Predicated region
        $region13: #{tpu_custom_call.1} parent=11 // pred_check
          %p188 = pneg %p63
        $region14: #{tpu_custom_call.1} parent=11 // pred_check_branch
          %190 = sbr.rel (%p188) target = $region16
        $region15: #{tpu_custom_call.1} parent=11 // pred_region
          _
        $region16: #{tpu_custom_call.1} parent=11 // pred_fallthru
          _
        // Predicated region
        $region17: #{tpu_custom_call.1} parent=11 // pred_check
          %p191 = pneg %p84
        $region18: #{tpu_custom_call.1} parent=11 // pred_check_branch
          %193 = sbr.rel (%p191) target = $region20
        $region19: #{tpu_custom_call.1} parent=11 // pred_region
          _
        $region20: #{tpu_custom_call.1} parent=11 // pred_fallthru
          _
        // Predicated region
        $region21: #{tpu_custom_call.1} parent=11 // pred_check
          %p194 = pneg %p105
        $region22: #{tpu_custom_call.1} parent=11 // pred_check_branch
          %196 = sbr.rel (%p194) target = $region24
        $region23: #{tpu_custom_call.1} parent=11 // pred_region
          _
        $region24: #{tpu_custom_call.1} parent=11 // pred_fallthru
          _
        // Predicated region
        $region25: #{tpu_custom_call.1} parent=11 // pred_check
          %p197 = pneg %p126
        $region26: #{tpu_custom_call.1} parent=11 // pred_check_branch
          %199 = sbr.rel (%p197) target = $region28
        $region27: #{tpu_custom_call.1} parent=11 // pred_region
          _
        $region28: #{tpu_custom_call.1} parent=11 // pred_fallthru
          _
        // Predicated region
        $region29: #{tpu_custom_call.1} parent=11 // pred_check
          %p200 = pneg %p147
        $region30: #{tpu_custom_call.1} parent=11 // pred_check_branch
          %202 = sbr.rel (%p200) target = $region32
        $region31: #{tpu_custom_call.1} parent=11 // pred_region
          %s204 = ssub.s32 1024, 1024
          %205 = vsyncadd [#allocation5], %s204
          %s206 = sshll.u32 [#allocation4], 4
          %s207 = int_to_ptr.vmem [resolvable:$true] %s206
          %212 = dma.hbm_to_vmem [thread:$0]  %s5, 1024, %s207, [#allocation5], 64, 64, 4
        $region32: #{tpu_custom_call.1} parent=11 // pred_fallthru
          _
      $region12: #{tpu_custom_call.1} parent=5 // pred_fallthru
        _
      %p213 = scmp.lt.s32.totalorder %s16, 2
      // Predicated region
      $region33: #{tpu_custom_call.1} parent=5 // pred_check
        %p214 = pneg %p213
      $region34: #{tpu_custom_call.1} parent=5 // pred_check_branch
        %216 = sbr.rel (%p214) target = $region36
      $region35: #{tpu_custom_call.1} parent=5 // pred_region
        // Predicated region
        $region37: #{tpu_custom_call.1} parent=35 // pred_check
          %p217 = pneg %p36
        $region38: #{tpu_custom_call.1} parent=35 // pred_check_branch
          %219 = sbr.rel (%p217) target = $region40
        $region39: #{tpu_custom_call.1} parent=35 // pred_region
          %p220 = scmp.lt.s32.totalorder %s16, 1
          %s221 = scalar_select %p220, %s16, 1
          %s222 = smul.addr %s221, 32
          %s223 = smul.addr %s222, 8
          %s224 = scalar_lea.vmem %s0, %s223
        $region40: #{tpu_custom_call.1} parent=35 // pred_fallthru
          _
      $region36: #{tpu_custom_call.1} parent=5 // pred_fallthru
        _
      %p225 = scmp.le.s32.totalorder 1, %s16
      %p226 = scmp.lt.s32.totalorder %s16, 3
      %p227 = pnand %p225, %p226
      %p228 = pneg %p227
      // Predicated region
      $region41: #{tpu_custom_call.1} parent=5 // pred_check
        _
      $region42: #{tpu_custom_call.1} parent=5 // pred_check_branch
        %230 = sbr.rel (%p227) target = $region44
      $region43: #{tpu_custom_call.1} parent=5 // pred_region
        %s231 = ssub.s32 %s16, 1
        // Predicated region
        $region45: #{tpu_custom_call.1} parent=43 // pred_check
          %p232 = pneg %p147
        $region46: #{tpu_custom_call.1} parent=43 // pred_check_branch
          %234 = sbr.rel (%p232) target = $region48
        $region47: #{tpu_custom_call.1} parent=43 // pred_region
          %235 = dma.done [#allocation5], 1024
        $region48: #{tpu_custom_call.1} parent=43 // pred_fallthru
          _
        %p236 = scmp.lt.s32.totalorder %s21, 1
        %s237 = scalar_select %p236, %s21, 1
        %s238 = smul.addr %s237, 32
        %s239 = smul.addr %s238, 8
        %s240 = scalar_lea.vmem %s0, %s239
        %p241 = pneg %p42
        %p242 = pneg %p39
        %p243 = pneg %p63
        %p244 = pneg %p60
        %p245 = pneg %p84
        %p246 = pneg %p81
        %p247 = pneg %p105
        %p248 = pneg %p102
        %p249 = pneg %p126
        %p250 = pneg %p123
        %p251 = pneg %p147
        %p252 = pneg %p144
        %p253 = pneg %p173
        %p254 = pneg %p170
        %s255 = sand.u32 %s160, 1
        %s256 = scalar_lea.sflag [#allocation6], %s255
        %s257 = sand.u32 %s160, 1
        %s258 = smul.addr %s257, 256
        %s259 = scalar_lea.vmem [#allocation7], %s258
        %p260 = scmp.lt.s32.totalorder %s21, 1
        %s261 = scalar_select %p260, %s21, 1
        %s262 = smul.addr %s261, 32
        %s263 = smul.addr %s262, 8
        %s264 = scalar_lea.vmem %s0, %s263
        %v266 = vld [vmem:[%s264] sm:$0xff]
        %v267 = vld [vmem:[%s264 + $0x8] sm:$0xff]
        %v268 = vld [vmem:[%s264 + $0x10] sm:$0xff]
        %v269 = vld [vmem:[%s264 + $0x18] sm:$0xff]
        %v270 = vld [vmem:[%s264 + $0x20] sm:$0xff]
        %v271 = vld [vmem:[%s264 + $0x28] sm:$0xff]
        %v272 = vld [vmem:[%s264 + $0x30] sm:$0xff]
        %v273 = vld [vmem:[%s264 + $0x38] sm:$0xff]
        %v274 = vld [vmem:[%s264 + $0x40] sm:$0xff]
        %v275 = vld [vmem:[%s264 + $0x48] sm:$0xff]
        %v276 = vld [vmem:[%s264 + $0x50] sm:$0xff]
        %v277 = vld [vmem:[%s264 + $0x58] sm:$0xff]
        %v278 = vld [vmem:[%s264 + $0x60] sm:$0xff]
        %v279 = vld [vmem:[%s264 + $0x68] sm:$0xff]
        %v280 = vld [vmem:[%s264 + $0x70] sm:$0xff]
        %v281 = vld [vmem:[%s264 + $0x78] sm:$0xff]
        %v282 = vld [vmem:[%s264 + $0x80] sm:$0xff]
        %v283 = vld [vmem:[%s264 + $0x88] sm:$0xff]
        %v284 = vld [vmem:[%s264 + $0x90] sm:$0xff]
        %v285 = vld [vmem:[%s264 + $0x98] sm:$0xff]
        %v286 = vld [vmem:[%s264 + $0xa0] sm:$0xff]
        %v287 = vld [vmem:[%s264 + $0xa8] sm:$0xff]
        %v288 = vld [vmem:[%s264 + $0xb0] sm:$0xff]
        %v289 = vld [vmem:[%s264 + $0xb8] sm:$0xff]
        %v290 = vld [vmem:[%s264 + $0xc0] sm:$0xff]
        %v291 = vld [vmem:[%s264 + $0xc8] sm:$0xff]
        %v292 = vld [vmem:[%s264 + $0xd0] sm:$0xff]
        %v293 = vld [vmem:[%s264 + $0xd8] sm:$0xff]
        %v294 = vld [vmem:[%s264 + $0xe0] sm:$0xff]
        %v295 = vld [vmem:[%s264 + $0xe8] sm:$0xff]
        %v296 = vld [vmem:[%s264 + $0xf0] sm:$0xff]
        %v297 = vld [vmem:[%s264 + $0xf8] sm:$0xff]
        %v298 = vpack.c.bf16 %v267, %v266
        %v299 = vpack.c.bf16 %v269, %v268
        %v300 = vpack.c.bf16 %v271, %v270
        %v301 = vpack.c.bf16 %v273, %v272
        %v302 = vpack.c.bf16 %v275, %v274
        %v303 = vpack.c.bf16 %v277, %v276
        %v304 = vpack.c.bf16 %v279, %v278
        %v305 = vpack.c.bf16 %v281, %v280
        %v306 = vpack.c.bf16 %v283, %v282
        %v307 = vpack.c.bf16 %v285, %v284
        %v308 = vpack.c.bf16 %v287, %v286
        %v309 = vpack.c.bf16 %v289, %v288
        %v310 = vpack.c.bf16 %v291, %v290
        %v311 = vpack.c.bf16 %v293, %v292
        %v312 = vpack.c.bf16 %v295, %v294
        %v313 = vpack.c.bf16 %v297, %v296
        %v314 = vld [vmem:[%s1] sm:$0xf]
        %v315 = vld [vmem:[%s1 + $0x4] sm:$0xf]
        %v318 = vunpack.c.l.b16 %v314
        %v319 = vunpack.c.l.b16 %v315
        %v320 = vpack.c.b16 %v319, %v318
        %vm322 = vcmask 130048
        %v324 = vsel %vm322, %v298, 0
        %v327 = vsel %vm322, %v299, 0
        %v330 = vsel %vm322, %v300, 0
        %v333 = vsel %vm322, %v301, 0
        %v336 = vsel %vm322, %v302, 0
        %v339 = vsel %vm322, %v303, 0
        %v342 = vsel %vm322, %v304, 0
        %v345 = vsel %vm322, %v305, 0
        %v348 = vsel %vm322, %v306, 0
        %v351 = vsel %vm322, %v307, 0
        %v354 = vsel %vm322, %v308, 0
        %v357 = vsel %vm322, %v309, 0
        %v360 = vsel %vm322, %v310, 0
        %v363 = vsel %vm322, %v311, 0
        %v366 = vsel %vm322, %v312, 0
        %v369 = vsel %vm322, %v313, 0
        %371 = vmatprep.subr.bf16.mxu0 0
        %372 = vmatpush1.bf16.msra.mxu0 %v320
        %373 = vmatprep.subr.bf16.mxu0 0
        %374 = vmatpush1.bf16.msra.mxu0 0
        %375 = vmatprep.subr.bf16.mxu0 0
        %376 = vmatpush1.bf16.msra.mxu0 0
        %377 = vmatprep.subr.bf16.mxu0 0
        %378 = vmatpush1.bf16.msra.mxu0 0
        %379 = vmatprep.subr.bf16.mxu0 0
        %380 = vmatpush1.bf16.msra.mxu0 0
        %381 = vmatprep.subr.bf16.mxu0 0
        %382 = vmatpush1.bf16.msra.mxu0 0
        %383 = vmatprep.subr.bf16.mxu0 0
        %384 = vmatpush1.bf16.msra.mxu0 0
        %385 = vmatprep.subr.bf16.mxu0 0
        %386 = vmatpush1.bf16.msra.mxu0 0
        %387 = vmatprep.subr.bf16.mxu0 0
        %388 = vmatpush1.bf16.msra.mxu0 0
        %389 = vmatprep.subr.bf16.mxu0 0
        %390 = vmatpush1.bf16.msra.mxu0 0
        %391 = vmatprep.subr.bf16.mxu0 0
        %392 = vmatpush1.bf16.msra.mxu0 0
        %393 = vmatprep.subr.bf16.mxu0 0
        %394 = vmatpush1.bf16.msra.mxu0 0
        %395 = vmatprep.subr.bf16.mxu0 0
        %396 = vmatpush1.bf16.msra.mxu0 0
        %397 = vmatprep.subr.bf16.mxu0 0
        %398 = vmatpush1.bf16.msra.mxu0 0
        %399 = vmatprep.subr.bf16.mxu0 0
        %400 = vmatpush1.bf16.msra.mxu0 0
        %401 = vmatprep.subr.bf16.mxu0 0
        %402 = vmatpush1.bf16.msra.mxu0 0
        %403 = vmatprep.mubr.bf16.mxu0 0
        %404 = vmatmul.mubr.bf16.gmra.mrb[0].mxu0 %v324
        %v405 = vpop.f32.mrb[0].mxu0
        %v406 = vadd.f32 0.0, %v405
        %v407 = vpop.f32.mrb[0].mxu0
        %v408 = vpop.f32.mrb[0].mxu0
        %v409 = vadd.f32 0.0, %v408
        %v410 = vpop.f32.mrb[0].mxu0
        %411 = vmatprep.mubr.bf16.mxu0 0
        %412 = vmatmul.mubr.bf16.gmra.mrb[0].mxu0 %v327
        %v413 = vpop.f32.mrb[0].mxu0
        %v414 = vadd.f32 0.0, %v413
        %v415 = vpop.f32.mrb[0].mxu0
        %v416 = vpop.f32.mrb[0].mxu0
        %v417 = vadd.f32 0.0, %v416
        %v418 = vpop.f32.mrb[0].mxu0
        %419 = vmatprep.mubr.bf16.mxu0 0
        %420 = vmatmul.mubr.bf16.gmra.mrb[0].mxu0 %v330
        %v421 = vpop.f32.mrb[0].mxu0
        %v422 = vadd.f32 0.0, %v421
        %v423 = vpop.f32.mrb[0].mxu0
        %v424 = vpop.f32.mrb[0].mxu0
        %v425 = vadd.f32 0.0, %v424
        %v426 = vpop.f32.mrb[0].mxu0
        %427 = vmatprep.mubr.bf16.mxu0 0
        %428 = vmatmul.mubr.bf16.gmra.mrb[0].mxu0 %v333
        %v429 = vpop.f32.mrb[0].mxu0
        %v430 = vadd.f32 0.0, %v429
        %v431 = vpop.f32.mrb[0].mxu0
        %v432 = vpop.f32.mrb[0].mxu0
        %v433 = vadd.f32 0.0, %v432
        %v434 = vpop.f32.mrb[0].mxu0
        %435 = vmatprep.mubr.bf16.mxu0 0
        %436 = vmatmul.mubr.bf16.gmra.mrb[0].mxu0 %v336
        %v437 = vpop.f32.mrb[0].mxu0
        %v438 = vadd.f32 0.0, %v437
        %v439 = vpop.f32.mrb[0].mxu0
        %v440 = vpop.f32.mrb[0].mxu0
        %v441 = vadd.f32 0.0, %v440
        %v442 = vpop.f32.mrb[0].mxu0
        %443 = vmatprep.mubr.bf16.mxu0 0
        %444 = vmatmul.mubr.bf16.gmra.mrb[0].mxu0 %v339
        %v445 = vpop.f32.mrb[0].mxu0
        %v446 = vadd.f32 0.0, %v445
        %v447 = vpop.f32.mrb[0].mxu0
        %v448 = vpop.f32.mrb[0].mxu0
        %v449 = vadd.f32 0.0, %v448
        %v450 = vpop.f32.mrb[0].mxu0
        %451 = vmatprep.mubr.bf16.mxu0 0
        %452 = vmatmul.mubr.bf16.gmra.mrb[0].mxu0 %v342
        %v453 = vpop.f32.mrb[0].mxu0
        %v454 = vadd.f32 0.0, %v453
        %v455 = vpop.f32.mrb[0].mxu0
        %v456 = vpop.f32.mrb[0].mxu0
        %v457 = vadd.f32 0.0, %v456
        %v458 = vpop.f32.mrb[0].mxu0
        %459 = vmatprep.mubr.bf16.mxu0 0
        %460 = vmatmul.mubr.bf16.gmra.mrb[0].mxu0 %v345
        %v461 = vpop.f32.mrb[0].mxu0
        %v462 = vadd.f32 0.0, %v461
        %v463 = vpop.f32.mrb[0].mxu0
        %v464 = vpop.f32.mrb[0].mxu0
        %v465 = vadd.f32 0.0, %v464
        %v466 = vpop.f32.mrb[0].mxu0
        %467 = vmatprep.mubr.bf16.mxu0 0
        %468 = vmatmul.mubr.bf16.gmra.mrb[0].mxu0 %v348
        %v469 = vpop.f32.mrb[0].mxu0
        %v470 = vadd.f32 0.0, %v469
        %v471 = vpop.f32.mrb[0].mxu0
        %v472 = vpop.f32.mrb[0].mxu0
        %v473 = vadd.f32 0.0, %v472
        %v474 = vpop.f32.mrb[0].mxu0
        %475 = vmatprep.mubr.bf16.mxu0 0
        %476 = vmatmul.mubr.bf16.gmra.mrb[0].mxu0 %v351
        %v477 = vpop.f32.mrb[0].mxu0
        %v478 = vadd.f32 0.0, %v477
        %v479 = vpop.f32.mrb[0].mxu0
        %v480 = vpop.f32.mrb[0].mxu0
        %v481 = vadd.f32 0.0, %v480
        %v482 = vpop.f32.mrb[0].mxu0
        %483 = vmatprep.mubr.bf16.mxu0 0
        %484 = vmatmul.mubr.bf16.gmra.mrb[0].mxu0 %v354
        %v485 = vpop.f32.mrb[0].mxu0
        %v486 = vadd.f32 0.0, %v485
        %v487 = vpop.f32.mrb[0].mxu0
        %v488 = vpop.f32.mrb[0].mxu0
        %v489 = vadd.f32 0.0, %v488
        %v490 = vpop.f32.mrb[0].mxu0
        %491 = vmatprep.mubr.bf16.mxu0 0
        %492 = vmatmul.mubr.bf16.gmra.mrb[0].mxu0 %v357
        %v493 = vpop.f32.mrb[0].mxu0
        %v494 = vadd.f32 0.0, %v493
        %v495 = vpop.f32.mrb[0].mxu0
        %v496 = vpop.f32.mrb[0].mxu0
        %v497 = vadd.f32 0.0, %v496
        %v498 = vpop.f32.mrb[0].mxu0
        %499 = vmatprep.mubr.bf16.mxu0 0
        %500 = vmatmul.mubr.bf16.gmra.mrb[0].mxu0 %v360
        %v501 = vpop.f32.mrb[0].mxu0
        %v502 = vadd.f32 0.0, %v501
        %v503 = vpop.f32.mrb[0].mxu0
        %v504 = vpop.f32.mrb[0].mxu0
        %v505 = vadd.f32 0.0, %v504
        %v506 = vpop.f32.mrb[0].mxu0
        %507 = vmatprep.mubr.bf16.mxu0 0
        %508 = vmatmul.mubr.bf16.gmra.mrb[0].mxu0 %v363
        %v509 = vpop.f32.mrb[0].mxu0
        %v510 = vadd.f32 0.0, %v509
        %v511 = vpop.f32.mrb[0].mxu0
        %v512 = vpop.f32.mrb[0].mxu0
        %v513 = vadd.f32 0.0, %v512
        %v514 = vpop.f32.mrb[0].mxu0
        %515 = vmatprep.mubr.bf16.mxu0 0
        %516 = vmatmul.mubr.bf16.gmra.mrb[0].mxu0 %v366
        %v517 = vpop.f32.mrb[0].mxu0
        %v518 = vadd.f32 0.0, %v517
        %v519 = vpop.f32.mrb[0].mxu0
        %v520 = vpop.f32.mrb[0].mxu0
        %v521 = vadd.f32 0.0, %v520
        %v522 = vpop.f32.mrb[0].mxu0
        %523 = vmatprep.mubr.bf16.mxu0 0
        %524 = vmatmul.mubr.bf16.gmra.mrb[0].mxu0 %v369
        %v525 = vpop.f32.mrb[0].mxu0
        %v526 = vadd.f32 0.0, %v525
        %v527 = vpop.f32.mrb[0].mxu0
        %v528 = vpop.f32.mrb[0].mxu0
        %v529 = vadd.f32 0.0, %v528
        %v530 = vpop.f32.mrb[0].mxu0
        %531 = vdwg.mxu0
        %v532 = vld [vmem:[%s2] sm:$0x1]
        %v534 = vlaneseq
        %v535 = vshrl.u32 %v534, 7
        %v536 = vsub.s32 0, %v535
        %v537 = vrot.slane %v532, %v536
        %v539 = vmax.f32 %v406, %v537
        %v540 = vmax.f32 %v409, %v537
        %v541 = vmax.f32 %v414, %v537
        %v542 = vmax.f32 %v417, %v537
        %v543 = vmax.f32 %v422, %v537
        %v544 = vmax.f32 %v425, %v537
        %v545 = vmax.f32 %v430, %v537
        %v546 = vmax.f32 %v433, %v537
        %v547 = vmax.f32 %v438, %v537
        %v548 = vmax.f32 %v441, %v537
        %v549 = vmax.f32 %v446, %v537
        %v550 = vmax.f32 %v449, %v537
        %v551 = vmax.f32 %v454, %v537
        %v552 = vmax.f32 %v457, %v537
        %v553 = vmax.f32 %v462, %v537
        %v554 = vmax.f32 %v465, %v537
        %v555 = vmax.f32 %v470, %v537
        %v556 = vmax.f32 %v473, %v537
        %v557 = vmax.f32 %v478, %v537
        %v558 = vmax.f32 %v481, %v537
        %v559 = vmax.f32 %v486, %v537
        %v560 = vmax.f32 %v489, %v537
        %v561 = vmax.f32 %v494, %v537
        %v562 = vmax.f32 %v497, %v537
        %v563 = vmax.f32 %v502, %v537
        %v564 = vmax.f32 %v505, %v537
        %v565 = vmax.f32 %v510, %v537
        %v566 = vmax.f32 %v513, %v537
        %v567 = vmax.f32 %v518, %v537
        %v568 = vmax.f32 %v521, %v537
        %v569 = vmax.f32 %v526, %v537
        %v570 = vmax.f32 %v529, %v537
        %v571 = vpack.c.bf16 %v540, %v539
        %v572 = vpack.c.bf16 %v542, %v541
        %v573 = vpack.c.bf16 %v544, %v543
        %v574 = vpack.c.bf16 %v546, %v545
        %v575 = vpack.c.bf16 %v548, %v547
        %v576 = vpack.c.bf16 %v550, %v549
        %v577 = vpack.c.bf16 %v552, %v551
        %v578 = vpack.c.bf16 %v554, %v553
        %v579 = vpack.c.bf16 %v556, %v555
        %v580 = vpack.c.bf16 %v558, %v557
        %v581 = vpack.c.bf16 %v560, %v559
        %v582 = vpack.c.bf16 %v562, %v561
        %v583 = vpack.c.bf16 %v564, %v563
        %v584 = vpack.c.bf16 %v566, %v565
        %v585 = vpack.c.bf16 %v568, %v567
        %v586 = vpack.c.bf16 %v570, %v569
        %587 = vst [vmem:[#allocation2] sm:$0xff] 0
        %588 = vst [vmem:[#allocation2 + $0x8] sm:$0xff] 0
        %589 = vst [vmem:[#allocation2 + $0x18] sm:$0xf] 0
        %590 = vst [vmem:[#allocation2 + $0x20] sm:$0xf0] 0
        %591 = vst [vmem:[#allocation2 + $0x30] sm:$0xf] 0
        %592 = vst [vmem:[#allocation2 + $0x38] sm:$0xf0] 0
        %593 = vst [vmem:[#allocation2 + $0x48] sm:$0xf] 0
        %594 = vst [vmem:[#allocation2 + $0x50] sm:$0xf0] 0
        %595 = vst [vmem:[#allocation2 + $0x60] sm:$0xf] 0
        %596 = vst [vmem:[#allocation2 + $0x68] sm:$0xf0] 0
        %597 = vst [vmem:[#allocation2 + $0x78] sm:$0xf] 0
        %598 = vst [vmem:[#allocation2 + $0x80] sm:$0xf0] 0
        %599 = vst [vmem:[#allocation2 + $0x90] sm:$0xf] 0
        %600 = vst [vmem:[#allocation2 + $0x98] sm:$0xf0] 0
        %601 = vst [vmem:[#allocation2 + $0xa8] sm:$0xf] 0
        %602 = vst [vmem:[#allocation2 + $0xb0] sm:$0xf0] 0
        %603 = vst [vmem:[#allocation2 + $0xc0] sm:$0xf] 0
        %604 = vst [vmem:[#allocation2 + $0xc8] sm:$0xf0] 0
        %605 = vst [vmem:[#allocation2 + $0xd0] sm:$0xff] 0
        %606 = vst [vmem:[#allocation2 + $0xd8] sm:$0xff] 0
        %607 = vst [vmem:[#allocation2 + $0x10] sm:$0xff] %v571
        %v609 = vrot.slane %v572, 4
        %611 = vst [vmem:[#allocation2 + $0x18] sm:$0xf0] %v609
        %612 = vst [vmem:[#allocation2 + $0x20] sm:$0xf] %v609
        %613 = vst [vmem:[#allocation2 + $0x28] sm:$0xff] %v573
        %v615 = vrot.slane %v574, 4
        %617 = vst [vmem:[#allocation2 + $0x30] sm:$0xf0] %v615
        %618 = vst [vmem:[#allocation2 + $0x38] sm:$0xf] %v615
        %619 = vst [vmem:[#allocation2 + $0x40] sm:$0xff] %v575
        %v621 = vrot.slane %v576, 4
        %623 = vst [vmem:[#allocation2 + $0x48] sm:$0xf0] %v621
        %624 = vst [vmem:[#allocation2 + $0x50] sm:$0xf] %v621
        %625 = vst [vmem:[#allocation2 + $0x58] sm:$0xff] %v577
        %v627 = vrot.slane %v578, 4
        %629 = vst [vmem:[#allocation2 + $0x60] sm:$0xf0] %v627
        %630 = vst [vmem:[#allocation2 + $0x68] sm:$0xf] %v627
        %631 = vst [vmem:[#allocation2 + $0x70] sm:$0xff] %v579
        %v633 = vrot.slane %v580, 4
        %635 = vst [vmem:[#allocation2 + $0x78] sm:$0xf0] %v633
        %636 = vst [vmem:[#allocation2 + $0x80] sm:$0xf] %v633
        %637 = vst [vmem:[#allocation2 + $0x88] sm:$0xff] %v581
        %v639 = vrot.slane %v582, 4
        %641 = vst [vmem:[#allocation2 + $0x90] sm:$0xf0] %v639
        %642 = vst [vmem:[#allocation2 + $0x98] sm:$0xf] %v639
        %643 = vst [vmem:[#allocation2 + $0xa0] sm:$0xff] %v583
        %v645 = vrot.slane %v584, 4
        %647 = vst [vmem:[#allocation2 + $0xa8] sm:$0xf0] %v645
        %648 = vst [vmem:[#allocation2 + $0xb0] sm:$0xf] %v645
        %649 = vst [vmem:[#allocation2 + $0xb8] sm:$0xff] %v585
        %v651 = vrot.slane %v586, 4
        %653 = vst [vmem:[#allocation2 + $0xc0] sm:$0xf0] %v651
        %654 = vst [vmem:[#allocation2 + $0xc8] sm:$0xf] %v651
        %v655 = vld [vmem:[#allocation2] sm:$0xf8]
        %v656 = vld [vmem:[#allocation2 + $0x8] sm:$0xff]
        %v657 = vld [vmem:[#allocation2 + $0x10] sm:$0xff]
        %v658 = vld [vmem:[#allocation2 + $0x18] sm:$0xff]
        %v659 = vld [vmem:[#allocation2 + $0x20] sm:$0xff]
        %v660 = vld [vmem:[#allocation2 + $0x28] sm:$0xff]
        %v661 = vld [vmem:[#allocation2 + $0x30] sm:$0xff]
        %v662 = vld [vmem:[#allocation2 + $0x38] sm:$0xff]
        %v663 = vld [vmem:[#allocation2 + $0x40] sm:$0xff]
        %v664 = vld [vmem:[#allocation2 + $0x48] sm:$0xff]
        %v665 = vld [vmem:[#allocation2 + $0x50] sm:$0xff]
        %v666 = vld [vmem:[#allocation2 + $0x58] sm:$0xff]
        %v667 = vld [vmem:[#allocation2 + $0x60] sm:$0xff]
        %v668 = vld [vmem:[#allocation2 + $0x68] sm:$0xff]
        %v669 = vld [vmem:[#allocation2 + $0x70] sm:$0xff]
        %v670 = vld [vmem:[#allocation2 + $0x78] sm:$0xff]
        %v671 = vld [vmem:[#allocation2 + $0x80] sm:$0xff]
        %v672 = vld [vmem:[#allocation2 + $0x88] sm:$0xff]
        %v673 = vld [vmem:[#allocation2 + $0x90] sm:$0xff]
        %v674 = vld [vmem:[#allocation2 + $0x98] sm:$0xff]
        %v675 = vld [vmem:[#allocation2 + $0xa0] sm:$0xff]
        %v676 = vld [vmem:[#allocation2 + $0xa8] sm:$0xff]
        %v677 = vld [vmem:[#allocation2 + $0xb0] sm:$0xff]
        %v678 = vld [vmem:[#allocation2 + $0xb8] sm:$0xff]
        %v679 = vld [vmem:[#allocation2 + $0xc0] sm:$0xf]
        %v680 = vld [vmem:[%s3] sm:$0xf]
        %v681 = vld [vmem:[%s3 + $0x4] sm:$0xf]
        %v682 = vld [vmem:[%s3 + $0x8] sm:$0xf]
        %v683 = vld [vmem:[%s3 + $0xc] sm:$0xf]
        %v684 = vld [vmem:[%s3 + $0x10] sm:$0xf]
        %v685 = vld [vmem:[%s3 + $0x14] sm:$0xf]
        %v686 = vld [vmem:[%s3 + $0x18] sm:$0xf]
        %v687 = vld [vmem:[%s3 + $0x1c] sm:$0xf]
        %v688 = vld [vmem:[%s3 + $0x20] sm:$0xf]
        %v689 = vld [vmem:[%s3 + $0x24] sm:$0xf]
        %v690 = vld [vmem:[%s3 + $0x28] sm:$0xf]
        %v691 = vld [vmem:[%s3 + $0x2c] sm:$0xf]
        %v692 = vld [vmem:[%s3 + $0x30] sm:$0xf]
        %v693 = vld [vmem:[%s3 + $0x34] sm:$0xf]
        %v694 = vld [vmem:[%s3 + $0x38] sm:$0xf]
        %v695 = vld [vmem:[%s3 + $0x3c] sm:$0xf]
        %vm696 = vsmask.f32 4352
        %v698 = vshrl.u32 %v655, 16
        %v700 = vrot.slane %v698, 3
        %v701 = vshll.u32 %v655, 16
        %v703 = vrot.slane %v701, 4
        %v704 = vor.u32 %v700, %v703
        %v706 = vshrl.u32 %v656, 16
        %v708 = vrot.slane %v706, 3
        %v709 = vshll.u32 %v656, 16
        %v711 = vrot.slane %v709, 4
        %v712 = vor.u32 %v708, %v711
        %v713 = vsel %vm696, %v704, %v712
        %v715 = vshrl.u32 %v657, 16
        %v717 = vrot.slane %v715, 3
        %v718 = vshll.u32 %v657, 16
        %v720 = vrot.slane %v718, 4
        %v721 = vor.u32 %v717, %v720
        %v722 = vsel %vm696, %v712, %v721
        %v724 = vshrl.u32 %v658, 16
        %v726 = vrot.slane %v724, 3
        %v727 = vshll.u32 %v658, 16
        %v729 = vrot.slane %v727, 4
        %v730 = vor.u32 %v726, %v729
        %v731 = vsel %vm696, %v721, %v730
        %v733 = vshrl.u32 %v659, 16
        %v735 = vrot.slane %v733, 3
        %v736 = vshll.u32 %v659, 16
        %v738 = vrot.slane %v736, 4
        %v739 = vor.u32 %v735, %v738
        %v740 = vsel %vm696, %v730, %v739
        %v742 = vshrl.u32 %v660, 16
        %v744 = vrot.slane %v742, 3
        %v745 = vshll.u32 %v660, 16
        %v747 = vrot.slane %v745, 4
        %v748 = vor.u32 %v744, %v747
        %v749 = vsel %vm696, %v739, %v748
        %v751 = vshrl.u32 %v661, 16
        %v753 = vrot.slane %v751, 3
        %v754 = vshll.u32 %v661, 16
        %v756 = vrot.slane %v754, 4
        %v757 = vor.u32 %v753, %v756
        %v758 = vsel %vm696, %v748, %v757
        %v760 = vshrl.u32 %v662, 16
        %v762 = vrot.slane %v760, 3
        %v763 = vshll.u32 %v662, 16
        %v765 = vrot.slane %v763, 4
        %v766 = vor.u32 %v762, %v765
        %v767 = vsel %vm696, %v757, %v766
        %v769 = vshrl.u32 %v663, 16
        %v771 = vrot.slane %v769, 3
        %v772 = vshll.u32 %v663, 16
        %v774 = vrot.slane %v772, 4
        %v775 = vor.u32 %v771, %v774
        %v776 = vsel %vm696, %v766, %v775
        %v778 = vshrl.u32 %v664, 16
        %v780 = vrot.slane %v778, 3
        %v781 = vshll.u32 %v664, 16
        %v783 = vrot.slane %v781, 4
        %v784 = vor.u32 %v780, %v783
        %v785 = vsel %vm696, %v775, %v784
        %v787 = vshrl.u32 %v665, 16
        %v789 = vrot.slane %v787, 3
        %v790 = vshll.u32 %v665, 16
        %v792 = vrot.slane %v790, 4
        %v793 = vor.u32 %v789, %v792
        %v794 = vsel %vm696, %v784, %v793
        %v796 = vshrl.u32 %v666, 16
        %v798 = vrot.slane %v796, 3
        %v799 = vshll.u32 %v666, 16
        %v801 = vrot.slane %v799, 4
        %v802 = vor.u32 %v798, %v801
        %v803 = vsel %vm696, %v793, %v802
        %v805 = vshrl.u32 %v667, 16
        %v807 = vrot.slane %v805, 3
        %v808 = vshll.u32 %v667, 16
        %v810 = vrot.slane %v808, 4
        %v811 = vor.u32 %v807, %v810
        %v812 = vsel %vm696, %v802, %v811
        %v814 = vshrl.u32 %v668, 16
        %v816 = vrot.slane %v814, 3
        %v817 = vshll.u32 %v668, 16
        %v819 = vrot.slane %v817, 4
        %v820 = vor.u32 %v816, %v819
        %v821 = vsel %vm696, %v811, %v820
        %v823 = vshrl.u32 %v669, 16
        %v825 = vrot.slane %v823, 3
        %v826 = vshll.u32 %v669, 16
        %v828 = vrot.slane %v826, 4
        %v829 = vor.u32 %v825, %v828
        %v830 = vsel %vm696, %v820, %v829
        %v832 = vshrl.u32 %v670, 16
        %v834 = vrot.slane %v832, 3
        %v835 = vshll.u32 %v670, 16
        %v837 = vrot.slane %v835, 4
        %v838 = vor.u32 %v834, %v837
        %v839 = vsel %vm696, %v829, %v838
        %v841 = vshrl.u32 %v671, 16
        %v843 = vrot.slane %v841, 3
        %v844 = vshll.u32 %v671, 16
        %v846 = vrot.slane %v844, 4
        %v847 = vor.u32 %v843, %v846
        %v848 = vsel %vm696, %v838, %v847
        %v850 = vshrl.u32 %v672, 16
        %v852 = vrot.slane %v850, 3
        %v853 = vshll.u32 %v672, 16
        %v855 = vrot.slane %v853, 4
        %v856 = vor.u32 %v852, %v855
        %v857 = vsel %vm696, %v847, %v856
        %v859 = vshrl.u32 %v673, 16
        %v861 = vrot.slane %v859, 3
        %v862 = vshll.u32 %v673, 16
        %v864 = vrot.slane %v862, 4
        %v865 = vor.u32 %v861, %v864
        %v866 = vsel %vm696, %v856, %v865
        %v868 = vshrl.u32 %v674, 16
        %v870 = vrot.slane %v868, 3
        %v871 = vshll.u32 %v674, 16
        %v873 = vrot.slane %v871, 4
        %v874 = vor.u32 %v870, %v873
        %v875 = vsel %vm696, %v865, %v874
        %v877 = vshrl.u32 %v675, 16
        %v879 = vrot.slane %v877, 3
        %v880 = vshll.u32 %v675, 16
        %v882 = vrot.slane %v880, 4
        %v883 = vor.u32 %v879, %v882
        %v884 = vsel %vm696, %v874, %v883
        %v886 = vshrl.u32 %v676, 16
        %v888 = vrot.slane %v886, 3
        %v889 = vshll.u32 %v676, 16
        %v891 = vrot.slane %v889, 4
        %v892 = vor.u32 %v888, %v891
        %v893 = vsel %vm696, %v883, %v892
        %v895 = vshrl.u32 %v677, 16
        %v897 = vrot.slane %v895, 3
        %v898 = vshll.u32 %v677, 16
        %v900 = vrot.slane %v898, 4
        %v901 = vor.u32 %v897, %v900
        %v902 = vsel %vm696, %v892, %v901
        %v904 = vshrl.u32 %v678, 16
        %v906 = vrot.slane %v904, 3
        %v907 = vshll.u32 %v678, 16
        %v909 = vrot.slane %v907, 4
        %v910 = vor.u32 %v906, %v909
        %v911 = vsel %vm696, %v901, %v910
        %v913 = vshrl.u32 %v679, 16
        %v915 = vrot.slane %v913, 3
        %v916 = vshll.u32 %v679, 16
        %v918 = vrot.slane %v916, 4
        %v919 = vor.u32 %v915, %v918
        %v920 = vsel %vm696, %v910, %v919
        %v961 = vunpack.c.l.b16 %v680
        %v962 = vunpack.c.l.b16 %v681
        %v963 = vunpack.c.l.b16 %v682
        %v964 = vunpack.c.l.b16 %v683
        %v965 = vunpack.c.l.b16 %v684
        %v966 = vunpack.c.l.b16 %v685
        %v967 = vunpack.c.l.b16 %v686
        %v968 = vunpack.c.l.b16 %v687
        %v969 = vunpack.c.l.b16 %v688
        %v970 = vunpack.c.l.b16 %v689
        %v971 = vunpack.c.l.b16 %v690
        %v972 = vunpack.c.l.b16 %v691
        %v973 = vunpack.c.l.b16 %v692
        %v974 = vunpack.c.l.b16 %v693
        %v975 = vunpack.c.l.b16 %v694
        %v976 = vunpack.c.l.b16 %v695
        %v977 = vpack.c.b16 %v962, %v961
        %v978 = vpack.c.b16 %v964, %v963
        %v979 = vpack.c.b16 %v966, %v965
        %v980 = vpack.c.b16 %v968, %v967
        %v981 = vpack.c.b16 %v970, %v969
        %v982 = vpack.c.b16 %v972, %v971
        %v983 = vpack.c.b16 %v974, %v973
        %v984 = vpack.c.b16 %v976, %v975
        %993 = vmatprep.subr.bf16.mxu0 0
        %994 = vmatpush1.bf16.msra.mxu0 %v977
        %995 = vmatprep.subr.bf16.mxu0 0
        %996 = vmatpush1.bf16.msra.mxu0 %v978
        %997 = vmatprep.subr.bf16.mxu0 0
        %998 = vmatpush1.bf16.msra.mxu0 %v979
        %999 = vmatprep.subr.bf16.mxu0 0
        %1000 = vmatpush1.bf16.msra.mxu0 %v980
        %1001 = vmatprep.subr.bf16.mxu0 0
        %1002 = vmatpush1.bf16.msra.mxu0 %v981
        %1003 = vmatprep.subr.bf16.mxu0 0
        %1004 = vmatpush1.bf16.msra.mxu0 %v982
        %1005 = vmatprep.subr.bf16.mxu0 0
        %1006 = vmatpush1.bf16.msra.mxu0 %v983
        %1007 = vmatprep.subr.bf16.mxu0 0
        %1008 = vmatpush1.bf16.msra.mxu0 %v984
        %1009 = vmatprep.subr.bf16.mxu0 0
        %1010 = vmatpush1.bf16.msra.mxu0 0
        %1011 = vmatprep.subr.bf16.mxu0 0
        %1012 = vmatpush1.bf16.msra.mxu0 0
        %1013 = vmatprep.subr.bf16.mxu0 0
        %1014 = vmatpush1.bf16.msra.mxu0 0
        %1015 = vmatprep.subr.bf16.mxu0 0
        %1016 = vmatpush1.bf16.msra.mxu0 0
        %1017 = vmatprep.subr.bf16.mxu0 0
        %1018 = vmatpush1.bf16.msra.mxu0 0
        %1019 = vmatprep.subr.bf16.mxu0 0
        %1020 = vmatpush1.bf16.msra.mxu0 0
        %1021 = vmatprep.subr.bf16.mxu0 0
        %1022 = vmatpush1.bf16.msra.mxu0 0
        %1023 = vmatprep.subr.bf16.mxu0 0
        %1024 = vmatpush1.bf16.msra.mxu0 0
        %1025 = vmatprep.mubr.bf16.mxu0 0
        %1026 = vmatmul.mubr.bf16.gmra.mrb[0].mxu0 %v713
        %v1027 = vpop.f32.mrb[0].mxu0
        %v1028 = vadd.f32 0.0, %v1027
        %v1029 = vpop.f32.mrb[0].mxu0
        %v1030 = vpop.f32.mrb[0].mxu0
        %v1031 = vadd.f32 0.0, %v1030
        %v1032 = vpop.f32.mrb[0].mxu0
        %1033 = vmatprep.mubr.bf16.mxu0 0
        %1034 = vmatmul.mubr.bf16.gmra.mrb[0].mxu0 %v722
        %v1035 = vpop.f32.mrb[0].mxu0
        %v1036 = vadd.f32 0.0, %v1035
        %v1037 = vpop.f32.mrb[0].mxu0
        %v1038 = vpop.f32.mrb[0].mxu0
        %v1039 = vadd.f32 0.0, %v1038
        %v1040 = vpop.f32.mrb[0].mxu0
        %1041 = vmatprep.mubr.bf16.mxu0 0
        %1042 = vmatmul.mubr.bf16.gmra.mrb[0].mxu0 %v731
        %v1043 = vpop.f32.mrb[0].mxu0
        %v1044 = vadd.f32 0.0, %v1043
        %v1045 = vpop.f32.mrb[0].mxu0
        %v1046 = vpop.f32.mrb[0].mxu0
        %v1047 = vadd.f32 0.0, %v1046
        %v1048 = vpop.f32.mrb[0].mxu0
        %1049 = vmatprep.mubr.bf16.mxu0 0
        %1050 = vmatmul.mubr.bf16.gmra.mrb[0].mxu0 %v740
        %v1051 = vpop.f32.mrb[0].mxu0
        %v1052 = vadd.f32 0.0, %v1051
        %v1053 = vpop.f32.mrb[0].mxu0
        %v1054 = vpop.f32.mrb[0].mxu0
        %v1055 = vadd.f32 0.0, %v1054
        %v1056 = vpop.f32.mrb[0].mxu0
        %1057 = vmatprep.mubr.bf16.mxu0 0
        %1058 = vmatmul.mubr.bf16.gmra.mrb[0].mxu0 %v749
        %v1059 = vpop.f32.mrb[0].mxu0
        %v1060 = vadd.f32 0.0, %v1059
        %v1061 = vpop.f32.mrb[0].mxu0
        %v1062 = vpop.f32.mrb[0].mxu0
        %v1063 = vadd.f32 0.0, %v1062
        %v1064 = vpop.f32.mrb[0].mxu0
        %1065 = vmatprep.mubr.bf16.mxu0 0
        %1066 = vmatmul.mubr.bf16.gmra.mrb[0].mxu0 %v758
        %v1067 = vpop.f32.mrb[0].mxu0
        %v1068 = vadd.f32 0.0, %v1067
        %v1069 = vpop.f32.mrb[0].mxu0
        %v1070 = vpop.f32.mrb[0].mxu0
        %v1071 = vadd.f32 0.0, %v1070
        %v1072 = vpop.f32.mrb[0].mxu0
        %1073 = vmatprep.mubr.bf16.mxu0 0
        %1074 = vmatmul.mubr.bf16.gmra.mrb[0].mxu0 %v767
        %v1075 = vpop.f32.mrb[0].mxu0
        %v1076 = vadd.f32 0.0, %v1075
        %v1077 = vpop.f32.mrb[0].mxu0
        %v1078 = vpop.f32.mrb[0].mxu0
        %v1079 = vadd.f32 0.0, %v1078
        %v1080 = vpop.f32.mrb[0].mxu0
        %1081 = vmatprep.mubr.bf16.mxu0 0
        %1082 = vmatmul.mubr.bf16.gmra.mrb[0].mxu0 %v776
        %v1083 = vpop.f32.mrb[0].mxu0
        %v1084 = vadd.f32 0.0, %v1083
        %v1085 = vpop.f32.mrb[0].mxu0
        %v1086 = vpop.f32.mrb[0].mxu0
        %v1087 = vadd.f32 0.0, %v1086
        %v1088 = vpop.f32.mrb[0].mxu0
        %1089 = vmatprep.mubr.bf16.mxu0 0
        %1090 = vmatmul.mubr.bf16.gmra.mrb[0].mxu0 %v785
        %v1091 = vpop.f32.mrb[0].mxu0
        %v1092 = vadd.f32 0.0, %v1091
        %v1093 = vpop.f32.mrb[0].mxu0
        %v1094 = vpop.f32.mrb[0].mxu0
        %v1095 = vadd.f32 0.0, %v1094
        %v1096 = vpop.f32.mrb[0].mxu0
        %1097 = vmatprep.mubr.bf16.mxu0 0
        %1098 = vmatmul.mubr.bf16.gmra.mrb[0].mxu0 %v794
        %v1099 = vpop.f32.mrb[0].mxu0
        %v1100 = vadd.f32 0.0, %v1099
        %v1101 = vpop.f32.mrb[0].mxu0
        %v1102 = vpop.f32.mrb[0].mxu0
        %v1103 = vadd.f32 0.0, %v1102
        %v1104 = vpop.f32.mrb[0].mxu0
        %1105 = vmatprep.mubr.bf16.mxu0 0
        %1106 = vmatmul.mubr.bf16.gmra.mrb[0].mxu0 %v803
        %v1107 = vpop.f32.mrb[0].mxu0
        %v1108 = vadd.f32 0.0, %v1107
        %v1109 = vpop.f32.mrb[0].mxu0
        %v1110 = vpop.f32.mrb[0].mxu0
        %v1111 = vadd.f32 0.0, %v1110
        %v1112 = vpop.f32.mrb[0].mxu0
        %1113 = vmatprep.mubr.bf16.mxu0 0
        %1114 = vmatmul.mubr.bf16.gmra.mrb[0].mxu0 %v812
        %v1115 = vpop.f32.mrb[0].mxu0
        %v1116 = vadd.f32 0.0, %v1115
        %v1117 = vpop.f32.mrb[0].mxu0
        %v1118 = vpop.f32.mrb[0].mxu0
        %v1119 = vadd.f32 0.0, %v1118
        %v1120 = vpop.f32.mrb[0].mxu0
        %1121 = vmatprep.mubr.bf16.mxu0 0
        %1122 = vmatmul.mubr.bf16.gmra.mrb[0].mxu0 %v821
        %v1123 = vpop.f32.mrb[0].mxu0
        %v1124 = vadd.f32 0.0, %v1123
        %v1125 = vpop.f32.mrb[0].mxu0
        %v1126 = vpop.f32.mrb[0].mxu0
        %v1127 = vadd.f32 0.0, %v1126
        %v1128 = vpop.f32.mrb[0].mxu0
        %1129 = vmatprep.mubr.bf16.mxu0 0
        %1130 = vmatmul.mubr.bf16.gmra.mrb[0].mxu0 %v830
        %v1131 = vpop.f32.mrb[0].mxu0
        %v1132 = vadd.f32 0.0, %v1131
        %v1133 = vpop.f32.mrb[0].mxu0
        %v1134 = vpop.f32.mrb[0].mxu0
        %v1135 = vadd.f32 0.0, %v1134
        %v1136 = vpop.f32.mrb[0].mxu0
        %1137 = vmatprep.mubr.bf16.mxu0 0
        %1138 = vmatmul.mubr.bf16.gmra.mrb[0].mxu0 %v839
        %v1139 = vpop.f32.mrb[0].mxu0
        %v1140 = vadd.f32 0.0, %v1139
        %v1141 = vpop.f32.mrb[0].mxu0
        %v1142 = vpop.f32.mrb[0].mxu0
        %v1143 = vadd.f32 0.0, %v1142
        %v1144 = vpop.f32.mrb[0].mxu0
        %1145 = vmatprep.mubr.bf16.mxu0 0
        %1146 = vmatmul.mubr.bf16.gmra.mrb[0].mxu0 %v848
        %v1147 = vpop.f32.mrb[0].mxu0
        %v1148 = vadd.f32 0.0, %v1147
        %v1149 = vpop.f32.mrb[0].mxu0
        %v1150 = vpop.f32.mrb[0].mxu0
        %v1151 = vadd.f32 0.0, %v1150
        %v1152 = vpop.f32.mrb[0].mxu0
        %1153 = vmatprep.mubr.bf16.mxu0 0
        %1154 = vmatmul.mubr.bf16.gmra.mrb[0].mxu0 %v857
        %v1155 = vpop.f32.mrb[0].mxu0
        %v1156 = vadd.f32 0.0, %v1155
        %v1157 = vpop.f32.mrb[0].mxu0
        %v1158 = vpop.f32.mrb[0].mxu0
        %v1159 = vadd.f32 0.0, %v1158
        %v1160 = vpop.f32.mrb[0].mxu0
        %1161 = vmatprep.mubr.bf16.mxu0 0
        %1162 = vmatmul.mubr.bf16.gmra.mrb[0].mxu0 %v866
        %v1163 = vpop.f32.mrb[0].mxu0
        %v1164 = vadd.f32 0.0, %v1163
        %v1165 = vpop.f32.mrb[0].mxu0
        %v1166 = vpop.f32.mrb[0].mxu0
        %v1167 = vadd.f32 0.0, %v1166
        %v1168 = vpop.f32.mrb[0].mxu0
        %1169 = vmatprep.mubr.bf16.mxu0 0
        %1170 = vmatmul.mubr.bf16.gmra.mrb[0].mxu0 %v875
        %v1171 = vpop.f32.mrb[0].mxu0
        %v1172 = vadd.f32 0.0, %v1171
        %v1173 = vpop.f32.mrb[0].mxu0
        %v1174 = vpop.f32.mrb[0].mxu0
        %v1175 = vadd.f32 0.0, %v1174
        %v1176 = vpop.f32.mrb[0].mxu0
        %1177 = vmatprep.mubr.bf16.mxu0 0
        %1178 = vmatmul.mubr.bf16.gmra.mrb[0].mxu0 %v884
        %v1179 = vpop.f32.mrb[0].mxu0
        %v1180 = vadd.f32 0.0, %v1179
        %v1181 = vpop.f32.mrb[0].mxu0
        %v1182 = vpop.f32.mrb[0].mxu0
        %v1183 = vadd.f32 0.0, %v1182
        %v1184 = vpop.f32.mrb[0].mxu0
        %1185 = vmatprep.mubr.bf16.mxu0 0
        %1186 = vmatmul.mubr.bf16.gmra.mrb[0].mxu0 %v893
        %v1187 = vpop.f32.mrb[0].mxu0
        %v1188 = vadd.f32 0.0, %v1187
        %v1189 = vpop.f32.mrb[0].mxu0
        %v1190 = vpop.f32.mrb[0].mxu0
        %v1191 = vadd.f32 0.0, %v1190
        %v1192 = vpop.f32.mrb[0].mxu0
        %1193 = vmatprep.mubr.bf16.mxu0 0
        %1194 = vmatmul.mubr.bf16.gmra.mrb[0].mxu0 %v902
        %v1195 = vpop.f32.mrb[0].mxu0
        %v1196 = vadd.f32 0.0, %v1195
        %v1197 = vpop.f32.mrb[0].mxu0
        %v1198 = vpop.f32.mrb[0].mxu0
        %v1199 = vadd.f32 0.0, %v1198
        %v1200 = vpop.f32.mrb[0].mxu0
        %1201 = vmatprep.mubr.bf16.mxu0 0
        %1202 = vmatmul.mubr.bf16.gmra.mrb[0].mxu0 %v911
        %v1203 = vpop.f32.mrb[0].mxu0
        %v1204 = vadd.f32 0.0, %v1203
        %v1205 = vpop.f32.mrb[0].mxu0
        %v1206 = vpop.f32.mrb[0].mxu0
        %v1207 = vadd.f32 0.0, %v1206
        %v1208 = vpop.f32.mrb[0].mxu0
        %1209 = vmatprep.mubr.bf16.mxu0 0
        %1210 = vmatmul.mubr.bf16.gmra.mrb[0].mxu0 %v920
        %v1211 = vpop.f32.mrb[0].mxu0
        %v1212 = vadd.f32 0.0, %v1211
        %v1213 = vpop.f32.mrb[0].mxu0
        %v1214 = vpop.f32.mrb[0].mxu0
        %v1215 = vadd.f32 0.0, %v1214
        %v1216 = vpop.f32.mrb[0].mxu0
        %1217 = vdwg.mxu0
        %1218 = vst [vmem:[#allocation3] sm:$0xff] %v1028
        %1219 = vst [vmem:[#allocation3 + $0x8] sm:$0xff] %v1031
        %1220 = vst [vmem:[#allocation3 + $0x10] sm:$0xff] %v1036
        %1221 = vst [vmem:[#allocation3 + $0x18] sm:$0xff] %v1039
        %1222 = vst [vmem:[#allocation3 + $0x20] sm:$0xff] %v1044
        %1223 = vst [vmem:[#allocation3 + $0x28] sm:$0xff] %v1047
        %1224 = vst [vmem:[#allocation3 + $0x30] sm:$0xff] %v1052
        %1225 = vst [vmem:[#allocation3 + $0x38] sm:$0xff] %v1055
        %1226 = vst [vmem:[#allocation3 + $0x40] sm:$0xff] %v1060
        %1227 = vst [vmem:[#allocation3 + $0x48] sm:$0xff] %v1063
        %1228 = vst [vmem:[#allocation3 + $0x50] sm:$0xff] %v1068
        %1229 = vst [vmem:[#allocation3 + $0x58] sm:$0xff] %v1071
        %1230 = vst [vmem:[#allocation3 + $0x60] sm:$0xff] %v1076
        %1231 = vst [vmem:[#allocation3 + $0x68] sm:$0xff] %v1079
        %1232 = vst [vmem:[#allocation3 + $0x70] sm:$0xff] %v1084
        %1233 = vst [vmem:[#allocation3 + $0x78] sm:$0xff] %v1087
        %1234 = vst [vmem:[#allocation3 + $0x80] sm:$0xff] %v1092
        %1235 = vst [vmem:[#allocation3 + $0x88] sm:$0xff] %v1095
        %1236 = vst [vmem:[#allocation3 + $0x90] sm:$0xff] %v1100
        %1237 = vst [vmem:[#allocation3 + $0x98] sm:$0xff] %v1103
        %1238 = vst [vmem:[#allocation3 + $0xa0] sm:$0xff] %v1108
        %1239 = vst [vmem:[#allocation3 + $0xa8] sm:$0xff] %v1111
        %1240 = vst [vmem:[#allocation3 + $0xb0] sm:$0xff] %v1116
        %1241 = vst [vmem:[#allocation3 + $0xb8] sm:$0xff] %v1119
        %1242 = vst [vmem:[#allocation3 + $0xc0] sm:$0xff] %v1124
        %1243 = vst [vmem:[#allocation3 + $0xc8] sm:$0xff] %v1127
        %1244 = vst [vmem:[#allocation3 + $0xd0] sm:$0xff] %v1132
        %1245 = vst [vmem:[#allocation3 + $0xd8] sm:$0xff] %v1135
        %1246 = vst [vmem:[#allocation3 + $0xe0] sm:$0xff] %v1140
        %1247 = vst [vmem:[#allocation3 + $0xe8] sm:$0xff] %v1143
        %1248 = vst [vmem:[#allocation3 + $0xf0] sm:$0xff] %v1148
        %1249 = vst [vmem:[#allocation3 + $0xf8] sm:$0xff] %v1151
        %1250 = vst [vmem:[#allocation3 + $0x100] sm:$0xff] %v1156
        %1251 = vst [vmem:[#allocation3 + $0x108] sm:$0xff] %v1159
        %1252 = vst [vmem:[#allocation3 + $0x110] sm:$0xff] %v1164
        %1253 = vst [vmem:[#allocation3 + $0x118] sm:$0xff] %v1167
        %1254 = vst [vmem:[#allocation3 + $0x120] sm:$0xff] %v1172
        %1255 = vst [vmem:[#allocation3 + $0x128] sm:$0xff] %v1175
        %1256 = vst [vmem:[#allocation3 + $0x130] sm:$0xff] %v1180
        %1257 = vst [vmem:[#allocation3 + $0x138] sm:$0xff] %v1183
        %1258 = vst [vmem:[#allocation3 + $0x140] sm:$0xff] %v1188
        %1259 = vst [vmem:[#allocation3 + $0x148] sm:$0xff] %v1191
        %1260 = vst [vmem:[#allocation3 + $0x150] sm:$0xff] %v1196
        %1261 = vst [vmem:[#allocation3 + $0x158] sm:$0xff] %v1199
        %1262 = vst [vmem:[#allocation3 + $0x160] sm:$0xff] %v1204
        %1263 = vst [vmem:[#allocation3 + $0x168] sm:$0xff] %v1207
        %1264 = vst [vmem:[#allocation3 + $0x170] sm:$0xff] %v1212
        %1265 = vst [vmem:[#allocation3 + $0x178] sm:$0xff] %v1215
        %v1266 = vld [vmem:[#allocation2] sm:$0xf0]
        %v1267 = vld [vmem:[#allocation2 + $0x8] sm:$0xff]
        %v1268 = vld [vmem:[#allocation2 + $0x10] sm:$0xff]
        %v1269 = vld [vmem:[#allocation2 + $0x18] sm:$0xff]
        %v1270 = vld [vmem:[#allocation2 + $0x20] sm:$0xff]
        %v1271 = vld [vmem:[#allocation2 + $0x28] sm:$0xff]
        %v1272 = vld [vmem:[#allocation2 + $0x30] sm:$0xff]
        %v1273 = vld [vmem:[#allocation2 + $0x38] sm:$0xff]
        %v1274 = vld [vmem:[#allocation2 + $0x40] sm:$0xff]
        %v1275 = vld [vmem:[#allocation2 + $0x48] sm:$0xff]
        %v1276 = vld [vmem:[#allocation2 + $0x50] sm:$0xff]
        %v1277 = vld [vmem:[#allocation2 + $0x58] sm:$0xff]
        %v1278 = vld [vmem:[#allocation2 + $0x60] sm:$0xff]
        %v1279 = vld [vmem:[#allocation2 + $0x68] sm:$0xff]
        %v1280 = vld [vmem:[#allocation2 + $0x70] sm:$0xff]
        %v1281 = vld [vmem:[#allocation2 + $0x78] sm:$0xff]
        %v1282 = vld [vmem:[#allocation2 + $0x80] sm:$0xff]
        %v1283 = vld [vmem:[#allocation2 + $0x88] sm:$0xff]
        %v1284 = vld [vmem:[#allocation2 + $0x90] sm:$0xff]
        %v1285 = vld [vmem:[#allocation2 + $0x98] sm:$0xff]
        %v1286 = vld [vmem:[#allocation2 + $0xa0] sm:$0xff]
        %v1287 = vld [vmem:[#allocation2 + $0xa8] sm:$0xff]
        %v1288 = vld [vmem:[#allocation2 + $0xb0] sm:$0xff]
        %v1289 = vld [vmem:[#allocation2 + $0xb8] sm:$0xff]
        %v1290 = vld [vmem:[#allocation2 + $0xc0] sm:$0xf]
        %s1291 = scalar_lea.vmem %s3, 64
        %v1292 = vld [vmem:[%s1291] sm:$0xf]
        %v1293 = vld [vmem:[%s1291 + $0x4] sm:$0xf]
        %v1294 = vld [vmem:[%s1291 + $0x8] sm:$0xf]
        %v1295 = vld [vmem:[%s1291 + $0xc] sm:$0xf]
        %v1296 = vld [vmem:[%s1291 + $0x10] sm:$0xf]
        %v1297 = vld [vmem:[%s1291 + $0x14] sm:$0xf]
        %v1298 = vld [vmem:[%s1291 + $0x18] sm:$0xf]
        %v1299 = vld [vmem:[%s1291 + $0x1c] sm:$0xf]
        %v1300 = vld [vmem:[%s1291 + $0x20] sm:$0xf]
        %v1301 = vld [vmem:[%s1291 + $0x24] sm:$0xf]
        %v1302 = vld [vmem:[%s1291 + $0x28] sm:$0xf]
        %v1303 = vld [vmem:[%s1291 + $0x2c] sm:$0xf]
        %v1304 = vld [vmem:[%s1291 + $0x30] sm:$0xf]
        %v1305 = vld [vmem:[%s1291 + $0x34] sm:$0xf]
        %v1306 = vld [vmem:[%s1291 + $0x38] sm:$0xf]
        %v1307 = vld [vmem:[%s1291 + $0x3c] sm:$0xf]
        %vm1333 = vcmask 1043456
        %v1334 = vrot.slane %v1266, 4
        %v1335 = vrot.slane %v1267, 4
        %v1336 = vsel %vm1333, %v1334, %v1335
        %v1337 = vrot.slane %v1268, 4
        %v1338 = vsel %vm1333, %v1335, %v1337
        %v1339 = vrot.slane %v1269, 4
        %v1340 = vsel %vm1333, %v1337, %v1339
        %v1341 = vrot.slane %v1270, 4
        %v1342 = vsel %vm1333, %v1339, %v1341
        %v1343 = vrot.slane %v1271, 4
        %v1344 = vsel %vm1333, %v1341, %v1343
        %v1345 = vrot.slane %v1272, 4
        %v1346 = vsel %vm1333, %v1343, %v1345
        %v1347 = vrot.slane %v1273, 4
        %v1348 = vsel %vm1333, %v1345, %v1347
        %v1349 = vrot.slane %v1274, 4
        %v1350 = vsel %vm1333, %v1347, %v1349
        %v1351 = vrot.slane %v1275, 4
        %v1352 = vsel %vm1333, %v1349, %v1351
        %v1353 = vrot.slane %v1276, 4
        %v1354 = vsel %vm1333, %v1351, %v1353
        %v1355 = vrot.slane %v1277, 4
        %v1356 = vsel %vm1333, %v1353, %v1355
        %v1357 = vrot.slane %v1278, 4
        %v1358 = vsel %vm1333, %v1355, %v1357
        %v1359 = vrot.slane %v1279, 4
        %v1360 = vsel %vm1333, %v1357, %v1359
        %v1361 = vrot.slane %v1280, 4
        %v1362 = vsel %vm1333, %v1359, %v1361
        %v1363 = vrot.slane %v1281, 4
        %v1364 = vsel %vm1333, %v1361, %v1363
        %v1365 = vrot.slane %v1282, 4
        %v1366 = vsel %vm1333, %v1363, %v1365
        %v1367 = vrot.slane %v1283, 4
        %v1368 = vsel %vm1333, %v1365, %v1367
        %v1369 = vrot.slane %v1284, 4
        %v1370 = vsel %vm1333, %v1367, %v1369
        %v1371 = vrot.slane %v1285, 4
        %v1372 = vsel %vm1333, %v1369, %v1371
        %v1373 = vrot.slane %v1286, 4
        %v1374 = vsel %vm1333, %v1371, %v1373
        %v1375 = vrot.slane %v1287, 4
        %v1376 = vsel %vm1333, %v1373, %v1375
        %v1377 = vrot.slane %v1288, 4
        %v1378 = vsel %vm1333, %v1375, %v1377
        %v1379 = vrot.slane %v1289, 4
        %v1380 = vsel %vm1333, %v1377, %v1379
        %v1381 = vrot.slane %v1290, 4
        %v1382 = vsel %vm1333, %v1379, %v1381
        %v1423 = vunpack.c.l.b16 %v1292
        %v1424 = vunpack.c.l.b16 %v1293
        %v1425 = vunpack.c.l.b16 %v1294
        %v1426 = vunpack.c.l.b16 %v1295
        %v1427 = vunpack.c.l.b16 %v1296
        %v1428 = vunpack.c.l.b16 %v1297
        %v1429 = vunpack.c.l.b16 %v1298
        %v1430 = vunpack.c.l.b16 %v1299
        %v1431 = vunpack.c.l.b16 %v1300
        %v1432 = vunpack.c.l.b16 %v1301
        %v1433 = vunpack.c.l.b16 %v1302
        %v1434 = vunpack.c.l.b16 %v1303
        %v1435 = vunpack.c.l.b16 %v1304
        %v1436 = vunpack.c.l.b16 %v1305
        %v1437 = vunpack.c.l.b16 %v1306
        %v1438 = vunpack.c.l.b16 %v1307
        %v1439 = vpack.c.b16 %v1424, %v1423
        %v1440 = vpack.c.b16 %v1426, %v1425
        %v1441 = vpack.c.b16 %v1428, %v1427
        %v1442 = vpack.c.b16 %v1430, %v1429
        %v1443 = vpack.c.b16 %v1432, %v1431
        %v1444 = vpack.c.b16 %v1434, %v1433
        %v1445 = vpack.c.b16 %v1436, %v1435
        %v1446 = vpack.c.b16 %v1438, %v1437
        %1455 = vmatprep.subr.bf16.mxu0 0
        %1456 = vmatpush1.bf16.msra.mxu0 %v1439
        %1457 = vmatprep.subr.bf16.mxu0 0
        %1458 = vmatpush1.bf16.msra.mxu0 %v1440
        %1459 = vmatprep.subr.bf16.mxu0 0
        %1460 = vmatpush1.bf16.msra.mxu0 %v1441
        %1461 = vmatprep.subr.bf16.mxu0 0
        %1462 = vmatpush1.bf16.msra.mxu0 %v1442
        %1463 = vmatprep.subr.bf16.mxu0 0
        %1464 = vmatpush1.bf16.msra.mxu0 %v1443
        %1465 = vmatprep.subr.bf16.mxu0 0
        %1466 = vmatpush1.bf16.msra.mxu0 %v1444
        %1467 = vmatprep.subr.bf16.mxu0 0
        %1468 = vmatpush1.bf16.msra.mxu0 %v1445
        %1469 = vmatprep.subr.bf16.mxu0 0
        %1470 = vmatpush1.bf16.msra.mxu0 %v1446
        %1471 = vmatprep.subr.bf16.mxu0 0
        %1472 = vmatpush1.bf16.msra.mxu0 0
        %1473 = vmatprep.subr.bf16.mxu0 0
        %1474 = vmatpush1.bf16.msra.mxu0 0
        %1475 = vmatprep.subr.bf16.mxu0 0
        %1476 = vmatpush1.bf16.msra.mxu0 0
        %1477 = vmatprep.subr.bf16.mxu0 0
        %1478 = vmatpush1.bf16.msra.mxu0 0
        %1479 = vmatprep.subr.bf16.mxu0 0
        %1480 = vmatpush1.bf16.msra.mxu0 0
        %1481 = vmatprep.subr.bf16.mxu0 0
        %1482 = vmatpush1.bf16.msra.mxu0 0
        %1483 = vmatprep.subr.bf16.mxu0 0
        %1484 = vmatpush1.bf16.msra.mxu0 0
        %1485 = vmatprep.subr.bf16.mxu0 0
        %1486 = vmatpush1.bf16.msra.mxu0 0
        %1487 = vmatprep.mubr.bf16.mxu0 0
        %1488 = vmatmul.mubr.bf16.gmra.mrb[0].mxu0 %v1336
        %v1489 = vpop.f32.mrb[0].mxu0
        %v1490 = vadd.f32 0.0, %v1489
        %v1491 = vpop.f32.mrb[0].mxu0
        %v1492 = vpop.f32.mrb[0].mxu0
        %v1493 = vadd.f32 0.0, %v1492
        %v1494 = vpop.f32.mrb[0].mxu0
        %1495 = vmatprep.mubr.bf16.mxu0 0
        %1496 = vmatmul.mubr.bf16.gmra.mrb[0].mxu0 %v1338
        %v1497 = vpop.f32.mrb[0].mxu0
        %v1498 = vadd.f32 0.0, %v1497
        %v1499 = vpop.f32.mrb[0].mxu0
        %v1500 = vpop.f32.mrb[0].mxu0
        %v1501 = vadd.f32 0.0, %v1500
        %v1502 = vpop.f32.mrb[0].mxu0
        %1503 = vmatprep.mubr.bf16.mxu0 0
        %1504 = vmatmul.mubr.bf16.gmra.mrb[0].mxu0 %v1340
        %v1505 = vpop.f32.mrb[0].mxu0
        %v1506 = vadd.f32 0.0, %v1505
        %v1507 = vpop.f32.mrb[0].mxu0
        %v1508 = vpop.f32.mrb[0].mxu0
        %v1509 = vadd.f32 0.0, %v1508
        %v1510 = vpop.f32.mrb[0].mxu0
        %1511 = vmatprep.mubr.bf16.mxu0 0
        %1512 = vmatmul.mubr.bf16.gmra.mrb[0].mxu0 %v1342
        %v1513 = vpop.f32.mrb[0].mxu0
        %v1514 = vadd.f32 0.0, %v1513
        %v1515 = vpop.f32.mrb[0].mxu0
        %v1516 = vpop.f32.mrb[0].mxu0
        %v1517 = vadd.f32 0.0, %v1516
        %v1518 = vpop.f32.mrb[0].mxu0
        %1519 = vmatprep.mubr.bf16.mxu0 0
        %1520 = vmatmul.mubr.bf16.gmra.mrb[0].mxu0 %v1344
        %v1521 = vpop.f32.mrb[0].mxu0
        %v1522 = vadd.f32 0.0, %v1521
        %v1523 = vpop.f32.mrb[0].mxu0
        %v1524 = vpop.f32.mrb[0].mxu0
        %v1525 = vadd.f32 0.0, %v1524
        %v1526 = vpop.f32.mrb[0].mxu0
        %1527 = vmatprep.mubr.bf16.mxu0 0
        %1528 = vmatmul.mubr.bf16.gmra.mrb[0].mxu0 %v1346
        %v1529 = vpop.f32.mrb[0].mxu0
        %v1530 = vadd.f32 0.0, %v1529
        %v1531 = vpop.f32.mrb[0].mxu0
        %v1532 = vpop.f32.mrb[0].mxu0
        %v1533 = vadd.f32 0.0, %v1532
        %v1534 = vpop.f32.mrb[0].mxu0
        %1535 = vmatprep.mubr.bf16.mxu0 0
        %1536 = vmatmul.mubr.bf16.gmra.mrb[0].mxu0 %v1348
        %v1537 = vpop.f32.mrb[0].mxu0
        %v1538 = vadd.f32 0.0, %v1537
        %v1539 = vpop.f32.mrb[0].mxu0
        %v1540 = vpop.f32.mrb[0].mxu0
        %v1541 = vadd.f32 0.0, %v1540
        %v1542 = vpop.f32.mrb[0].mxu0
        %1543 = vmatprep.mubr.bf16.mxu0 0
        %1544 = vmatmul.mubr.bf16.gmra.mrb[0].mxu0 %v1350
        %v1545 = vpop.f32.mrb[0].mxu0
        %v1546 = vadd.f32 0.0, %v1545
        %v1547 = vpop.f32.mrb[0].mxu0
        %v1548 = vpop.f32.mrb[0].mxu0
        %v1549 = vadd.f32 0.0, %v1548
        %v1550 = vpop.f32.mrb[0].mxu0
        %1551 = vmatprep.mubr.bf16.mxu0 0
        %1552 = vmatmul.mubr.bf16.gmra.mrb[0].mxu0 %v1352
        %v1553 = vpop.f32.mrb[0].mxu0
        %v1554 = vadd.f32 0.0, %v1553
        %v1555 = vpop.f32.mrb[0].mxu0
        %v1556 = vpop.f32.mrb[0].mxu0
        %v1557 = vadd.f32 0.0, %v1556
        %v1558 = vpop.f32.mrb[0].mxu0
        %1559 = vmatprep.mubr.bf16.mxu0 0
        %1560 = vmatmul.mubr.bf16.gmra.mrb[0].mxu0 %v1354
        %v1561 = vpop.f32.mrb[0].mxu0
        %v1562 = vadd.f32 0.0, %v1561
        %v1563 = vpop.f32.mrb[0].mxu0
        %v1564 = vpop.f32.mrb[0].mxu0
        %v1565 = vadd.f32 0.0, %v1564
        %v1566 = vpop.f32.mrb[0].mxu0
        %1567 = vmatprep.mubr.bf16.mxu0 0
        %1568 = vmatmul.mubr.bf16.gmra.mrb[0].mxu0 %v1356
        %v1569 = vpop.f32.mrb[0].mxu0
        %v1570 = vadd.f32 0.0, %v1569
        %v1571 = vpop.f32.mrb[0].mxu0
        %v1572 = vpop.f32.mrb[0].mxu0
        %v1573 = vadd.f32 0.0, %v1572
        %v1574 = vpop.f32.mrb[0].mxu0
        %1575 = vmatprep.mubr.bf16.mxu0 0
        %1576 = vmatmul.mubr.bf16.gmra.mrb[0].mxu0 %v1358
        %v1577 = vpop.f32.mrb[0].mxu0
        %v1578 = vadd.f32 0.0, %v1577
        %v1579 = vpop.f32.mrb[0].mxu0
        %v1580 = vpop.f32.mrb[0].mxu0
        %v1581 = vadd.f32 0.0, %v1580
        %v1582 = vpop.f32.mrb[0].mxu0
        %1583 = vmatprep.mubr.bf16.mxu0 0
        %1584 = vmatmul.mubr.bf16.gmra.mrb[0].mxu0 %v1360
        %v1585 = vpop.f32.mrb[0].mxu0
        %v1586 = vadd.f32 0.0, %v1585
        %v1587 = vpop.f32.mrb[0].mxu0
        %v1588 = vpop.f32.mrb[0].mxu0
        %v1589 = vadd.f32 0.0, %v1588
        %v1590 = vpop.f32.mrb[0].mxu0
        %1591 = vmatprep.mubr.bf16.mxu0 0
        %1592 = vmatmul.mubr.bf16.gmra.mrb[0].mxu0 %v1362
        %v1593 = vpop.f32.mrb[0].mxu0
        %v1594 = vadd.f32 0.0, %v1593
        %v1595 = vpop.f32.mrb[0].mxu0
        %v1596 = vpop.f32.mrb[0].mxu0
        %v1597 = vadd.f32 0.0, %v1596
        %v1598 = vpop.f32.mrb[0].mxu0
        %1599 = vmatprep.mubr.bf16.mxu0 0
        %1600 = vmatmul.mubr.bf16.gmra.mrb[0].mxu0 %v1364
        %v1601 = vpop.f32.mrb[0].mxu0
        %v1602 = vadd.f32 0.0, %v1601
        %v1603 = vpop.f32.mrb[0].mxu0
        %v1604 = vpop.f32.mrb[0].mxu0
        %v1605 = vadd.f32 0.0, %v1604
        %v1606 = vpop.f32.mrb[0].mxu0
        %1607 = vmatprep.mubr.bf16.mxu0 0
        %1608 = vmatmul.mubr.bf16.gmra.mrb[0].mxu0 %v1366
        %v1609 = vpop.f32.mrb[0].mxu0
        %v1610 = vadd.f32 0.0, %v1609
        %v1611 = vpop.f32.mrb[0].mxu0
        %v1612 = vpop.f32.mrb[0].mxu0
        %v1613 = vadd.f32 0.0, %v1612
        %v1614 = vpop.f32.mrb[0].mxu0
        %1615 = vmatprep.mubr.bf16.mxu0 0
        %1616 = vmatmul.mubr.bf16.gmra.mrb[0].mxu0 %v1368
        %v1617 = vpop.f32.mrb[0].mxu0
        %v1618 = vadd.f32 0.0, %v1617
        %v1619 = vpop.f32.mrb[0].mxu0
        %v1620 = vpop.f32.mrb[0].mxu0
        %v1621 = vadd.f32 0.0, %v1620
        %v1622 = vpop.f32.mrb[0].mxu0
        %1623 = vmatprep.mubr.bf16.mxu0 0
        %1624 = vmatmul.mubr.bf16.gmra.mrb[0].mxu0 %v1370
        %v1625 = vpop.f32.mrb[0].mxu0
        %v1626 = vadd.f32 0.0, %v1625
        %v1627 = vpop.f32.mrb[0].mxu0
        %v1628 = vpop.f32.mrb[0].mxu0
        %v1629 = vadd.f32 0.0, %v1628
        %v1630 = vpop.f32.mrb[0].mxu0
        %1631 = vmatprep.mubr.bf16.mxu0 0
        %1632 = vmatmul.mubr.bf16.gmra.mrb[0].mxu0 %v1372
        %v1633 = vpop.f32.mrb[0].mxu0
        %v1634 = vadd.f32 0.0, %v1633
        %v1635 = vpop.f32.mrb[0].mxu0
        %v1636 = vpop.f32.mrb[0].mxu0
        %v1637 = vadd.f32 0.0, %v1636
        %v1638 = vpop.f32.mrb[0].mxu0
        %1639 = vmatprep.mubr.bf16.mxu0 0
        %1640 = vmatmul.mubr.bf16.gmra.mrb[0].mxu0 %v1374
        %v1641 = vpop.f32.mrb[0].mxu0
        %v1642 = vadd.f32 0.0, %v1641
        %v1643 = vpop.f32.mrb[0].mxu0
        %v1644 = vpop.f32.mrb[0].mxu0
        %v1645 = vadd.f32 0.0, %v1644
        %v1646 = vpop.f32.mrb[0].mxu0
        %1647 = vmatprep.mubr.bf16.mxu0 0
        %1648 = vmatmul.mubr.bf16.gmra.mrb[0].mxu0 %v1376
        %v1649 = vpop.f32.mrb[0].mxu0
        %v1650 = vadd.f32 0.0, %v1649
        %v1651 = vpop.f32.mrb[0].mxu0
        %v1652 = vpop.f32.mrb[0].mxu0
        %v1653 = vadd.f32 0.0, %v1652
        %v1654 = vpop.f32.mrb[0].mxu0
        %1655 = vmatprep.mubr.bf16.mxu0 0
        %1656 = vmatmul.mubr.bf16.gmra.mrb[0].mxu0 %v1378
        %v1657 = vpop.f32.mrb[0].mxu0
        %v1658 = vadd.f32 0.0, %v1657
        %v1659 = vpop.f32.mrb[0].mxu0
        %v1660 = vpop.f32.mrb[0].mxu0
        %v1661 = vadd.f32 0.0, %v1660
        %v1662 = vpop.f32.mrb[0].mxu0
        %1663 = vmatprep.mubr.bf16.mxu0 0
        %1664 = vmatmul.mubr.bf16.gmra.mrb[0].mxu0 %v1380
        %v1665 = vpop.f32.mrb[0].mxu0
        %v1666 = vadd.f32 0.0, %v1665
        %v1667 = vpop.f32.mrb[0].mxu0
        %v1668 = vpop.f32.mrb[0].mxu0
        %v1669 = vadd.f32 0.0, %v1668
        %v1670 = vpop.f32.mrb[0].mxu0
        %1671 = vmatprep.mubr.bf16.mxu0 0
        %1672 = vmatmul.mubr.bf16.gmra.mrb[0].mxu0 %v1382
        %v1673 = vpop.f32.mrb[0].mxu0
        %v1674 = vadd.f32 0.0, %v1673
        %v1675 = vpop.f32.mrb[0].mxu0
        %v1676 = vpop.f32.mrb[0].mxu0
        %v1677 = vadd.f32 0.0, %v1676
        %v1678 = vpop.f32.mrb[0].mxu0
        %1679 = vdwg.mxu0
        %v1680 = vld [vmem:[#allocation3] sm:$0xff]
        %v1681 = vld [vmem:[#allocation3 + $0x8] sm:$0xff]
        %v1682 = vld [vmem:[#allocation3 + $0x10] sm:$0xff]
        %v1683 = vld [vmem:[#allocation3 + $0x18] sm:$0xff]
        %v1684 = vld [vmem:[#allocation3 + $0x20] sm:$0xff]
        %v1685 = vld [vmem:[#allocation3 + $0x28] sm:$0xff]
        %v1686 = vld [vmem:[#allocation3 + $0x30] sm:$0xff]
        %v1687 = vld [vmem:[#allocation3 + $0x38] sm:$0xff]
        %v1688 = vld [vmem:[#allocation3 + $0x40] sm:$0xff]
        %v1689 = vld [vmem:[#allocation3 + $0x48] sm:$0xff]
        %v1690 = vld [vmem:[#allocation3 + $0x50] sm:$0xff]
        %v1691 = vld [vmem:[#allocation3 + $0x58] sm:$0xff]
        %v1692 = vld [vmem:[#allocation3 + $0x60] sm:$0xff]
        %v1693 = vld [vmem:[#allocation3 + $0x68] sm:$0xff]
        %v1694 = vld [vmem:[#allocation3 + $0x70] sm:$0xff]
        %v1695 = vld [vmem:[#allocation3 + $0x78] sm:$0xff]
        %v1696 = vld [vmem:[#allocation3 + $0x80] sm:$0xff]
        %v1697 = vld [vmem:[#allocation3 + $0x88] sm:$0xff]
        %v1698 = vld [vmem:[#allocation3 + $0x90] sm:$0xff]
        %v1699 = vld [vmem:[#allocation3 + $0x98] sm:$0xff]
        %v1700 = vld [vmem:[#allocation3 + $0xa0] sm:$0xff]
        %v1701 = vld [vmem:[#allocation3 + $0xa8] sm:$0xff]
        %v1702 = vld [vmem:[#allocation3 + $0xb0] sm:$0xff]
        %v1703 = vld [vmem:[#allocation3 + $0xb8] sm:$0xff]
        %v1704 = vld [vmem:[#allocation3 + $0xc0] sm:$0xff]
        %v1705 = vld [vmem:[#allocation3 + $0xc8] sm:$0xff]
        %v1706 = vld [vmem:[#allocation3 + $0xd0] sm:$0xff]
        %v1707 = vld [vmem:[#allocation3 + $0xd8] sm:$0xff]
        %v1708 = vld [vmem:[#allocation3 + $0xe0] sm:$0xff]
        %v1709 = vld [vmem:[#allocation3 + $0xe8] sm:$0xff]
        %v1710 = vld [vmem:[#allocation3 + $0xf0] sm:$0xff]
        %v1711 = vld [vmem:[#allocation3 + $0xf8] sm:$0xff]
        %v1712 = vld [vmem:[#allocation3 + $0x100] sm:$0xff]
        %v1713 = vld [vmem:[#allocation3 + $0x108] sm:$0xff]
        %v1714 = vld [vmem:[#allocation3 + $0x110] sm:$0xff]
        %v1715 = vld [vmem:[#allocation3 + $0x118] sm:$0xff]
        %v1716 = vld [vmem:[#allocation3 + $0x120] sm:$0xff]
        %v1717 = vld [vmem:[#allocation3 + $0x128] sm:$0xff]
        %v1718 = vld [vmem:[#allocation3 + $0x130] sm:$0xff]
        %v1719 = vld [vmem:[#allocation3 + $0x138] sm:$0xff]
        %v1720 = vld [vmem:[#allocation3 + $0x140] sm:$0xff]
        %v1721 = vld [vmem:[#allocation3 + $0x148] sm:$0xff]
        %v1722 = vld [vmem:[#allocation3 + $0x150] sm:$0xff]
        %v1723 = vld [vmem:[#allocation3 + $0x158] sm:$0xff]
        %v1724 = vld [vmem:[#allocation3 + $0x160] sm:$0xff]
        %v1725 = vld [vmem:[#allocation3 + $0x168] sm:$0xff]
        %v1726 = vld [vmem:[#allocation3 + $0x170] sm:$0xff]
        %v1727 = vld [vmem:[#allocation3 + $0x178] sm:$0xff]
        %v1728 = vadd.f32 %v1680, %v1490
        %v1729 = vadd.f32 %v1681, %v1493
        %v1730 = vadd.f32 %v1682, %v1498
        %v1731 = vadd.f32 %v1683, %v1501
        %v1732 = vadd.f32 %v1684, %v1506
        %v1733 = vadd.f32 %v1685, %v1509
        %v1734 = vadd.f32 %v1686, %v1514
        %v1735 = vadd.f32 %v1687, %v1517
        %v1736 = vadd.f32 %v1688, %v1522
        %v1737 = vadd.f32 %v1689, %v1525
        %v1738 = vadd.f32 %v1690, %v1530
        %v1739 = vadd.f32 %v1691, %v1533
        %v1740 = vadd.f32 %v1692, %v1538
        %v1741 = vadd.f32 %v1693, %v1541
        %v1742 = vadd.f32 %v1694, %v1546
        %v1743 = vadd.f32 %v1695, %v1549
        %v1744 = vadd.f32 %v1696, %v1554
        %v1745 = vadd.f32 %v1697, %v1557
        %v1746 = vadd.f32 %v1698, %v1562
        %v1747 = vadd.f32 %v1699, %v1565
        %v1748 = vadd.f32 %v1700, %v1570
        %v1749 = vadd.f32 %v1701, %v1573
        %v1750 = vadd.f32 %v1702, %v1578
        %v1751 = vadd.f32 %v1703, %v1581
        %v1752 = vadd.f32 %v1704, %v1586
        %v1753 = vadd.f32 %v1705, %v1589
        %v1754 = vadd.f32 %v1706, %v1594
        %v1755 = vadd.f32 %v1707, %v1597
        %v1756 = vadd.f32 %v1708, %v1602
        %v1757 = vadd.f32 %v1709, %v1605
        %v1758 = vadd.f32 %v1710, %v1610
        %v1759 = vadd.f32 %v1711, %v1613
        %v1760 = vadd.f32 %v1712, %v1618
        %v1761 = vadd.f32 %v1713, %v1621
        %v1762 = vadd.f32 %v1714, %v1626
        %v1763 = vadd.f32 %v1715, %v1629
        %v1764 = vadd.f32 %v1716, %v1634
        %v1765 = vadd.f32 %v1717, %v1637
        %v1766 = vadd.f32 %v1718, %v1642
        %v1767 = vadd.f32 %v1719, %v1645
        %v1768 = vadd.f32 %v1720, %v1650
        %v1769 = vadd.f32 %v1721, %v1653
        %v1770 = vadd.f32 %v1722, %v1658
        %v1771 = vadd.f32 %v1723, %v1661
        %v1772 = vadd.f32 %v1724, %v1666
        %v1773 = vadd.f32 %v1725, %v1669
        %v1774 = vadd.f32 %v1726, %v1674
        %v1775 = vadd.f32 %v1727, %v1677
        %1776 = vst [vmem:[#allocation3] sm:$0xff] %v1728
        %1777 = vst [vmem:[#allocation3 + $0x8] sm:$0xff] %v1729
        %1778 = vst [vmem:[#allocation3 + $0x10] sm:$0xff] %v1730
        %1779 = vst [vmem:[#allocation3 + $0x18] sm:$0xff] %v1731
        %1780 = vst [vmem:[#allocation3 + $0x20] sm:$0xff] %v1732
        %1781 = vst [vmem:[#allocation3 + $0x28] sm:$0xff] %v1733
        %1782 = vst [vmem:[#allocation3 + $0x30] sm:$0xff] %v1734
        %1783 = vst [vmem:[#allocation3 + $0x38] sm:$0xff] %v1735
        %1784 = vst [vmem:[#allocation3 + $0x40] sm:$0xff] %v1736
        %1785 = vst [vmem:[#allocation3 + $0x48] sm:$0xff] %v1737
        %1786 = vst [vmem:[#allocation3 + $0x50] sm:$0xff] %v1738
        %1787 = vst [vmem:[#allocation3 + $0x58] sm:$0xff] %v1739
        %1788 = vst [vmem:[#allocation3 + $0x60] sm:$0xff] %v1740
        %1789 = vst [vmem:[#allocation3 + $0x68] sm:$0xff] %v1741
        %1790 = vst [vmem:[#allocation3 + $0x70] sm:$0xff] %v1742
        %1791 = vst [vmem:[#allocation3 + $0x78] sm:$0xff] %v1743
        %1792 = vst [vmem:[#allocation3 + $0x80] sm:$0xff] %v1744
        %1793 = vst [vmem:[#allocation3 + $0x88] sm:$0xff] %v1745
        %1794 = vst [vmem:[#allocation3 + $0x90] sm:$0xff] %v1746
        %1795 = vst [vmem:[#allocation3 + $0x98] sm:$0xff] %v1747
        %1796 = vst [vmem:[#allocation3 + $0xa0] sm:$0xff] %v1748
        %1797 = vst [vmem:[#allocation3 + $0xa8] sm:$0xff] %v1749
        %1798 = vst [vmem:[#allocation3 + $0xb0] sm:$0xff] %v1750
        %1799 = vst [vmem:[#allocation3 + $0xb8] sm:$0xff] %v1751
        %1800 = vst [vmem:[#allocation3 + $0xc0] sm:$0xff] %v1752
        %1801 = vst [vmem:[#allocation3 + $0xc8] sm:$0xff] %v1753
        %1802 = vst [vmem:[#allocation3 + $0xd0] sm:$0xff] %v1754
        %1803 = vst [vmem:[#allocation3 + $0xd8] sm:$0xff] %v1755
        %1804 = vst [vmem:[#allocation3 + $0xe0] sm:$0xff] %v1756
        %1805 = vst [vmem:[#allocation3 + $0xe8] sm:$0xff] %v1757
        %1806 = vst [vmem:[#allocation3 + $0xf0] sm:$0xff] %v1758
        %1807 = vst [vmem:[#allocation3 + $0xf8] sm:$0xff] %v1759
        %1808 = vst [vmem:[#allocation3 + $0x100] sm:$0xff] %v1760
        %1809 = vst [vmem:[#allocation3 + $0x108] sm:$0xff] %v1761
        %1810 = vst [vmem:[#allocation3 + $0x110] sm:$0xff] %v1762
        %1811 = vst [vmem:[#allocation3 + $0x118] sm:$0xff] %v1763
        %1812 = vst [vmem:[#allocation3 + $0x120] sm:$0xff] %v1764
        %1813 = vst [vmem:[#allocation3 + $0x128] sm:$0xff] %v1765
        %1814 = vst [vmem:[#allocation3 + $0x130] sm:$0xff] %v1766
        %1815 = vst [vmem:[#allocation3 + $0x138] sm:$0xff] %v1767
        %1816 = vst [vmem:[#allocation3 + $0x140] sm:$0xff] %v1768
        %1817 = vst [vmem:[#allocation3 + $0x148] sm:$0xff] %v1769
        %1818 = vst [vmem:[#allocation3 + $0x150] sm:$0xff] %v1770
        %1819 = vst [vmem:[#allocation3 + $0x158] sm:$0xff] %v1771
        %1820 = vst [vmem:[#allocation3 + $0x160] sm:$0xff] %v1772
        %1821 = vst [vmem:[#allocation3 + $0x168] sm:$0xff] %v1773
        %1822 = vst [vmem:[#allocation3 + $0x170] sm:$0xff] %v1774
        %1823 = vst [vmem:[#allocation3 + $0x178] sm:$0xff] %v1775
        %v1824 = vld [vmem:[#allocation2] sm:$0xf0]
        %v1825 = vld [vmem:[#allocation2 + $0x8] sm:$0xff]
        %v1826 = vld [vmem:[#allocation2 + $0x10] sm:$0xff]
        %v1827 = vld [vmem:[#allocation2 + $0x18] sm:$0xff]
        %v1828 = vld [vmem:[#allocation2 + $0x20] sm:$0xff]
        %v1829 = vld [vmem:[#allocation2 + $0x28] sm:$0xff]
        %v1830 = vld [vmem:[#allocation2 + $0x30] sm:$0xff]
        %v1831 = vld [vmem:[#allocation2 + $0x38] sm:$0xff]
        %v1832 = vld [vmem:[#allocation2 + $0x40] sm:$0xff]
        %v1833 = vld [vmem:[#allocation2 + $0x48] sm:$0xff]
        %v1834 = vld [vmem:[#allocation2 + $0x50] sm:$0xff]
        %v1835 = vld [vmem:[#allocation2 + $0x58] sm:$0xff]
        %v1836 = vld [vmem:[#allocation2 + $0x60] sm:$0xff]
        %v1837 = vld [vmem:[#allocation2 + $0x68] sm:$0xff]
        %v1838 = vld [vmem:[#allocation2 + $0x70] sm:$0xff]
        %v1839 = vld [vmem:[#allocation2 + $0x78] sm:$0xff]
        %v1840 = vld [vmem:[#allocation2 + $0x80] sm:$0xff]
        %v1841 = vld [vmem:[#allocation2 + $0x88] sm:$0xff]
        %v1842 = vld [vmem:[#allocation2 + $0x90] sm:$0xff]
        %v1843 = vld [vmem:[#allocation2 + $0x98] sm:$0xff]
        %v1844 = vld [vmem:[#allocation2 + $0xa0] sm:$0xff]
        %v1845 = vld [vmem:[#allocation2 + $0xa8] sm:$0xff]
        %v1846 = vld [vmem:[#allocation2 + $0xb0] sm:$0xff]
        %v1847 = vld [vmem:[#allocation2 + $0xb8] sm:$0xff]
        %v1848 = vld [vmem:[#allocation2 + $0xc0] sm:$0x1f]
        %s1849 = scalar_lea.vmem %s3, 128
        %v1850 = vld [vmem:[%s1849] sm:$0xf]
        %v1851 = vld [vmem:[%s1849 + $0x4] sm:$0xf]
        %v1852 = vld [vmem:[%s1849 + $0x8] sm:$0xf]
        %v1853 = vld [vmem:[%s1849 + $0xc] sm:$0xf]
        %v1854 = vld [vmem:[%s1849 + $0x10] sm:$0xf]
        %v1855 = vld [vmem:[%s1849 + $0x14] sm:$0xf]
        %v1856 = vld [vmem:[%s1849 + $0x18] sm:$0xf]
        %v1857 = vld [vmem:[%s1849 + $0x1c] sm:$0xf]
        %v1858 = vld [vmem:[%s1849 + $0x20] sm:$0xf]
        %v1859 = vld [vmem:[%s1849 + $0x24] sm:$0xf]
        %v1860 = vld [vmem:[%s1849 + $0x28] sm:$0xf]
        %v1861 = vld [vmem:[%s1849 + $0x2c] sm:$0xf]
        %v1862 = vld [vmem:[%s1849 + $0x30] sm:$0xf]
        %v1863 = vld [vmem:[%s1849 + $0x34] sm:$0xf]
        %v1864 = vld [vmem:[%s1849 + $0x38] sm:$0xf]
        %v1865 = vld [vmem:[%s1849 + $0x3c] sm:$0xf]
        %vm1866 = vsmask.f32 3328
        %v1868 = vshrl.u32 %v1824, 16
        %v1870 = vrot.slane %v1868, 4
        %v1871 = vshll.u32 %v1824, 16
        %v1873 = vrot.slane %v1871, 5
        %v1874 = vor.u32 %v1870, %v1873
        %v1876 = vshrl.u32 %v1825, 16
        %v1878 = vrot.slane %v1876, 4
        %v1879 = vshll.u32 %v1825, 16
        %v1881 = vrot.slane %v1879, 5
        %v1882 = vor.u32 %v1878, %v1881
        %v1883 = vsel %vm1866, %v1874, %v1882
        %v1885 = vshrl.u32 %v1826, 16
        %v1887 = vrot.slane %v1885, 4
        %v1888 = vshll.u32 %v1826, 16
        %v1890 = vrot.slane %v1888, 5
        %v1891 = vor.u32 %v1887, %v1890
        %v1892 = vsel %vm1866, %v1882, %v1891
        %v1894 = vshrl.u32 %v1827, 16
        %v1896 = vrot.slane %v1894, 4
        %v1897 = vshll.u32 %v1827, 16
        %v1899 = vrot.slane %v1897, 5
        %v1900 = vor.u32 %v1896, %v1899
        %v1901 = vsel %vm1866, %v1891, %v1900
        %v1903 = vshrl.u32 %v1828, 16
        %v1905 = vrot.slane %v1903, 4
        %v1906 = vshll.u32 %v1828, 16
        %v1908 = vrot.slane %v1906, 5
        %v1909 = vor.u32 %v1905, %v1908
        %v1910 = vsel %vm1866, %v1900, %v1909
        %v1912 = vshrl.u32 %v1829, 16
        %v1914 = vrot.slane %v1912, 4
        %v1915 = vshll.u32 %v1829, 16
        %v1917 = vrot.slane %v1915, 5
        %v1918 = vor.u32 %v1914, %v1917
        %v1919 = vsel %vm1866, %v1909, %v1918
        %v1921 = vshrl.u32 %v1830, 16
        %v1923 = vrot.slane %v1921, 4
        %v1924 = vshll.u32 %v1830, 16
        %v1926 = vrot.slane %v1924, 5
        %v1927 = vor.u32 %v1923, %v1926
        %v1928 = vsel %vm1866, %v1918, %v1927
        %v1930 = vshrl.u32 %v1831, 16
        %v1932 = vrot.slane %v1930, 4
        %v1933 = vshll.u32 %v1831, 16
        %v1935 = vrot.slane %v1933, 5
        %v1936 = vor.u32 %v1932, %v1935
        %v1937 = vsel %vm1866, %v1927, %v1936
        %v1939 = vshrl.u32 %v1832, 16
        %v1941 = vrot.slane %v1939, 4
        %v1942 = vshll.u32 %v1832, 16
        %v1944 = vrot.slane %v1942, 5
        %v1945 = vor.u32 %v1941, %v1944
        %v1946 = vsel %vm1866, %v1936, %v1945
        %v1948 = vshrl.u32 %v1833, 16
        %v1950 = vrot.slane %v1948, 4
        %v1951 = vshll.u32 %v1833, 16
        %v1953 = vrot.slane %v1951, 5
        %v1954 = vor.u32 %v1950, %v1953
        %v1955 = vsel %vm1866, %v1945, %v1954
        %v1957 = vshrl.u32 %v1834, 16
        %v1959 = vrot.slane %v1957, 4
        %v1960 = vshll.u32 %v1834, 16
        %v1962 = vrot.slane %v1960, 5
        %v1963 = vor.u32 %v1959, %v1962
        %v1964 = vsel %vm1866, %v1954, %v1963
        %v1966 = vshrl.u32 %v1835, 16
        %v1968 = vrot.slane %v1966, 4
        %v1969 = vshll.u32 %v1835, 16
        %v1971 = vrot.slane %v1969, 5
        %v1972 = vor.u32 %v1968, %v1971
        %v1973 = vsel %vm1866, %v1963, %v1972
        %v1975 = vshrl.u32 %v1836, 16
        %v1977 = vrot.slane %v1975, 4
        %v1978 = vshll.u32 %v1836, 16
        %v1980 = vrot.slane %v1978, 5
        %v1981 = vor.u32 %v1977, %v1980
        %v1982 = vsel %vm1866, %v1972, %v1981
        %v1984 = vshrl.u32 %v1837, 16
        %v1986 = vrot.slane %v1984, 4
        %v1987 = vshll.u32 %v1837, 16
        %v1989 = vrot.slane %v1987, 5
        %v1990 = vor.u32 %v1986, %v1989
        %v1991 = vsel %vm1866, %v1981, %v1990
        %v1993 = vshrl.u32 %v1838, 16
        %v1995 = vrot.slane %v1993, 4
        %v1996 = vshll.u32 %v1838, 16
        %v1998 = vrot.slane %v1996, 5
        %v1999 = vor.u32 %v1995, %v1998
        %v2000 = vsel %vm1866, %v1990, %v1999
        %v2002 = vshrl.u32 %v1839, 16
        %v2004 = vrot.slane %v2002, 4
        %v2005 = vshll.u32 %v1839, 16
        %v2007 = vrot.slane %v2005, 5
        %v2008 = vor.u32 %v2004, %v2007
        %v2009 = vsel %vm1866, %v1999, %v2008
        %v2011 = vshrl.u32 %v1840, 16
        %v2013 = vrot.slane %v2011, 4
        %v2014 = vshll.u32 %v1840, 16
        %v2016 = vrot.slane %v2014, 5
        %v2017 = vor.u32 %v2013, %v2016
        %v2018 = vsel %vm1866, %v2008, %v2017
        %v2020 = vshrl.u32 %v1841, 16
        %v2022 = vrot.slane %v2020, 4
        %v2023 = vshll.u32 %v1841, 16
        %v2025 = vrot.slane %v2023, 5
        %v2026 = vor.u32 %v2022, %v2025
        %v2027 = vsel %vm1866, %v2017, %v2026
        %v2029 = vshrl.u32 %v1842, 16
        %v2031 = vrot.slane %v2029, 4
        %v2032 = vshll.u32 %v1842, 16
        %v2034 = vrot.slane %v2032, 5
        %v2035 = vor.u32 %v2031, %v2034
        %v2036 = vsel %vm1866, %v2026, %v2035
        %v2038 = vshrl.u32 %v1843, 16
        %v2040 = vrot.slane %v2038, 4
        %v2041 = vshll.u32 %v1843, 16
        %v2043 = vrot.slane %v2041, 5
        %v2044 = vor.u32 %v2040, %v2043
        %v2045 = vsel %vm1866, %v2035, %v2044
        %v2047 = vshrl.u32 %v1844, 16
        %v2049 = vrot.slane %v2047, 4
        %v2050 = vshll.u32 %v1844, 16
        %v2052 = vrot.slane %v2050, 5
        %v2053 = vor.u32 %v2049, %v2052
        %v2054 = vsel %vm1866, %v2044, %v2053
        %v2056 = vshrl.u32 %v1845, 16
        %v2058 = vrot.slane %v2056, 4
        %v2059 = vshll.u32 %v1845, 16
        %v2061 = vrot.slane %v2059, 5
        %v2062 = vor.u32 %v2058, %v2061
        %v2063 = vsel %vm1866, %v2053, %v2062
        %v2065 = vshrl.u32 %v1846, 16
        %v2067 = vrot.slane %v2065, 4
        %v2068 = vshll.u32 %v1846, 16
        %v2070 = vrot.slane %v2068, 5
        %v2071 = vor.u32 %v2067, %v2070
        %v2072 = vsel %vm1866, %v2062, %v2071
        %v2074 = vshrl.u32 %v1847, 16
        %v2076 = vrot.slane %v2074, 4
        %v2077 = vshll.u32 %v1847, 16
        %v2079 = vrot.slane %v2077, 5
        %v2080 = vor.u32 %v2076, %v2079
        %v2081 = vsel %vm1866, %v2071, %v2080
        %v2083 = vshrl.u32 %v1848, 16
        %v2085 = vrot.slane %v2083, 4
        %v2086 = vshll.u32 %v1848, 16
        %v2088 = vrot.slane %v2086, 5
        %v2089 = vor.u32 %v2085, %v2088
        %v2090 = vsel %vm1866, %v2080, %v2089
        %v2131 = vunpack.c.l.b16 %v1850
        %v2132 = vunpack.c.l.b16 %v1851
        %v2133 = vunpack.c.l.b16 %v1852
        %v2134 = vunpack.c.l.b16 %v1853
        %v2135 = vunpack.c.l.b16 %v1854
        %v2136 = vunpack.c.l.b16 %v1855
        %v2137 = vunpack.c.l.b16 %v1856
        %v2138 = vunpack.c.l.b16 %v1857
        %v2139 = vunpack.c.l.b16 %v1858
        %v2140 = vunpack.c.l.b16 %v1859
        %v2141 = vunpack.c.l.b16 %v1860
        %v2142 = vunpack.c.l.b16 %v1861
        %v2143 = vunpack.c.l.b16 %v1862
        %v2144 = vunpack.c.l.b16 %v1863
        %v2145 = vunpack.c.l.b16 %v1864
        %v2146 = vunpack.c.l.b16 %v1865
        %v2147 = vpack.c.b16 %v2132, %v2131
        %v2148 = vpack.c.b16 %v2134, %v2133
        %v2149 = vpack.c.b16 %v2136, %v2135
        %v2150 = vpack.c.b16 %v2138, %v2137
        %v2151 = vpack.c.b16 %v2140, %v2139
        %v2152 = vpack.c.b16 %v2142, %v2141
        %v2153 = vpack.c.b16 %v2144, %v2143
        %v2154 = vpack.c.b16 %v2146, %v2145
        %2163 = vmatprep.subr.bf16.mxu0 0
        %2164 = vmatpush1.bf16.msra.mxu0 %v2147
        %2165 = vmatprep.subr.bf16.mxu0 0
        %2166 = vmatpush1.bf16.msra.mxu0 %v2148
        %2167 = vmatprep.subr.bf16.mxu0 0
        %2168 = vmatpush1.bf16.msra.mxu0 %v2149
        %2169 = vmatprep.subr.bf16.mxu0 0
        %2170 = vmatpush1.bf16.msra.mxu0 %v2150
        %2171 = vmatprep.subr.bf16.mxu0 0
        %2172 = vmatpush1.bf16.msra.mxu0 %v2151
        %2173 = vmatprep.subr.bf16.mxu0 0
        %2174 = vmatpush1.bf16.msra.mxu0 %v2152
        %2175 = vmatprep.subr.bf16.mxu0 0
        %2176 = vmatpush1.bf16.msra.mxu0 %v2153
        %2177 = vmatprep.subr.bf16.mxu0 0
        %2178 = vmatpush1.bf16.msra.mxu0 %v2154
        %2179 = vmatprep.subr.bf16.mxu0 0
        %2180 = vmatpush1.bf16.msra.mxu0 0
        %2181 = vmatprep.subr.bf16.mxu0 0
        %2182 = vmatpush1.bf16.msra.mxu0 0
        %2183 = vmatprep.subr.bf16.mxu0 0
        %2184 = vmatpush1.bf16.msra.mxu0 0
        %2185 = vmatprep.subr.bf16.mxu0 0
        %2186 = vmatpush1.bf16.msra.mxu0 0
        %2187 = vmatprep.subr.bf16.mxu0 0
        %2188 = vmatpush1.bf16.msra.mxu0 0
        %2189 = vmatprep.subr.bf16.mxu0 0
        %2190 = vmatpush1.bf16.msra.mxu0 0
        %2191 = vmatprep.subr.bf16.mxu0 0
        %2192 = vmatpush1.bf16.msra.mxu0 0
        %2193 = vmatprep.subr.bf16.mxu0 0
        %2194 = vmatpush1.bf16.msra.mxu0 0
        %2195 = vmatprep.mubr.bf16.mxu0 0
        %2196 = vmatmul.mubr.bf16.gmra.mrb[0].mxu0 %v1883
        %v2197 = vpop.f32.mrb[0].mxu0
        %v2198 = vadd.f32 0.0, %v2197
        %v2199 = vpop.f32.mrb[0].mxu0
        %v2200 = vpop.f32.mrb[0].mxu0
        %v2201 = vadd.f32 0.0, %v2200
        %v2202 = vpop.f32.mrb[0].mxu0
        %2203 = vmatprep.mubr.bf16.mxu0 0
        %2204 = vmatmul.mubr.bf16.gmra.mrb[0].mxu0 %v1892
        %v2205 = vpop.f32.mrb[0].mxu0
        %v2206 = vadd.f32 0.0, %v2205
        %v2207 = vpop.f32.mrb[0].mxu0
        %v2208 = vpop.f32.mrb[0].mxu0
        %v2209 = vadd.f32 0.0, %v2208
        %v2210 = vpop.f32.mrb[0].mxu0
        %2211 = vmatprep.mubr.bf16.mxu0 0
        %2212 = vmatmul.mubr.bf16.gmra.mrb[0].mxu0 %v1901
        %v2213 = vpop.f32.mrb[0].mxu0
        %v2214 = vadd.f32 0.0, %v2213
        %v2215 = vpop.f32.mrb[0].mxu0
        %v2216 = vpop.f32.mrb[0].mxu0
        %v2217 = vadd.f32 0.0, %v2216
        %v2218 = vpop.f32.mrb[0].mxu0
        %2219 = vmatprep.mubr.bf16.mxu0 0
        %2220 = vmatmul.mubr.bf16.gmra.mrb[0].mxu0 %v1910
        %v2221 = vpop.f32.mrb[0].mxu0
        %v2222 = vadd.f32 0.0, %v2221
        %v2223 = vpop.f32.mrb[0].mxu0
        %v2224 = vpop.f32.mrb[0].mxu0
        %v2225 = vadd.f32 0.0, %v2224
        %v2226 = vpop.f32.mrb[0].mxu0
        %2227 = vmatprep.mubr.bf16.mxu0 0
        %2228 = vmatmul.mubr.bf16.gmra.mrb[0].mxu0 %v1919
        %v2229 = vpop.f32.mrb[0].mxu0
        %v2230 = vadd.f32 0.0, %v2229
        %v2231 = vpop.f32.mrb[0].mxu0
        %v2232 = vpop.f32.mrb[0].mxu0
        %v2233 = vadd.f32 0.0, %v2232
        %v2234 = vpop.f32.mrb[0].mxu0
        %2235 = vmatprep.mubr.bf16.mxu0 0
        %2236 = vmatmul.mubr.bf16.gmra.mrb[0].mxu0 %v1928
        %v2237 = vpop.f32.mrb[0].mxu0
        %v2238 = vadd.f32 0.0, %v2237
        %v2239 = vpop.f32.mrb[0].mxu0
        %v2240 = vpop.f32.mrb[0].mxu0
        %v2241 = vadd.f32 0.0, %v2240
        %v2242 = vpop.f32.mrb[0].mxu0
        %2243 = vmatprep.mubr.bf16.mxu0 0
        %2244 = vmatmul.mubr.bf16.gmra.mrb[0].mxu0 %v1937
        %v2245 = vpop.f32.mrb[0].mxu0
        %v2246 = vadd.f32 0.0, %v2245
        %v2247 = vpop.f32.mrb[0].mxu0
        %v2248 = vpop.f32.mrb[0].mxu0
        %v2249 = vadd.f32 0.0, %v2248
        %v2250 = vpop.f32.mrb[0].mxu0
        %2251 = vmatprep.mubr.bf16.mxu0 0
        %2252 = vmatmul.mubr.bf16.gmra.mrb[0].mxu0 %v1946
        %v2253 = vpop.f32.mrb[0].mxu0
        %v2254 = vadd.f32 0.0, %v2253
        %v2255 = vpop.f32.mrb[0].mxu0
        %v2256 = vpop.f32.mrb[0].mxu0
        %v2257 = vadd.f32 0.0, %v2256
        %v2258 = vpop.f32.mrb[0].mxu0
        %2259 = vmatprep.mubr.bf16.mxu0 0
        %2260 = vmatmul.mubr.bf16.gmra.mrb[0].mxu0 %v1955
        %v2261 = vpop.f32.mrb[0].mxu0
        %v2262 = vadd.f32 0.0, %v2261
        %v2263 = vpop.f32.mrb[0].mxu0
        %v2264 = vpop.f32.mrb[0].mxu0
        %v2265 = vadd.f32 0.0, %v2264
        %v2266 = vpop.f32.mrb[0].mxu0
        %2267 = vmatprep.mubr.bf16.mxu0 0
        %2268 = vmatmul.mubr.bf16.gmra.mrb[0].mxu0 %v1964
        %v2269 = vpop.f32.mrb[0].mxu0
        %v2270 = vadd.f32 0.0, %v2269
        %v2271 = vpop.f32.mrb[0].mxu0
        %v2272 = vpop.f32.mrb[0].mxu0
        %v2273 = vadd.f32 0.0, %v2272
        %v2274 = vpop.f32.mrb[0].mxu0
        %2275 = vmatprep.mubr.bf16.mxu0 0
        %2276 = vmatmul.mubr.bf16.gmra.mrb[0].mxu0 %v1973
        %v2277 = vpop.f32.mrb[0].mxu0
        %v2278 = vadd.f32 0.0, %v2277
        %v2279 = vpop.f32.mrb[0].mxu0
        %v2280 = vpop.f32.mrb[0].mxu0
        %v2281 = vadd.f32 0.0, %v2280
        %v2282 = vpop.f32.mrb[0].mxu0
        %2283 = vmatprep.mubr.bf16.mxu0 0
        %2284 = vmatmul.mubr.bf16.gmra.mrb[0].mxu0 %v1982
        %v2285 = vpop.f32.mrb[0].mxu0
        %v2286 = vadd.f32 0.0, %v2285
        %v2287 = vpop.f32.mrb[0].mxu0
        %v2288 = vpop.f32.mrb[0].mxu0
        %v2289 = vadd.f32 0.0, %v2288
        %v2290 = vpop.f32.mrb[0].mxu0
        %2291 = vmatprep.mubr.bf16.mxu0 0
        %2292 = vmatmul.mubr.bf16.gmra.mrb[0].mxu0 %v1991
        %v2293 = vpop.f32.mrb[0].mxu0
        %v2294 = vadd.f32 0.0, %v2293
        %v2295 = vpop.f32.mrb[0].mxu0
        %v2296 = vpop.f32.mrb[0].mxu0
        %v2297 = vadd.f32 0.0, %v2296
        %v2298 = vpop.f32.mrb[0].mxu0
        %2299 = vmatprep.mubr.bf16.mxu0 0
        %2300 = vmatmul.mubr.bf16.gmra.mrb[0].mxu0 %v2000
        %v2301 = vpop.f32.mrb[0].mxu0
        %v2302 = vadd.f32 0.0, %v2301
        %v2303 = vpop.f32.mrb[0].mxu0
        %v2304 = vpop.f32.mrb[0].mxu0
        %v2305 = vadd.f32 0.0, %v2304
        %v2306 = vpop.f32.mrb[0].mxu0
        %2307 = vmatprep.mubr.bf16.mxu0 0
        %2308 = vmatmul.mubr.bf16.gmra.mrb[0].mxu0 %v2009
        %v2309 = vpop.f32.mrb[0].mxu0
        %v2310 = vadd.f32 0.0, %v2309
        %v2311 = vpop.f32.mrb[0].mxu0
        %v2312 = vpop.f32.mrb[0].mxu0
        %v2313 = vadd.f32 0.0, %v2312
        %v2314 = vpop.f32.mrb[0].mxu0
        %2315 = vmatprep.mubr.bf16.mxu0 0
        %2316 = vmatmul.mubr.bf16.gmra.mrb[0].mxu0 %v2018
        %v2317 = vpop.f32.mrb[0].mxu0
        %v2318 = vadd.f32 0.0, %v2317
        %v2319 = vpop.f32.mrb[0].mxu0
        %v2320 = vpop.f32.mrb[0].mxu0
        %v2321 = vadd.f32 0.0, %v2320
        %v2322 = vpop.f32.mrb[0].mxu0
        %2323 = vmatprep.mubr.bf16.mxu0 0
        %2324 = vmatmul.mubr.bf16.gmra.mrb[0].mxu0 %v2027
        %v2325 = vpop.f32.mrb[0].mxu0
        %v2326 = vadd.f32 0.0, %v2325
        %v2327 = vpop.f32.mrb[0].mxu0
        %v2328 = vpop.f32.mrb[0].mxu0
        %v2329 = vadd.f32 0.0, %v2328
        %v2330 = vpop.f32.mrb[0].mxu0
        %2331 = vmatprep.mubr.bf16.mxu0 0
        %2332 = vmatmul.mubr.bf16.gmra.mrb[0].mxu0 %v2036
        %v2333 = vpop.f32.mrb[0].mxu0
        %v2334 = vadd.f32 0.0, %v2333
        %v2335 = vpop.f32.mrb[0].mxu0
        %v2336 = vpop.f32.mrb[0].mxu0
        %v2337 = vadd.f32 0.0, %v2336
        %v2338 = vpop.f32.mrb[0].mxu0
        %2339 = vmatprep.mubr.bf16.mxu0 0
        %2340 = vmatmul.mubr.bf16.gmra.mrb[0].mxu0 %v2045
        %v2341 = vpop.f32.mrb[0].mxu0
        %v2342 = vadd.f32 0.0, %v2341
        %v2343 = vpop.f32.mrb[0].mxu0
        %v2344 = vpop.f32.mrb[0].mxu0
        %v2345 = vadd.f32 0.0, %v2344
        %v2346 = vpop.f32.mrb[0].mxu0
        %2347 = vmatprep.mubr.bf16.mxu0 0
        %2348 = vmatmul.mubr.bf16.gmra.mrb[0].mxu0 %v2054
        %v2349 = vpop.f32.mrb[0].mxu0
        %v2350 = vadd.f32 0.0, %v2349
        %v2351 = vpop.f32.mrb[0].mxu0
        %v2352 = vpop.f32.mrb[0].mxu0
        %v2353 = vadd.f32 0.0, %v2352
        %v2354 = vpop.f32.mrb[0].mxu0
        %2355 = vmatprep.mubr.bf16.mxu0 0
        %2356 = vmatmul.mubr.bf16.gmra.mrb[0].mxu0 %v2063
        %v2357 = vpop.f32.mrb[0].mxu0
        %v2358 = vadd.f32 0.0, %v2357
        %v2359 = vpop.f32.mrb[0].mxu0
        %v2360 = vpop.f32.mrb[0].mxu0
        %v2361 = vadd.f32 0.0, %v2360
        %v2362 = vpop.f32.mrb[0].mxu0
        %2363 = vmatprep.mubr.bf16.mxu0 0
        %2364 = vmatmul.mubr.bf16.gmra.mrb[0].mxu0 %v2072
        %v2365 = vpop.f32.mrb[0].mxu0
        %v2366 = vadd.f32 0.0, %v2365
        %v2367 = vpop.f32.mrb[0].mxu0
        %v2368 = vpop.f32.mrb[0].mxu0
        %v2369 = vadd.f32 0.0, %v2368
        %v2370 = vpop.f32.mrb[0].mxu0
        %2371 = vmatprep.mubr.bf16.mxu0 0
        %2372 = vmatmul.mubr.bf16.gmra.mrb[0].mxu0 %v2081
        %v2373 = vpop.f32.mrb[0].mxu0
        %v2374 = vadd.f32 0.0, %v2373
        %v2375 = vpop.f32.mrb[0].mxu0
        %v2376 = vpop.f32.mrb[0].mxu0
        %v2377 = vadd.f32 0.0, %v2376
        %v2378 = vpop.f32.mrb[0].mxu0
        %2379 = vmatprep.mubr.bf16.mxu0 0
        %2380 = vmatmul.mubr.bf16.gmra.mrb[0].mxu0 %v2090
        %v2381 = vpop.f32.mrb[0].mxu0
        %v2382 = vadd.f32 0.0, %v2381
        %v2383 = vpop.f32.mrb[0].mxu0
        %v2384 = vpop.f32.mrb[0].mxu0
        %v2385 = vadd.f32 0.0, %v2384
        %v2386 = vpop.f32.mrb[0].mxu0
        %2387 = vdwg.mxu0
        %v2388 = vld [vmem:[#allocation3] sm:$0xff]
        %v2389 = vld [vmem:[#allocation3 + $0x8] sm:$0xff]
        %v2390 = vld [vmem:[#allocation3 + $0x10] sm:$0xff]
        %v2391 = vld [vmem:[#allocation3 + $0x18] sm:$0xff]
        %v2392 = vld [vmem:[#allocation3 + $0x20] sm:$0xff]
        %v2393 = vld [vmem:[#allocation3 + $0x28] sm:$0xff]
        %v2394 = vld [vmem:[#allocation3 + $0x30] sm:$0xff]
        %v2395 = vld [vmem:[#allocation3 + $0x38] sm:$0xff]
        %v2396 = vld [vmem:[#allocation3 + $0x40] sm:$0xff]
        %v2397 = vld [vmem:[#allocation3 + $0x48] sm:$0xff]
        %v2398 = vld [vmem:[#allocation3 + $0x50] sm:$0xff]
        %v2399 = vld [vmem:[#allocation3 + $0x58] sm:$0xff]
        %v2400 = vld [vmem:[#allocation3 + $0x60] sm:$0xff]
        %v2401 = vld [vmem:[#allocation3 + $0x68] sm:$0xff]
        %v2402 = vld [vmem:[#allocation3 + $0x70] sm:$0xff]
        %v2403 = vld [vmem:[#allocation3 + $0x78] sm:$0xff]
        %v2404 = vld [vmem:[#allocation3 + $0x80] sm:$0xff]
        %v2405 = vld [vmem:[#allocation3 + $0x88] sm:$0xff]
        %v2406 = vld [vmem:[#allocation3 + $0x90] sm:$0xff]
        %v2407 = vld [vmem:[#allocation3 + $0x98] sm:$0xff]
        %v2408 = vld [vmem:[#allocation3 + $0xa0] sm:$0xff]
        %v2409 = vld [vmem:[#allocation3 + $0xa8] sm:$0xff]
        %v2410 = vld [vmem:[#allocation3 + $0xb0] sm:$0xff]
        %v2411 = vld [vmem:[#allocation3 + $0xb8] sm:$0xff]
        %v2412 = vld [vmem:[#allocation3 + $0xc0] sm:$0xff]
        %v2413 = vld [vmem:[#allocation3 + $0xc8] sm:$0xff]
        %v2414 = vld [vmem:[#allocation3 + $0xd0] sm:$0xff]
        %v2415 = vld [vmem:[#allocation3 + $0xd8] sm:$0xff]
        %v2416 = vld [vmem:[#allocation3 + $0xe0] sm:$0xff]
        %v2417 = vld [vmem:[#allocation3 + $0xe8] sm:$0xff]
        %v2418 = vld [vmem:[#allocation3 + $0xf0] sm:$0xff]
        %v2419 = vld [vmem:[#allocation3 + $0xf8] sm:$0xff]
        %v2420 = vld [vmem:[#allocation3 + $0x100] sm:$0xff]
        %v2421 = vld [vmem:[#allocation3 + $0x108] sm:$0xff]
        %v2422 = vld [vmem:[#allocation3 + $0x110] sm:$0xff]
        %v2423 = vld [vmem:[#allocation3 + $0x118] sm:$0xff]
        %v2424 = vld [vmem:[#allocation3 + $0x120] sm:$0xff]
        %v2425 = vld [vmem:[#allocation3 + $0x128] sm:$0xff]
        %v2426 = vld [vmem:[#allocation3 + $0x130] sm:$0xff]
        %v2427 = vld [vmem:[#allocation3 + $0x138] sm:$0xff]
        %v2428 = vld [vmem:[#allocation3 + $0x140] sm:$0xff]
        %v2429 = vld [vmem:[#allocation3 + $0x148] sm:$0xff]
        %v2430 = vld [vmem:[#allocation3 + $0x150] sm:$0xff]
        %v2431 = vld [vmem:[#allocation3 + $0x158] sm:$0xff]
        %v2432 = vld [vmem:[#allocation3 + $0x160] sm:$0xff]
        %v2433 = vld [vmem:[#allocation3 + $0x168] sm:$0xff]
        %v2434 = vld [vmem:[#allocation3 + $0x170] sm:$0xff]
        %v2435 = vld [vmem:[#allocation3 + $0x178] sm:$0xff]
        %v2436 = vadd.f32 %v2388, %v2198
        %v2437 = vadd.f32 %v2389, %v2201
        %v2438 = vadd.f32 %v2390, %v2206
        %v2439 = vadd.f32 %v2391, %v2209
        %v2440 = vadd.f32 %v2392, %v2214
        %v2441 = vadd.f32 %v2393, %v2217
        %v2442 = vadd.f32 %v2394, %v2222
        %v2443 = vadd.f32 %v2395, %v2225
        %v2444 = vadd.f32 %v2396, %v2230
        %v2445 = vadd.f32 %v2397, %v2233
        %v2446 = vadd.f32 %v2398, %v2238
        %v2447 = vadd.f32 %v2399, %v2241
        %v2448 = vadd.f32 %v2400, %v2246
        %v2449 = vadd.f32 %v2401, %v2249
        %v2450 = vadd.f32 %v2402, %v2254
        %v2451 = vadd.f32 %v2403, %v2257
        %v2452 = vadd.f32 %v2404, %v2262
        %v2453 = vadd.f32 %v2405, %v2265
        %v2454 = vadd.f32 %v2406, %v2270
        %v2455 = vadd.f32 %v2407, %v2273
        %v2456 = vadd.f32 %v2408, %v2278
        %v2457 = vadd.f32 %v2409, %v2281
        %v2458 = vadd.f32 %v2410, %v2286
        %v2459 = vadd.f32 %v2411, %v2289
        %v2460 = vadd.f32 %v2412, %v2294
        %v2461 = vadd.f32 %v2413, %v2297
        %v2462 = vadd.f32 %v2414, %v2302
        %v2463 = vadd.f32 %v2415, %v2305
        %v2464 = vadd.f32 %v2416, %v2310
        %v2465 = vadd.f32 %v2417, %v2313
        %v2466 = vadd.f32 %v2418, %v2318
        %v2467 = vadd.f32 %v2419, %v2321
        %v2468 = vadd.f32 %v2420, %v2326
        %v2469 = vadd.f32 %v2421, %v2329
        %v2470 = vadd.f32 %v2422, %v2334
        %v2471 = vadd.f32 %v2423, %v2337
        %v2472 = vadd.f32 %v2424, %v2342
        %v2473 = vadd.f32 %v2425, %v2345
        %v2474 = vadd.f32 %v2426, %v2350
        %v2475 = vadd.f32 %v2427, %v2353
        %v2476 = vadd.f32 %v2428, %v2358
        %v2477 = vadd.f32 %v2429, %v2361
        %v2478 = vadd.f32 %v2430, %v2366
        %v2479 = vadd.f32 %v2431, %v2369
        %v2480 = vadd.f32 %v2432, %v2374
        %v2481 = vadd.f32 %v2433, %v2377
        %v2482 = vadd.f32 %v2434, %v2382
        %v2483 = vadd.f32 %v2435, %v2385
        %2484 = vst [vmem:[#allocation3] sm:$0xff] %v2436
        %2485 = vst [vmem:[#allocation3 + $0x8] sm:$0xff] %v2437
        %2486 = vst [vmem:[#allocation3 + $0x10] sm:$0xff] %v2438
        %2487 = vst [vmem:[#allocation3 + $0x18] sm:$0xff] %v2439
        %2488 = vst [vmem:[#allocation3 + $0x20] sm:$0xff] %v2440
        %2489 = vst [vmem:[#allocation3 + $0x28] sm:$0xff] %v2441
        %2490 = vst [vmem:[#allocation3 + $0x30] sm:$0xff] %v2442
        %2491 = vst [vmem:[#allocation3 + $0x38] sm:$0xff] %v2443
        %2492 = vst [vmem:[#allocation3 + $0x40] sm:$0xff] %v2444
        %2493 = vst [vmem:[#allocation3 + $0x48] sm:$0xff] %v2445
        %2494 = vst [vmem:[#allocation3 + $0x50] sm:$0xff] %v2446
        %2495 = vst [vmem:[#allocation3 + $0x58] sm:$0xff] %v2447
        %2496 = vst [vmem:[#allocation3 + $0x60] sm:$0xff] %v2448
        %2497 = vst [vmem:[#allocation3 + $0x68] sm:$0xff] %v2449
        %2498 = vst [vmem:[#allocation3 + $0x70] sm:$0xff] %v2450
        %2499 = vst [vmem:[#allocation3 + $0x78] sm:$0xff] %v2451
        %2500 = vst [vmem:[#allocation3 + $0x80] sm:$0xff] %v2452
        %2501 = vst [vmem:[#allocation3 + $0x88] sm:$0xff] %v2453
        %2502 = vst [vmem:[#allocation3 + $0x90] sm:$0xff] %v2454
        %2503 = vst [vmem:[#allocation3 + $0x98] sm:$0xff] %v2455
        %2504 = vst [vmem:[#allocation3 + $0xa0] sm:$0xff] %v2456
        %2505 = vst [vmem:[#allocation3 + $0xa8] sm:$0xff] %v2457
        %2506 = vst [vmem:[#allocation3 + $0xb0] sm:$0xff] %v2458
        %2507 = vst [vmem:[#allocation3 + $0xb8] sm:$0xff] %v2459
        %2508 = vst [vmem:[#allocation3 + $0xc0] sm:$0xff] %v2460
        %2509 = vst [vmem:[#allocation3 + $0xc8] sm:$0xff] %v2461
        %2510 = vst [vmem:[#allocation3 + $0xd0] sm:$0xff] %v2462
        %2511 = vst [vmem:[#allocation3 + $0xd8] sm:$0xff] %v2463
        %2512 = vst [vmem:[#allocation3 + $0xe0] sm:$0xff] %v2464
        %2513 = vst [vmem:[#allocation3 + $0xe8] sm:$0xff] %v2465
        %2514 = vst [vmem:[#allocation3 + $0xf0] sm:$0xff] %v2466
        %2515 = vst [vmem:[#allocation3 + $0xf8] sm:$0xff] %v2467
        %2516 = vst [vmem:[#allocation3 + $0x100] sm:$0xff] %v2468
        %2517 = vst [vmem:[#allocation3 + $0x108] sm:$0xff] %v2469
        %2518 = vst [vmem:[#allocation3 + $0x110] sm:$0xff] %v2470
        %2519 = vst [vmem:[#allocation3 + $0x118] sm:$0xff] %v2471
        %2520 = vst [vmem:[#allocation3 + $0x120] sm:$0xff] %v2472
        %2521 = vst [vmem:[#allocation3 + $0x128] sm:$0xff] %v2473
        %2522 = vst [vmem:[#allocation3 + $0x130] sm:$0xff] %v2474
        %2523 = vst [vmem:[#allocation3 + $0x138] sm:$0xff] %v2475
        %2524 = vst [vmem:[#allocation3 + $0x140] sm:$0xff] %v2476
        %2525 = vst [vmem:[#allocation3 + $0x148] sm:$0xff] %v2477
        %2526 = vst [vmem:[#allocation3 + $0x150] sm:$0xff] %v2478
        %2527 = vst [vmem:[#allocation3 + $0x158] sm:$0xff] %v2479
        %2528 = vst [vmem:[#allocation3 + $0x160] sm:$0xff] %v2480
        %2529 = vst [vmem:[#allocation3 + $0x168] sm:$0xff] %v2481
        %2530 = vst [vmem:[#allocation3 + $0x170] sm:$0xff] %v2482
        %2531 = vst [vmem:[#allocation3 + $0x178] sm:$0xff] %v2483
        %v2532 = vld [vmem:[#allocation2 + $0x8] sm:$0x80]
        %v2533 = vld [vmem:[#allocation2 + $0x10] sm:$0xff]
        %v2534 = vld [vmem:[#allocation2 + $0x18] sm:$0xff]
        %v2535 = vld [vmem:[#allocation2 + $0x20] sm:$0xff]
        %v2536 = vld [vmem:[#allocation2 + $0x28] sm:$0xff]
        %v2537 = vld [vmem:[#allocation2 + $0x30] sm:$0xff]
        %v2538 = vld [vmem:[#allocation2 + $0x38] sm:$0xff]
        %v2539 = vld [vmem:[#allocation2 + $0x40] sm:$0xff]
        %v2540 = vld [vmem:[#allocation2 + $0x48] sm:$0xff]
        %v2541 = vld [vmem:[#allocation2 + $0x50] sm:$0xff]
        %v2542 = vld [vmem:[#allocation2 + $0x58] sm:$0xff]
        %v2543 = vld [vmem:[#allocation2 + $0x60] sm:$0xff]
        %v2544 = vld [vmem:[#allocation2 + $0x68] sm:$0xff]
        %v2545 = vld [vmem:[#allocation2 + $0x70] sm:$0xff]
        %v2546 = vld [vmem:[#allocation2 + $0x78] sm:$0xff]
        %v2547 = vld [vmem:[#allocation2 + $0x80] sm:$0xff]
        %v2548 = vld [vmem:[#allocation2 + $0x88] sm:$0xff]
        %v2549 = vld [vmem:[#allocation2 + $0x90] sm:$0xff]
        %v2550 = vld [vmem:[#allocation2 + $0x98] sm:$0xff]
        %v2551 = vld [vmem:[#allocation2 + $0xa0] sm:$0xff]
        %v2552 = vld [vmem:[#allocation2 + $0xa8] sm:$0xff]
        %v2553 = vld [vmem:[#allocation2 + $0xb0] sm:$0xff]
        %v2554 = vld [vmem:[#allocation2 + $0xb8] sm:$0xff]
        %v2555 = vld [vmem:[#allocation2 + $0xc0] sm:$0xff]
        %v2556 = vld [vmem:[#allocation2 + $0xc8] sm:$0xff]
        %s2557 = scalar_lea.vmem %s3, 192
        %v2558 = vld [vmem:[%s2557] sm:$0xf]
        %v2559 = vld [vmem:[%s2557 + $0x4] sm:$0xf]
        %v2560 = vld [vmem:[%s2557 + $0x8] sm:$0xf]
        %v2561 = vld [vmem:[%s2557 + $0xc] sm:$0xf]
        %v2562 = vld [vmem:[%s2557 + $0x10] sm:$0xf]
        %v2563 = vld [vmem:[%s2557 + $0x14] sm:$0xf]
        %v2564 = vld [vmem:[%s2557 + $0x18] sm:$0xf]
        %v2565 = vld [vmem:[%s2557 + $0x1c] sm:$0xf]
        %v2566 = vld [vmem:[%s2557 + $0x20] sm:$0xf]
        %v2567 = vld [vmem:[%s2557 + $0x24] sm:$0xf]
        %v2568 = vld [vmem:[%s2557 + $0x28] sm:$0xf]
        %v2569 = vld [vmem:[%s2557 + $0x2c] sm:$0xf]
        %v2570 = vld [vmem:[%s2557 + $0x30] sm:$0xf]
        %v2571 = vld [vmem:[%s2557 + $0x34] sm:$0xf]
        %v2572 = vld [vmem:[%s2557 + $0x38] sm:$0xf]
        %v2573 = vld [vmem:[%s2557 + $0x3c] sm:$0xf]
        %vm2574 = vsmask.f32 256
        %v2576 = vshrl.u32 %v2532, 16
        %v2578 = vrot.slane %v2576, 7
        %v2580 = vshrl.u32 %v2533, 16
        %v2582 = vrot.slane %v2580, 7
        %v2583 = vshll.u32 %v2533, 16
        %v2585 = vor.u32 %v2582, %v2583
        %v2586 = vsel %vm2574, %v2578, %v2585
        %v2588 = vshrl.u32 %v2534, 16
        %v2590 = vrot.slane %v2588, 7
        %v2591 = vshll.u32 %v2534, 16
        %v2593 = vor.u32 %v2590, %v2591
        %v2594 = vsel %vm2574, %v2582, %v2593
        %v2596 = vshrl.u32 %v2535, 16
        %v2598 = vrot.slane %v2596, 7
        %v2599 = vshll.u32 %v2535, 16
        %v2601 = vor.u32 %v2598, %v2599
        %v2602 = vsel %vm2574, %v2590, %v2601
        %v2604 = vshrl.u32 %v2536, 16
        %v2606 = vrot.slane %v2604, 7
        %v2607 = vshll.u32 %v2536, 16
        %v2609 = vor.u32 %v2606, %v2607
        %v2610 = vsel %vm2574, %v2598, %v2609
        %v2612 = vshrl.u32 %v2537, 16
        %v2614 = vrot.slane %v2612, 7
        %v2615 = vshll.u32 %v2537, 16
        %v2617 = vor.u32 %v2614, %v2615
        %v2618 = vsel %vm2574, %v2606, %v2617
        %v2620 = vshrl.u32 %v2538, 16
        %v2622 = vrot.slane %v2620, 7
        %v2623 = vshll.u32 %v2538, 16
        %v2625 = vor.u32 %v2622, %v2623
        %v2626 = vsel %vm2574, %v2614, %v2625
        %v2628 = vshrl.u32 %v2539, 16
        %v2630 = vrot.slane %v2628, 7
        %v2631 = vshll.u32 %v2539, 16
        %v2633 = vor.u32 %v2630, %v2631
        %v2634 = vsel %vm2574, %v2622, %v2633
        %v2636 = vshrl.u32 %v2540, 16
        %v2638 = vrot.slane %v2636, 7
        %v2639 = vshll.u32 %v2540, 16
        %v2641 = vor.u32 %v2638, %v2639
        %v2642 = vsel %vm2574, %v2630, %v2641
        %v2644 = vshrl.u32 %v2541, 16
        %v2646 = vrot.slane %v2644, 7
        %v2647 = vshll.u32 %v2541, 16
        %v2649 = vor.u32 %v2646, %v2647
        %v2650 = vsel %vm2574, %v2638, %v2649
        %v2652 = vshrl.u32 %v2542, 16
        %v2654 = vrot.slane %v2652, 7
        %v2655 = vshll.u32 %v2542, 16
        %v2657 = vor.u32 %v2654, %v2655
        %v2658 = vsel %vm2574, %v2646, %v2657
        %v2660 = vshrl.u32 %v2543, 16
        %v2662 = vrot.slane %v2660, 7
        %v2663 = vshll.u32 %v2543, 16
        %v2665 = vor.u32 %v2662, %v2663
        %v2666 = vsel %vm2574, %v2654, %v2665
        %v2668 = vshrl.u32 %v2544, 16
        %v2670 = vrot.slane %v2668, 7
        %v2671 = vshll.u32 %v2544, 16
        %v2673 = vor.u32 %v2670, %v2671
        %v2674 = vsel %vm2574, %v2662, %v2673
        %v2676 = vshrl.u32 %v2545, 16
        %v2678 = vrot.slane %v2676, 7
        %v2679 = vshll.u32 %v2545, 16
        %v2681 = vor.u32 %v2678, %v2679
        %v2682 = vsel %vm2574, %v2670, %v2681
        %v2684 = vshrl.u32 %v2546, 16
        %v2686 = vrot.slane %v2684, 7
        %v2687 = vshll.u32 %v2546, 16
        %v2689 = vor.u32 %v2686, %v2687
        %v2690 = vsel %vm2574, %v2678, %v2689
        %v2692 = vshrl.u32 %v2547, 16
        %v2694 = vrot.slane %v2692, 7
        %v2695 = vshll.u32 %v2547, 16
        %v2697 = vor.u32 %v2694, %v2695
        %v2698 = vsel %vm2574, %v2686, %v2697
        %v2700 = vshrl.u32 %v2548, 16
        %v2702 = vrot.slane %v2700, 7
        %v2703 = vshll.u32 %v2548, 16
        %v2705 = vor.u32 %v2702, %v2703
        %v2706 = vsel %vm2574, %v2694, %v2705
        %v2708 = vshrl.u32 %v2549, 16
        %v2710 = vrot.slane %v2708, 7
        %v2711 = vshll.u32 %v2549, 16
        %v2713 = vor.u32 %v2710, %v2711
        %v2714 = vsel %vm2574, %v2702, %v2713
        %v2716 = vshrl.u32 %v2550, 16
        %v2718 = vrot.slane %v2716, 7
        %v2719 = vshll.u32 %v2550, 16
        %v2721 = vor.u32 %v2718, %v2719
        %v2722 = vsel %vm2574, %v2710, %v2721
        %v2724 = vshrl.u32 %v2551, 16
        %v2726 = vrot.slane %v2724, 7
        %v2727 = vshll.u32 %v2551, 16
        %v2729 = vor.u32 %v2726, %v2727
        %v2730 = vsel %vm2574, %v2718, %v2729
        %v2732 = vshrl.u32 %v2552, 16
        %v2734 = vrot.slane %v2732, 7
        %v2735 = vshll.u32 %v2552, 16
        %v2737 = vor.u32 %v2734, %v2735
        %v2738 = vsel %vm2574, %v2726, %v2737
        %v2740 = vshrl.u32 %v2553, 16
        %v2742 = vrot.slane %v2740, 7
        %v2743 = vshll.u32 %v2553, 16
        %v2745 = vor.u32 %v2742, %v2743
        %v2746 = vsel %vm2574, %v2734, %v2745
        %v2748 = vshrl.u32 %v2554, 16
        %v2750 = vrot.slane %v2748, 7
        %v2751 = vshll.u32 %v2554, 16
        %v2753 = vor.u32 %v2750, %v2751
        %v2754 = vsel %vm2574, %v2742, %v2753
        %v2756 = vshrl.u32 %v2555, 16
        %v2758 = vrot.slane %v2756, 7
        %v2759 = vshll.u32 %v2555, 16
        %v2761 = vor.u32 %v2758, %v2759
        %v2762 = vsel %vm2574, %v2750, %v2761
        %v2764 = vshrl.u32 %v2556, 16
        %v2766 = vrot.slane %v2764, 7
        %v2767 = vshll.u32 %v2556, 16
        %v2769 = vor.u32 %v2766, %v2767
        %v2770 = vsel %vm2574, %v2758, %v2769
        %v2811 = vunpack.c.l.b16 %v2558
        %v2812 = vunpack.c.l.b16 %v2559
        %v2813 = vunpack.c.l.b16 %v2560
        %v2814 = vunpack.c.l.b16 %v2561
        %v2815 = vunpack.c.l.b16 %v2562
        %v2816 = vunpack.c.l.b16 %v2563
        %v2817 = vunpack.c.l.b16 %v2564
        %v2818 = vunpack.c.l.b16 %v2565
        %v2819 = vunpack.c.l.b16 %v2566
        %v2820 = vunpack.c.l.b16 %v2567
        %v2821 = vunpack.c.l.b16 %v2568
        %v2822 = vunpack.c.l.b16 %v2569
        %v2823 = vunpack.c.l.b16 %v2570
        %v2824 = vunpack.c.l.b16 %v2571
        %v2825 = vunpack.c.l.b16 %v2572
        %v2826 = vunpack.c.l.b16 %v2573
        %v2827 = vpack.c.b16 %v2812, %v2811
        %v2828 = vpack.c.b16 %v2814, %v2813
        %v2829 = vpack.c.b16 %v2816, %v2815
        %v2830 = vpack.c.b16 %v2818, %v2817
        %v2831 = vpack.c.b16 %v2820, %v2819
        %v2832 = vpack.c.b16 %v2822, %v2821
        %v2833 = vpack.c.b16 %v2824, %v2823
        %v2834 = vpack.c.b16 %v2826, %v2825
        %2843 = vmatprep.subr.bf16.mxu0 0
        %2844 = vmatpush1.bf16.msra.mxu0 %v2827
        %2845 = vmatprep.subr.bf16.mxu0 0
        %2846 = vmatpush1.bf16.msra.mxu0 %v2828
        %2847 = vmatprep.subr.bf16.mxu0 0
        %2848 = vmatpush1.bf16.msra.mxu0 %v2829
        %2849 = vmatprep.subr.bf16.mxu0 0
        %2850 = vmatpush1.bf16.msra.mxu0 %v2830
        %2851 = vmatprep.subr.bf16.mxu0 0
        %2852 = vmatpush1.bf16.msra.mxu0 %v2831
        %2853 = vmatprep.subr.bf16.mxu0 0
        %2854 = vmatpush1.bf16.msra.mxu0 %v2832
        %2855 = vmatprep.subr.bf16.mxu0 0
        %2856 = vmatpush1.bf16.msra.mxu0 %v2833
        %2857 = vmatprep.subr.bf16.mxu0 0
        %2858 = vmatpush1.bf16.msra.mxu0 %v2834
        %2859 = vmatprep.subr.bf16.mxu0 0
        %2860 = vmatpush1.bf16.msra.mxu0 0
        %2861 = vmatprep.subr.bf16.mxu0 0
        %2862 = vmatpush1.bf16.msra.mxu0 0
        %2863 = vmatprep.subr.bf16.mxu0 0
        %2864 = vmatpush1.bf16.msra.mxu0 0
        %2865 = vmatprep.subr.bf16.mxu0 0
        %2866 = vmatpush1.bf16.msra.mxu0 0
        %2867 = vmatprep.subr.bf16.mxu0 0
        %2868 = vmatpush1.bf16.msra.mxu0 0
        %2869 = vmatprep.subr.bf16.mxu0 0
        %2870 = vmatpush1.bf16.msra.mxu0 0
        %2871 = vmatprep.subr.bf16.mxu0 0
        %2872 = vmatpush1.bf16.msra.mxu0 0
        %2873 = vmatprep.subr.bf16.mxu0 0
        %2874 = vmatpush1.bf16.msra.mxu0 0
        %2875 = vmatprep.mubr.bf16.mxu0 0
        %2876 = vmatmul.mubr.bf16.gmra.mrb[0].mxu0 %v2586
        %v2877 = vpop.f32.mrb[0].mxu0
        %v2878 = vadd.f32 0.0, %v2877
        %v2879 = vpop.f32.mrb[0].mxu0
        %v2880 = vpop.f32.mrb[0].mxu0
        %v2881 = vadd.f32 0.0, %v2880
        %v2882 = vpop.f32.mrb[0].mxu0
        %2883 = vmatprep.mubr.bf16.mxu0 0
        %2884 = vmatmul.mubr.bf16.gmra.mrb[0].mxu0 %v2594
        %v2885 = vpop.f32.mrb[0].mxu0
        %v2886 = vadd.f32 0.0, %v2885
        %v2887 = vpop.f32.mrb[0].mxu0
        %v2888 = vpop.f32.mrb[0].mxu0
        %v2889 = vadd.f32 0.0, %v2888
        %v2890 = vpop.f32.mrb[0].mxu0
        %2891 = vmatprep.mubr.bf16.mxu0 0
        %2892 = vmatmul.mubr.bf16.gmra.mrb[0].mxu0 %v2602
        %v2893 = vpop.f32.mrb[0].mxu0
        %v2894 = vadd.f32 0.0, %v2893
        %v2895 = vpop.f32.mrb[0].mxu0
        %v2896 = vpop.f32.mrb[0].mxu0
        %v2897 = vadd.f32 0.0, %v2896
        %v2898 = vpop.f32.mrb[0].mxu0
        %2899 = vmatprep.mubr.bf16.mxu0 0
        %2900 = vmatmul.mubr.bf16.gmra.mrb[0].mxu0 %v2610
        %v2901 = vpop.f32.mrb[0].mxu0
        %v2902 = vadd.f32 0.0, %v2901
        %v2903 = vpop.f32.mrb[0].mxu0
        %v2904 = vpop.f32.mrb[0].mxu0
        %v2905 = vadd.f32 0.0, %v2904
        %v2906 = vpop.f32.mrb[0].mxu0
        %2907 = vmatprep.mubr.bf16.mxu0 0
        %2908 = vmatmul.mubr.bf16.gmra.mrb[0].mxu0 %v2618
        %v2909 = vpop.f32.mrb[0].mxu0
        %v2910 = vadd.f32 0.0, %v2909
        %v2911 = vpop.f32.mrb[0].mxu0
        %v2912 = vpop.f32.mrb[0].mxu0
        %v2913 = vadd.f32 0.0, %v2912
        %v2914 = vpop.f32.mrb[0].mxu0
        %2915 = vmatprep.mubr.bf16.mxu0 0
        %2916 = vmatmul.mubr.bf16.gmra.mrb[0].mxu0 %v2626
        %v2917 = vpop.f32.mrb[0].mxu0
        %v2918 = vadd.f32 0.0, %v2917
        %v2919 = vpop.f32.mrb[0].mxu0
        %v2920 = vpop.f32.mrb[0].mxu0
        %v2921 = vadd.f32 0.0, %v2920
        %v2922 = vpop.f32.mrb[0].mxu0
        %2923 = vmatprep.mubr.bf16.mxu0 0
        %2924 = vmatmul.mubr.bf16.gmra.mrb[0].mxu0 %v2634
        %v2925 = vpop.f32.mrb[0].mxu0
        %v2926 = vadd.f32 0.0, %v2925
        %v2927 = vpop.f32.mrb[0].mxu0
        %v2928 = vpop.f32.mrb[0].mxu0
        %v2929 = vadd.f32 0.0, %v2928
        %v2930 = vpop.f32.mrb[0].mxu0
        %2931 = vmatprep.mubr.bf16.mxu0 0
        %2932 = vmatmul.mubr.bf16.gmra.mrb[0].mxu0 %v2642
        %v2933 = vpop.f32.mrb[0].mxu0
        %v2934 = vadd.f32 0.0, %v2933
        %v2935 = vpop.f32.mrb[0].mxu0
        %v2936 = vpop.f32.mrb[0].mxu0
        %v2937 = vadd.f32 0.0, %v2936
        %v2938 = vpop.f32.mrb[0].mxu0
        %2939 = vmatprep.mubr.bf16.mxu0 0
        %2940 = vmatmul.mubr.bf16.gmra.mrb[0].mxu0 %v2650
        %v2941 = vpop.f32.mrb[0].mxu0
        %v2942 = vadd.f32 0.0, %v2941
        %v2943 = vpop.f32.mrb[0].mxu0
        %v2944 = vpop.f32.mrb[0].mxu0
        %v2945 = vadd.f32 0.0, %v2944
        %v2946 = vpop.f32.mrb[0].mxu0
        %2947 = vmatprep.mubr.bf16.mxu0 0
        %2948 = vmatmul.mubr.bf16.gmra.mrb[0].mxu0 %v2658
        %v2949 = vpop.f32.mrb[0].mxu0
        %v2950 = vadd.f32 0.0, %v2949
        %v2951 = vpop.f32.mrb[0].mxu0
        %v2952 = vpop.f32.mrb[0].mxu0
        %v2953 = vadd.f32 0.0, %v2952
        %v2954 = vpop.f32.mrb[0].mxu0
        %2955 = vmatprep.mubr.bf16.mxu0 0
        %2956 = vmatmul.mubr.bf16.gmra.mrb[0].mxu0 %v2666
        %v2957 = vpop.f32.mrb[0].mxu0
        %v2958 = vadd.f32 0.0, %v2957
        %v2959 = vpop.f32.mrb[0].mxu0
        %v2960 = vpop.f32.mrb[0].mxu0
        %v2961 = vadd.f32 0.0, %v2960
        %v2962 = vpop.f32.mrb[0].mxu0
        %2963 = vmatprep.mubr.bf16.mxu0 0
        %2964 = vmatmul.mubr.bf16.gmra.mrb[0].mxu0 %v2674
        %v2965 = vpop.f32.mrb[0].mxu0
        %v2966 = vadd.f32 0.0, %v2965
        %v2967 = vpop.f32.mrb[0].mxu0
        %v2968 = vpop.f32.mrb[0].mxu0
        %v2969 = vadd.f32 0.0, %v2968
        %v2970 = vpop.f32.mrb[0].mxu0
        %2971 = vmatprep.mubr.bf16.mxu0 0
        %2972 = vmatmul.mubr.bf16.gmra.mrb[0].mxu0 %v2682
        %v2973 = vpop.f32.mrb[0].mxu0
        %v2974 = vadd.f32 0.0, %v2973
        %v2975 = vpop.f32.mrb[0].mxu0
        %v2976 = vpop.f32.mrb[0].mxu0
        %v2977 = vadd.f32 0.0, %v2976
        %v2978 = vpop.f32.mrb[0].mxu0
        %2979 = vmatprep.mubr.bf16.mxu0 0
        %2980 = vmatmul.mubr.bf16.gmra.mrb[0].mxu0 %v2690
        %v2981 = vpop.f32.mrb[0].mxu0
        %v2982 = vadd.f32 0.0, %v2981
        %v2983 = vpop.f32.mrb[0].mxu0
        %v2984 = vpop.f32.mrb[0].mxu0
        %v2985 = vadd.f32 0.0, %v2984
        %v2986 = vpop.f32.mrb[0].mxu0
        %2987 = vmatprep.mubr.bf16.mxu0 0
        %2988 = vmatmul.mubr.bf16.gmra.mrb[0].mxu0 %v2698
        %v2989 = vpop.f32.mrb[0].mxu0
        %v2990 = vadd.f32 0.0, %v2989
        %v2991 = vpop.f32.mrb[0].mxu0
        %v2992 = vpop.f32.mrb[0].mxu0
        %v2993 = vadd.f32 0.0, %v2992
        %v2994 = vpop.f32.mrb[0].mxu0
        %2995 = vmatprep.mubr.bf16.mxu0 0
        %2996 = vmatmul.mubr.bf16.gmra.mrb[0].mxu0 %v2706
        %v2997 = vpop.f32.mrb[0].mxu0
        %v2998 = vadd.f32 0.0, %v2997
        %v2999 = vpop.f32.mrb[0].mxu0
        %v3000 = vpop.f32.mrb[0].mxu0
        %v3001 = vadd.f32 0.0, %v3000
        %v3002 = vpop.f32.mrb[0].mxu0
        %3003 = vmatprep.mubr.bf16.mxu0 0
        %3004 = vmatmul.mubr.bf16.gmra.mrb[0].mxu0 %v2714
        %v3005 = vpop.f32.mrb[0].mxu0
        %v3006 = vadd.f32 0.0, %v3005
        %v3007 = vpop.f32.mrb[0].mxu0
        %v3008 = vpop.f32.mrb[0].mxu0
        %v3009 = vadd.f32 0.0, %v3008
        %v3010 = vpop.f32.mrb[0].mxu0
        %3011 = vmatprep.mubr.bf16.mxu0 0
        %3012 = vmatmul.mubr.bf16.gmra.mrb[0].mxu0 %v2722
        %v3013 = vpop.f32.mrb[0].mxu0
        %v3014 = vadd.f32 0.0, %v3013
        %v3015 = vpop.f32.mrb[0].mxu0
        %v3016 = vpop.f32.mrb[0].mxu0
        %v3017 = vadd.f32 0.0, %v3016
        %v3018 = vpop.f32.mrb[0].mxu0
        %3019 = vmatprep.mubr.bf16.mxu0 0
        %3020 = vmatmul.mubr.bf16.gmra.mrb[0].mxu0 %v2730
        %v3021 = vpop.f32.mrb[0].mxu0
        %v3022 = vadd.f32 0.0, %v3021
        %v3023 = vpop.f32.mrb[0].mxu0
        %v3024 = vpop.f32.mrb[0].mxu0
        %v3025 = vadd.f32 0.0, %v3024
        %v3026 = vpop.f32.mrb[0].mxu0
        %3027 = vmatprep.mubr.bf16.mxu0 0
        %3028 = vmatmul.mubr.bf16.gmra.mrb[0].mxu0 %v2738
        %v3029 = vpop.f32.mrb[0].mxu0
        %v3030 = vadd.f32 0.0, %v3029
        %v3031 = vpop.f32.mrb[0].mxu0
        %v3032 = vpop.f32.mrb[0].mxu0
        %v3033 = vadd.f32 0.0, %v3032
        %v3034 = vpop.f32.mrb[0].mxu0
        %3035 = vmatprep.mubr.bf16.mxu0 0
        %3036 = vmatmul.mubr.bf16.gmra.mrb[0].mxu0 %v2746
        %v3037 = vpop.f32.mrb[0].mxu0
        %v3038 = vadd.f32 0.0, %v3037
        %v3039 = vpop.f32.mrb[0].mxu0
        %v3040 = vpop.f32.mrb[0].mxu0
        %v3041 = vadd.f32 0.0, %v3040
        %v3042 = vpop.f32.mrb[0].mxu0
        %3043 = vmatprep.mubr.bf16.mxu0 0
        %3044 = vmatmul.mubr.bf16.gmra.mrb[0].mxu0 %v2754
        %v3045 = vpop.f32.mrb[0].mxu0
        %v3046 = vadd.f32 0.0, %v3045
        %v3047 = vpop.f32.mrb[0].mxu0
        %v3048 = vpop.f32.mrb[0].mxu0
        %v3049 = vadd.f32 0.0, %v3048
        %v3050 = vpop.f32.mrb[0].mxu0
        %3051 = vmatprep.mubr.bf16.mxu0 0
        %3052 = vmatmul.mubr.bf16.gmra.mrb[0].mxu0 %v2762
        %v3053 = vpop.f32.mrb[0].mxu0
        %v3054 = vadd.f32 0.0, %v3053
        %v3055 = vpop.f32.mrb[0].mxu0
        %v3056 = vpop.f32.mrb[0].mxu0
        %v3057 = vadd.f32 0.0, %v3056
        %v3058 = vpop.f32.mrb[0].mxu0
        %3059 = vmatprep.mubr.bf16.mxu0 0
        %3060 = vmatmul.mubr.bf16.gmra.mrb[0].mxu0 %v2770
        %v3061 = vpop.f32.mrb[0].mxu0
        %v3062 = vadd.f32 0.0, %v3061
        %v3063 = vpop.f32.mrb[0].mxu0
        %v3064 = vpop.f32.mrb[0].mxu0
        %v3065 = vadd.f32 0.0, %v3064
        %v3066 = vpop.f32.mrb[0].mxu0
        %3067 = vdwg.mxu0
        %v3068 = vld [vmem:[#allocation3] sm:$0xff]
        %v3069 = vld [vmem:[#allocation3 + $0x8] sm:$0xff]
        %v3070 = vld [vmem:[#allocation3 + $0x10] sm:$0xff]
        %v3071 = vld [vmem:[#allocation3 + $0x18] sm:$0xff]
        %v3072 = vld [vmem:[#allocation3 + $0x20] sm:$0xff]
        %v3073 = vld [vmem:[#allocation3 + $0x28] sm:$0xff]
        %v3074 = vld [vmem:[#allocation3 + $0x30] sm:$0xff]
        %v3075 = vld [vmem:[#allocation3 + $0x38] sm:$0xff]
        %v3076 = vld [vmem:[#allocation3 + $0x40] sm:$0xff]
        %v3077 = vld [vmem:[#allocation3 + $0x48] sm:$0xff]
        %v3078 = vld [vmem:[#allocation3 + $0x50] sm:$0xff]
        %v3079 = vld [vmem:[#allocation3 + $0x58] sm:$0xff]
        %v3080 = vld [vmem:[#allocation3 + $0x60] sm:$0xff]
        %v3081 = vld [vmem:[#allocation3 + $0x68] sm:$0xff]
        %v3082 = vld [vmem:[#allocation3 + $0x70] sm:$0xff]
        %v3083 = vld [vmem:[#allocation3 + $0x78] sm:$0xff]
        %v3084 = vld [vmem:[#allocation3 + $0x80] sm:$0xff]
        %v3085 = vld [vmem:[#allocation3 + $0x88] sm:$0xff]
        %v3086 = vld [vmem:[#allocation3 + $0x90] sm:$0xff]
        %v3087 = vld [vmem:[#allocation3 + $0x98] sm:$0xff]
        %v3088 = vld [vmem:[#allocation3 + $0xa0] sm:$0xff]
        %v3089 = vld [vmem:[#allocation3 + $0xa8] sm:$0xff]
        %v3090 = vld [vmem:[#allocation3 + $0xb0] sm:$0xff]
        %v3091 = vld [vmem:[#allocation3 + $0xb8] sm:$0xff]
        %v3092 = vld [vmem:[#allocation3 + $0xc0] sm:$0xff]
        %v3093 = vld [vmem:[#allocation3 + $0xc8] sm:$0xff]
        %v3094 = vld [vmem:[#allocation3 + $0xd0] sm:$0xff]
        %v3095 = vld [vmem:[#allocation3 + $0xd8] sm:$0xff]
        %v3096 = vld [vmem:[#allocation3 + $0xe0] sm:$0xff]
        %v3097 = vld [vmem:[#allocation3 + $0xe8] sm:$0xff]
        %v3098 = vld [vmem:[#allocation3 + $0xf0] sm:$0xff]
        %v3099 = vld [vmem:[#allocation3 + $0xf8] sm:$0xff]
        %v3100 = vld [vmem:[#allocation3 + $0x100] sm:$0xff]
        %v3101 = vld [vmem:[#allocation3 + $0x108] sm:$0xff]
        %v3102 = vld [vmem:[#allocation3 + $0x110] sm:$0xff]
        %v3103 = vld [vmem:[#allocation3 + $0x118] sm:$0xff]
        %v3104 = vld [vmem:[#allocation3 + $0x120] sm:$0xff]
        %v3105 = vld [vmem:[#allocation3 + $0x128] sm:$0xff]
        %v3106 = vld [vmem:[#allocation3 + $0x130] sm:$0xff]
        %v3107 = vld [vmem:[#allocation3 + $0x138] sm:$0xff]
        %v3108 = vld [vmem:[#allocation3 + $0x140] sm:$0xff]
        %v3109 = vld [vmem:[#allocation3 + $0x148] sm:$0xff]
        %v3110 = vld [vmem:[#allocation3 + $0x150] sm:$0xff]
        %v3111 = vld [vmem:[#allocation3 + $0x158] sm:$0xff]
        %v3112 = vld [vmem:[#allocation3 + $0x160] sm:$0xff]
        %v3113 = vld [vmem:[#allocation3 + $0x168] sm:$0xff]
        %v3114 = vld [vmem:[#allocation3 + $0x170] sm:$0xff]
        %v3115 = vld [vmem:[#allocation3 + $0x178] sm:$0xff]
        %v3116 = vadd.f32 %v3068, %v2878
        %v3117 = vadd.f32 %v3069, %v2881
        %v3118 = vadd.f32 %v3070, %v2886
        %v3119 = vadd.f32 %v3071, %v2889
        %v3120 = vadd.f32 %v3072, %v2894
        %v3121 = vadd.f32 %v3073, %v2897
        %v3122 = vadd.f32 %v3074, %v2902
        %v3123 = vadd.f32 %v3075, %v2905
        %v3124 = vadd.f32 %v3076, %v2910
        %v3125 = vadd.f32 %v3077, %v2913
        %v3126 = vadd.f32 %v3078, %v2918
        %v3127 = vadd.f32 %v3079, %v2921
        %v3128 = vadd.f32 %v3080, %v2926
        %v3129 = vadd.f32 %v3081, %v2929
        %v3130 = vadd.f32 %v3082, %v2934
        %v3131 = vadd.f32 %v3083, %v2937
        %v3132 = vadd.f32 %v3084, %v2942
        %v3133 = vadd.f32 %v3085, %v2945
        %v3134 = vadd.f32 %v3086, %v2950
        %v3135 = vadd.f32 %v3087, %v2953
        %v3136 = vadd.f32 %v3088, %v2958
        %v3137 = vadd.f32 %v3089, %v2961
        %v3138 = vadd.f32 %v3090, %v2966
        %v3139 = vadd.f32 %v3091, %v2969
        %v3140 = vadd.f32 %v3092, %v2974
        %v3141 = vadd.f32 %v3093, %v2977
        %v3142 = vadd.f32 %v3094, %v2982
        %v3143 = vadd.f32 %v3095, %v2985
        %v3144 = vadd.f32 %v3096, %v2990
        %v3145 = vadd.f32 %v3097, %v2993
        %v3146 = vadd.f32 %v3098, %v2998
        %v3147 = vadd.f32 %v3099, %v3001
        %v3148 = vadd.f32 %v3100, %v3006
        %v3149 = vadd.f32 %v3101, %v3009
        %v3150 = vadd.f32 %v3102, %v3014
        %v3151 = vadd.f32 %v3103, %v3017
        %v3152 = vadd.f32 %v3104, %v3022
        %v3153 = vadd.f32 %v3105, %v3025
        %v3154 = vadd.f32 %v3106, %v3030
        %v3155 = vadd.f32 %v3107, %v3033
        %v3156 = vadd.f32 %v3108, %v3038
        %v3157 = vadd.f32 %v3109, %v3041
        %v3158 = vadd.f32 %v3110, %v3046
        %v3159 = vadd.f32 %v3111, %v3049
        %v3160 = vadd.f32 %v3112, %v3054
        %v3161 = vadd.f32 %v3113, %v3057
        %v3162 = vadd.f32 %v3114, %v3062
        %v3163 = vadd.f32 %v3115, %v3065
        %3164 = vst [vmem:[#allocation3] sm:$0xff] %v3116
        %3165 = vst [vmem:[#allocation3 + $0x8] sm:$0xff] %v3117
        %3166 = vst [vmem:[#allocation3 + $0x10] sm:$0xff] %v3118
        %3167 = vst [vmem:[#allocation3 + $0x18] sm:$0xff] %v3119
        %3168 = vst [vmem:[#allocation3 + $0x20] sm:$0xff] %v3120
        %3169 = vst [vmem:[#allocation3 + $0x28] sm:$0xff] %v3121
        %3170 = vst [vmem:[#allocation3 + $0x30] sm:$0xff] %v3122
        %3171 = vst [vmem:[#allocation3 + $0x38] sm:$0xff] %v3123
        %3172 = vst [vmem:[#allocation3 + $0x40] sm:$0xff] %v3124
        %3173 = vst [vmem:[#allocation3 + $0x48] sm:$0xff] %v3125
        %3174 = vst [vmem:[#allocation3 + $0x50] sm:$0xff] %v3126
        %3175 = vst [vmem:[#allocation3 + $0x58] sm:$0xff] %v3127
        %3176 = vst [vmem:[#allocation3 + $0x60] sm:$0xff] %v3128
        %3177 = vst [vmem:[#allocation3 + $0x68] sm:$0xff] %v3129
        %3178 = vst [vmem:[#allocation3 + $0x70] sm:$0xff] %v3130
        %3179 = vst [vmem:[#allocation3 + $0x78] sm:$0xff] %v3131
        %3180 = vst [vmem:[#allocation3 + $0x80] sm:$0xff] %v3132
        %3181 = vst [vmem:[#allocation3 + $0x88] sm:$0xff] %v3133
        %3182 = vst [vmem:[#allocation3 + $0x90] sm:$0xff] %v3134
        %3183 = vst [vmem:[#allocation3 + $0x98] sm:$0xff] %v3135
        %3184 = vst [vmem:[#allocation3 + $0xa0] sm:$0xff] %v3136
        %3185 = vst [vmem:[#allocation3 + $0xa8] sm:$0xff] %v3137
        %3186 = vst [vmem:[#allocation3 + $0xb0] sm:$0xff] %v3138
        %3187 = vst [vmem:[#allocation3 + $0xb8] sm:$0xff] %v3139
        %3188 = vst [vmem:[#allocation3 + $0xc0] sm:$0xff] %v3140
        %3189 = vst [vmem:[#allocation3 + $0xc8] sm:$0xff] %v3141
        %3190 = vst [vmem:[#allocation3 + $0xd0] sm:$0xff] %v3142
        %3191 = vst [vmem:[#allocation3 + $0xd8] sm:$0xff] %v3143
        %3192 = vst [vmem:[#allocation3 + $0xe0] sm:$0xff] %v3144
        %3193 = vst [vmem:[#allocation3 + $0xe8] sm:$0xff] %v3145
        %3194 = vst [vmem:[#allocation3 + $0xf0] sm:$0xff] %v3146
        %3195 = vst [vmem:[#allocation3 + $0xf8] sm:$0xff] %v3147
        %3196 = vst [vmem:[#allocation3 + $0x100] sm:$0xff] %v3148
        %3197 = vst [vmem:[#allocation3 + $0x108] sm:$0xff] %v3149
        %3198 = vst [vmem:[#allocation3 + $0x110] sm:$0xff] %v3150
        %3199 = vst [vmem:[#allocation3 + $0x118] sm:$0xff] %v3151
        %3200 = vst [vmem:[#allocation3 + $0x120] sm:$0xff] %v3152
        %3201 = vst [vmem:[#allocation3 + $0x128] sm:$0xff] %v3153
        %3202 = vst [vmem:[#allocation3 + $0x130] sm:$0xff] %v3154
        %3203 = vst [vmem:[#allocation3 + $0x138] sm:$0xff] %v3155
        %3204 = vst [vmem:[#allocation3 + $0x140] sm:$0xff] %v3156
        %3205 = vst [vmem:[#allocation3 + $0x148] sm:$0xff] %v3157
        %3206 = vst [vmem:[#allocation3 + $0x150] sm:$0xff] %v3158
        %3207 = vst [vmem:[#allocation3 + $0x158] sm:$0xff] %v3159
        %3208 = vst [vmem:[#allocation3 + $0x160] sm:$0xff] %v3160
        %3209 = vst [vmem:[#allocation3 + $0x168] sm:$0xff] %v3161
        %3210 = vst [vmem:[#allocation3 + $0x170] sm:$0xff] %v3162
        %3211 = vst [vmem:[#allocation3 + $0x178] sm:$0xff] %v3163
        %v3212 = vld [vmem:[#allocation2 + $0x10] sm:$0xff]
        %v3213 = vld [vmem:[#allocation2 + $0x18] sm:$0xff]
        %v3214 = vld [vmem:[#allocation2 + $0x20] sm:$0xff]
        %v3215 = vld [vmem:[#allocation2 + $0x28] sm:$0xff]
        %v3216 = vld [vmem:[#allocation2 + $0x30] sm:$0xff]
        %v3217 = vld [vmem:[#allocation2 + $0x38] sm:$0xff]
        %v3218 = vld [vmem:[#allocation2 + $0x40] sm:$0xff]
        %v3219 = vld [vmem:[#allocation2 + $0x48] sm:$0xff]
        %v3220 = vld [vmem:[#allocation2 + $0x50] sm:$0xff]
        %v3221 = vld [vmem:[#allocation2 + $0x58] sm:$0xff]
        %v3222 = vld [vmem:[#allocation2 + $0x60] sm:$0xff]
        %v3223 = vld [vmem:[#allocation2 + $0x68] sm:$0xff]
        %v3224 = vld [vmem:[#allocation2 + $0x70] sm:$0xff]
        %v3225 = vld [vmem:[#allocation2 + $0x78] sm:$0xff]
        %v3226 = vld [vmem:[#allocation2 + $0x80] sm:$0xff]
        %v3227 = vld [vmem:[#allocation2 + $0x88] sm:$0xff]
        %v3228 = vld [vmem:[#allocation2 + $0x90] sm:$0xff]
        %v3229 = vld [vmem:[#allocation2 + $0x98] sm:$0xff]
        %v3230 = vld [vmem:[#allocation2 + $0xa0] sm:$0xff]
        %v3231 = vld [vmem:[#allocation2 + $0xa8] sm:$0xff]
        %v3232 = vld [vmem:[#allocation2 + $0xb0] sm:$0xff]
        %v3233 = vld [vmem:[#allocation2 + $0xb8] sm:$0xff]
        %v3234 = vld [vmem:[#allocation2 + $0xc0] sm:$0xff]
        %v3235 = vld [vmem:[#allocation2 + $0xc8] sm:$0xff]
        %s3236 = scalar_lea.vmem %s3, 256
        %v3237 = vld [vmem:[%s3236] sm:$0xf]
        %v3238 = vld [vmem:[%s3236 + $0x4] sm:$0xf]
        %v3239 = vld [vmem:[%s3236 + $0x8] sm:$0xf]
        %v3240 = vld [vmem:[%s3236 + $0xc] sm:$0xf]
        %v3241 = vld [vmem:[%s3236 + $0x10] sm:$0xf]
        %v3242 = vld [vmem:[%s3236 + $0x14] sm:$0xf]
        %v3243 = vld [vmem:[%s3236 + $0x18] sm:$0xf]
        %v3244 = vld [vmem:[%s3236 + $0x1c] sm:$0xf]
        %v3245 = vld [vmem:[%s3236 + $0x20] sm:$0xf]
        %v3246 = vld [vmem:[%s3236 + $0x24] sm:$0xf]
        %v3247 = vld [vmem:[%s3236 + $0x28] sm:$0xf]
        %v3248 = vld [vmem:[%s3236 + $0x2c] sm:$0xf]
        %v3249 = vld [vmem:[%s3236 + $0x30] sm:$0xf]
        %v3250 = vld [vmem:[%s3236 + $0x34] sm:$0xf]
        %v3251 = vld [vmem:[%s3236 + $0x38] sm:$0xf]
        %v3252 = vld [vmem:[%s3236 + $0x3c] sm:$0xf]
        %v3269 = vunpack.c.l.b16 %v3237
        %v3270 = vunpack.c.l.b16 %v3238
        %v3271 = vunpack.c.l.b16 %v3239
        %v3272 = vunpack.c.l.b16 %v3240
        %v3273 = vunpack.c.l.b16 %v3241
        %v3274 = vunpack.c.l.b16 %v3242
        %v3275 = vunpack.c.l.b16 %v3243
        %v3276 = vunpack.c.l.b16 %v3244
        %v3277 = vunpack.c.l.b16 %v3245
        %v3278 = vunpack.c.l.b16 %v3246
        %v3279 = vunpack.c.l.b16 %v3247
        %v3280 = vunpack.c.l.b16 %v3248
        %v3281 = vunpack.c.l.b16 %v3249
        %v3282 = vunpack.c.l.b16 %v3250
        %v3283 = vunpack.c.l.b16 %v3251
        %v3284 = vunpack.c.l.b16 %v3252
        %v3285 = vpack.c.b16 %v3270, %v3269
        %v3286 = vpack.c.b16 %v3272, %v3271
        %v3287 = vpack.c.b16 %v3274, %v3273
        %v3288 = vpack.c.b16 %v3276, %v3275
        %v3289 = vpack.c.b16 %v3278, %v3277
        %v3290 = vpack.c.b16 %v3280, %v3279
        %v3291 = vpack.c.b16 %v3282, %v3281
        %v3292 = vpack.c.b16 %v3284, %v3283
        %3301 = vmatprep.subr.bf16.mxu0 0
        %3302 = vmatpush1.bf16.msra.mxu0 %v3285
        %3303 = vmatprep.subr.bf16.mxu0 0
        %3304 = vmatpush1.bf16.msra.mxu0 %v3286
        %3305 = vmatprep.subr.bf16.mxu0 0
        %3306 = vmatpush1.bf16.msra.mxu0 %v3287
        %3307 = vmatprep.subr.bf16.mxu0 0
        %3308 = vmatpush1.bf16.msra.mxu0 %v3288
        %3309 = vmatprep.subr.bf16.mxu0 0
        %3310 = vmatpush1.bf16.msra.mxu0 %v3289
        %3311 = vmatprep.subr.bf16.mxu0 0
        %3312 = vmatpush1.bf16.msra.mxu0 %v3290
        %3313 = vmatprep.subr.bf16.mxu0 0
        %3314 = vmatpush1.bf16.msra.mxu0 %v3291
        %3315 = vmatprep.subr.bf16.mxu0 0
        %3316 = vmatpush1.bf16.msra.mxu0 %v3292
        %3317 = vmatprep.subr.bf16.mxu0 0
        %3318 = vmatpush1.bf16.msra.mxu0 0
        %3319 = vmatprep.subr.bf16.mxu0 0
        %3320 = vmatpush1.bf16.msra.mxu0 0
        %3321 = vmatprep.subr.bf16.mxu0 0
        %3322 = vmatpush1.bf16.msra.mxu0 0
        %3323 = vmatprep.subr.bf16.mxu0 0
        %3324 = vmatpush1.bf16.msra.mxu0 0
        %3325 = vmatprep.subr.bf16.mxu0 0
        %3326 = vmatpush1.bf16.msra.mxu0 0
        %3327 = vmatprep.subr.bf16.mxu0 0
        %3328 = vmatpush1.bf16.msra.mxu0 0
        %3329 = vmatprep.subr.bf16.mxu0 0
        %3330 = vmatpush1.bf16.msra.mxu0 0
        %3331 = vmatprep.subr.bf16.mxu0 0
        %3332 = vmatpush1.bf16.msra.mxu0 0
        %3333 = vmatprep.mubr.bf16.mxu0 0
        %3334 = vmatmul.mubr.bf16.gmra.mrb[0].mxu0 %v3212
        %v3335 = vpop.f32.mrb[0].mxu0
        %v3336 = vadd.f32 0.0, %v3335
        %v3337 = vpop.f32.mrb[0].mxu0
        %v3338 = vpop.f32.mrb[0].mxu0
        %v3339 = vadd.f32 0.0, %v3338
        %v3340 = vpop.f32.mrb[0].mxu0
        %3341 = vmatprep.mubr.bf16.mxu0 0
        %3342 = vmatmul.mubr.bf16.gmra.mrb[0].mxu0 %v3213
        %v3343 = vpop.f32.mrb[0].mxu0
        %v3344 = vadd.f32 0.0, %v3343
        %v3345 = vpop.f32.mrb[0].mxu0
        %v3346 = vpop.f32.mrb[0].mxu0
        %v3347 = vadd.f32 0.0, %v3346
        %v3348 = vpop.f32.mrb[0].mxu0
        %3349 = vmatprep.mubr.bf16.mxu0 0
        %3350 = vmatmul.mubr.bf16.gmra.mrb[0].mxu0 %v3214
        %v3351 = vpop.f32.mrb[0].mxu0
        %v3352 = vadd.f32 0.0, %v3351
        %v3353 = vpop.f32.mrb[0].mxu0
        %v3354 = vpop.f32.mrb[0].mxu0
        %v3355 = vadd.f32 0.0, %v3354
        %v3356 = vpop.f32.mrb[0].mxu0
        %3357 = vmatprep.mubr.bf16.mxu0 0
        %3358 = vmatmul.mubr.bf16.gmra.mrb[0].mxu0 %v3215
        %v3359 = vpop.f32.mrb[0].mxu0
        %v3360 = vadd.f32 0.0, %v3359
        %v3361 = vpop.f32.mrb[0].mxu0
        %v3362 = vpop.f32.mrb[0].mxu0
        %v3363 = vadd.f32 0.0, %v3362
        %v3364 = vpop.f32.mrb[0].mxu0
        %3365 = vmatprep.mubr.bf16.mxu0 0
        %3366 = vmatmul.mubr.bf16.gmra.mrb[0].mxu0 %v3216
        %v3367 = vpop.f32.mrb[0].mxu0
        %v3368 = vadd.f32 0.0, %v3367
        %v3369 = vpop.f32.mrb[0].mxu0
        %v3370 = vpop.f32.mrb[0].mxu0
        %v3371 = vadd.f32 0.0, %v3370
        %v3372 = vpop.f32.mrb[0].mxu0
        %3373 = vmatprep.mubr.bf16.mxu0 0
        %3374 = vmatmul.mubr.bf16.gmra.mrb[0].mxu0 %v3217
        %v3375 = vpop.f32.mrb[0].mxu0
        %v3376 = vadd.f32 0.0, %v3375
        %v3377 = vpop.f32.mrb[0].mxu0
        %v3378 = vpop.f32.mrb[0].mxu0
        %v3379 = vadd.f32 0.0, %v3378
        %v3380 = vpop.f32.mrb[0].mxu0
        %3381 = vmatprep.mubr.bf16.mxu0 0
        %3382 = vmatmul.mubr.bf16.gmra.mrb[0].mxu0 %v3218
        %v3383 = vpop.f32.mrb[0].mxu0
        %v3384 = vadd.f32 0.0, %v3383
        %v3385 = vpop.f32.mrb[0].mxu0
        %v3386 = vpop.f32.mrb[0].mxu0
        %v3387 = vadd.f32 0.0, %v3386
        %v3388 = vpop.f32.mrb[0].mxu0
        %3389 = vmatprep.mubr.bf16.mxu0 0
        %3390 = vmatmul.mubr.bf16.gmra.mrb[0].mxu0 %v3219
        %v3391 = vpop.f32.mrb[0].mxu0
        %v3392 = vadd.f32 0.0, %v3391
        %v3393 = vpop.f32.mrb[0].mxu0
        %v3394 = vpop.f32.mrb[0].mxu0
        %v3395 = vadd.f32 0.0, %v3394
        %v3396 = vpop.f32.mrb[0].mxu0
        %3397 = vmatprep.mubr.bf16.mxu0 0
        %3398 = vmatmul.mubr.bf16.gmra.mrb[0].mxu0 %v3220
        %v3399 = vpop.f32.mrb[0].mxu0
        %v3400 = vadd.f32 0.0, %v3399
        %v3401 = vpop.f32.mrb[0].mxu0
        %v3402 = vpop.f32.mrb[0].mxu0
        %v3403 = vadd.f32 0.0, %v3402
        %v3404 = vpop.f32.mrb[0].mxu0
        %3405 = vmatprep.mubr.bf16.mxu0 0
        %3406 = vmatmul.mubr.bf16.gmra.mrb[0].mxu0 %v3221
        %v3407 = vpop.f32.mrb[0].mxu0
        %v3408 = vadd.f32 0.0, %v3407
        %v3409 = vpop.f32.mrb[0].mxu0
        %v3410 = vpop.f32.mrb[0].mxu0
        %v3411 = vadd.f32 0.0, %v3410
        %v3412 = vpop.f32.mrb[0].mxu0
        %3413 = vmatprep.mubr.bf16.mxu0 0
        %3414 = vmatmul.mubr.bf16.gmra.mrb[0].mxu0 %v3222
        %v3415 = vpop.f32.mrb[0].mxu0
        %v3416 = vadd.f32 0.0, %v3415
        %v3417 = vpop.f32.mrb[0].mxu0
        %v3418 = vpop.f32.mrb[0].mxu0
        %v3419 = vadd.f32 0.0, %v3418
        %v3420 = vpop.f32.mrb[0].mxu0
        %3421 = vmatprep.mubr.bf16.mxu0 0
        %3422 = vmatmul.mubr.bf16.gmra.mrb[0].mxu0 %v3223
        %v3423 = vpop.f32.mrb[0].mxu0
        %v3424 = vadd.f32 0.0, %v3423
        %v3425 = vpop.f32.mrb[0].mxu0
        %v3426 = vpop.f32.mrb[0].mxu0
        %v3427 = vadd.f32 0.0, %v3426
        %v3428 = vpop.f32.mrb[0].mxu0
        %3429 = vmatprep.mubr.bf16.mxu0 0
        %3430 = vmatmul.mubr.bf16.gmra.mrb[0].mxu0 %v3224
        %v3431 = vpop.f32.mrb[0].mxu0
        %v3432 = vadd.f32 0.0, %v3431
        %v3433 = vpop.f32.mrb[0].mxu0
        %v3434 = vpop.f32.mrb[0].mxu0
        %v3435 = vadd.f32 0.0, %v3434
        %v3436 = vpop.f32.mrb[0].mxu0
        %3437 = vmatprep.mubr.bf16.mxu0 0
        %3438 = vmatmul.mubr.bf16.gmra.mrb[0].mxu0 %v3225
        %v3439 = vpop.f32.mrb[0].mxu0
        %v3440 = vadd.f32 0.0, %v3439
        %v3441 = vpop.f32.mrb[0].mxu0
        %v3442 = vpop.f32.mrb[0].mxu0
        %v3443 = vadd.f32 0.0, %v3442
        %v3444 = vpop.f32.mrb[0].mxu0
        %3445 = vmatprep.mubr.bf16.mxu0 0
        %3446 = vmatmul.mubr.bf16.gmra.mrb[0].mxu0 %v3226
        %v3447 = vpop.f32.mrb[0].mxu0
        %v3448 = vadd.f32 0.0, %v3447
        %v3449 = vpop.f32.mrb[0].mxu0
        %v3450 = vpop.f32.mrb[0].mxu0
        %v3451 = vadd.f32 0.0, %v3450
        %v3452 = vpop.f32.mrb[0].mxu0
        %3453 = vmatprep.mubr.bf16.mxu0 0
        %3454 = vmatmul.mubr.bf16.gmra.mrb[0].mxu0 %v3227
        %v3455 = vpop.f32.mrb[0].mxu0
        %v3456 = vadd.f32 0.0, %v3455
        %v3457 = vpop.f32.mrb[0].mxu0
        %v3458 = vpop.f32.mrb[0].mxu0
        %v3459 = vadd.f32 0.0, %v3458
        %v3460 = vpop.f32.mrb[0].mxu0
        %3461 = vmatprep.mubr.bf16.mxu0 0
        %3462 = vmatmul.mubr.bf16.gmra.mrb[0].mxu0 %v3228
        %v3463 = vpop.f32.mrb[0].mxu0
        %v3464 = vadd.f32 0.0, %v3463
        %v3465 = vpop.f32.mrb[0].mxu0
        %v3466 = vpop.f32.mrb[0].mxu0
        %v3467 = vadd.f32 0.0, %v3466
        %v3468 = vpop.f32.mrb[0].mxu0
        %3469 = vmatprep.mubr.bf16.mxu0 0
        %3470 = vmatmul.mubr.bf16.gmra.mrb[0].mxu0 %v3229
        %v3471 = vpop.f32.mrb[0].mxu0
        %v3472 = vadd.f32 0.0, %v3471
        %v3473 = vpop.f32.mrb[0].mxu0
        %v3474 = vpop.f32.mrb[0].mxu0
        %v3475 = vadd.f32 0.0, %v3474
        %v3476 = vpop.f32.mrb[0].mxu0
        %3477 = vmatprep.mubr.bf16.mxu0 0
        %3478 = vmatmul.mubr.bf16.gmra.mrb[0].mxu0 %v3230
        %v3479 = vpop.f32.mrb[0].mxu0
        %v3480 = vadd.f32 0.0, %v3479
        %v3481 = vpop.f32.mrb[0].mxu0
        %v3482 = vpop.f32.mrb[0].mxu0
        %v3483 = vadd.f32 0.0, %v3482
        %v3484 = vpop.f32.mrb[0].mxu0
        %3485 = vmatprep.mubr.bf16.mxu0 0
        %3486 = vmatmul.mubr.bf16.gmra.mrb[0].mxu0 %v3231
        %v3487 = vpop.f32.mrb[0].mxu0
        %v3488 = vadd.f32 0.0, %v3487
        %v3489 = vpop.f32.mrb[0].mxu0
        %v3490 = vpop.f32.mrb[0].mxu0
        %v3491 = vadd.f32 0.0, %v3490
        %v3492 = vpop.f32.mrb[0].mxu0
        %3493 = vmatprep.mubr.bf16.mxu0 0
        %3494 = vmatmul.mubr.bf16.gmra.mrb[0].mxu0 %v3232
        %v3495 = vpop.f32.mrb[0].mxu0
        %v3496 = vadd.f32 0.0, %v3495
        %v3497 = vpop.f32.mrb[0].mxu0
        %v3498 = vpop.f32.mrb[0].mxu0
        %v3499 = vadd.f32 0.0, %v3498
        %v3500 = vpop.f32.mrb[0].mxu0
        %3501 = vmatprep.mubr.bf16.mxu0 0
        %3502 = vmatmul.mubr.bf16.gmra.mrb[0].mxu0 %v3233
        %v3503 = vpop.f32.mrb[0].mxu0
        %v3504 = vadd.f32 0.0, %v3503
        %v3505 = vpop.f32.mrb[0].mxu0
        %v3506 = vpop.f32.mrb[0].mxu0
        %v3507 = vadd.f32 0.0, %v3506
        %v3508 = vpop.f32.mrb[0].mxu0
        %3509 = vmatprep.mubr.bf16.mxu0 0
        %3510 = vmatmul.mubr.bf16.gmra.mrb[0].mxu0 %v3234
        %v3511 = vpop.f32.mrb[0].mxu0
        %v3512 = vadd.f32 0.0, %v3511
        %v3513 = vpop.f32.mrb[0].mxu0
        %v3514 = vpop.f32.mrb[0].mxu0
        %v3515 = vadd.f32 0.0, %v3514
        %v3516 = vpop.f32.mrb[0].mxu0
        %3517 = vmatprep.mubr.bf16.mxu0 0
        %3518 = vmatmul.mubr.bf16.gmra.mrb[0].mxu0 %v3235
        %v3519 = vpop.f32.mrb[0].mxu0
        %v3520 = vadd.f32 0.0, %v3519
        %v3521 = vpop.f32.mrb[0].mxu0
        %v3522 = vpop.f32.mrb[0].mxu0
        %v3523 = vadd.f32 0.0, %v3522
        %v3524 = vpop.f32.mrb[0].mxu0
        %3525 = vdwg.mxu0
        %v3526 = vld [vmem:[#allocation3] sm:$0xff]
        %v3527 = vld [vmem:[#allocation3 + $0x8] sm:$0xff]
        %v3528 = vld [vmem:[#allocation3 + $0x10] sm:$0xff]
        %v3529 = vld [vmem:[#allocation3 + $0x18] sm:$0xff]
        %v3530 = vld [vmem:[#allocation3 + $0x20] sm:$0xff]
        %v3531 = vld [vmem:[#allocation3 + $0x28] sm:$0xff]
        %v3532 = vld [vmem:[#allocation3 + $0x30] sm:$0xff]
        %v3533 = vld [vmem:[#allocation3 + $0x38] sm:$0xff]
        %v3534 = vld [vmem:[#allocation3 + $0x40] sm:$0xff]
        %v3535 = vld [vmem:[#allocation3 + $0x48] sm:$0xff]
        %v3536 = vld [vmem:[#allocation3 + $0x50] sm:$0xff]
        %v3537 = vld [vmem:[#allocation3 + $0x58] sm:$0xff]
        %v3538 = vld [vmem:[#allocation3 + $0x60] sm:$0xff]
        %v3539 = vld [vmem:[#allocation3 + $0x68] sm:$0xff]
        %v3540 = vld [vmem:[#allocation3 + $0x70] sm:$0xff]
        %v3541 = vld [vmem:[#allocation3 + $0x78] sm:$0xff]
        %v3542 = vld [vmem:[#allocation3 + $0x80] sm:$0xff]
        %v3543 = vld [vmem:[#allocation3 + $0x88] sm:$0xff]
        %v3544 = vld [vmem:[#allocation3 + $0x90] sm:$0xff]
        %v3545 = vld [vmem:[#allocation3 + $0x98] sm:$0xff]
        %v3546 = vld [vmem:[#allocation3 + $0xa0] sm:$0xff]
        %v3547 = vld [vmem:[#allocation3 + $0xa8] sm:$0xff]
        %v3548 = vld [vmem:[#allocation3 + $0xb0] sm:$0xff]
        %v3549 = vld [vmem:[#allocation3 + $0xb8] sm:$0xff]
        %v3550 = vld [vmem:[#allocation3 + $0xc0] sm:$0xff]
        %v3551 = vld [vmem:[#allocation3 + $0xc8] sm:$0xff]
        %v3552 = vld [vmem:[#allocation3 + $0xd0] sm:$0xff]
        %v3553 = vld [vmem:[#allocation3 + $0xd8] sm:$0xff]
        %v3554 = vld [vmem:[#allocation3 + $0xe0] sm:$0xff]
        %v3555 = vld [vmem:[#allocation3 + $0xe8] sm:$0xff]
        %v3556 = vld [vmem:[#allocation3 + $0xf0] sm:$0xff]
        %v3557 = vld [vmem:[#allocation3 + $0xf8] sm:$0xff]
        %v3558 = vld [vmem:[#allocation3 + $0x100] sm:$0xff]
        %v3559 = vld [vmem:[#allocation3 + $0x108] sm:$0xff]
        %v3560 = vld [vmem:[#allocation3 + $0x110] sm:$0xff]
        %v3561 = vld [vmem:[#allocation3 + $0x118] sm:$0xff]
        %v3562 = vld [vmem:[#allocation3 + $0x120] sm:$0xff]
        %v3563 = vld [vmem:[#allocation3 + $0x128] sm:$0xff]
        %v3564 = vld [vmem:[#allocation3 + $0x130] sm:$0xff]
        %v3565 = vld [vmem:[#allocation3 + $0x138] sm:$0xff]
        %v3566 = vld [vmem:[#allocation3 + $0x140] sm:$0xff]
        %v3567 = vld [vmem:[#allocation3 + $0x148] sm:$0xff]
        %v3568 = vld [vmem:[#allocation3 + $0x150] sm:$0xff]
        %v3569 = vld [vmem:[#allocation3 + $0x158] sm:$0xff]
        %v3570 = vld [vmem:[#allocation3 + $0x160] sm:$0xff]
        %v3571 = vld [vmem:[#allocation3 + $0x168] sm:$0xff]
        %v3572 = vld [vmem:[#allocation3 + $0x170] sm:$0xff]
        %v3573 = vld [vmem:[#allocation3 + $0x178] sm:$0xff]
        %v3574 = vadd.f32 %v3526, %v3336
        %v3575 = vadd.f32 %v3527, %v3339
        %v3576 = vadd.f32 %v3528, %v3344
        %v3577 = vadd.f32 %v3529, %v3347
        %v3578 = vadd.f32 %v3530, %v3352
        %v3579 = vadd.f32 %v3531, %v3355
        %v3580 = vadd.f32 %v3532, %v3360
        %v3581 = vadd.f32 %v3533, %v3363
        %v3582 = vadd.f32 %v3534, %v3368
        %v3583 = vadd.f32 %v3535, %v3371
        %v3584 = vadd.f32 %v3536, %v3376
        %v3585 = vadd.f32 %v3537, %v3379
        %v3586 = vadd.f32 %v3538, %v3384
        %v3587 = vadd.f32 %v3539, %v3387
        %v3588 = vadd.f32 %v3540, %v3392
        %v3589 = vadd.f32 %v3541, %v3395
        %v3590 = vadd.f32 %v3542, %v3400
        %v3591 = vadd.f32 %v3543, %v3403
        %v3592 = vadd.f32 %v3544, %v3408
        %v3593 = vadd.f32 %v3545, %v3411
        %v3594 = vadd.f32 %v3546, %v3416
        %v3595 = vadd.f32 %v3547, %v3419
        %v3596 = vadd.f32 %v3548, %v3424
        %v3597 = vadd.f32 %v3549, %v3427
        %v3598 = vadd.f32 %v3550, %v3432
        %v3599 = vadd.f32 %v3551, %v3435
        %v3600 = vadd.f32 %v3552, %v3440
        %v3601 = vadd.f32 %v3553, %v3443
        %v3602 = vadd.f32 %v3554, %v3448
        %v3603 = vadd.f32 %v3555, %v3451
        %v3604 = vadd.f32 %v3556, %v3456
        %v3605 = vadd.f32 %v3557, %v3459
        %v3606 = vadd.f32 %v3558, %v3464
        %v3607 = vadd.f32 %v3559, %v3467
        %v3608 = vadd.f32 %v3560, %v3472
        %v3609 = vadd.f32 %v3561, %v3475
        %v3610 = vadd.f32 %v3562, %v3480
        %v3611 = vadd.f32 %v3563, %v3483
        %v3612 = vadd.f32 %v3564, %v3488
        %v3613 = vadd.f32 %v3565, %v3491
        %v3614 = vadd.f32 %v3566, %v3496
        %v3615 = vadd.f32 %v3567, %v3499
        %v3616 = vadd.f32 %v3568, %v3504
        %v3617 = vadd.f32 %v3569, %v3507
        %v3618 = vadd.f32 %v3570, %v3512
        %v3619 = vadd.f32 %v3571, %v3515
        %v3620 = vadd.f32 %v3572, %v3520
        %v3621 = vadd.f32 %v3573, %v3523
        %3622 = vst [vmem:[#allocation3] sm:$0xff] %v3574
        %3623 = vst [vmem:[#allocation3 + $0x8] sm:$0xff] %v3575
        %3624 = vst [vmem:[#allocation3 + $0x10] sm:$0xff] %v3576
        %3625 = vst [vmem:[#allocation3 + $0x18] sm:$0xff] %v3577
        %3626 = vst [vmem:[#allocation3 + $0x20] sm:$0xff] %v3578
        %3627 = vst [vmem:[#allocation3 + $0x28] sm:$0xff] %v3579
        %3628 = vst [vmem:[#allocation3 + $0x30] sm:$0xff] %v3580
        %3629 = vst [vmem:[#allocation3 + $0x38] sm:$0xff] %v3581
        %3630 = vst [vmem:[#allocation3 + $0x40] sm:$0xff] %v3582
        %3631 = vst [vmem:[#allocation3 + $0x48] sm:$0xff] %v3583
        %3632 = vst [vmem:[#allocation3 + $0x50] sm:$0xff] %v3584
        %3633 = vst [vmem:[#allocation3 + $0x58] sm:$0xff] %v3585
        %3634 = vst [vmem:[#allocation3 + $0x60] sm:$0xff] %v3586
        %3635 = vst [vmem:[#allocation3 + $0x68] sm:$0xff] %v3587
        %3636 = vst [vmem:[#allocation3 + $0x70] sm:$0xff] %v3588
        %3637 = vst [vmem:[#allocation3 + $0x78] sm:$0xff] %v3589
        %3638 = vst [vmem:[#allocation3 + $0x80] sm:$0xff] %v3590
        %3639 = vst [vmem:[#allocation3 + $0x88] sm:$0xff] %v3591
        %3640 = vst [vmem:[#allocation3 + $0x90] sm:$0xff] %v3592
        %3641 = vst [vmem:[#allocation3 + $0x98] sm:$0xff] %v3593
        %3642 = vst [vmem:[#allocation3 + $0xa0] sm:$0xff] %v3594
        %3643 = vst [vmem:[#allocation3 + $0xa8] sm:$0xff] %v3595
        %3644 = vst [vmem:[#allocation3 + $0xb0] sm:$0xff] %v3596
        %3645 = vst [vmem:[#allocation3 + $0xb8] sm:$0xff] %v3597
        %3646 = vst [vmem:[#allocation3 + $0xc0] sm:$0xff] %v3598
        %3647 = vst [vmem:[#allocation3 + $0xc8] sm:$0xff] %v3599
        %3648 = vst [vmem:[#allocation3 + $0xd0] sm:$0xff] %v3600
        %3649 = vst [vmem:[#allocation3 + $0xd8] sm:$0xff] %v3601
        %3650 = vst [vmem:[#allocation3 + $0xe0] sm:$0xff] %v3602
        %3651 = vst [vmem:[#allocation3 + $0xe8] sm:$0xff] %v3603
        %3652 = vst [vmem:[#allocation3 + $0xf0] sm:$0xff] %v3604
        %3653 = vst [vmem:[#allocation3 + $0xf8] sm:$0xff] %v3605
        %3654 = vst [vmem:[#allocation3 + $0x100] sm:$0xff] %v3606
        %3655 = vst [vmem:[#allocation3 + $0x108] sm:$0xff] %v3607
        %3656 = vst [vmem:[#allocation3 + $0x110] sm:$0xff] %v3608
        %3657 = vst [vmem:[#allocation3 + $0x118] sm:$0xff] %v3609
        %3658 = vst [vmem:[#allocation3 + $0x120] sm:$0xff] %v3610
        %3659 = vst [vmem:[#allocation3 + $0x128] sm:$0xff] %v3611
        %3660 = vst [vmem:[#allocation3 + $0x130] sm:$0xff] %v3612
        %3661 = vst [vmem:[#allocation3 + $0x138] sm:$0xff] %v3613
        %3662 = vst [vmem:[#allocation3 + $0x140] sm:$0xff] %v3614
        %3663 = vst [vmem:[#allocation3 + $0x148] sm:$0xff] %v3615
        %3664 = vst [vmem:[#allocation3 + $0x150] sm:$0xff] %v3616
        %3665 = vst [vmem:[#allocation3 + $0x158] sm:$0xff] %v3617
        %3666 = vst [vmem:[#allocation3 + $0x160] sm:$0xff] %v3618
        %3667 = vst [vmem:[#allocation3 + $0x168] sm:$0xff] %v3619
        %3668 = vst [vmem:[#allocation3 + $0x170] sm:$0xff] %v3620
        %3669 = vst [vmem:[#allocation3 + $0x178] sm:$0xff] %v3621
        %v3670 = vld [vmem:[#allocation2 + $0x10] sm:$0xff]
        %v3671 = vld [vmem:[#allocation2 + $0x18] sm:$0xff]
        %v3672 = vld [vmem:[#allocation2 + $0x20] sm:$0xff]
        %v3673 = vld [vmem:[#allocation2 + $0x28] sm:$0xff]
        %v3674 = vld [vmem:[#allocation2 + $0x30] sm:$0xff]
        %v3675 = vld [vmem:[#allocation2 + $0x38] sm:$0xff]
        %v3676 = vld [vmem:[#allocation2 + $0x40] sm:$0xff]
        %v3677 = vld [vmem:[#allocation2 + $0x48] sm:$0xff]
        %v3678 = vld [vmem:[#allocation2 + $0x50] sm:$0xff]
        %v3679 = vld [vmem:[#allocation2 + $0x58] sm:$0xff]
        %v3680 = vld [vmem:[#allocation2 + $0x60] sm:$0xff]
        %v3681 = vld [vmem:[#allocation2 + $0x68] sm:$0xff]
        %v3682 = vld [vmem:[#allocation2 + $0x70] sm:$0xff]
        %v3683 = vld [vmem:[#allocation2 + $0x78] sm:$0xff]
        %v3684 = vld [vmem:[#allocation2 + $0x80] sm:$0xff]
        %v3685 = vld [vmem:[#allocation2 + $0x88] sm:$0xff]
        %v3686 = vld [vmem:[#allocation2 + $0x90] sm:$0xff]
        %v3687 = vld [vmem:[#allocation2 + $0x98] sm:$0xff]
        %v3688 = vld [vmem:[#allocation2 + $0xa0] sm:$0xff]
        %v3689 = vld [vmem:[#allocation2 + $0xa8] sm:$0xff]
        %v3690 = vld [vmem:[#allocation2 + $0xb0] sm:$0xff]
        %v3691 = vld [vmem:[#allocation2 + $0xb8] sm:$0xff]
        %v3692 = vld [vmem:[#allocation2 + $0xc0] sm:$0xff]
        %v3693 = vld [vmem:[#allocation2 + $0xc8] sm:$0xff]
        %v3694 = vld [vmem:[#allocation2 + $0xd0] sm:$0x1]
        %s3695 = scalar_lea.vmem %s3, 320
        %v3696 = vld [vmem:[%s3695] sm:$0xf]
        %v3697 = vld [vmem:[%s3695 + $0x4] sm:$0xf]
        %v3698 = vld [vmem:[%s3695 + $0x8] sm:$0xf]
        %v3699 = vld [vmem:[%s3695 + $0xc] sm:$0xf]
        %v3700 = vld [vmem:[%s3695 + $0x10] sm:$0xf]
        %v3701 = vld [vmem:[%s3695 + $0x14] sm:$0xf]
        %v3702 = vld [vmem:[%s3695 + $0x18] sm:$0xf]
        %v3703 = vld [vmem:[%s3695 + $0x1c] sm:$0xf]
        %v3704 = vld [vmem:[%s3695 + $0x20] sm:$0xf]
        %v3705 = vld [vmem:[%s3695 + $0x24] sm:$0xf]
        %v3706 = vld [vmem:[%s3695 + $0x28] sm:$0xf]
        %v3707 = vld [vmem:[%s3695 + $0x2c] sm:$0xf]
        %v3708 = vld [vmem:[%s3695 + $0x30] sm:$0xf]
        %v3709 = vld [vmem:[%s3695 + $0x34] sm:$0xf]
        %v3710 = vld [vmem:[%s3695 + $0x38] sm:$0xf]
        %v3711 = vld [vmem:[%s3695 + $0x3c] sm:$0xf]
        %vm3712 = vsmask.f32 7424
        %v3714 = vshrl.u32 %v3670, 16
        %v3716 = vshll.u32 %v3670, 16
        %v3718 = vrot.slane %v3716, 1
        %v3719 = vor.u32 %v3714, %v3718
        %v3721 = vshll.u32 %v3671, 16
        %v3723 = vrot.slane %v3721, 1
        %v3724 = vsel %vm3712, %v3719, %v3723
        %v3725 = vshrl.u32 %v3671, 16
        %v3727 = vor.u32 %v3725, %v3723
        %v3729 = vshll.u32 %v3672, 16
        %v3731 = vrot.slane %v3729, 1
        %v3732 = vsel %vm3712, %v3727, %v3731
        %v3733 = vshrl.u32 %v3672, 16
        %v3735 = vor.u32 %v3733, %v3731
        %v3737 = vshll.u32 %v3673, 16
        %v3739 = vrot.slane %v3737, 1
        %v3740 = vsel %vm3712, %v3735, %v3739
        %v3741 = vshrl.u32 %v3673, 16
        %v3743 = vor.u32 %v3741, %v3739
        %v3745 = vshll.u32 %v3674, 16
        %v3747 = vrot.slane %v3745, 1
        %v3748 = vsel %vm3712, %v3743, %v3747
        %v3749 = vshrl.u32 %v3674, 16
        %v3751 = vor.u32 %v3749, %v3747
        %v3753 = vshll.u32 %v3675, 16
        %v3755 = vrot.slane %v3753, 1
        %v3756 = vsel %vm3712, %v3751, %v3755
        %v3757 = vshrl.u32 %v3675, 16
        %v3759 = vor.u32 %v3757, %v3755
        %v3761 = vshll.u32 %v3676, 16
        %v3763 = vrot.slane %v3761, 1
        %v3764 = vsel %vm3712, %v3759, %v3763
        %v3765 = vshrl.u32 %v3676, 16
        %v3767 = vor.u32 %v3765, %v3763
        %v3769 = vshll.u32 %v3677, 16
        %v3771 = vrot.slane %v3769, 1
        %v3772 = vsel %vm3712, %v3767, %v3771
        %v3773 = vshrl.u32 %v3677, 16
        %v3775 = vor.u32 %v3773, %v3771
        %v3777 = vshll.u32 %v3678, 16
        %v3779 = vrot.slane %v3777, 1
        %v3780 = vsel %vm3712, %v3775, %v3779
        %v3781 = vshrl.u32 %v3678, 16
        %v3783 = vor.u32 %v3781, %v3779
        %v3785 = vshll.u32 %v3679, 16
        %v3787 = vrot.slane %v3785, 1
        %v3788 = vsel %vm3712, %v3783, %v3787
        %v3789 = vshrl.u32 %v3679, 16
        %v3791 = vor.u32 %v3789, %v3787
        %v3793 = vshll.u32 %v3680, 16
        %v3795 = vrot.slane %v3793, 1
        %v3796 = vsel %vm3712, %v3791, %v3795
        %v3797 = vshrl.u32 %v3680, 16
        %v3799 = vor.u32 %v3797, %v3795
        %v3801 = vshll.u32 %v3681, 16
        %v3803 = vrot.slane %v3801, 1
        %v3804 = vsel %vm3712, %v3799, %v3803
        %v3805 = vshrl.u32 %v3681, 16
        %v3807 = vor.u32 %v3805, %v3803
        %v3809 = vshll.u32 %v3682, 16
        %v3811 = vrot.slane %v3809, 1
        %v3812 = vsel %vm3712, %v3807, %v3811
        %v3813 = vshrl.u32 %v3682, 16
        %v3815 = vor.u32 %v3813, %v3811
        %v3817 = vshll.u32 %v3683, 16
        %v3819 = vrot.slane %v3817, 1
        %v3820 = vsel %vm3712, %v3815, %v3819
        %v3821 = vshrl.u32 %v3683, 16
        %v3823 = vor.u32 %v3821, %v3819
        %v3825 = vshll.u32 %v3684, 16
        %v3827 = vrot.slane %v3825, 1
        %v3828 = vsel %vm3712, %v3823, %v3827
        %v3829 = vshrl.u32 %v3684, 16
        %v3831 = vor.u32 %v3829, %v3827
        %v3833 = vshll.u32 %v3685, 16
        %v3835 = vrot.slane %v3833, 1
        %v3836 = vsel %vm3712, %v3831, %v3835
        %v3837 = vshrl.u32 %v3685, 16
        %v3839 = vor.u32 %v3837, %v3835
        %v3841 = vshll.u32 %v3686, 16
        %v3843 = vrot.slane %v3841, 1
        %v3844 = vsel %vm3712, %v3839, %v3843
        %v3845 = vshrl.u32 %v3686, 16
        %v3847 = vor.u32 %v3845, %v3843
        %v3849 = vshll.u32 %v3687, 16
        %v3851 = vrot.slane %v3849, 1
        %v3852 = vsel %vm3712, %v3847, %v3851
        %v3853 = vshrl.u32 %v3687, 16
        %v3855 = vor.u32 %v3853, %v3851
        %v3857 = vshll.u32 %v3688, 16
        %v3859 = vrot.slane %v3857, 1
        %v3860 = vsel %vm3712, %v3855, %v3859
        %v3861 = vshrl.u32 %v3688, 16
        %v3863 = vor.u32 %v3861, %v3859
        %v3865 = vshll.u32 %v3689, 16
        %v3867 = vrot.slane %v3865, 1
        %v3868 = vsel %vm3712, %v3863, %v3867
        %v3869 = vshrl.u32 %v3689, 16
        %v3871 = vor.u32 %v3869, %v3867
        %v3873 = vshll.u32 %v3690, 16
        %v3875 = vrot.slane %v3873, 1
        %v3876 = vsel %vm3712, %v3871, %v3875
        %v3877 = vshrl.u32 %v3690, 16
        %v3879 = vor.u32 %v3877, %v3875
        %v3881 = vshll.u32 %v3691, 16
        %v3883 = vrot.slane %v3881, 1
        %v3884 = vsel %vm3712, %v3879, %v3883
        %v3885 = vshrl.u32 %v3691, 16
        %v3887 = vor.u32 %v3885, %v3883
        %v3889 = vshll.u32 %v3692, 16
        %v3891 = vrot.slane %v3889, 1
        %v3892 = vsel %vm3712, %v3887, %v3891
        %v3893 = vshrl.u32 %v3692, 16
        %v3895 = vor.u32 %v3893, %v3891
        %v3897 = vshll.u32 %v3693, 16
        %v3899 = vrot.slane %v3897, 1
        %v3900 = vsel %vm3712, %v3895, %v3899
        %v3901 = vshrl.u32 %v3693, 16
        %v3903 = vor.u32 %v3901, %v3899
        %v3905 = vshll.u32 %v3694, 16
        %v3907 = vrot.slane %v3905, 1
        %v3908 = vsel %vm3712, %v3903, %v3907
        %v3949 = vunpack.c.l.b16 %v3696
        %v3950 = vunpack.c.l.b16 %v3697
        %v3951 = vunpack.c.l.b16 %v3698
        %v3952 = vunpack.c.l.b16 %v3699
        %v3953 = vunpack.c.l.b16 %v3700
        %v3954 = vunpack.c.l.b16 %v3701
        %v3955 = vunpack.c.l.b16 %v3702
        %v3956 = vunpack.c.l.b16 %v3703
        %v3957 = vunpack.c.l.b16 %v3704
        %v3958 = vunpack.c.l.b16 %v3705
        %v3959 = vunpack.c.l.b16 %v3706
        %v3960 = vunpack.c.l.b16 %v3707
        %v3961 = vunpack.c.l.b16 %v3708
        %v3962 = vunpack.c.l.b16 %v3709
        %v3963 = vunpack.c.l.b16 %v3710
        %v3964 = vunpack.c.l.b16 %v3711
        %v3965 = vpack.c.b16 %v3950, %v3949
        %v3966 = vpack.c.b16 %v3952, %v3951
        %v3967 = vpack.c.b16 %v3954, %v3953
        %v3968 = vpack.c.b16 %v3956, %v3955
        %v3969 = vpack.c.b16 %v3958, %v3957
        %v3970 = vpack.c.b16 %v3960, %v3959
        %v3971 = vpack.c.b16 %v3962, %v3961
        %v3972 = vpack.c.b16 %v3964, %v3963
        %3981 = vmatprep.subr.bf16.mxu0 0
        %3982 = vmatpush1.bf16.msra.mxu0 %v3965
        %3983 = vmatprep.subr.bf16.mxu0 0
        %3984 = vmatpush1.bf16.msra.mxu0 %v3966
        %3985 = vmatprep.subr.bf16.mxu0 0
        %3986 = vmatpush1.bf16.msra.mxu0 %v3967
        %3987 = vmatprep.subr.bf16.mxu0 0
        %3988 = vmatpush1.bf16.msra.mxu0 %v3968
        %3989 = vmatprep.subr.bf16.mxu0 0
        %3990 = vmatpush1.bf16.msra.mxu0 %v3969
        %3991 = vmatprep.subr.bf16.mxu0 0
        %3992 = vmatpush1.bf16.msra.mxu0 %v3970
        %3993 = vmatprep.subr.bf16.mxu0 0
        %3994 = vmatpush1.bf16.msra.mxu0 %v3971
        %3995 = vmatprep.subr.bf16.mxu0 0
        %3996 = vmatpush1.bf16.msra.mxu0 %v3972
        %3997 = vmatprep.subr.bf16.mxu0 0
        %3998 = vmatpush1.bf16.msra.mxu0 0
        %3999 = vmatprep.subr.bf16.mxu0 0
        %4000 = vmatpush1.bf16.msra.mxu0 0
        %4001 = vmatprep.subr.bf16.mxu0 0
        %4002 = vmatpush1.bf16.msra.mxu0 0
        %4003 = vmatprep.subr.bf16.mxu0 0
        %4004 = vmatpush1.bf16.msra.mxu0 0
        %4005 = vmatprep.subr.bf16.mxu0 0
        %4006 = vmatpush1.bf16.msra.mxu0 0
        %4007 = vmatprep.subr.bf16.mxu0 0
        %4008 = vmatpush1.bf16.msra.mxu0 0
        %4009 = vmatprep.subr.bf16.mxu0 0
        %4010 = vmatpush1.bf16.msra.mxu0 0
        %4011 = vmatprep.subr.bf16.mxu0 0
        %4012 = vmatpush1.bf16.msra.mxu0 0
        %4013 = vmatprep.mubr.bf16.mxu0 0
        %4014 = vmatmul.mubr.bf16.gmra.mrb[0].mxu0 %v3724
        %v4015 = vpop.f32.mrb[0].mxu0
        %v4016 = vadd.f32 0.0, %v4015
        %v4017 = vpop.f32.mrb[0].mxu0
        %v4018 = vpop.f32.mrb[0].mxu0
        %v4019 = vadd.f32 0.0, %v4018
        %v4020 = vpop.f32.mrb[0].mxu0
        %4021 = vmatprep.mubr.bf16.mxu0 0
        %4022 = vmatmul.mubr.bf16.gmra.mrb[0].mxu0 %v3732
        %v4023 = vpop.f32.mrb[0].mxu0
        %v4024 = vadd.f32 0.0, %v4023
        %v4025 = vpop.f32.mrb[0].mxu0
        %v4026 = vpop.f32.mrb[0].mxu0
        %v4027 = vadd.f32 0.0, %v4026
        %v4028 = vpop.f32.mrb[0].mxu0
        %4029 = vmatprep.mubr.bf16.mxu0 0
        %4030 = vmatmul.mubr.bf16.gmra.mrb[0].mxu0 %v3740
        %v4031 = vpop.f32.mrb[0].mxu0
        %v4032 = vadd.f32 0.0, %v4031
        %v4033 = vpop.f32.mrb[0].mxu0
        %v4034 = vpop.f32.mrb[0].mxu0
        %v4035 = vadd.f32 0.0, %v4034
        %v4036 = vpop.f32.mrb[0].mxu0
        %4037 = vmatprep.mubr.bf16.mxu0 0
        %4038 = vmatmul.mubr.bf16.gmra.mrb[0].mxu0 %v3748
        %v4039 = vpop.f32.mrb[0].mxu0
        %v4040 = vadd.f32 0.0, %v4039
        %v4041 = vpop.f32.mrb[0].mxu0
        %v4042 = vpop.f32.mrb[0].mxu0
        %v4043 = vadd.f32 0.0, %v4042
        %v4044 = vpop.f32.mrb[0].mxu0
        %4045 = vmatprep.mubr.bf16.mxu0 0
        %4046 = vmatmul.mubr.bf16.gmra.mrb[0].mxu0 %v3756
        %v4047 = vpop.f32.mrb[0].mxu0
        %v4048 = vadd.f32 0.0, %v4047
        %v4049 = vpop.f32.mrb[0].mxu0
        %v4050 = vpop.f32.mrb[0].mxu0
        %v4051 = vadd.f32 0.0, %v4050
        %v4052 = vpop.f32.mrb[0].mxu0
        %4053 = vmatprep.mubr.bf16.mxu0 0
        %4054 = vmatmul.mubr.bf16.gmra.mrb[0].mxu0 %v3764
        %v4055 = vpop.f32.mrb[0].mxu0
        %v4056 = vadd.f32 0.0, %v4055
        %v4057 = vpop.f32.mrb[0].mxu0
        %v4058 = vpop.f32.mrb[0].mxu0
        %v4059 = vadd.f32 0.0, %v4058
        %v4060 = vpop.f32.mrb[0].mxu0
        %4061 = vmatprep.mubr.bf16.mxu0 0
        %4062 = vmatmul.mubr.bf16.gmra.mrb[0].mxu0 %v3772
        %v4063 = vpop.f32.mrb[0].mxu0
        %v4064 = vadd.f32 0.0, %v4063
        %v4065 = vpop.f32.mrb[0].mxu0
        %v4066 = vpop.f32.mrb[0].mxu0
        %v4067 = vadd.f32 0.0, %v4066
        %v4068 = vpop.f32.mrb[0].mxu0
        %4069 = vmatprep.mubr.bf16.mxu0 0
        %4070 = vmatmul.mubr.bf16.gmra.mrb[0].mxu0 %v3780
        %v4071 = vpop.f32.mrb[0].mxu0
        %v4072 = vadd.f32 0.0, %v4071
        %v4073 = vpop.f32.mrb[0].mxu0
        %v4074 = vpop.f32.mrb[0].mxu0
        %v4075 = vadd.f32 0.0, %v4074
        %v4076 = vpop.f32.mrb[0].mxu0
        %4077 = vmatprep.mubr.bf16.mxu0 0
        %4078 = vmatmul.mubr.bf16.gmra.mrb[0].mxu0 %v3788
        %v4079 = vpop.f32.mrb[0].mxu0
        %v4080 = vadd.f32 0.0, %v4079
        %v4081 = vpop.f32.mrb[0].mxu0
        %v4082 = vpop.f32.mrb[0].mxu0
        %v4083 = vadd.f32 0.0, %v4082
        %v4084 = vpop.f32.mrb[0].mxu0
        %4085 = vmatprep.mubr.bf16.mxu0 0
        %4086 = vmatmul.mubr.bf16.gmra.mrb[0].mxu0 %v3796
        %v4087 = vpop.f32.mrb[0].mxu0
        %v4088 = vadd.f32 0.0, %v4087
        %v4089 = vpop.f32.mrb[0].mxu0
        %v4090 = vpop.f32.mrb[0].mxu0
        %v4091 = vadd.f32 0.0, %v4090
        %v4092 = vpop.f32.mrb[0].mxu0
        %4093 = vmatprep.mubr.bf16.mxu0 0
        %4094 = vmatmul.mubr.bf16.gmra.mrb[0].mxu0 %v3804
        %v4095 = vpop.f32.mrb[0].mxu0
        %v4096 = vadd.f32 0.0, %v4095
        %v4097 = vpop.f32.mrb[0].mxu0
        %v4098 = vpop.f32.mrb[0].mxu0
        %v4099 = vadd.f32 0.0, %v4098
        %v4100 = vpop.f32.mrb[0].mxu0
        %4101 = vmatprep.mubr.bf16.mxu0 0
        %4102 = vmatmul.mubr.bf16.gmra.mrb[0].mxu0 %v3812
        %v4103 = vpop.f32.mrb[0].mxu0
        %v4104 = vadd.f32 0.0, %v4103
        %v4105 = vpop.f32.mrb[0].mxu0
        %v4106 = vpop.f32.mrb[0].mxu0
        %v4107 = vadd.f32 0.0, %v4106
        %v4108 = vpop.f32.mrb[0].mxu0
        %4109 = vmatprep.mubr.bf16.mxu0 0
        %4110 = vmatmul.mubr.bf16.gmra.mrb[0].mxu0 %v3820
        %v4111 = vpop.f32.mrb[0].mxu0
        %v4112 = vadd.f32 0.0, %v4111
        %v4113 = vpop.f32.mrb[0].mxu0
        %v4114 = vpop.f32.mrb[0].mxu0
        %v4115 = vadd.f32 0.0, %v4114
        %v4116 = vpop.f32.mrb[0].mxu0
        %4117 = vmatprep.mubr.bf16.mxu0 0
        %4118 = vmatmul.mubr.bf16.gmra.mrb[0].mxu0 %v3828
        %v4119 = vpop.f32.mrb[0].mxu0
        %v4120 = vadd.f32 0.0, %v4119
        %v4121 = vpop.f32.mrb[0].mxu0
        %v4122 = vpop.f32.mrb[0].mxu0
        %v4123 = vadd.f32 0.0, %v4122
        %v4124 = vpop.f32.mrb[0].mxu0
        %4125 = vmatprep.mubr.bf16.mxu0 0
        %4126 = vmatmul.mubr.bf16.gmra.mrb[0].mxu0 %v3836
        %v4127 = vpop.f32.mrb[0].mxu0
        %v4128 = vadd.f32 0.0, %v4127
        %v4129 = vpop.f32.mrb[0].mxu0
        %v4130 = vpop.f32.mrb[0].mxu0
        %v4131 = vadd.f32 0.0, %v4130
        %v4132 = vpop.f32.mrb[0].mxu0
        %4133 = vmatprep.mubr.bf16.mxu0 0
        %4134 = vmatmul.mubr.bf16.gmra.mrb[0].mxu0 %v3844
        %v4135 = vpop.f32.mrb[0].mxu0
        %v4136 = vadd.f32 0.0, %v4135
        %v4137 = vpop.f32.mrb[0].mxu0
        %v4138 = vpop.f32.mrb[0].mxu0
        %v4139 = vadd.f32 0.0, %v4138
        %v4140 = vpop.f32.mrb[0].mxu0
        %4141 = vmatprep.mubr.bf16.mxu0 0
        %4142 = vmatmul.mubr.bf16.gmra.mrb[0].mxu0 %v3852
        %v4143 = vpop.f32.mrb[0].mxu0
        %v4144 = vadd.f32 0.0, %v4143
        %v4145 = vpop.f32.mrb[0].mxu0
        %v4146 = vpop.f32.mrb[0].mxu0
        %v4147 = vadd.f32 0.0, %v4146
        %v4148 = vpop.f32.mrb[0].mxu0
        %4149 = vmatprep.mubr.bf16.mxu0 0
        %4150 = vmatmul.mubr.bf16.gmra.mrb[0].mxu0 %v3860
        %v4151 = vpop.f32.mrb[0].mxu0
        %v4152 = vadd.f32 0.0, %v4151
        %v4153 = vpop.f32.mrb[0].mxu0
        %v4154 = vpop.f32.mrb[0].mxu0
        %v4155 = vadd.f32 0.0, %v4154
        %v4156 = vpop.f32.mrb[0].mxu0
        %4157 = vmatprep.mubr.bf16.mxu0 0
        %4158 = vmatmul.mubr.bf16.gmra.mrb[0].mxu0 %v3868
        %v4159 = vpop.f32.mrb[0].mxu0
        %v4160 = vadd.f32 0.0, %v4159
        %v4161 = vpop.f32.mrb[0].mxu0
        %v4162 = vpop.f32.mrb[0].mxu0
        %v4163 = vadd.f32 0.0, %v4162
        %v4164 = vpop.f32.mrb[0].mxu0
        %4165 = vmatprep.mubr.bf16.mxu0 0
        %4166 = vmatmul.mubr.bf16.gmra.mrb[0].mxu0 %v3876
        %v4167 = vpop.f32.mrb[0].mxu0
        %v4168 = vadd.f32 0.0, %v4167
        %v4169 = vpop.f32.mrb[0].mxu0
        %v4170 = vpop.f32.mrb[0].mxu0
        %v4171 = vadd.f32 0.0, %v4170
        %v4172 = vpop.f32.mrb[0].mxu0
        %4173 = vmatprep.mubr.bf16.mxu0 0
        %4174 = vmatmul.mubr.bf16.gmra.mrb[0].mxu0 %v3884
        %v4175 = vpop.f32.mrb[0].mxu0
        %v4176 = vadd.f32 0.0, %v4175
        %v4177 = vpop.f32.mrb[0].mxu0
        %v4178 = vpop.f32.mrb[0].mxu0
        %v4179 = vadd.f32 0.0, %v4178
        %v4180 = vpop.f32.mrb[0].mxu0
        %4181 = vmatprep.mubr.bf16.mxu0 0
        %4182 = vmatmul.mubr.bf16.gmra.mrb[0].mxu0 %v3892
        %v4183 = vpop.f32.mrb[0].mxu0
        %v4184 = vadd.f32 0.0, %v4183
        %v4185 = vpop.f32.mrb[0].mxu0
        %v4186 = vpop.f32.mrb[0].mxu0
        %v4187 = vadd.f32 0.0, %v4186
        %v4188 = vpop.f32.mrb[0].mxu0
        %4189 = vmatprep.mubr.bf16.mxu0 0
        %4190 = vmatmul.mubr.bf16.gmra.mrb[0].mxu0 %v3900
        %v4191 = vpop.f32.mrb[0].mxu0
        %v4192 = vadd.f32 0.0, %v4191
        %v4193 = vpop.f32.mrb[0].mxu0
        %v4194 = vpop.f32.mrb[0].mxu0
        %v4195 = vadd.f32 0.0, %v4194
        %v4196 = vpop.f32.mrb[0].mxu0
        %4197 = vmatprep.mubr.bf16.mxu0 0
        %4198 = vmatmul.mubr.bf16.gmra.mrb[0].mxu0 %v3908
        %v4199 = vpop.f32.mrb[0].mxu0
        %v4200 = vadd.f32 0.0, %v4199
        %v4201 = vpop.f32.mrb[0].mxu0
        %v4202 = vpop.f32.mrb[0].mxu0
        %v4203 = vadd.f32 0.0, %v4202
        %v4204 = vpop.f32.mrb[0].mxu0
        %4205 = vdwg.mxu0
        %v4206 = vld [vmem:[#allocation3] sm:$0xff]
        %v4207 = vld [vmem:[#allocation3 + $0x8] sm:$0xff]
        %v4208 = vld [vmem:[#allocation3 + $0x10] sm:$0xff]
        %v4209 = vld [vmem:[#allocation3 + $0x18] sm:$0xff]
        %v4210 = vld [vmem:[#allocation3 + $0x20] sm:$0xff]
        %v4211 = vld [vmem:[#allocation3 + $0x28] sm:$0xff]
        %v4212 = vld [vmem:[#allocation3 + $0x30] sm:$0xff]
        %v4213 = vld [vmem:[#allocation3 + $0x38] sm:$0xff]
        %v4214 = vld [vmem:[#allocation3 + $0x40] sm:$0xff]
        %v4215 = vld [vmem:[#allocation3 + $0x48] sm:$0xff]
        %v4216 = vld [vmem:[#allocation3 + $0x50] sm:$0xff]
        %v4217 = vld [vmem:[#allocation3 + $0x58] sm:$0xff]
        %v4218 = vld [vmem:[#allocation3 + $0x60] sm:$0xff]
        %v4219 = vld [vmem:[#allocation3 + $0x68] sm:$0xff]
        %v4220 = vld [vmem:[#allocation3 + $0x70] sm:$0xff]
        %v4221 = vld [vmem:[#allocation3 + $0x78] sm:$0xff]
        %v4222 = vld [vmem:[#allocation3 + $0x80] sm:$0xff]
        %v4223 = vld [vmem:[#allocation3 + $0x88] sm:$0xff]
        %v4224 = vld [vmem:[#allocation3 + $0x90] sm:$0xff]
        %v4225 = vld [vmem:[#allocation3 + $0x98] sm:$0xff]
        %v4226 = vld [vmem:[#allocation3 + $0xa0] sm:$0xff]
        %v4227 = vld [vmem:[#allocation3 + $0xa8] sm:$0xff]
        %v4228 = vld [vmem:[#allocation3 + $0xb0] sm:$0xff]
        %v4229 = vld [vmem:[#allocation3 + $0xb8] sm:$0xff]
        %v4230 = vld [vmem:[#allocation3 + $0xc0] sm:$0xff]
        %v4231 = vld [vmem:[#allocation3 + $0xc8] sm:$0xff]
        %v4232 = vld [vmem:[#allocation3 + $0xd0] sm:$0xff]
        %v4233 = vld [vmem:[#allocation3 + $0xd8] sm:$0xff]
        %v4234 = vld [vmem:[#allocation3 + $0xe0] sm:$0xff]
        %v4235 = vld [vmem:[#allocation3 + $0xe8] sm:$0xff]
        %v4236 = vld [vmem:[#allocation3 + $0xf0] sm:$0xff]
        %v4237 = vld [vmem:[#allocation3 + $0xf8] sm:$0xff]
        %v4238 = vld [vmem:[#allocation3 + $0x100] sm:$0xff]
        %v4239 = vld [vmem:[#allocation3 + $0x108] sm:$0xff]
        %v4240 = vld [vmem:[#allocation3 + $0x110] sm:$0xff]
        %v4241 = vld [vmem:[#allocation3 + $0x118] sm:$0xff]
        %v4242 = vld [vmem:[#allocation3 + $0x120] sm:$0xff]
        %v4243 = vld [vmem:[#allocation3 + $0x128] sm:$0xff]
        %v4244 = vld [vmem:[#allocation3 + $0x130] sm:$0xff]
        %v4245 = vld [vmem:[#allocation3 + $0x138] sm:$0xff]
        %v4246 = vld [vmem:[#allocation3 + $0x140] sm:$0xff]
        %v4247 = vld [vmem:[#allocation3 + $0x148] sm:$0xff]
        %v4248 = vld [vmem:[#allocation3 + $0x150] sm:$0xff]
        %v4249 = vld [vmem:[#allocation3 + $0x158] sm:$0xff]
        %v4250 = vld [vmem:[#allocation3 + $0x160] sm:$0xff]
        %v4251 = vld [vmem:[#allocation3 + $0x168] sm:$0xff]
        %v4252 = vld [vmem:[#allocation3 + $0x170] sm:$0xff]
        %v4253 = vld [vmem:[#allocation3 + $0x178] sm:$0xff]
        %v4254 = vadd.f32 %v4206, %v4016
        %v4255 = vadd.f32 %v4207, %v4019
        %v4256 = vadd.f32 %v4208, %v4024
        %v4257 = vadd.f32 %v4209, %v4027
        %v4258 = vadd.f32 %v4210, %v4032
        %v4259 = vadd.f32 %v4211, %v4035
        %v4260 = vadd.f32 %v4212, %v4040
        %v4261 = vadd.f32 %v4213, %v4043
        %v4262 = vadd.f32 %v4214, %v4048
        %v4263 = vadd.f32 %v4215, %v4051
        %v4264 = vadd.f32 %v4216, %v4056
        %v4265 = vadd.f32 %v4217, %v4059
        %v4266 = vadd.f32 %v4218, %v4064
        %v4267 = vadd.f32 %v4219, %v4067
        %v4268 = vadd.f32 %v4220, %v4072
        %v4269 = vadd.f32 %v4221, %v4075
        %v4270 = vadd.f32 %v4222, %v4080
        %v4271 = vadd.f32 %v4223, %v4083
        %v4272 = vadd.f32 %v4224, %v4088
        %v4273 = vadd.f32 %v4225, %v4091
        %v4274 = vadd.f32 %v4226, %v4096
        %v4275 = vadd.f32 %v4227, %v4099
        %v4276 = vadd.f32 %v4228, %v4104
        %v4277 = vadd.f32 %v4229, %v4107
        %v4278 = vadd.f32 %v4230, %v4112
        %v4279 = vadd.f32 %v4231, %v4115
        %v4280 = vadd.f32 %v4232, %v4120
        %v4281 = vadd.f32 %v4233, %v4123
        %v4282 = vadd.f32 %v4234, %v4128
        %v4283 = vadd.f32 %v4235, %v4131
        %v4284 = vadd.f32 %v4236, %v4136
        %v4285 = vadd.f32 %v4237, %v4139
        %v4286 = vadd.f32 %v4238, %v4144
        %v4287 = vadd.f32 %v4239, %v4147
        %v4288 = vadd.f32 %v4240, %v4152
        %v4289 = vadd.f32 %v4241, %v4155
        %v4290 = vadd.f32 %v4242, %v4160
        %v4291 = vadd.f32 %v4243, %v4163
        %v4292 = vadd.f32 %v4244, %v4168
        %v4293 = vadd.f32 %v4245, %v4171
        %v4294 = vadd.f32 %v4246, %v4176
        %v4295 = vadd.f32 %v4247, %v4179
        %v4296 = vadd.f32 %v4248, %v4184
        %v4297 = vadd.f32 %v4249, %v4187
        %v4298 = vadd.f32 %v4250, %v4192
        %v4299 = vadd.f32 %v4251, %v4195
        %v4300 = vadd.f32 %v4252, %v4200
        %v4301 = vadd.f32 %v4253, %v4203
        %4302 = vst [vmem:[#allocation3] sm:$0xff] %v4254
        %4303 = vst [vmem:[#allocation3 + $0x8] sm:$0xff] %v4255
        %4304 = vst [vmem:[#allocation3 + $0x10] sm:$0xff] %v4256
        %4305 = vst [vmem:[#allocation3 + $0x18] sm:$0xff] %v4257
        %4306 = vst [vmem:[#allocation3 + $0x20] sm:$0xff] %v4258
        %4307 = vst [vmem:[#allocation3 + $0x28] sm:$0xff] %v4259
        %4308 = vst [vmem:[#allocation3 + $0x30] sm:$0xff] %v4260
        %4309 = vst [vmem:[#allocation3 + $0x38] sm:$0xff] %v4261
        %4310 = vst [vmem:[#allocation3 + $0x40] sm:$0xff] %v4262
        %4311 = vst [vmem:[#allocation3 + $0x48] sm:$0xff] %v4263
        %4312 = vst [vmem:[#allocation3 + $0x50] sm:$0xff] %v4264
        %4313 = vst [vmem:[#allocation3 + $0x58] sm:$0xff] %v4265
        %4314 = vst [vmem:[#allocation3 + $0x60] sm:$0xff] %v4266
        %4315 = vst [vmem:[#allocation3 + $0x68] sm:$0xff] %v4267
        %4316 = vst [vmem:[#allocation3 + $0x70] sm:$0xff] %v4268
        %4317 = vst [vmem:[#allocation3 + $0x78] sm:$0xff] %v4269
        %4318 = vst [vmem:[#allocation3 + $0x80] sm:$0xff] %v4270
        %4319 = vst [vmem:[#allocation3 + $0x88] sm:$0xff] %v4271
        %4320 = vst [vmem:[#allocation3 + $0x90] sm:$0xff] %v4272
        %4321 = vst [vmem:[#allocation3 + $0x98] sm:$0xff] %v4273
        %4322 = vst [vmem:[#allocation3 + $0xa0] sm:$0xff] %v4274
        %4323 = vst [vmem:[#allocation3 + $0xa8] sm:$0xff] %v4275
        %4324 = vst [vmem:[#allocation3 + $0xb0] sm:$0xff] %v4276
        %4325 = vst [vmem:[#allocation3 + $0xb8] sm:$0xff] %v4277
        %4326 = vst [vmem:[#allocation3 + $0xc0] sm:$0xff] %v4278
        %4327 = vst [vmem:[#allocation3 + $0xc8] sm:$0xff] %v4279
        %4328 = vst [vmem:[#allocation3 + $0xd0] sm:$0xff] %v4280
        %4329 = vst [vmem:[#allocation3 + $0xd8] sm:$0xff] %v4281
        %4330 = vst [vmem:[#allocation3 + $0xe0] sm:$0xff] %v4282
        %4331 = vst [vmem:[#allocation3 + $0xe8] sm:$0xff] %v4283
        %4332 = vst [vmem:[#allocation3 + $0xf0] sm:$0xff] %v4284
        %4333 = vst [vmem:[#allocation3 + $0xf8] sm:$0xff] %v4285
        %4334 = vst [vmem:[#allocation3 + $0x100] sm:$0xff] %v4286
        %4335 = vst [vmem:[#allocation3 + $0x108] sm:$0xff] %v4287
        %4336 = vst [vmem:[#allocation3 + $0x110] sm:$0xff] %v4288
        %4337 = vst [vmem:[#allocation3 + $0x118] sm:$0xff] %v4289
        %4338 = vst [vmem:[#allocation3 + $0x120] sm:$0xff] %v4290
        %4339 = vst [vmem:[#allocation3 + $0x128] sm:$0xff] %v4291
        %4340 = vst [vmem:[#allocation3 + $0x130] sm:$0xff] %v4292
        %4341 = vst [vmem:[#allocation3 + $0x138] sm:$0xff] %v4293
        %4342 = vst [vmem:[#allocation3 + $0x140] sm:$0xff] %v4294
        %4343 = vst [vmem:[#allocation3 + $0x148] sm:$0xff] %v4295
        %4344 = vst [vmem:[#allocation3 + $0x150] sm:$0xff] %v4296
        %4345 = vst [vmem:[#allocation3 + $0x158] sm:$0xff] %v4297
        %4346 = vst [vmem:[#allocation3 + $0x160] sm:$0xff] %v4298
        %4347 = vst [vmem:[#allocation3 + $0x168] sm:$0xff] %v4299
        %4348 = vst [vmem:[#allocation3 + $0x170] sm:$0xff] %v4300
        %4349 = vst [vmem:[#allocation3 + $0x178] sm:$0xff] %v4301
        %v4350 = vld [vmem:[#allocation2 + $0x18] sm:$0xf8]
        %v4351 = vld [vmem:[#allocation2 + $0x20] sm:$0xff]
        %v4352 = vld [vmem:[#allocation2 + $0x28] sm:$0xff]
        %v4353 = vld [vmem:[#allocation2 + $0x30] sm:$0xff]
        %v4354 = vld [vmem:[#allocation2 + $0x38] sm:$0xff]
        %v4355 = vld [vmem:[#allocation2 + $0x40] sm:$0xff]
        %v4356 = vld [vmem:[#allocation2 + $0x48] sm:$0xff]
        %v4357 = vld [vmem:[#allocation2 + $0x50] sm:$0xff]
        %v4358 = vld [vmem:[#allocation2 + $0x58] sm:$0xff]
        %v4359 = vld [vmem:[#allocation2 + $0x60] sm:$0xff]
        %v4360 = vld [vmem:[#allocation2 + $0x68] sm:$0xff]
        %v4361 = vld [vmem:[#allocation2 + $0x70] sm:$0xff]
        %v4362 = vld [vmem:[#allocation2 + $0x78] sm:$0xff]
        %v4363 = vld [vmem:[#allocation2 + $0x80] sm:$0xff]
        %v4364 = vld [vmem:[#allocation2 + $0x88] sm:$0xff]
        %v4365 = vld [vmem:[#allocation2 + $0x90] sm:$0xff]
        %v4366 = vld [vmem:[#allocation2 + $0x98] sm:$0xff]
        %v4367 = vld [vmem:[#allocation2 + $0xa0] sm:$0xff]
        %v4368 = vld [vmem:[#allocation2 + $0xa8] sm:$0xff]
        %v4369 = vld [vmem:[#allocation2 + $0xb0] sm:$0xff]
        %v4370 = vld [vmem:[#allocation2 + $0xb8] sm:$0xff]
        %v4371 = vld [vmem:[#allocation2 + $0xc0] sm:$0xff]
        %v4372 = vld [vmem:[#allocation2 + $0xc8] sm:$0xff]
        %v4373 = vld [vmem:[#allocation2 + $0xd0] sm:$0xff]
        %v4374 = vld [vmem:[#allocation2 + $0xd8] sm:$0xf]
        %s4375 = scalar_lea.vmem %s3, 384
        %v4376 = vld [vmem:[%s4375] sm:$0xf]
        %v4377 = vld [vmem:[%s4375 + $0x4] sm:$0xf]
        %v4378 = vld [vmem:[%s4375 + $0x8] sm:$0xf]
        %v4379 = vld [vmem:[%s4375 + $0xc] sm:$0xf]
        %v4380 = vld [vmem:[%s4375 + $0x10] sm:$0xf]
        %v4381 = vld [vmem:[%s4375 + $0x14] sm:$0xf]
        %v4382 = vld [vmem:[%s4375 + $0x18] sm:$0xf]
        %v4383 = vld [vmem:[%s4375 + $0x1c] sm:$0xf]
        %v4384 = vld [vmem:[%s4375 + $0x20] sm:$0xf]
        %v4385 = vld [vmem:[%s4375 + $0x24] sm:$0xf]
        %v4386 = vld [vmem:[%s4375 + $0x28] sm:$0xf]
        %v4387 = vld [vmem:[%s4375 + $0x2c] sm:$0xf]
        %v4388 = vld [vmem:[%s4375 + $0x30] sm:$0xf]
        %v4389 = vld [vmem:[%s4375 + $0x34] sm:$0xf]
        %v4390 = vld [vmem:[%s4375 + $0x38] sm:$0xf]
        %v4391 = vld [vmem:[%s4375 + $0x3c] sm:$0xf]
        %v4393 = vshrl.u32 %v4350, 16
        %v4395 = vrot.slane %v4393, 3
        %v4396 = vshll.u32 %v4350, 16
        %v4398 = vrot.slane %v4396, 4
        %v4399 = vor.u32 %v4395, %v4398
        %v4401 = vshrl.u32 %v4351, 16
        %v4403 = vrot.slane %v4401, 3
        %v4404 = vshll.u32 %v4351, 16
        %v4406 = vrot.slane %v4404, 4
        %v4407 = vor.u32 %v4403, %v4406
        %v4408 = vsel %vm696, %v4399, %v4407
        %v4410 = vshrl.u32 %v4352, 16
        %v4412 = vrot.slane %v4410, 3
        %v4413 = vshll.u32 %v4352, 16
        %v4415 = vrot.slane %v4413, 4
        %v4416 = vor.u32 %v4412, %v4415
        %v4417 = vsel %vm696, %v4407, %v4416
        %v4419 = vshrl.u32 %v4353, 16
        %v4421 = vrot.slane %v4419, 3
        %v4422 = vshll.u32 %v4353, 16
        %v4424 = vrot.slane %v4422, 4
        %v4425 = vor.u32 %v4421, %v4424
        %v4426 = vsel %vm696, %v4416, %v4425
        %v4428 = vshrl.u32 %v4354, 16
        %v4430 = vrot.slane %v4428, 3
        %v4431 = vshll.u32 %v4354, 16
        %v4433 = vrot.slane %v4431, 4
        %v4434 = vor.u32 %v4430, %v4433
        %v4435 = vsel %vm696, %v4425, %v4434
        %v4437 = vshrl.u32 %v4355, 16
        %v4439 = vrot.slane %v4437, 3
        %v4440 = vshll.u32 %v4355, 16
        %v4442 = vrot.slane %v4440, 4
        %v4443 = vor.u32 %v4439, %v4442
        %v4444 = vsel %vm696, %v4434, %v4443
        %v4446 = vshrl.u32 %v4356, 16
        %v4448 = vrot.slane %v4446, 3
        %v4449 = vshll.u32 %v4356, 16
        %v4451 = vrot.slane %v4449, 4
        %v4452 = vor.u32 %v4448, %v4451
        %v4453 = vsel %vm696, %v4443, %v4452
        %v4455 = vshrl.u32 %v4357, 16
        %v4457 = vrot.slane %v4455, 3
        %v4458 = vshll.u32 %v4357, 16
        %v4460 = vrot.slane %v4458, 4
        %v4461 = vor.u32 %v4457, %v4460
        %v4462 = vsel %vm696, %v4452, %v4461
        %v4464 = vshrl.u32 %v4358, 16
        %v4466 = vrot.slane %v4464, 3
        %v4467 = vshll.u32 %v4358, 16
        %v4469 = vrot.slane %v4467, 4
        %v4470 = vor.u32 %v4466, %v4469
        %v4471 = vsel %vm696, %v4461, %v4470
        %v4473 = vshrl.u32 %v4359, 16
        %v4475 = vrot.slane %v4473, 3
        %v4476 = vshll.u32 %v4359, 16
        %v4478 = vrot.slane %v4476, 4
        %v4479 = vor.u32 %v4475, %v4478
        %v4480 = vsel %vm696, %v4470, %v4479
        %v4482 = vshrl.u32 %v4360, 16
        %v4484 = vrot.slane %v4482, 3
        %v4485 = vshll.u32 %v4360, 16
        %v4487 = vrot.slane %v4485, 4
        %v4488 = vor.u32 %v4484, %v4487
        %v4489 = vsel %vm696, %v4479, %v4488
        %v4491 = vshrl.u32 %v4361, 16
        %v4493 = vrot.slane %v4491, 3
        %v4494 = vshll.u32 %v4361, 16
        %v4496 = vrot.slane %v4494, 4
        %v4497 = vor.u32 %v4493, %v4496
        %v4498 = vsel %vm696, %v4488, %v4497
        %v4500 = vshrl.u32 %v4362, 16
        %v4502 = vrot.slane %v4500, 3
        %v4503 = vshll.u32 %v4362, 16
        %v4505 = vrot.slane %v4503, 4
        %v4506 = vor.u32 %v4502, %v4505
        %v4507 = vsel %vm696, %v4497, %v4506
        %v4509 = vshrl.u32 %v4363, 16
        %v4511 = vrot.slane %v4509, 3
        %v4512 = vshll.u32 %v4363, 16
        %v4514 = vrot.slane %v4512, 4
        %v4515 = vor.u32 %v4511, %v4514
        %v4516 = vsel %vm696, %v4506, %v4515
        %v4518 = vshrl.u32 %v4364, 16
        %v4520 = vrot.slane %v4518, 3
        %v4521 = vshll.u32 %v4364, 16
        %v4523 = vrot.slane %v4521, 4
        %v4524 = vor.u32 %v4520, %v4523
        %v4525 = vsel %vm696, %v4515, %v4524
        %v4527 = vshrl.u32 %v4365, 16
        %v4529 = vrot.slane %v4527, 3
        %v4530 = vshll.u32 %v4365, 16
        %v4532 = vrot.slane %v4530, 4
        %v4533 = vor.u32 %v4529, %v4532
        %v4534 = vsel %vm696, %v4524, %v4533
        %v4536 = vshrl.u32 %v4366, 16
        %v4538 = vrot.slane %v4536, 3
        %v4539 = vshll.u32 %v4366, 16
        %v4541 = vrot.slane %v4539, 4
        %v4542 = vor.u32 %v4538, %v4541
        %v4543 = vsel %vm696, %v4533, %v4542
        %v4545 = vshrl.u32 %v4367, 16
        %v4547 = vrot.slane %v4545, 3
        %v4548 = vshll.u32 %v4367, 16
        %v4550 = vrot.slane %v4548, 4
        %v4551 = vor.u32 %v4547, %v4550
        %v4552 = vsel %vm696, %v4542, %v4551
        %v4554 = vshrl.u32 %v4368, 16
        %v4556 = vrot.slane %v4554, 3
        %v4557 = vshll.u32 %v4368, 16
        %v4559 = vrot.slane %v4557, 4
        %v4560 = vor.u32 %v4556, %v4559
        %v4561 = vsel %vm696, %v4551, %v4560
        %v4563 = vshrl.u32 %v4369, 16
        %v4565 = vrot.slane %v4563, 3
        %v4566 = vshll.u32 %v4369, 16
        %v4568 = vrot.slane %v4566, 4
        %v4569 = vor.u32 %v4565, %v4568
        %v4570 = vsel %vm696, %v4560, %v4569
        %v4572 = vshrl.u32 %v4370, 16
        %v4574 = vrot.slane %v4572, 3
        %v4575 = vshll.u32 %v4370, 16
        %v4577 = vrot.slane %v4575, 4
        %v4578 = vor.u32 %v4574, %v4577
        %v4579 = vsel %vm696, %v4569, %v4578
        %v4581 = vshrl.u32 %v4371, 16
        %v4583 = vrot.slane %v4581, 3
        %v4584 = vshll.u32 %v4371, 16
        %v4586 = vrot.slane %v4584, 4
        %v4587 = vor.u32 %v4583, %v4586
        %v4588 = vsel %vm696, %v4578, %v4587
        %v4590 = vshrl.u32 %v4372, 16
        %v4592 = vrot.slane %v4590, 3
        %v4593 = vshll.u32 %v4372, 16
        %v4595 = vrot.slane %v4593, 4
        %v4596 = vor.u32 %v4592, %v4595
        %v4597 = vsel %vm696, %v4587, %v4596
        %v4599 = vshrl.u32 %v4373, 16
        %v4601 = vrot.slane %v4599, 3
        %v4602 = vshll.u32 %v4373, 16
        %v4604 = vrot.slane %v4602, 4
        %v4605 = vor.u32 %v4601, %v4604
        %v4606 = vsel %vm696, %v4596, %v4605
        %v4608 = vshrl.u32 %v4374, 16
        %v4610 = vrot.slane %v4608, 3
        %v4611 = vshll.u32 %v4374, 16
        %v4613 = vrot.slane %v4611, 4
        %v4614 = vor.u32 %v4610, %v4613
        %v4615 = vsel %vm696, %v4605, %v4614
        %v4656 = vunpack.c.l.b16 %v4376
        %v4657 = vunpack.c.l.b16 %v4377
        %v4658 = vunpack.c.l.b16 %v4378
        %v4659 = vunpack.c.l.b16 %v4379
        %v4660 = vunpack.c.l.b16 %v4380
        %v4661 = vunpack.c.l.b16 %v4381
        %v4662 = vunpack.c.l.b16 %v4382
        %v4663 = vunpack.c.l.b16 %v4383
        %v4664 = vunpack.c.l.b16 %v4384
        %v4665 = vunpack.c.l.b16 %v4385
        %v4666 = vunpack.c.l.b16 %v4386
        %v4667 = vunpack.c.l.b16 %v4387
        %v4668 = vunpack.c.l.b16 %v4388
        %v4669 = vunpack.c.l.b16 %v4389
        %v4670 = vunpack.c.l.b16 %v4390
        %v4671 = vunpack.c.l.b16 %v4391
        %v4672 = vpack.c.b16 %v4657, %v4656
        %v4673 = vpack.c.b16 %v4659, %v4658
        %v4674 = vpack.c.b16 %v4661, %v4660
        %v4675 = vpack.c.b16 %v4663, %v4662
        %v4676 = vpack.c.b16 %v4665, %v4664
        %v4677 = vpack.c.b16 %v4667, %v4666
        %v4678 = vpack.c.b16 %v4669, %v4668
        %v4679 = vpack.c.b16 %v4671, %v4670
        %4688 = vmatprep.subr.bf16.mxu0 0
        %4689 = vmatpush1.bf16.msra.mxu0 %v4672
        %4690 = vmatprep.subr.bf16.mxu0 0
        %4691 = vmatpush1.bf16.msra.mxu0 %v4673
        %4692 = vmatprep.subr.bf16.mxu0 0
        %4693 = vmatpush1.bf16.msra.mxu0 %v4674
        %4694 = vmatprep.subr.bf16.mxu0 0
        %4695 = vmatpush1.bf16.msra.mxu0 %v4675
        %4696 = vmatprep.subr.bf16.mxu0 0
        %4697 = vmatpush1.bf16.msra.mxu0 %v4676
        %4698 = vmatprep.subr.bf16.mxu0 0
        %4699 = vmatpush1.bf16.msra.mxu0 %v4677
        %4700 = vmatprep.subr.bf16.mxu0 0
        %4701 = vmatpush1.bf16.msra.mxu0 %v4678
        %4702 = vmatprep.subr.bf16.mxu0 0
        %4703 = vmatpush1.bf16.msra.mxu0 %v4679
        %4704 = vmatprep.subr.bf16.mxu0 0
        %4705 = vmatpush1.bf16.msra.mxu0 0
        %4706 = vmatprep.subr.bf16.mxu0 0
        %4707 = vmatpush1.bf16.msra.mxu0 0
        %4708 = vmatprep.subr.bf16.mxu0 0
        %4709 = vmatpush1.bf16.msra.mxu0 0
        %4710 = vmatprep.subr.bf16.mxu0 0
        %4711 = vmatpush1.bf16.msra.mxu0 0
        %4712 = vmatprep.subr.bf16.mxu0 0
        %4713 = vmatpush1.bf16.msra.mxu0 0
        %4714 = vmatprep.subr.bf16.mxu0 0
        %4715 = vmatpush1.bf16.msra.mxu0 0
        %4716 = vmatprep.subr.bf16.mxu0 0
        %4717 = vmatpush1.bf16.msra.mxu0 0
        %4718 = vmatprep.subr.bf16.mxu0 0
        %4719 = vmatpush1.bf16.msra.mxu0 0
        %4720 = vmatprep.mubr.bf16.mxu0 0
        %4721 = vmatmul.mubr.bf16.gmra.mrb[0].mxu0 %v4408
        %v4722 = vpop.f32.mrb[0].mxu0
        %v4723 = vadd.f32 0.0, %v4722
        %v4724 = vpop.f32.mrb[0].mxu0
        %v4725 = vpop.f32.mrb[0].mxu0
        %v4726 = vadd.f32 0.0, %v4725
        %v4727 = vpop.f32.mrb[0].mxu0
        %4728 = vmatprep.mubr.bf16.mxu0 0
        %4729 = vmatmul.mubr.bf16.gmra.mrb[0].mxu0 %v4417
        %v4730 = vpop.f32.mrb[0].mxu0
        %v4731 = vadd.f32 0.0, %v4730
        %v4732 = vpop.f32.mrb[0].mxu0
        %v4733 = vpop.f32.mrb[0].mxu0
        %v4734 = vadd.f32 0.0, %v4733
        %v4735 = vpop.f32.mrb[0].mxu0
        %4736 = vmatprep.mubr.bf16.mxu0 0
        %4737 = vmatmul.mubr.bf16.gmra.mrb[0].mxu0 %v4426
        %v4738 = vpop.f32.mrb[0].mxu0
        %v4739 = vadd.f32 0.0, %v4738
        %v4740 = vpop.f32.mrb[0].mxu0
        %v4741 = vpop.f32.mrb[0].mxu0
        %v4742 = vadd.f32 0.0, %v4741
        %v4743 = vpop.f32.mrb[0].mxu0
        %4744 = vmatprep.mubr.bf16.mxu0 0
        %4745 = vmatmul.mubr.bf16.gmra.mrb[0].mxu0 %v4435
        %v4746 = vpop.f32.mrb[0].mxu0
        %v4747 = vadd.f32 0.0, %v4746
        %v4748 = vpop.f32.mrb[0].mxu0
        %v4749 = vpop.f32.mrb[0].mxu0
        %v4750 = vadd.f32 0.0, %v4749
        %v4751 = vpop.f32.mrb[0].mxu0
        %4752 = vmatprep.mubr.bf16.mxu0 0
        %4753 = vmatmul.mubr.bf16.gmra.mrb[0].mxu0 %v4444
        %v4754 = vpop.f32.mrb[0].mxu0
        %v4755 = vadd.f32 0.0, %v4754
        %v4756 = vpop.f32.mrb[0].mxu0
        %v4757 = vpop.f32.mrb[0].mxu0
        %v4758 = vadd.f32 0.0, %v4757
        %v4759 = vpop.f32.mrb[0].mxu0
        %4760 = vmatprep.mubr.bf16.mxu0 0
        %4761 = vmatmul.mubr.bf16.gmra.mrb[0].mxu0 %v4453
        %v4762 = vpop.f32.mrb[0].mxu0
        %v4763 = vadd.f32 0.0, %v4762
        %v4764 = vpop.f32.mrb[0].mxu0
        %v4765 = vpop.f32.mrb[0].mxu0
        %v4766 = vadd.f32 0.0, %v4765
        %v4767 = vpop.f32.mrb[0].mxu0
        %4768 = vmatprep.mubr.bf16.mxu0 0
        %4769 = vmatmul.mubr.bf16.gmra.mrb[0].mxu0 %v4462
        %v4770 = vpop.f32.mrb[0].mxu0
        %v4771 = vadd.f32 0.0, %v4770
        %v4772 = vpop.f32.mrb[0].mxu0
        %v4773 = vpop.f32.mrb[0].mxu0
        %v4774 = vadd.f32 0.0, %v4773
        %v4775 = vpop.f32.mrb[0].mxu0
        %4776 = vmatprep.mubr.bf16.mxu0 0
        %4777 = vmatmul.mubr.bf16.gmra.mrb[0].mxu0 %v4471
        %v4778 = vpop.f32.mrb[0].mxu0
        %v4779 = vadd.f32 0.0, %v4778
        %v4780 = vpop.f32.mrb[0].mxu0
        %v4781 = vpop.f32.mrb[0].mxu0
        %v4782 = vadd.f32 0.0, %v4781
        %v4783 = vpop.f32.mrb[0].mxu0
        %4784 = vmatprep.mubr.bf16.mxu0 0
        %4785 = vmatmul.mubr.bf16.gmra.mrb[0].mxu0 %v4480
        %v4786 = vpop.f32.mrb[0].mxu0
        %v4787 = vadd.f32 0.0, %v4786
        %v4788 = vpop.f32.mrb[0].mxu0
        %v4789 = vpop.f32.mrb[0].mxu0
        %v4790 = vadd.f32 0.0, %v4789
        %v4791 = vpop.f32.mrb[0].mxu0
        %4792 = vmatprep.mubr.bf16.mxu0 0
        %4793 = vmatmul.mubr.bf16.gmra.mrb[0].mxu0 %v4489
        %v4794 = vpop.f32.mrb[0].mxu0
        %v4795 = vadd.f32 0.0, %v4794
        %v4796 = vpop.f32.mrb[0].mxu0
        %v4797 = vpop.f32.mrb[0].mxu0
        %v4798 = vadd.f32 0.0, %v4797
        %v4799 = vpop.f32.mrb[0].mxu0
        %4800 = vmatprep.mubr.bf16.mxu0 0
        %4801 = vmatmul.mubr.bf16.gmra.mrb[0].mxu0 %v4498
        %v4802 = vpop.f32.mrb[0].mxu0
        %v4803 = vadd.f32 0.0, %v4802
        %v4804 = vpop.f32.mrb[0].mxu0
        %v4805 = vpop.f32.mrb[0].mxu0
        %v4806 = vadd.f32 0.0, %v4805
        %v4807 = vpop.f32.mrb[0].mxu0
        %4808 = vmatprep.mubr.bf16.mxu0 0
        %4809 = vmatmul.mubr.bf16.gmra.mrb[0].mxu0 %v4507
        %v4810 = vpop.f32.mrb[0].mxu0
        %v4811 = vadd.f32 0.0, %v4810
        %v4812 = vpop.f32.mrb[0].mxu0
        %v4813 = vpop.f32.mrb[0].mxu0
        %v4814 = vadd.f32 0.0, %v4813
        %v4815 = vpop.f32.mrb[0].mxu0
        %4816 = vmatprep.mubr.bf16.mxu0 0
        %4817 = vmatmul.mubr.bf16.gmra.mrb[0].mxu0 %v4516
        %v4818 = vpop.f32.mrb[0].mxu0
        %v4819 = vadd.f32 0.0, %v4818
        %v4820 = vpop.f32.mrb[0].mxu0
        %v4821 = vpop.f32.mrb[0].mxu0
        %v4822 = vadd.f32 0.0, %v4821
        %v4823 = vpop.f32.mrb[0].mxu0
        %4824 = vmatprep.mubr.bf16.mxu0 0
        %4825 = vmatmul.mubr.bf16.gmra.mrb[0].mxu0 %v4525
        %v4826 = vpop.f32.mrb[0].mxu0
        %v4827 = vadd.f32 0.0, %v4826
        %v4828 = vpop.f32.mrb[0].mxu0
        %v4829 = vpop.f32.mrb[0].mxu0
        %v4830 = vadd.f32 0.0, %v4829
        %v4831 = vpop.f32.mrb[0].mxu0
        %4832 = vmatprep.mubr.bf16.mxu0 0
        %4833 = vmatmul.mubr.bf16.gmra.mrb[0].mxu0 %v4534
        %v4834 = vpop.f32.mrb[0].mxu0
        %v4835 = vadd.f32 0.0, %v4834
        %v4836 = vpop.f32.mrb[0].mxu0
        %v4837 = vpop.f32.mrb[0].mxu0
        %v4838 = vadd.f32 0.0, %v4837
        %v4839 = vpop.f32.mrb[0].mxu0
        %4840 = vmatprep.mubr.bf16.mxu0 0
        %4841 = vmatmul.mubr.bf16.gmra.mrb[0].mxu0 %v4543
        %v4842 = vpop.f32.mrb[0].mxu0
        %v4843 = vadd.f32 0.0, %v4842
        %v4844 = vpop.f32.mrb[0].mxu0
        %v4845 = vpop.f32.mrb[0].mxu0
        %v4846 = vadd.f32 0.0, %v4845
        %v4847 = vpop.f32.mrb[0].mxu0
        %4848 = vmatprep.mubr.bf16.mxu0 0
        %4849 = vmatmul.mubr.bf16.gmra.mrb[0].mxu0 %v4552
        %v4850 = vpop.f32.mrb[0].mxu0
        %v4851 = vadd.f32 0.0, %v4850
        %v4852 = vpop.f32.mrb[0].mxu0
        %v4853 = vpop.f32.mrb[0].mxu0
        %v4854 = vadd.f32 0.0, %v4853
        %v4855 = vpop.f32.mrb[0].mxu0
        %4856 = vmatprep.mubr.bf16.mxu0 0
        %4857 = vmatmul.mubr.bf16.gmra.mrb[0].mxu0 %v4561
        %v4858 = vpop.f32.mrb[0].mxu0
        %v4859 = vadd.f32 0.0, %v4858
        %v4860 = vpop.f32.mrb[0].mxu0
        %v4861 = vpop.f32.mrb[0].mxu0
        %v4862 = vadd.f32 0.0, %v4861
        %v4863 = vpop.f32.mrb[0].mxu0
        %4864 = vmatprep.mubr.bf16.mxu0 0
        %4865 = vmatmul.mubr.bf16.gmra.mrb[0].mxu0 %v4570
        %v4866 = vpop.f32.mrb[0].mxu0
        %v4867 = vadd.f32 0.0, %v4866
        %v4868 = vpop.f32.mrb[0].mxu0
        %v4869 = vpop.f32.mrb[0].mxu0
        %v4870 = vadd.f32 0.0, %v4869
        %v4871 = vpop.f32.mrb[0].mxu0
        %4872 = vmatprep.mubr.bf16.mxu0 0
        %4873 = vmatmul.mubr.bf16.gmra.mrb[0].mxu0 %v4579
        %v4874 = vpop.f32.mrb[0].mxu0
        %v4875 = vadd.f32 0.0, %v4874
        %v4876 = vpop.f32.mrb[0].mxu0
        %v4877 = vpop.f32.mrb[0].mxu0
        %v4878 = vadd.f32 0.0, %v4877
        %v4879 = vpop.f32.mrb[0].mxu0
        %4880 = vmatprep.mubr.bf16.mxu0 0
        %4881 = vmatmul.mubr.bf16.gmra.mrb[0].mxu0 %v4588
        %v4882 = vpop.f32.mrb[0].mxu0
        %v4883 = vadd.f32 0.0, %v4882
        %v4884 = vpop.f32.mrb[0].mxu0
        %v4885 = vpop.f32.mrb[0].mxu0
        %v4886 = vadd.f32 0.0, %v4885
        %v4887 = vpop.f32.mrb[0].mxu0
        %4888 = vmatprep.mubr.bf16.mxu0 0
        %4889 = vmatmul.mubr.bf16.gmra.mrb[0].mxu0 %v4597
        %v4890 = vpop.f32.mrb[0].mxu0
        %v4891 = vadd.f32 0.0, %v4890
        %v4892 = vpop.f32.mrb[0].mxu0
        %v4893 = vpop.f32.mrb[0].mxu0
        %v4894 = vadd.f32 0.0, %v4893
        %v4895 = vpop.f32.mrb[0].mxu0
        %4896 = vmatprep.mubr.bf16.mxu0 0
        %4897 = vmatmul.mubr.bf16.gmra.mrb[0].mxu0 %v4606
        %v4898 = vpop.f32.mrb[0].mxu0
        %v4899 = vadd.f32 0.0, %v4898
        %v4900 = vpop.f32.mrb[0].mxu0
        %v4901 = vpop.f32.mrb[0].mxu0
        %v4902 = vadd.f32 0.0, %v4901
        %v4903 = vpop.f32.mrb[0].mxu0
        %4904 = vmatprep.mubr.bf16.mxu0 0
        %4905 = vmatmul.mubr.bf16.gmra.mrb[0].mxu0 %v4615
        %v4906 = vpop.f32.mrb[0].mxu0
        %v4907 = vadd.f32 0.0, %v4906
        %v4908 = vpop.f32.mrb[0].mxu0
        %v4909 = vpop.f32.mrb[0].mxu0
        %v4910 = vadd.f32 0.0, %v4909
        %v4911 = vpop.f32.mrb[0].mxu0
        %4912 = vdwg.mxu0
        %v4913 = vld [vmem:[#allocation3] sm:$0xff]
        %v4914 = vld [vmem:[#allocation3 + $0x8] sm:$0xff]
        %v4915 = vld [vmem:[#allocation3 + $0x10] sm:$0xff]
        %v4916 = vld [vmem:[#allocation3 + $0x18] sm:$0xff]
        %v4917 = vld [vmem:[#allocation3 + $0x20] sm:$0xff]
        %v4918 = vld [vmem:[#allocation3 + $0x28] sm:$0xff]
        %v4919 = vld [vmem:[#allocation3 + $0x30] sm:$0xff]
        %v4920 = vld [vmem:[#allocation3 + $0x38] sm:$0xff]
        %v4921 = vld [vmem:[#allocation3 + $0x40] sm:$0xff]
        %v4922 = vld [vmem:[#allocation3 + $0x48] sm:$0xff]
        %v4923 = vld [vmem:[#allocation3 + $0x50] sm:$0xff]
        %v4924 = vld [vmem:[#allocation3 + $0x58] sm:$0xff]
        %v4925 = vld [vmem:[#allocation3 + $0x60] sm:$0xff]
        %v4926 = vld [vmem:[#allocation3 + $0x68] sm:$0xff]
        %v4927 = vld [vmem:[#allocation3 + $0x70] sm:$0xff]
        %v4928 = vld [vmem:[#allocation3 + $0x78] sm:$0xff]
        %v4929 = vld [vmem:[#allocation3 + $0x80] sm:$0xff]
        %v4930 = vld [vmem:[#allocation3 + $0x88] sm:$0xff]
        %v4931 = vld [vmem:[#allocation3 + $0x90] sm:$0xff]
        %v4932 = vld [vmem:[#allocation3 + $0x98] sm:$0xff]
        %v4933 = vld [vmem:[#allocation3 + $0xa0] sm:$0xff]
        %v4934 = vld [vmem:[#allocation3 + $0xa8] sm:$0xff]
        %v4935 = vld [vmem:[#allocation3 + $0xb0] sm:$0xff]
        %v4936 = vld [vmem:[#allocation3 + $0xb8] sm:$0xff]
        %v4937 = vld [vmem:[#allocation3 + $0xc0] sm:$0xff]
        %v4938 = vld [vmem:[#allocation3 + $0xc8] sm:$0xff]
        %v4939 = vld [vmem:[#allocation3 + $0xd0] sm:$0xff]
        %v4940 = vld [vmem:[#allocation3 + $0xd8] sm:$0xff]
        %v4941 = vld [vmem:[#allocation3 + $0xe0] sm:$0xff]
        %v4942 = vld [vmem:[#allocation3 + $0xe8] sm:$0xff]
        %v4943 = vld [vmem:[#allocation3 + $0xf0] sm:$0xff]
        %v4944 = vld [vmem:[#allocation3 + $0xf8] sm:$0xff]
        %v4945 = vld [vmem:[#allocation3 + $0x100] sm:$0xff]
        %v4946 = vld [vmem:[#allocation3 + $0x108] sm:$0xff]
        %v4947 = vld [vmem:[#allocation3 + $0x110] sm:$0xff]
        %v4948 = vld [vmem:[#allocation3 + $0x118] sm:$0xff]
        %v4949 = vld [vmem:[#allocation3 + $0x120] sm:$0xff]
        %v4950 = vld [vmem:[#allocation3 + $0x128] sm:$0xff]
        %v4951 = vld [vmem:[#allocation3 + $0x130] sm:$0xff]
        %v4952 = vld [vmem:[#allocation3 + $0x138] sm:$0xff]
        %v4953 = vld [vmem:[#allocation3 + $0x140] sm:$0xff]
        %v4954 = vld [vmem:[#allocation3 + $0x148] sm:$0xff]
        %v4955 = vld [vmem:[#allocation3 + $0x150] sm:$0xff]
        %v4956 = vld [vmem:[#allocation3 + $0x158] sm:$0xff]
        %v4957 = vld [vmem:[#allocation3 + $0x160] sm:$0xff]
        %v4958 = vld [vmem:[#allocation3 + $0x168] sm:$0xff]
        %v4959 = vld [vmem:[#allocation3 + $0x170] sm:$0xff]
        %v4960 = vld [vmem:[#allocation3 + $0x178] sm:$0xff]
        %v4961 = vadd.f32 %v4913, %v4723
        %v4962 = vadd.f32 %v4914, %v4726
        %v4963 = vadd.f32 %v4915, %v4731
        %v4964 = vadd.f32 %v4916, %v4734
        %v4965 = vadd.f32 %v4917, %v4739
        %v4966 = vadd.f32 %v4918, %v4742
        %v4967 = vadd.f32 %v4919, %v4747
        %v4968 = vadd.f32 %v4920, %v4750
        %v4969 = vadd.f32 %v4921, %v4755
        %v4970 = vadd.f32 %v4922, %v4758
        %v4971 = vadd.f32 %v4923, %v4763
        %v4972 = vadd.f32 %v4924, %v4766
        %v4973 = vadd.f32 %v4925, %v4771
        %v4974 = vadd.f32 %v4926, %v4774
        %v4975 = vadd.f32 %v4927, %v4779
        %v4976 = vadd.f32 %v4928, %v4782
        %v4977 = vadd.f32 %v4929, %v4787
        %v4978 = vadd.f32 %v4930, %v4790
        %v4979 = vadd.f32 %v4931, %v4795
        %v4980 = vadd.f32 %v4932, %v4798
        %v4981 = vadd.f32 %v4933, %v4803
        %v4982 = vadd.f32 %v4934, %v4806
        %v4983 = vadd.f32 %v4935, %v4811
        %v4984 = vadd.f32 %v4936, %v4814
        %v4985 = vadd.f32 %v4937, %v4819
        %v4986 = vadd.f32 %v4938, %v4822
        %v4987 = vadd.f32 %v4939, %v4827
        %v4988 = vadd.f32 %v4940, %v4830
        %v4989 = vadd.f32 %v4941, %v4835
        %v4990 = vadd.f32 %v4942, %v4838
        %v4991 = vadd.f32 %v4943, %v4843
        %v4992 = vadd.f32 %v4944, %v4846
        %v4993 = vadd.f32 %v4945, %v4851
        %v4994 = vadd.f32 %v4946, %v4854
        %v4995 = vadd.f32 %v4947, %v4859
        %v4996 = vadd.f32 %v4948, %v4862
        %v4997 = vadd.f32 %v4949, %v4867
        %v4998 = vadd.f32 %v4950, %v4870
        %v4999 = vadd.f32 %v4951, %v4875
        %v5000 = vadd.f32 %v4952, %v4878
        %v5001 = vadd.f32 %v4953, %v4883
        %v5002 = vadd.f32 %v4954, %v4886
        %v5003 = vadd.f32 %v4955, %v4891
        %v5004 = vadd.f32 %v4956, %v4894
        %v5005 = vadd.f32 %v4957, %v4899
        %v5006 = vadd.f32 %v4958, %v4902
        %v5007 = vadd.f32 %v4959, %v4907
        %v5008 = vadd.f32 %v4960, %v4910
        %5009 = vst [vmem:[#allocation3] sm:$0xff] %v4961
        %5010 = vst [vmem:[#allocation3 + $0x8] sm:$0xff] %v4962
        %5011 = vst [vmem:[#allocation3 + $0x10] sm:$0xff] %v4963
        %5012 = vst [vmem:[#allocation3 + $0x18] sm:$0xff] %v4964
        %5013 = vst [vmem:[#allocation3 + $0x20] sm:$0xff] %v4965
        %5014 = vst [vmem:[#allocation3 + $0x28] sm:$0xff] %v4966
        %5015 = vst [vmem:[#allocation3 + $0x30] sm:$0xff] %v4967
        %5016 = vst [vmem:[#allocation3 + $0x38] sm:$0xff] %v4968
        %5017 = vst [vmem:[#allocation3 + $0x40] sm:$0xff] %v4969
        %5018 = vst [vmem:[#allocation3 + $0x48] sm:$0xff] %v4970
        %5019 = vst [vmem:[#allocation3 + $0x50] sm:$0xff] %v4971
        %5020 = vst [vmem:[#allocation3 + $0x58] sm:$0xff] %v4972
        %5021 = vst [vmem:[#allocation3 + $0x60] sm:$0xff] %v4973
        %5022 = vst [vmem:[#allocation3 + $0x68] sm:$0xff] %v4974
        %5023 = vst [vmem:[#allocation3 + $0x70] sm:$0xff] %v4975
        %5024 = vst [vmem:[#allocation3 + $0x78] sm:$0xff] %v4976
        %5025 = vst [vmem:[#allocation3 + $0x80] sm:$0xff] %v4977
        %5026 = vst [vmem:[#allocation3 + $0x88] sm:$0xff] %v4978
        %5027 = vst [vmem:[#allocation3 + $0x90] sm:$0xff] %v4979
        %5028 = vst [vmem:[#allocation3 + $0x98] sm:$0xff] %v4980
        %5029 = vst [vmem:[#allocation3 + $0xa0] sm:$0xff] %v4981
        %5030 = vst [vmem:[#allocation3 + $0xa8] sm:$0xff] %v4982
        %5031 = vst [vmem:[#allocation3 + $0xb0] sm:$0xff] %v4983
        %5032 = vst [vmem:[#allocation3 + $0xb8] sm:$0xff] %v4984
        %5033 = vst [vmem:[#allocation3 + $0xc0] sm:$0xff] %v4985
        %5034 = vst [vmem:[#allocation3 + $0xc8] sm:$0xff] %v4986
        %5035 = vst [vmem:[#allocation3 + $0xd0] sm:$0xff] %v4987
        %5036 = vst [vmem:[#allocation3 + $0xd8] sm:$0xff] %v4988
        %5037 = vst [vmem:[#allocation3 + $0xe0] sm:$0xff] %v4989
        %5038 = vst [vmem:[#allocation3 + $0xe8] sm:$0xff] %v4990
        %5039 = vst [vmem:[#allocation3 + $0xf0] sm:$0xff] %v4991
        %5040 = vst [vmem:[#allocation3 + $0xf8] sm:$0xff] %v4992
        %5041 = vst [vmem:[#allocation3 + $0x100] sm:$0xff] %v4993
        %5042 = vst [vmem:[#allocation3 + $0x108] sm:$0xff] %v4994
        %5043 = vst [vmem:[#allocation3 + $0x110] sm:$0xff] %v4995
        %5044 = vst [vmem:[#allocation3 + $0x118] sm:$0xff] %v4996
        %5045 = vst [vmem:[#allocation3 + $0x120] sm:$0xff] %v4997
        %5046 = vst [vmem:[#allocation3 + $0x128] sm:$0xff] %v4998
        %5047 = vst [vmem:[#allocation3 + $0x130] sm:$0xff] %v4999
        %5048 = vst [vmem:[#allocation3 + $0x138] sm:$0xff] %v5000
        %5049 = vst [vmem:[#allocation3 + $0x140] sm:$0xff] %v5001
        %5050 = vst [vmem:[#allocation3 + $0x148] sm:$0xff] %v5002
        %5051 = vst [vmem:[#allocation3 + $0x150] sm:$0xff] %v5003
        %5052 = vst [vmem:[#allocation3 + $0x158] sm:$0xff] %v5004
        %5053 = vst [vmem:[#allocation3 + $0x160] sm:$0xff] %v5005
        %5054 = vst [vmem:[#allocation3 + $0x168] sm:$0xff] %v5006
        %5055 = vst [vmem:[#allocation3 + $0x170] sm:$0xff] %v5007
        %5056 = vst [vmem:[#allocation3 + $0x178] sm:$0xff] %v5008
        %v5057 = vld [vmem:[#allocation2 + $0x18] sm:$0xf0]
        %v5058 = vld [vmem:[#allocation2 + $0x20] sm:$0xff]
        %v5059 = vld [vmem:[#allocation2 + $0x28] sm:$0xff]
        %v5060 = vld [vmem:[#allocation2 + $0x30] sm:$0xff]
        %v5061 = vld [vmem:[#allocation2 + $0x38] sm:$0xff]
        %v5062 = vld [vmem:[#allocation2 + $0x40] sm:$0xff]
        %v5063 = vld [vmem:[#allocation2 + $0x48] sm:$0xff]
        %v5064 = vld [vmem:[#allocation2 + $0x50] sm:$0xff]
        %v5065 = vld [vmem:[#allocation2 + $0x58] sm:$0xff]
        %v5066 = vld [vmem:[#allocation2 + $0x60] sm:$0xff]
        %v5067 = vld [vmem:[#allocation2 + $0x68] sm:$0xff]
        %v5068 = vld [vmem:[#allocation2 + $0x70] sm:$0xff]
        %v5069 = vld [vmem:[#allocation2 + $0x78] sm:$0xff]
        %v5070 = vld [vmem:[#allocation2 + $0x80] sm:$0xff]
        %v5071 = vld [vmem:[#allocation2 + $0x88] sm:$0xff]
        %v5072 = vld [vmem:[#allocation2 + $0x90] sm:$0xff]
        %v5073 = vld [vmem:[#allocation2 + $0x98] sm:$0xff]
        %v5074 = vld [vmem:[#allocation2 + $0xa0] sm:$0xff]
        %v5075 = vld [vmem:[#allocation2 + $0xa8] sm:$0xff]
        %v5076 = vld [vmem:[#allocation2 + $0xb0] sm:$0xff]
        %v5077 = vld [vmem:[#allocation2 + $0xb8] sm:$0xff]
        %v5078 = vld [vmem:[#allocation2 + $0xc0] sm:$0xff]
        %v5079 = vld [vmem:[#allocation2 + $0xc8] sm:$0xff]
        %v5080 = vld [vmem:[#allocation2 + $0xd0] sm:$0xff]
        %v5081 = vld [vmem:[#allocation2 + $0xd8] sm:$0xf]
        %s5082 = scalar_lea.vmem %s3, 448
        %v5083 = vld [vmem:[%s5082] sm:$0xf]
        %v5084 = vld [vmem:[%s5082 + $0x4] sm:$0xf]
        %v5085 = vld [vmem:[%s5082 + $0x8] sm:$0xf]
        %v5086 = vld [vmem:[%s5082 + $0xc] sm:$0xf]
        %v5087 = vld [vmem:[%s5082 + $0x10] sm:$0xf]
        %v5088 = vld [vmem:[%s5082 + $0x14] sm:$0xf]
        %v5089 = vld [vmem:[%s5082 + $0x18] sm:$0xf]
        %v5090 = vld [vmem:[%s5082 + $0x1c] sm:$0xf]
        %v5091 = vld [vmem:[%s5082 + $0x20] sm:$0xf]
        %v5092 = vld [vmem:[%s5082 + $0x24] sm:$0xf]
        %v5093 = vld [vmem:[%s5082 + $0x28] sm:$0xf]
        %v5094 = vld [vmem:[%s5082 + $0x2c] sm:$0xf]
        %v5095 = vld [vmem:[%s5082 + $0x30] sm:$0xf]
        %v5096 = vld [vmem:[%s5082 + $0x34] sm:$0xf]
        %v5097 = vld [vmem:[%s5082 + $0x38] sm:$0xf]
        %v5098 = vld [vmem:[%s5082 + $0x3c] sm:$0xf]
        %v5124 = vrot.slane %v5057, 4
        %v5125 = vrot.slane %v5058, 4
        %v5126 = vsel %vm1333, %v5124, %v5125
        %v5127 = vrot.slane %v5059, 4
        %v5128 = vsel %vm1333, %v5125, %v5127
        %v5129 = vrot.slane %v5060, 4
        %v5130 = vsel %vm1333, %v5127, %v5129
        %v5131 = vrot.slane %v5061, 4
        %v5132 = vsel %vm1333, %v5129, %v5131
        %v5133 = vrot.slane %v5062, 4
        %v5134 = vsel %vm1333, %v5131, %v5133
        %v5135 = vrot.slane %v5063, 4
        %v5136 = vsel %vm1333, %v5133, %v5135
        %v5137 = vrot.slane %v5064, 4
        %v5138 = vsel %vm1333, %v5135, %v5137
        %v5139 = vrot.slane %v5065, 4
        %v5140 = vsel %vm1333, %v5137, %v5139
        %v5141 = vrot.slane %v5066, 4
        %v5142 = vsel %vm1333, %v5139, %v5141
        %v5143 = vrot.slane %v5067, 4
        %v5144 = vsel %vm1333, %v5141, %v5143
        %v5145 = vrot.slane %v5068, 4
        %v5146 = vsel %vm1333, %v5143, %v5145
        %v5147 = vrot.slane %v5069, 4
        %v5148 = vsel %vm1333, %v5145, %v5147
        %v5149 = vrot.slane %v5070, 4
        %v5150 = vsel %vm1333, %v5147, %v5149
        %v5151 = vrot.slane %v5071, 4
        %v5152 = vsel %vm1333, %v5149, %v5151
        %v5153 = vrot.slane %v5072, 4
        %v5154 = vsel %vm1333, %v5151, %v5153
        %v5155 = vrot.slane %v5073, 4
        %v5156 = vsel %vm1333, %v5153, %v5155
        %v5157 = vrot.slane %v5074, 4
        %v5158 = vsel %vm1333, %v5155, %v5157
        %v5159 = vrot.slane %v5075, 4
        %v5160 = vsel %vm1333, %v5157, %v5159
        %v5161 = vrot.slane %v5076, 4
        %v5162 = vsel %vm1333, %v5159, %v5161
        %v5163 = vrot.slane %v5077, 4
        %v5164 = vsel %vm1333, %v5161, %v5163
        %v5165 = vrot.slane %v5078, 4
        %v5166 = vsel %vm1333, %v5163, %v5165
        %v5167 = vrot.slane %v5079, 4
        %v5168 = vsel %vm1333, %v5165, %v5167
        %v5169 = vrot.slane %v5080, 4
        %v5170 = vsel %vm1333, %v5167, %v5169
        %v5171 = vrot.slane %v5081, 4
        %v5172 = vsel %vm1333, %v5169, %v5171
        %v5213 = vunpack.c.l.b16 %v5083
        %v5214 = vunpack.c.l.b16 %v5084
        %v5215 = vunpack.c.l.b16 %v5085
        %v5216 = vunpack.c.l.b16 %v5086
        %v5217 = vunpack.c.l.b16 %v5087
        %v5218 = vunpack.c.l.b16 %v5088
        %v5219 = vunpack.c.l.b16 %v5089
        %v5220 = vunpack.c.l.b16 %v5090
        %v5221 = vunpack.c.l.b16 %v5091
        %v5222 = vunpack.c.l.b16 %v5092
        %v5223 = vunpack.c.l.b16 %v5093
        %v5224 = vunpack.c.l.b16 %v5094
        %v5225 = vunpack.c.l.b16 %v5095
        %v5226 = vunpack.c.l.b16 %v5096
        %v5227 = vunpack.c.l.b16 %v5097
        %v5228 = vunpack.c.l.b16 %v5098
        %v5229 = vpack.c.b16 %v5214, %v5213
        %v5230 = vpack.c.b16 %v5216, %v5215
        %v5231 = vpack.c.b16 %v5218, %v5217
        %v5232 = vpack.c.b16 %v5220, %v5219
        %v5233 = vpack.c.b16 %v5222, %v5221
        %v5234 = vpack.c.b16 %v5224, %v5223
        %v5235 = vpack.c.b16 %v5226, %v5225
        %v5236 = vpack.c.b16 %v5228, %v5227
        %5245 = vmatprep.subr.bf16.mxu0 0
        %5246 = vmatpush1.bf16.msra.mxu0 %v5229
        %5247 = vmatprep.subr.bf16.mxu0 0
        %5248 = vmatpush1.bf16.msra.mxu0 %v5230
        %5249 = vmatprep.subr.bf16.mxu0 0
        %5250 = vmatpush1.bf16.msra.mxu0 %v5231
        %5251 = vmatprep.subr.bf16.mxu0 0
        %5252 = vmatpush1.bf16.msra.mxu0 %v5232
        %5253 = vmatprep.subr.bf16.mxu0 0
        %5254 = vmatpush1.bf16.msra.mxu0 %v5233
        %5255 = vmatprep.subr.bf16.mxu0 0
        %5256 = vmatpush1.bf16.msra.mxu0 %v5234
        %5257 = vmatprep.subr.bf16.mxu0 0
        %5258 = vmatpush1.bf16.msra.mxu0 %v5235
        %5259 = vmatprep.subr.bf16.mxu0 0
        %5260 = vmatpush1.bf16.msra.mxu0 %v5236
        %5261 = vmatprep.subr.bf16.mxu0 0
        %5262 = vmatpush1.bf16.msra.mxu0 0
        %5263 = vmatprep.subr.bf16.mxu0 0
        %5264 = vmatpush1.bf16.msra.mxu0 0
        %5265 = vmatprep.subr.bf16.mxu0 0
        %5266 = vmatpush1.bf16.msra.mxu0 0
        %5267 = vmatprep.subr.bf16.mxu0 0
        %5268 = vmatpush1.bf16.msra.mxu0 0
        %5269 = vmatprep.subr.bf16.mxu0 0
        %5270 = vmatpush1.bf16.msra.mxu0 0
        %5271 = vmatprep.subr.bf16.mxu0 0
        %5272 = vmatpush1.bf16.msra.mxu0 0
        %5273 = vmatprep.subr.bf16.mxu0 0
        %5274 = vmatpush1.bf16.msra.mxu0 0
        %5275 = vmatprep.subr.bf16.mxu0 0
        %5276 = vmatpush1.bf16.msra.mxu0 0
        %5277 = vmatprep.mubr.bf16.mxu0 0
        %5278 = vmatmul.mubr.bf16.gmra.mrb[0].mxu0 %v5126
        %v5279 = vpop.f32.mrb[0].mxu0
        %v5280 = vadd.f32 0.0, %v5279
        %v5281 = vpop.f32.mrb[0].mxu0
        %v5282 = vpop.f32.mrb[0].mxu0
        %v5283 = vadd.f32 0.0, %v5282
        %v5284 = vpop.f32.mrb[0].mxu0
        %5285 = vmatprep.mubr.bf16.mxu0 0
        %5286 = vmatmul.mubr.bf16.gmra.mrb[0].mxu0 %v5128
        %v5287 = vpop.f32.mrb[0].mxu0
        %v5288 = vadd.f32 0.0, %v5287
        %v5289 = vpop.f32.mrb[0].mxu0
        %v5290 = vpop.f32.mrb[0].mxu0
        %v5291 = vadd.f32 0.0, %v5290
        %v5292 = vpop.f32.mrb[0].mxu0
        %5293 = vmatprep.mubr.bf16.mxu0 0
        %5294 = vmatmul.mubr.bf16.gmra.mrb[0].mxu0 %v5130
        %v5295 = vpop.f32.mrb[0].mxu0
        %v5296 = vadd.f32 0.0, %v5295
        %v5297 = vpop.f32.mrb[0].mxu0
        %v5298 = vpop.f32.mrb[0].mxu0
        %v5299 = vadd.f32 0.0, %v5298
        %v5300 = vpop.f32.mrb[0].mxu0
        %5301 = vmatprep.mubr.bf16.mxu0 0
        %5302 = vmatmul.mubr.bf16.gmra.mrb[0].mxu0 %v5132
        %v5303 = vpop.f32.mrb[0].mxu0
        %v5304 = vadd.f32 0.0, %v5303
        %v5305 = vpop.f32.mrb[0].mxu0
        %v5306 = vpop.f32.mrb[0].mxu0
        %v5307 = vadd.f32 0.0, %v5306
        %v5308 = vpop.f32.mrb[0].mxu0
        %5309 = vmatprep.mubr.bf16.mxu0 0
        %5310 = vmatmul.mubr.bf16.gmra.mrb[0].mxu0 %v5134
        %v5311 = vpop.f32.mrb[0].mxu0
        %v5312 = vadd.f32 0.0, %v5311
        %v5313 = vpop.f32.mrb[0].mxu0
        %v5314 = vpop.f32.mrb[0].mxu0
        %v5315 = vadd.f32 0.0, %v5314
        %v5316 = vpop.f32.mrb[0].mxu0
        %5317 = vmatprep.mubr.bf16.mxu0 0
        %5318 = vmatmul.mubr.bf16.gmra.mrb[0].mxu0 %v5136
        %v5319 = vpop.f32.mrb[0].mxu0
        %v5320 = vadd.f32 0.0, %v5319
        %v5321 = vpop.f32.mrb[0].mxu0
        %v5322 = vpop.f32.mrb[0].mxu0
        %v5323 = vadd.f32 0.0, %v5322
        %v5324 = vpop.f32.mrb[0].mxu0
        %5325 = vmatprep.mubr.bf16.mxu0 0
        %5326 = vmatmul.mubr.bf16.gmra.mrb[0].mxu0 %v5138
        %v5327 = vpop.f32.mrb[0].mxu0
        %v5328 = vadd.f32 0.0, %v5327
        %v5329 = vpop.f32.mrb[0].mxu0
        %v5330 = vpop.f32.mrb[0].mxu0
        %v5331 = vadd.f32 0.0, %v5330
        %v5332 = vpop.f32.mrb[0].mxu0
        %5333 = vmatprep.mubr.bf16.mxu0 0
        %5334 = vmatmul.mubr.bf16.gmra.mrb[0].mxu0 %v5140
        %v5335 = vpop.f32.mrb[0].mxu0
        %v5336 = vadd.f32 0.0, %v5335
        %v5337 = vpop.f32.mrb[0].mxu0
        %v5338 = vpop.f32.mrb[0].mxu0
        %v5339 = vadd.f32 0.0, %v5338
        %v5340 = vpop.f32.mrb[0].mxu0
        %5341 = vmatprep.mubr.bf16.mxu0 0
        %5342 = vmatmul.mubr.bf16.gmra.mrb[0].mxu0 %v5142
        %v5343 = vpop.f32.mrb[0].mxu0
        %v5344 = vadd.f32 0.0, %v5343
        %v5345 = vpop.f32.mrb[0].mxu0
        %v5346 = vpop.f32.mrb[0].mxu0
        %v5347 = vadd.f32 0.0, %v5346
        %v5348 = vpop.f32.mrb[0].mxu0
        %5349 = vmatprep.mubr.bf16.mxu0 0
        %5350 = vmatmul.mubr.bf16.gmra.mrb[0].mxu0 %v5144
        %v5351 = vpop.f32.mrb[0].mxu0
        %v5352 = vadd.f32 0.0, %v5351
        %v5353 = vpop.f32.mrb[0].mxu0
        %v5354 = vpop.f32.mrb[0].mxu0
        %v5355 = vadd.f32 0.0, %v5354
        %v5356 = vpop.f32.mrb[0].mxu0
        %5357 = vmatprep.mubr.bf16.mxu0 0
        %5358 = vmatmul.mubr.bf16.gmra.mrb[0].mxu0 %v5146
        %v5359 = vpop.f32.mrb[0].mxu0
        %v5360 = vadd.f32 0.0, %v5359
        %v5361 = vpop.f32.mrb[0].mxu0
        %v5362 = vpop.f32.mrb[0].mxu0
        %v5363 = vadd.f32 0.0, %v5362
        %v5364 = vpop.f32.mrb[0].mxu0
        %5365 = vmatprep.mubr.bf16.mxu0 0
        %5366 = vmatmul.mubr.bf16.gmra.mrb[0].mxu0 %v5148
        %v5367 = vpop.f32.mrb[0].mxu0
        %v5368 = vadd.f32 0.0, %v5367
        %v5369 = vpop.f32.mrb[0].mxu0
        %v5370 = vpop.f32.mrb[0].mxu0
        %v5371 = vadd.f32 0.0, %v5370
        %v5372 = vpop.f32.mrb[0].mxu0
        %5373 = vmatprep.mubr.bf16.mxu0 0
        %5374 = vmatmul.mubr.bf16.gmra.mrb[0].mxu0 %v5150
        %v5375 = vpop.f32.mrb[0].mxu0
        %v5376 = vadd.f32 0.0, %v5375
        %v5377 = vpop.f32.mrb[0].mxu0
        %v5378 = vpop.f32.mrb[0].mxu0
        %v5379 = vadd.f32 0.0, %v5378
        %v5380 = vpop.f32.mrb[0].mxu0
        %5381 = vmatprep.mubr.bf16.mxu0 0
        %5382 = vmatmul.mubr.bf16.gmra.mrb[0].mxu0 %v5152
        %v5383 = vpop.f32.mrb[0].mxu0
        %v5384 = vadd.f32 0.0, %v5383
        %v5385 = vpop.f32.mrb[0].mxu0
        %v5386 = vpop.f32.mrb[0].mxu0
        %v5387 = vadd.f32 0.0, %v5386
        %v5388 = vpop.f32.mrb[0].mxu0
        %5389 = vmatprep.mubr.bf16.mxu0 0
        %5390 = vmatmul.mubr.bf16.gmra.mrb[0].mxu0 %v5154
        %v5391 = vpop.f32.mrb[0].mxu0
        %v5392 = vadd.f32 0.0, %v5391
        %v5393 = vpop.f32.mrb[0].mxu0
        %v5394 = vpop.f32.mrb[0].mxu0
        %v5395 = vadd.f32 0.0, %v5394
        %v5396 = vpop.f32.mrb[0].mxu0
        %5397 = vmatprep.mubr.bf16.mxu0 0
        %5398 = vmatmul.mubr.bf16.gmra.mrb[0].mxu0 %v5156
        %v5399 = vpop.f32.mrb[0].mxu0
        %v5400 = vadd.f32 0.0, %v5399
        %v5401 = vpop.f32.mrb[0].mxu0
        %v5402 = vpop.f32.mrb[0].mxu0
        %v5403 = vadd.f32 0.0, %v5402
        %v5404 = vpop.f32.mrb[0].mxu0
        %5405 = vmatprep.mubr.bf16.mxu0 0
        %5406 = vmatmul.mubr.bf16.gmra.mrb[0].mxu0 %v5158
        %v5407 = vpop.f32.mrb[0].mxu0
        %v5408 = vadd.f32 0.0, %v5407
        %v5409 = vpop.f32.mrb[0].mxu0
        %v5410 = vpop.f32.mrb[0].mxu0
        %v5411 = vadd.f32 0.0, %v5410
        %v5412 = vpop.f32.mrb[0].mxu0
        %5413 = vmatprep.mubr.bf16.mxu0 0
        %5414 = vmatmul.mubr.bf16.gmra.mrb[0].mxu0 %v5160
        %v5415 = vpop.f32.mrb[0].mxu0
        %v5416 = vadd.f32 0.0, %v5415
        %v5417 = vpop.f32.mrb[0].mxu0
        %v5418 = vpop.f32.mrb[0].mxu0
        %v5419 = vadd.f32 0.0, %v5418
        %v5420 = vpop.f32.mrb[0].mxu0
        %5421 = vmatprep.mubr.bf16.mxu0 0
        %5422 = vmatmul.mubr.bf16.gmra.mrb[0].mxu0 %v5162
        %v5423 = vpop.f32.mrb[0].mxu0
        %v5424 = vadd.f32 0.0, %v5423
        %v5425 = vpop.f32.mrb[0].mxu0
        %v5426 = vpop.f32.mrb[0].mxu0
        %v5427 = vadd.f32 0.0, %v5426
        %v5428 = vpop.f32.mrb[0].mxu0
        %5429 = vmatprep.mubr.bf16.mxu0 0
        %5430 = vmatmul.mubr.bf16.gmra.mrb[0].mxu0 %v5164
        %v5431 = vpop.f32.mrb[0].mxu0
        %v5432 = vadd.f32 0.0, %v5431
        %v5433 = vpop.f32.mrb[0].mxu0
        %v5434 = vpop.f32.mrb[0].mxu0
        %v5435 = vadd.f32 0.0, %v5434
        %v5436 = vpop.f32.mrb[0].mxu0
        %5437 = vmatprep.mubr.bf16.mxu0 0
        %5438 = vmatmul.mubr.bf16.gmra.mrb[0].mxu0 %v5166
        %v5439 = vpop.f32.mrb[0].mxu0
        %v5440 = vadd.f32 0.0, %v5439
        %v5441 = vpop.f32.mrb[0].mxu0
        %v5442 = vpop.f32.mrb[0].mxu0
        %v5443 = vadd.f32 0.0, %v5442
        %v5444 = vpop.f32.mrb[0].mxu0
        %5445 = vmatprep.mubr.bf16.mxu0 0
        %5446 = vmatmul.mubr.bf16.gmra.mrb[0].mxu0 %v5168
        %v5447 = vpop.f32.mrb[0].mxu0
        %v5448 = vadd.f32 0.0, %v5447
        %v5449 = vpop.f32.mrb[0].mxu0
        %v5450 = vpop.f32.mrb[0].mxu0
        %v5451 = vadd.f32 0.0, %v5450
        %v5452 = vpop.f32.mrb[0].mxu0
        %5453 = vmatprep.mubr.bf16.mxu0 0
        %5454 = vmatmul.mubr.bf16.gmra.mrb[0].mxu0 %v5170
        %v5455 = vpop.f32.mrb[0].mxu0
        %v5456 = vadd.f32 0.0, %v5455
        %v5457 = vpop.f32.mrb[0].mxu0
        %v5458 = vpop.f32.mrb[0].mxu0
        %v5459 = vadd.f32 0.0, %v5458
        %v5460 = vpop.f32.mrb[0].mxu0
        %5461 = vmatprep.mubr.bf16.mxu0 0
        %5462 = vmatmul.mubr.bf16.gmra.mrb[0].mxu0 %v5172
        %v5463 = vpop.f32.mrb[0].mxu0
        %v5464 = vadd.f32 0.0, %v5463
        %v5465 = vpop.f32.mrb[0].mxu0
        %v5466 = vpop.f32.mrb[0].mxu0
        %v5467 = vadd.f32 0.0, %v5466
        %v5468 = vpop.f32.mrb[0].mxu0
        %5469 = vdwg.mxu0
        %v5470 = vld [vmem:[#allocation3] sm:$0xff]
        %v5471 = vld [vmem:[#allocation3 + $0x8] sm:$0xff]
        %v5472 = vld [vmem:[#allocation3 + $0x10] sm:$0xff]
        %v5473 = vld [vmem:[#allocation3 + $0x18] sm:$0xff]
        %v5474 = vld [vmem:[#allocation3 + $0x20] sm:$0xff]
        %v5475 = vld [vmem:[#allocation3 + $0x28] sm:$0xff]
        %v5476 = vld [vmem:[#allocation3 + $0x30] sm:$0xff]
        %v5477 = vld [vmem:[#allocation3 + $0x38] sm:$0xff]
        %v5478 = vld [vmem:[#allocation3 + $0x40] sm:$0xff]
        %v5479 = vld [vmem:[#allocation3 + $0x48] sm:$0xff]
        %v5480 = vld [vmem:[#allocation3 + $0x50] sm:$0xff]
        %v5481 = vld [vmem:[#allocation3 + $0x58] sm:$0xff]
        %v5482 = vld [vmem:[#allocation3 + $0x60] sm:$0xff]
        %v5483 = vld [vmem:[#allocation3 + $0x68] sm:$0xff]
        %v5484 = vld [vmem:[#allocation3 + $0x70] sm:$0xff]
        %v5485 = vld [vmem:[#allocation3 + $0x78] sm:$0xff]
        %v5486 = vld [vmem:[#allocation3 + $0x80] sm:$0xff]
        %v5487 = vld [vmem:[#allocation3 + $0x88] sm:$0xff]
        %v5488 = vld [vmem:[#allocation3 + $0x90] sm:$0xff]
        %v5489 = vld [vmem:[#allocation3 + $0x98] sm:$0xff]
        %v5490 = vld [vmem:[#allocation3 + $0xa0] sm:$0xff]
        %v5491 = vld [vmem:[#allocation3 + $0xa8] sm:$0xff]
        %v5492 = vld [vmem:[#allocation3 + $0xb0] sm:$0xff]
        %v5493 = vld [vmem:[#allocation3 + $0xb8] sm:$0xff]
        %v5494 = vld [vmem:[#allocation3 + $0xc0] sm:$0xff]
        %v5495 = vld [vmem:[#allocation3 + $0xc8] sm:$0xff]
        %v5496 = vld [vmem:[#allocation3 + $0xd0] sm:$0xff]
        %v5497 = vld [vmem:[#allocation3 + $0xd8] sm:$0xff]
        %v5498 = vld [vmem:[#allocation3 + $0xe0] sm:$0xff]
        %v5499 = vld [vmem:[#allocation3 + $0xe8] sm:$0xff]
        %v5500 = vld [vmem:[#allocation3 + $0xf0] sm:$0xff]
        %v5501 = vld [vmem:[#allocation3 + $0xf8] sm:$0xff]
        %v5502 = vld [vmem:[#allocation3 + $0x100] sm:$0xff]
        %v5503 = vld [vmem:[#allocation3 + $0x108] sm:$0xff]
        %v5504 = vld [vmem:[#allocation3 + $0x110] sm:$0xff]
        %v5505 = vld [vmem:[#allocation3 + $0x118] sm:$0xff]
        %v5506 = vld [vmem:[#allocation3 + $0x120] sm:$0xff]
        %v5507 = vld [vmem:[#allocation3 + $0x128] sm:$0xff]
        %v5508 = vld [vmem:[#allocation3 + $0x130] sm:$0xff]
        %v5509 = vld [vmem:[#allocation3 + $0x138] sm:$0xff]
        %v5510 = vld [vmem:[#allocation3 + $0x140] sm:$0xff]
        %v5511 = vld [vmem:[#allocation3 + $0x148] sm:$0xff]
        %v5512 = vld [vmem:[#allocation3 + $0x150] sm:$0xff]
        %v5513 = vld [vmem:[#allocation3 + $0x158] sm:$0xff]
        %v5514 = vld [vmem:[#allocation3 + $0x160] sm:$0xff]
        %v5515 = vld [vmem:[#allocation3 + $0x168] sm:$0xff]
        %v5516 = vld [vmem:[#allocation3 + $0x170] sm:$0xff]
        %v5517 = vld [vmem:[#allocation3 + $0x178] sm:$0xff]
        %v5518 = vadd.f32 %v5470, %v5280
        %v5519 = vadd.f32 %v5471, %v5283
        %v5520 = vadd.f32 %v5472, %v5288
        %v5521 = vadd.f32 %v5473, %v5291
        %v5522 = vadd.f32 %v5474, %v5296
        %v5523 = vadd.f32 %v5475, %v5299
        %v5524 = vadd.f32 %v5476, %v5304
        %v5525 = vadd.f32 %v5477, %v5307
        %v5526 = vadd.f32 %v5478, %v5312
        %v5527 = vadd.f32 %v5479, %v5315
        %v5528 = vadd.f32 %v5480, %v5320
        %v5529 = vadd.f32 %v5481, %v5323
        %v5530 = vadd.f32 %v5482, %v5328
        %v5531 = vadd.f32 %v5483, %v5331
        %v5532 = vadd.f32 %v5484, %v5336
        %v5533 = vadd.f32 %v5485, %v5339
        %v5534 = vadd.f32 %v5486, %v5344
        %v5535 = vadd.f32 %v5487, %v5347
        %v5536 = vadd.f32 %v5488, %v5352
        %v5537 = vadd.f32 %v5489, %v5355
        %v5538 = vadd.f32 %v5490, %v5360
        %v5539 = vadd.f32 %v5491, %v5363
        %v5540 = vadd.f32 %v5492, %v5368
        %v5541 = vadd.f32 %v5493, %v5371
        %v5542 = vadd.f32 %v5494, %v5376
        %v5543 = vadd.f32 %v5495, %v5379
        %v5544 = vadd.f32 %v5496, %v5384
        %v5545 = vadd.f32 %v5497, %v5387
        %v5546 = vadd.f32 %v5498, %v5392
        %v5547 = vadd.f32 %v5499, %v5395
        %v5548 = vadd.f32 %v5500, %v5400
        %v5549 = vadd.f32 %v5501, %v5403
        %v5550 = vadd.f32 %v5502, %v5408
        %v5551 = vadd.f32 %v5503, %v5411
        %v5552 = vadd.f32 %v5504, %v5416
        %v5553 = vadd.f32 %v5505, %v5419
        %v5554 = vadd.f32 %v5506, %v5424
        %v5555 = vadd.f32 %v5507, %v5427
        %v5556 = vadd.f32 %v5508, %v5432
        %v5557 = vadd.f32 %v5509, %v5435
        %v5558 = vadd.f32 %v5510, %v5440
        %v5559 = vadd.f32 %v5511, %v5443
        %v5560 = vadd.f32 %v5512, %v5448
        %v5561 = vadd.f32 %v5513, %v5451
        %v5562 = vadd.f32 %v5514, %v5456
        %v5563 = vadd.f32 %v5515, %v5459
        %v5564 = vadd.f32 %v5516, %v5464
        %v5565 = vadd.f32 %v5517, %v5467
        %5566 = vst [vmem:[#allocation3] sm:$0xff] %v5518
        %5567 = vst [vmem:[#allocation3 + $0x8] sm:$0xff] %v5519
        %5568 = vst [vmem:[#allocation3 + $0x10] sm:$0xff] %v5520
        %5569 = vst [vmem:[#allocation3 + $0x18] sm:$0xff] %v5521
        %5570 = vst [vmem:[#allocation3 + $0x20] sm:$0xff] %v5522
        %5571 = vst [vmem:[#allocation3 + $0x28] sm:$0xff] %v5523
        %5572 = vst [vmem:[#allocation3 + $0x30] sm:$0xff] %v5524
        %5573 = vst [vmem:[#allocation3 + $0x38] sm:$0xff] %v5525
        %5574 = vst [vmem:[#allocation3 + $0x40] sm:$0xff] %v5526
        %5575 = vst [vmem:[#allocation3 + $0x48] sm:$0xff] %v5527
        %5576 = vst [vmem:[#allocation3 + $0x50] sm:$0xff] %v5528
        %5577 = vst [vmem:[#allocation3 + $0x58] sm:$0xff] %v5529
        %5578 = vst [vmem:[#allocation3 + $0x60] sm:$0xff] %v5530
        %5579 = vst [vmem:[#allocation3 + $0x68] sm:$0xff] %v5531
        %5580 = vst [vmem:[#allocation3 + $0x70] sm:$0xff] %v5532
        %5581 = vst [vmem:[#allocation3 + $0x78] sm:$0xff] %v5533
        %5582 = vst [vmem:[#allocation3 + $0x80] sm:$0xff] %v5534
        %5583 = vst [vmem:[#allocation3 + $0x88] sm:$0xff] %v5535
        %5584 = vst [vmem:[#allocation3 + $0x90] sm:$0xff] %v5536
        %5585 = vst [vmem:[#allocation3 + $0x98] sm:$0xff] %v5537
        %5586 = vst [vmem:[#allocation3 + $0xa0] sm:$0xff] %v5538
        %5587 = vst [vmem:[#allocation3 + $0xa8] sm:$0xff] %v5539
        %5588 = vst [vmem:[#allocation3 + $0xb0] sm:$0xff] %v5540
        %5589 = vst [vmem:[#allocation3 + $0xb8] sm:$0xff] %v5541
        %5590 = vst [vmem:[#allocation3 + $0xc0] sm:$0xff] %v5542
        %5591 = vst [vmem:[#allocation3 + $0xc8] sm:$0xff] %v5543
        %5592 = vst [vmem:[#allocation3 + $0xd0] sm:$0xff] %v5544
        %5593 = vst [vmem:[#allocation3 + $0xd8] sm:$0xff] %v5545
        %5594 = vst [vmem:[#allocation3 + $0xe0] sm:$0xff] %v5546
        %5595 = vst [vmem:[#allocation3 + $0xe8] sm:$0xff] %v5547
        %5596 = vst [vmem:[#allocation3 + $0xf0] sm:$0xff] %v5548
        %5597 = vst [vmem:[#allocation3 + $0xf8] sm:$0xff] %v5549
        %5598 = vst [vmem:[#allocation3 + $0x100] sm:$0xff] %v5550
        %5599 = vst [vmem:[#allocation3 + $0x108] sm:$0xff] %v5551
        %5600 = vst [vmem:[#allocation3 + $0x110] sm:$0xff] %v5552
        %5601 = vst [vmem:[#allocation3 + $0x118] sm:$0xff] %v5553
        %5602 = vst [vmem:[#allocation3 + $0x120] sm:$0xff] %v5554
        %5603 = vst [vmem:[#allocation3 + $0x128] sm:$0xff] %v5555
        %5604 = vst [vmem:[#allocation3 + $0x130] sm:$0xff] %v5556
        %5605 = vst [vmem:[#allocation3 + $0x138] sm:$0xff] %v5557
        %5606 = vst [vmem:[#allocation3 + $0x140] sm:$0xff] %v5558
        %5607 = vst [vmem:[#allocation3 + $0x148] sm:$0xff] %v5559
        %5608 = vst [vmem:[#allocation3 + $0x150] sm:$0xff] %v5560
        %5609 = vst [vmem:[#allocation3 + $0x158] sm:$0xff] %v5561
        %5610 = vst [vmem:[#allocation3 + $0x160] sm:$0xff] %v5562
        %5611 = vst [vmem:[#allocation3 + $0x168] sm:$0xff] %v5563
        %5612 = vst [vmem:[#allocation3 + $0x170] sm:$0xff] %v5564
        %5613 = vst [vmem:[#allocation3 + $0x178] sm:$0xff] %v5565
        %v5614 = vld [vmem:[#allocation2 + $0x18] sm:$0xf0]
        %v5615 = vld [vmem:[#allocation2 + $0x20] sm:$0xff]
        %v5616 = vld [vmem:[#allocation2 + $0x28] sm:$0xff]
        %v5617 = vld [vmem:[#allocation2 + $0x30] sm:$0xff]
        %v5618 = vld [vmem:[#allocation2 + $0x38] sm:$0xff]
        %v5619 = vld [vmem:[#allocation2 + $0x40] sm:$0xff]
        %v5620 = vld [vmem:[#allocation2 + $0x48] sm:$0xff]
        %v5621 = vld [vmem:[#allocation2 + $0x50] sm:$0xff]
        %v5622 = vld [vmem:[#allocation2 + $0x58] sm:$0xff]
        %v5623 = vld [vmem:[#allocation2 + $0x60] sm:$0xff]
        %v5624 = vld [vmem:[#allocation2 + $0x68] sm:$0xff]
        %v5625 = vld [vmem:[#allocation2 + $0x70] sm:$0xff]
        %v5626 = vld [vmem:[#allocation2 + $0x78] sm:$0xff]
        %v5627 = vld [vmem:[#allocation2 + $0x80] sm:$0xff]
        %v5628 = vld [vmem:[#allocation2 + $0x88] sm:$0xff]
        %v5629 = vld [vmem:[#allocation2 + $0x90] sm:$0xff]
        %v5630 = vld [vmem:[#allocation2 + $0x98] sm:$0xff]
        %v5631 = vld [vmem:[#allocation2 + $0xa0] sm:$0xff]
        %v5632 = vld [vmem:[#allocation2 + $0xa8] sm:$0xff]
        %v5633 = vld [vmem:[#allocation2 + $0xb0] sm:$0xff]
        %v5634 = vld [vmem:[#allocation2 + $0xb8] sm:$0xff]
        %v5635 = vld [vmem:[#allocation2 + $0xc0] sm:$0xff]
        %v5636 = vld [vmem:[#allocation2 + $0xc8] sm:$0xff]
        %v5637 = vld [vmem:[#allocation2 + $0xd0] sm:$0xff]
        %v5638 = vld [vmem:[#allocation2 + $0xd8] sm:$0x1f]
        %s5639 = scalar_lea.vmem %s3, 512
        %v5640 = vld [vmem:[%s5639] sm:$0xf]
        %v5641 = vld [vmem:[%s5639 + $0x4] sm:$0xf]
        %v5642 = vld [vmem:[%s5639 + $0x8] sm:$0xf]
        %v5643 = vld [vmem:[%s5639 + $0xc] sm:$0xf]
        %v5644 = vld [vmem:[%s5639 + $0x10] sm:$0xf]
        %v5645 = vld [vmem:[%s5639 + $0x14] sm:$0xf]
        %v5646 = vld [vmem:[%s5639 + $0x18] sm:$0xf]
        %v5647 = vld [vmem:[%s5639 + $0x1c] sm:$0xf]
        %v5648 = vld [vmem:[%s5639 + $0x20] sm:$0xf]
        %v5649 = vld [vmem:[%s5639 + $0x24] sm:$0xf]
        %v5650 = vld [vmem:[%s5639 + $0x28] sm:$0xf]
        %v5651 = vld [vmem:[%s5639 + $0x2c] sm:$0xf]
        %v5652 = vld [vmem:[%s5639 + $0x30] sm:$0xf]
        %v5653 = vld [vmem:[%s5639 + $0x34] sm:$0xf]
        %v5654 = vld [vmem:[%s5639 + $0x38] sm:$0xf]
        %v5655 = vld [vmem:[%s5639 + $0x3c] sm:$0xf]
        %v5657 = vshrl.u32 %v5614, 16
        %v5659 = vrot.slane %v5657, 4
        %v5660 = vshll.u32 %v5614, 16
        %v5662 = vrot.slane %v5660, 5
        %v5663 = vor.u32 %v5659, %v5662
        %v5665 = vshrl.u32 %v5615, 16
        %v5667 = vrot.slane %v5665, 4
        %v5668 = vshll.u32 %v5615, 16
        %v5670 = vrot.slane %v5668, 5
        %v5671 = vor.u32 %v5667, %v5670
        %v5672 = vsel %vm1866, %v5663, %v5671
        %v5674 = vshrl.u32 %v5616, 16
        %v5676 = vrot.slane %v5674, 4
        %v5677 = vshll.u32 %v5616, 16
        %v5679 = vrot.slane %v5677, 5
        %v5680 = vor.u32 %v5676, %v5679
        %v5681 = vsel %vm1866, %v5671, %v5680
        %v5683 = vshrl.u32 %v5617, 16
        %v5685 = vrot.slane %v5683, 4
        %v5686 = vshll.u32 %v5617, 16
        %v5688 = vrot.slane %v5686, 5
        %v5689 = vor.u32 %v5685, %v5688
        %v5690 = vsel %vm1866, %v5680, %v5689
        %v5692 = vshrl.u32 %v5618, 16
        %v5694 = vrot.slane %v5692, 4
        %v5695 = vshll.u32 %v5618, 16
        %v5697 = vrot.slane %v5695, 5
        %v5698 = vor.u32 %v5694, %v5697
        %v5699 = vsel %vm1866, %v5689, %v5698
        %v5701 = vshrl.u32 %v5619, 16
        %v5703 = vrot.slane %v5701, 4
        %v5704 = vshll.u32 %v5619, 16
        %v5706 = vrot.slane %v5704, 5
        %v5707 = vor.u32 %v5703, %v5706
        %v5708 = vsel %vm1866, %v5698, %v5707
        %v5710 = vshrl.u32 %v5620, 16
        %v5712 = vrot.slane %v5710, 4
        %v5713 = vshll.u32 %v5620, 16
        %v5715 = vrot.slane %v5713, 5
        %v5716 = vor.u32 %v5712, %v5715
        %v5717 = vsel %vm1866, %v5707, %v5716
        %v5719 = vshrl.u32 %v5621, 16
        %v5721 = vrot.slane %v5719, 4
        %v5722 = vshll.u32 %v5621, 16
        %v5724 = vrot.slane %v5722, 5
        %v5725 = vor.u32 %v5721, %v5724
        %v5726 = vsel %vm1866, %v5716, %v5725
        %v5728 = vshrl.u32 %v5622, 16
        %v5730 = vrot.slane %v5728, 4
        %v5731 = vshll.u32 %v5622, 16
        %v5733 = vrot.slane %v5731, 5
        %v5734 = vor.u32 %v5730, %v5733
        %v5735 = vsel %vm1866, %v5725, %v5734
        %v5737 = vshrl.u32 %v5623, 16
        %v5739 = vrot.slane %v5737, 4
        %v5740 = vshll.u32 %v5623, 16
        %v5742 = vrot.slane %v5740, 5
        %v5743 = vor.u32 %v5739, %v5742
        %v5744 = vsel %vm1866, %v5734, %v5743
        %v5746 = vshrl.u32 %v5624, 16
        %v5748 = vrot.slane %v5746, 4
        %v5749 = vshll.u32 %v5624, 16
        %v5751 = vrot.slane %v5749, 5
        %v5752 = vor.u32 %v5748, %v5751
        %v5753 = vsel %vm1866, %v5743, %v5752
        %v5755 = vshrl.u32 %v5625, 16
        %v5757 = vrot.slane %v5755, 4
        %v5758 = vshll.u32 %v5625, 16
        %v5760 = vrot.slane %v5758, 5
        %v5761 = vor.u32 %v5757, %v5760
        %v5762 = vsel %vm1866, %v5752, %v5761
        %v5764 = vshrl.u32 %v5626, 16
        %v5766 = vrot.slane %v5764, 4
        %v5767 = vshll.u32 %v5626, 16
        %v5769 = vrot.slane %v5767, 5
        %v5770 = vor.u32 %v5766, %v5769
        %v5771 = vsel %vm1866, %v5761, %v5770
        %v5773 = vshrl.u32 %v5627, 16
        %v5775 = vrot.slane %v5773, 4
        %v5776 = vshll.u32 %v5627, 16
        %v5778 = vrot.slane %v5776, 5
        %v5779 = vor.u32 %v5775, %v5778
        %v5780 = vsel %vm1866, %v5770, %v5779
        %v5782 = vshrl.u32 %v5628, 16
        %v5784 = vrot.slane %v5782, 4
        %v5785 = vshll.u32 %v5628, 16
        %v5787 = vrot.slane %v5785, 5
        %v5788 = vor.u32 %v5784, %v5787
        %v5789 = vsel %vm1866, %v5779, %v5788
        %v5791 = vshrl.u32 %v5629, 16
        %v5793 = vrot.slane %v5791, 4
        %v5794 = vshll.u32 %v5629, 16
        %v5796 = vrot.slane %v5794, 5
        %v5797 = vor.u32 %v5793, %v5796
        %v5798 = vsel %vm1866, %v5788, %v5797
        %v5800 = vshrl.u32 %v5630, 16
        %v5802 = vrot.slane %v5800, 4
        %v5803 = vshll.u32 %v5630, 16
        %v5805 = vrot.slane %v5803, 5
        %v5806 = vor.u32 %v5802, %v5805
        %v5807 = vsel %vm1866, %v5797, %v5806
        %v5809 = vshrl.u32 %v5631, 16
        %v5811 = vrot.slane %v5809, 4
        %v5812 = vshll.u32 %v5631, 16
        %v5814 = vrot.slane %v5812, 5
        %v5815 = vor.u32 %v5811, %v5814
        %v5816 = vsel %vm1866, %v5806, %v5815
        %v5818 = vshrl.u32 %v5632, 16
        %v5820 = vrot.slane %v5818, 4
        %v5821 = vshll.u32 %v5632, 16
        %v5823 = vrot.slane %v5821, 5
        %v5824 = vor.u32 %v5820, %v5823
        %v5825 = vsel %vm1866, %v5815, %v5824
        %v5827 = vshrl.u32 %v5633, 16
        %v5829 = vrot.slane %v5827, 4
        %v5830 = vshll.u32 %v5633, 16
        %v5832 = vrot.slane %v5830, 5
        %v5833 = vor.u32 %v5829, %v5832
        %v5834 = vsel %vm1866, %v5824, %v5833
        %v5836 = vshrl.u32 %v5634, 16
        %v5838 = vrot.slane %v5836, 4
        %v5839 = vshll.u32 %v5634, 16
        %v5841 = vrot.slane %v5839, 5
        %v5842 = vor.u32 %v5838, %v5841
        %v5843 = vsel %vm1866, %v5833, %v5842
        %v5845 = vshrl.u32 %v5635, 16
        %v5847 = vrot.slane %v5845, 4
        %v5848 = vshll.u32 %v5635, 16
        %v5850 = vrot.slane %v5848, 5
        %v5851 = vor.u32 %v5847, %v5850
        %v5852 = vsel %vm1866, %v5842, %v5851
        %v5854 = vshrl.u32 %v5636, 16
        %v5856 = vrot.slane %v5854, 4
        %v5857 = vshll.u32 %v5636, 16
        %v5859 = vrot.slane %v5857, 5
        %v5860 = vor.u32 %v5856, %v5859
        %v5861 = vsel %vm1866, %v5851, %v5860
        %v5863 = vshrl.u32 %v5637, 16
        %v5865 = vrot.slane %v5863, 4
        %v5866 = vshll.u32 %v5637, 16
        %v5868 = vrot.slane %v5866, 5
        %v5869 = vor.u32 %v5865, %v5868
        %v5870 = vsel %vm1866, %v5860, %v5869
        %v5872 = vshrl.u32 %v5638, 16
        %v5874 = vrot.slane %v5872, 4
        %v5875 = vshll.u32 %v5638, 16
        %v5877 = vrot.slane %v5875, 5
        %v5878 = vor.u32 %v5874, %v5877
        %v5879 = vsel %vm1866, %v5869, %v5878
        %v5920 = vunpack.c.l.b16 %v5640
        %v5921 = vunpack.c.l.b16 %v5641
        %v5922 = vunpack.c.l.b16 %v5642
        %v5923 = vunpack.c.l.b16 %v5643
        %v5924 = vunpack.c.l.b16 %v5644
        %v5925 = vunpack.c.l.b16 %v5645
        %v5926 = vunpack.c.l.b16 %v5646
        %v5927 = vunpack.c.l.b16 %v5647
        %v5928 = vunpack.c.l.b16 %v5648
        %v5929 = vunpack.c.l.b16 %v5649
        %v5930 = vunpack.c.l.b16 %v5650
        %v5931 = vunpack.c.l.b16 %v5651
        %v5932 = vunpack.c.l.b16 %v5652
        %v5933 = vunpack.c.l.b16 %v5653
        %v5934 = vunpack.c.l.b16 %v5654
        %v5935 = vunpack.c.l.b16 %v5655
        %v5936 = vpack.c.b16 %v5921, %v5920
        %v5937 = vpack.c.b16 %v5923, %v5922
        %v5938 = vpack.c.b16 %v5925, %v5924
        %v5939 = vpack.c.b16 %v5927, %v5926
        %v5940 = vpack.c.b16 %v5929, %v5928
        %v5941 = vpack.c.b16 %v5931, %v5930
        %v5942 = vpack.c.b16 %v5933, %v5932
        %v5943 = vpack.c.b16 %v5935, %v5934
        %5952 = vmatprep.subr.bf16.mxu0 0
        %5953 = vmatpush1.bf16.msra.mxu0 %v5936
        %5954 = vmatprep.subr.bf16.mxu0 0
        %5955 = vmatpush1.bf16.msra.mxu0 %v5937
        %5956 = vmatprep.subr.bf16.mxu0 0
        %5957 = vmatpush1.bf16.msra.mxu0 %v5938
        %5958 = vmatprep.subr.bf16.mxu0 0
        %5959 = vmatpush1.bf16.msra.mxu0 %v5939
        %5960 = vmatprep.subr.bf16.mxu0 0
        %5961 = vmatpush1.bf16.msra.mxu0 %v5940
        %5962 = vmatprep.subr.bf16.mxu0 0
        %5963 = vmatpush1.bf16.msra.mxu0 %v5941
        %5964 = vmatprep.subr.bf16.mxu0 0
        %5965 = vmatpush1.bf16.msra.mxu0 %v5942
        %5966 = vmatprep.subr.bf16.mxu0 0
        %5967 = vmatpush1.bf16.msra.mxu0 %v5943
        %5968 = vmatprep.subr.bf16.mxu0 0
        %5969 = vmatpush1.bf16.msra.mxu0 0
        %5970 = vmatprep.subr.bf16.mxu0 0
        %5971 = vmatpush1.bf16.msra.mxu0 0
        %5972 = vmatprep.subr.bf16.mxu0 0
        %5973 = vmatpush1.bf16.msra.mxu0 0
        %5974 = vmatprep.subr.bf16.mxu0 0
        %5975 = vmatpush1.bf16.msra.mxu0 0
        %5976 = vmatprep.subr.bf16.mxu0 0
        %5977 = vmatpush1.bf16.msra.mxu0 0
        %5978 = vmatprep.subr.bf16.mxu0 0
        %5979 = vmatpush1.bf16.msra.mxu0 0
        %5980 = vmatprep.subr.bf16.mxu0 0
        %5981 = vmatpush1.bf16.msra.mxu0 0
        %5982 = vmatprep.subr.bf16.mxu0 0
        %5983 = vmatpush1.bf16.msra.mxu0 0
        %5984 = vmatprep.mubr.bf16.mxu0 0
        %5985 = vmatmul.mubr.bf16.gmra.mrb[0].mxu0 %v5672
        %v5986 = vpop.f32.mrb[0].mxu0
        %v5987 = vadd.f32 0.0, %v5986
        %v5988 = vpop.f32.mrb[0].mxu0
        %v5989 = vpop.f32.mrb[0].mxu0
        %v5990 = vadd.f32 0.0, %v5989
        %v5991 = vpop.f32.mrb[0].mxu0
        %5992 = vmatprep.mubr.bf16.mxu0 0
        %5993 = vmatmul.mubr.bf16.gmra.mrb[0].mxu0 %v5681
        %v5994 = vpop.f32.mrb[0].mxu0
        %v5995 = vadd.f32 0.0, %v5994
        %v5996 = vpop.f32.mrb[0].mxu0
        %v5997 = vpop.f32.mrb[0].mxu0
        %v5998 = vadd.f32 0.0, %v5997
        %v5999 = vpop.f32.mrb[0].mxu0
        %6000 = vmatprep.mubr.bf16.mxu0 0
        %6001 = vmatmul.mubr.bf16.gmra.mrb[0].mxu0 %v5690
        %v6002 = vpop.f32.mrb[0].mxu0
        %v6003 = vadd.f32 0.0, %v6002
        %v6004 = vpop.f32.mrb[0].mxu0
        %v6005 = vpop.f32.mrb[0].mxu0
        %v6006 = vadd.f32 0.0, %v6005
        %v6007 = vpop.f32.mrb[0].mxu0
        %6008 = vmatprep.mubr.bf16.mxu0 0
        %6009 = vmatmul.mubr.bf16.gmra.mrb[0].mxu0 %v5699
        %v6010 = vpop.f32.mrb[0].mxu0
        %v6011 = vadd.f32 0.0, %v6010
        %v6012 = vpop.f32.mrb[0].mxu0
        %v6013 = vpop.f32.mrb[0].mxu0
        %v6014 = vadd.f32 0.0, %v6013
        %v6015 = vpop.f32.mrb[0].mxu0
        %6016 = vmatprep.mubr.bf16.mxu0 0
        %6017 = vmatmul.mubr.bf16.gmra.mrb[0].mxu0 %v5708
        %v6018 = vpop.f32.mrb[0].mxu0
        %v6019 = vadd.f32 0.0, %v6018
        %v6020 = vpop.f32.mrb[0].mxu0
        %v6021 = vpop.f32.mrb[0].mxu0
        %v6022 = vadd.f32 0.0, %v6021
        %v6023 = vpop.f32.mrb[0].mxu0
        %6024 = vmatprep.mubr.bf16.mxu0 0
        %6025 = vmatmul.mubr.bf16.gmra.mrb[0].mxu0 %v5717
        %v6026 = vpop.f32.mrb[0].mxu0
        %v6027 = vadd.f32 0.0, %v6026
        %v6028 = vpop.f32.mrb[0].mxu0
        %v6029 = vpop.f32.mrb[0].mxu0
        %v6030 = vadd.f32 0.0, %v6029
        %v6031 = vpop.f32.mrb[0].mxu0
        %6032 = vmatprep.mubr.bf16.mxu0 0
        %6033 = vmatmul.mubr.bf16.gmra.mrb[0].mxu0 %v5726
        %v6034 = vpop.f32.mrb[0].mxu0
        %v6035 = vadd.f32 0.0, %v6034
        %v6036 = vpop.f32.mrb[0].mxu0
        %v6037 = vpop.f32.mrb[0].mxu0
        %v6038 = vadd.f32 0.0, %v6037
        %v6039 = vpop.f32.mrb[0].mxu0
        %6040 = vmatprep.mubr.bf16.mxu0 0
        %6041 = vmatmul.mubr.bf16.gmra.mrb[0].mxu0 %v5735
        %v6042 = vpop.f32.mrb[0].mxu0
        %v6043 = vadd.f32 0.0, %v6042
        %v6044 = vpop.f32.mrb[0].mxu0
        %v6045 = vpop.f32.mrb[0].mxu0
        %v6046 = vadd.f32 0.0, %v6045
        %v6047 = vpop.f32.mrb[0].mxu0
        %6048 = vmatprep.mubr.bf16.mxu0 0
        %6049 = vmatmul.mubr.bf16.gmra.mrb[0].mxu0 %v5744
        %v6050 = vpop.f32.mrb[0].mxu0
        %v6051 = vadd.f32 0.0, %v6050
        %v6052 = vpop.f32.mrb[0].mxu0
        %v6053 = vpop.f32.mrb[0].mxu0
        %v6054 = vadd.f32 0.0, %v6053
        %v6055 = vpop.f32.mrb[0].mxu0
        %6056 = vmatprep.mubr.bf16.mxu0 0
        %6057 = vmatmul.mubr.bf16.gmra.mrb[0].mxu0 %v5753
        %v6058 = vpop.f32.mrb[0].mxu0
        %v6059 = vadd.f32 0.0, %v6058
        %v6060 = vpop.f32.mrb[0].mxu0
        %v6061 = vpop.f32.mrb[0].mxu0
        %v6062 = vadd.f32 0.0, %v6061
        %v6063 = vpop.f32.mrb[0].mxu0
        %6064 = vmatprep.mubr.bf16.mxu0 0
        %6065 = vmatmul.mubr.bf16.gmra.mrb[0].mxu0 %v5762
        %v6066 = vpop.f32.mrb[0].mxu0
        %v6067 = vadd.f32 0.0, %v6066
        %v6068 = vpop.f32.mrb[0].mxu0
        %v6069 = vpop.f32.mrb[0].mxu0
        %v6070 = vadd.f32 0.0, %v6069
        %v6071 = vpop.f32.mrb[0].mxu0
        %6072 = vmatprep.mubr.bf16.mxu0 0
        %6073 = vmatmul.mubr.bf16.gmra.mrb[0].mxu0 %v5771
        %v6074 = vpop.f32.mrb[0].mxu0
        %v6075 = vadd.f32 0.0, %v6074
        %v6076 = vpop.f32.mrb[0].mxu0
        %v6077 = vpop.f32.mrb[0].mxu0
        %v6078 = vadd.f32 0.0, %v6077
        %v6079 = vpop.f32.mrb[0].mxu0
        %6080 = vmatprep.mubr.bf16.mxu0 0
        %6081 = vmatmul.mubr.bf16.gmra.mrb[0].mxu0 %v5780
        %v6082 = vpop.f32.mrb[0].mxu0
        %v6083 = vadd.f32 0.0, %v6082
        %v6084 = vpop.f32.mrb[0].mxu0
        %v6085 = vpop.f32.mrb[0].mxu0
        %v6086 = vadd.f32 0.0, %v6085
        %v6087 = vpop.f32.mrb[0].mxu0
        %6088 = vmatprep.mubr.bf16.mxu0 0
        %6089 = vmatmul.mubr.bf16.gmra.mrb[0].mxu0 %v5789
        %v6090 = vpop.f32.mrb[0].mxu0
        %v6091 = vadd.f32 0.0, %v6090
        %v6092 = vpop.f32.mrb[0].mxu0
        %v6093 = vpop.f32.mrb[0].mxu0
        %v6094 = vadd.f32 0.0, %v6093
        %v6095 = vpop.f32.mrb[0].mxu0
        %6096 = vmatprep.mubr.bf16.mxu0 0
        %6097 = vmatmul.mubr.bf16.gmra.mrb[0].mxu0 %v5798
        %v6098 = vpop.f32.mrb[0].mxu0
        %v6099 = vadd.f32 0.0, %v6098
        %v6100 = vpop.f32.mrb[0].mxu0
        %v6101 = vpop.f32.mrb[0].mxu0
        %v6102 = vadd.f32 0.0, %v6101
        %v6103 = vpop.f32.mrb[0].mxu0
        %6104 = vmatprep.mubr.bf16.mxu0 0
        %6105 = vmatmul.mubr.bf16.gmra.mrb[0].mxu0 %v5807
        %v6106 = vpop.f32.mrb[0].mxu0
        %v6107 = vadd.f32 0.0, %v6106
        %v6108 = vpop.f32.mrb[0].mxu0
        %v6109 = vpop.f32.mrb[0].mxu0
        %v6110 = vadd.f32 0.0, %v6109
        %v6111 = vpop.f32.mrb[0].mxu0
        %6112 = vmatprep.mubr.bf16.mxu0 0
        %6113 = vmatmul.mubr.bf16.gmra.mrb[0].mxu0 %v5816
        %v6114 = vpop.f32.mrb[0].mxu0
        %v6115 = vadd.f32 0.0, %v6114
        %v6116 = vpop.f32.mrb[0].mxu0
        %v6117 = vpop.f32.mrb[0].mxu0
        %v6118 = vadd.f32 0.0, %v6117
        %v6119 = vpop.f32.mrb[0].mxu0
        %6120 = vmatprep.mubr.bf16.mxu0 0
        %6121 = vmatmul.mubr.bf16.gmra.mrb[0].mxu0 %v5825
        %v6122 = vpop.f32.mrb[0].mxu0
        %v6123 = vadd.f32 0.0, %v6122
        %v6124 = vpop.f32.mrb[0].mxu0
        %v6125 = vpop.f32.mrb[0].mxu0
        %v6126 = vadd.f32 0.0, %v6125
        %v6127 = vpop.f32.mrb[0].mxu0
        %6128 = vmatprep.mubr.bf16.mxu0 0
        %6129 = vmatmul.mubr.bf16.gmra.mrb[0].mxu0 %v5834
        %v6130 = vpop.f32.mrb[0].mxu0
        %v6131 = vadd.f32 0.0, %v6130
        %v6132 = vpop.f32.mrb[0].mxu0
        %v6133 = vpop.f32.mrb[0].mxu0
        %v6134 = vadd.f32 0.0, %v6133
        %v6135 = vpop.f32.mrb[0].mxu0
        %6136 = vmatprep.mubr.bf16.mxu0 0
        %6137 = vmatmul.mubr.bf16.gmra.mrb[0].mxu0 %v5843
        %v6138 = vpop.f32.mrb[0].mxu0
        %v6139 = vadd.f32 0.0, %v6138
        %v6140 = vpop.f32.mrb[0].mxu0
        %v6141 = vpop.f32.mrb[0].mxu0
        %v6142 = vadd.f32 0.0, %v6141
        %v6143 = vpop.f32.mrb[0].mxu0
        %6144 = vmatprep.mubr.bf16.mxu0 0
        %6145 = vmatmul.mubr.bf16.gmra.mrb[0].mxu0 %v5852
        %v6146 = vpop.f32.mrb[0].mxu0
        %v6147 = vadd.f32 0.0, %v6146
        %v6148 = vpop.f32.mrb[0].mxu0
        %v6149 = vpop.f32.mrb[0].mxu0
        %v6150 = vadd.f32 0.0, %v6149
        %v6151 = vpop.f32.mrb[0].mxu0
        %6152 = vmatprep.mubr.bf16.mxu0 0
        %6153 = vmatmul.mubr.bf16.gmra.mrb[0].mxu0 %v5861
        %v6154 = vpop.f32.mrb[0].mxu0
        %v6155 = vadd.f32 0.0, %v6154
        %v6156 = vpop.f32.mrb[0].mxu0
        %v6157 = vpop.f32.mrb[0].mxu0
        %v6158 = vadd.f32 0.0, %v6157
        %v6159 = vpop.f32.mrb[0].mxu0
        %6160 = vmatprep.mubr.bf16.mxu0 0
        %6161 = vmatmul.mubr.bf16.gmra.mrb[0].mxu0 %v5870
        %v6162 = vpop.f32.mrb[0].mxu0
        %v6163 = vadd.f32 0.0, %v6162
        %v6164 = vpop.f32.mrb[0].mxu0
        %v6165 = vpop.f32.mrb[0].mxu0
        %v6166 = vadd.f32 0.0, %v6165
        %v6167 = vpop.f32.mrb[0].mxu0
        %6168 = vmatprep.mubr.bf16.mxu0 0
        %6169 = vmatmul.mubr.bf16.gmra.mrb[0].mxu0 %v5879
        %v6170 = vpop.f32.mrb[0].mxu0
        %v6171 = vadd.f32 0.0, %v6170
        %v6172 = vpop.f32.mrb[0].mxu0
        %v6173 = vpop.f32.mrb[0].mxu0
        %v6174 = vadd.f32 0.0, %v6173
        %v6175 = vpop.f32.mrb[0].mxu0
        %6176 = vdwg.mxu0
        %v6177 = vld [vmem:[#allocation3] sm:$0xff]
        %v6178 = vld [vmem:[#allocation3 + $0x8] sm:$0xff]
        %v6179 = vld [vmem:[#allocation3 + $0x10] sm:$0xff]
        %v6180 = vld [vmem:[#allocation3 + $0x18] sm:$0xff]
        %v6181 = vld [vmem:[#allocation3 + $0x20] sm:$0xff]
        %v6182 = vld [vmem:[#allocation3 + $0x28] sm:$0xff]
        %v6183 = vld [vmem:[#allocation3 + $0x30] sm:$0xff]
        %v6184 = vld [vmem:[#allocation3 + $0x38] sm:$0xff]
        %v6185 = vld [vmem:[#allocation3 + $0x40] sm:$0xff]
        %v6186 = vld [vmem:[#allocation3 + $0x48] sm:$0xff]
        %v6187 = vld [vmem:[#allocation3 + $0x50] sm:$0xff]
        %v6188 = vld [vmem:[#allocation3 + $0x58] sm:$0xff]
        %v6189 = vld [vmem:[#allocation3 + $0x60] sm:$0xff]
        %v6190 = vld [vmem:[#allocation3 + $0x68] sm:$0xff]
        %v6191 = vld [vmem:[#allocation3 + $0x70] sm:$0xff]
        %v6192 = vld [vmem:[#allocation3 + $0x78] sm:$0xff]
        %v6193 = vld [vmem:[#allocation3 + $0x80] sm:$0xff]
        %v6194 = vld [vmem:[#allocation3 + $0x88] sm:$0xff]
        %v6195 = vld [vmem:[#allocation3 + $0x90] sm:$0xff]
        %v6196 = vld [vmem:[#allocation3 + $0x98] sm:$0xff]
        %v6197 = vld [vmem:[#allocation3 + $0xa0] sm:$0xff]
        %v6198 = vld [vmem:[#allocation3 + $0xa8] sm:$0xff]
        %v6199 = vld [vmem:[#allocation3 + $0xb0] sm:$0xff]
        %v6200 = vld [vmem:[#allocation3 + $0xb8] sm:$0xff]
        %v6201 = vld [vmem:[#allocation3 + $0xc0] sm:$0xff]
        %v6202 = vld [vmem:[#allocation3 + $0xc8] sm:$0xff]
        %v6203 = vld [vmem:[#allocation3 + $0xd0] sm:$0xff]
        %v6204 = vld [vmem:[#allocation3 + $0xd8] sm:$0xff]
        %v6205 = vld [vmem:[#allocation3 + $0xe0] sm:$0xff]
        %v6206 = vld [vmem:[#allocation3 + $0xe8] sm:$0xff]
        %v6207 = vld [vmem:[#allocation3 + $0xf0] sm:$0xff]
        %v6208 = vld [vmem:[#allocation3 + $0xf8] sm:$0xff]
        %v6209 = vld [vmem:[#allocation3 + $0x100] sm:$0xff]
        %v6210 = vld [vmem:[#allocation3 + $0x108] sm:$0xff]
        %v6211 = vld [vmem:[#allocation3 + $0x110] sm:$0xff]
        %v6212 = vld [vmem:[#allocation3 + $0x118] sm:$0xff]
        %v6213 = vld [vmem:[#allocation3 + $0x120] sm:$0xff]
        %v6214 = vld [vmem:[#allocation3 + $0x128] sm:$0xff]
        %v6215 = vld [vmem:[#allocation3 + $0x130] sm:$0xff]
        %v6216 = vld [vmem:[#allocation3 + $0x138] sm:$0xff]
        %v6217 = vld [vmem:[#allocation3 + $0x140] sm:$0xff]
        %v6218 = vld [vmem:[#allocation3 + $0x148] sm:$0xff]
        %v6219 = vld [vmem:[#allocation3 + $0x150] sm:$0xff]
        %v6220 = vld [vmem:[#allocation3 + $0x158] sm:$0xff]
        %v6221 = vld [vmem:[#allocation3 + $0x160] sm:$0xff]
        %v6222 = vld [vmem:[#allocation3 + $0x168] sm:$0xff]
        %v6223 = vld [vmem:[#allocation3 + $0x170] sm:$0xff]
        %v6224 = vld [vmem:[#allocation3 + $0x178] sm:$0xff]
        %v6225 = vadd.f32 %v6177, %v5987
        %v6226 = vadd.f32 %v6178, %v5990
        %v6227 = vadd.f32 %v6179, %v5995
        %v6228 = vadd.f32 %v6180, %v5998
        %v6229 = vadd.f32 %v6181, %v6003
        %v6230 = vadd.f32 %v6182, %v6006
        %v6231 = vadd.f32 %v6183, %v6011
        %v6232 = vadd.f32 %v6184, %v6014
        %v6233 = vadd.f32 %v6185, %v6019
        %v6234 = vadd.f32 %v6186, %v6022
        %v6235 = vadd.f32 %v6187, %v6027
        %v6236 = vadd.f32 %v6188, %v6030
        %v6237 = vadd.f32 %v6189, %v6035
        %v6238 = vadd.f32 %v6190, %v6038
        %v6239 = vadd.f32 %v6191, %v6043
        %v6240 = vadd.f32 %v6192, %v6046
        %v6241 = vadd.f32 %v6193, %v6051
        %v6242 = vadd.f32 %v6194, %v6054
        %v6243 = vadd.f32 %v6195, %v6059
        %v6244 = vadd.f32 %v6196, %v6062
        %v6245 = vadd.f32 %v6197, %v6067
        %v6246 = vadd.f32 %v6198, %v6070
        %v6247 = vadd.f32 %v6199, %v6075
        %v6248 = vadd.f32 %v6200, %v6078
        %v6249 = vadd.f32 %v6201, %v6083
        %v6250 = vadd.f32 %v6202, %v6086
        %v6251 = vadd.f32 %v6203, %v6091
        %v6252 = vadd.f32 %v6204, %v6094
        %v6253 = vadd.f32 %v6205, %v6099
        %v6254 = vadd.f32 %v6206, %v6102
        %v6255 = vadd.f32 %v6207, %v6107
        %v6256 = vadd.f32 %v6208, %v6110
        %v6257 = vadd.f32 %v6209, %v6115
        %v6258 = vadd.f32 %v6210, %v6118
        %v6259 = vadd.f32 %v6211, %v6123
        %v6260 = vadd.f32 %v6212, %v6126
        %v6261 = vadd.f32 %v6213, %v6131
        %v6262 = vadd.f32 %v6214, %v6134
        %v6263 = vadd.f32 %v6215, %v6139
        %v6264 = vadd.f32 %v6216, %v6142
        %v6265 = vadd.f32 %v6217, %v6147
        %v6266 = vadd.f32 %v6218, %v6150
        %v6267 = vadd.f32 %v6219, %v6155
        %v6268 = vadd.f32 %v6220, %v6158
        %v6269 = vadd.f32 %v6221, %v6163
        %v6270 = vadd.f32 %v6222, %v6166
        %v6271 = vadd.f32 %v6223, %v6171
        %v6272 = vadd.f32 %v6224, %v6174
        %6273 = vst [vmem:[#allocation3] sm:$0xff] %v6225
        %6274 = vst [vmem:[#allocation3 + $0x8] sm:$0xff] %v6226
        %6275 = vst [vmem:[#allocation3 + $0x10] sm:$0xff] %v6227
        %6276 = vst [vmem:[#allocation3 + $0x18] sm:$0xff] %v6228
        %6277 = vst [vmem:[#allocation3 + $0x20] sm:$0xff] %v6229
        %6278 = vst [vmem:[#allocation3 + $0x28] sm:$0xff] %v6230
        %6279 = vst [vmem:[#allocation3 + $0x30] sm:$0xff] %v6231
        %6280 = vst [vmem:[#allocation3 + $0x38] sm:$0xff] %v6232
        %6281 = vst [vmem:[#allocation3 + $0x40] sm:$0xff] %v6233
        %6282 = vst [vmem:[#allocation3 + $0x48] sm:$0xff] %v6234
        %6283 = vst [vmem:[#allocation3 + $0x50] sm:$0xff] %v6235
        %6284 = vst [vmem:[#allocation3 + $0x58] sm:$0xff] %v6236
        %6285 = vst [vmem:[#allocation3 + $0x60] sm:$0xff] %v6237
        %6286 = vst [vmem:[#allocation3 + $0x68] sm:$0xff] %v6238
        %6287 = vst [vmem:[#allocation3 + $0x70] sm:$0xff] %v6239
        %6288 = vst [vmem:[#allocation3 + $0x78] sm:$0xff] %v6240
        %6289 = vst [vmem:[#allocation3 + $0x80] sm:$0xff] %v6241
        %6290 = vst [vmem:[#allocation3 + $0x88] sm:$0xff] %v6242
        %6291 = vst [vmem:[#allocation3 + $0x90] sm:$0xff] %v6243
        %6292 = vst [vmem:[#allocation3 + $0x98] sm:$0xff] %v6244
        %6293 = vst [vmem:[#allocation3 + $0xa0] sm:$0xff] %v6245
        %6294 = vst [vmem:[#allocation3 + $0xa8] sm:$0xff] %v6246
        %6295 = vst [vmem:[#allocation3 + $0xb0] sm:$0xff] %v6247
        %6296 = vst [vmem:[#allocation3 + $0xb8] sm:$0xff] %v6248
        %6297 = vst [vmem:[#allocation3 + $0xc0] sm:$0xff] %v6249
        %6298 = vst [vmem:[#allocation3 + $0xc8] sm:$0xff] %v6250
        %6299 = vst [vmem:[#allocation3 + $0xd0] sm:$0xff] %v6251
        %6300 = vst [vmem:[#allocation3 + $0xd8] sm:$0xff] %v6252
        %6301 = vst [vmem:[#allocation3 + $0xe0] sm:$0xff] %v6253
        %6302 = vst [vmem:[#allocation3 + $0xe8] sm:$0xff] %v6254
        %6303 = vst [vmem:[#allocation3 + $0xf0] sm:$0xff] %v6255
        %6304 = vst [vmem:[#allocation3 + $0xf8] sm:$0xff] %v6256
        %6305 = vst [vmem:[#allocation3 + $0x100] sm:$0xff] %v6257
        %6306 = vst [vmem:[#allocation3 + $0x108] sm:$0xff] %v6258
        %6307 = vst [vmem:[#allocation3 + $0x110] sm:$0xff] %v6259
        %6308 = vst [vmem:[#allocation3 + $0x118] sm:$0xff] %v6260
        %6309 = vst [vmem:[#allocation3 + $0x120] sm:$0xff] %v6261
        %6310 = vst [vmem:[#allocation3 + $0x128] sm:$0xff] %v6262
        %6311 = vst [vmem:[#allocation3 + $0x130] sm:$0xff] %v6263
        %6312 = vst [vmem:[#allocation3 + $0x138] sm:$0xff] %v6264
        %6313 = vst [vmem:[#allocation3 + $0x140] sm:$0xff] %v6265
        %6314 = vst [vmem:[#allocation3 + $0x148] sm:$0xff] %v6266
        %6315 = vst [vmem:[#allocation3 + $0x150] sm:$0xff] %v6267
        %6316 = vst [vmem:[#allocation3 + $0x158] sm:$0xff] %v6268
        %6317 = vst [vmem:[#allocation3 + $0x160] sm:$0xff] %v6269
        %6318 = vst [vmem:[#allocation3 + $0x168] sm:$0xff] %v6270
        %6319 = vst [vmem:[#allocation3 + $0x170] sm:$0xff] %v6271
        %6320 = vst [vmem:[#allocation3 + $0x178] sm:$0xff] %v6272
        %v6321 = vld [vmem:[#allocation3] sm:$0xff]
        %v6322 = vld [vmem:[#allocation3 + $0x8] sm:$0xff]
        %v6323 = vld [vmem:[#allocation3 + $0x10] sm:$0xff]
        %v6324 = vld [vmem:[#allocation3 + $0x18] sm:$0xff]
        %v6325 = vld [vmem:[#allocation3 + $0x20] sm:$0xff]
        %v6326 = vld [vmem:[#allocation3 + $0x28] sm:$0xff]
        %v6327 = vld [vmem:[#allocation3 + $0x30] sm:$0xff]
        %v6328 = vld [vmem:[#allocation3 + $0x38] sm:$0xff]
        %v6329 = vld [vmem:[#allocation3 + $0x40] sm:$0xff]
        %v6330 = vld [vmem:[#allocation3 + $0x48] sm:$0xff]
        %v6331 = vld [vmem:[#allocation3 + $0x50] sm:$0xff]
        %v6332 = vld [vmem:[#allocation3 + $0x58] sm:$0xff]
        %v6333 = vld [vmem:[#allocation3 + $0x60] sm:$0xff]
        %v6334 = vld [vmem:[#allocation3 + $0x68] sm:$0xff]
        %v6335 = vld [vmem:[#allocation3 + $0x70] sm:$0xff]
        %v6336 = vld [vmem:[#allocation3 + $0x78] sm:$0xff]
        %v6337 = vld [vmem:[#allocation3 + $0x80] sm:$0xff]
        %v6338 = vld [vmem:[#allocation3 + $0x88] sm:$0xff]
        %v6339 = vld [vmem:[#allocation3 + $0x90] sm:$0xff]
        %v6340 = vld [vmem:[#allocation3 + $0x98] sm:$0xff]
        %v6341 = vld [vmem:[#allocation3 + $0xa0] sm:$0xff]
        %v6342 = vld [vmem:[#allocation3 + $0xa8] sm:$0xff]
        %v6343 = vld [vmem:[#allocation3 + $0xb0] sm:$0xff]
        %v6344 = vld [vmem:[#allocation3 + $0xb8] sm:$0xff]
        %v6345 = vld [vmem:[#allocation3 + $0xc0] sm:$0xff]
        %v6346 = vld [vmem:[#allocation3 + $0xc8] sm:$0xff]
        %v6347 = vld [vmem:[#allocation3 + $0xd0] sm:$0xff]
        %v6348 = vld [vmem:[#allocation3 + $0xd8] sm:$0xff]
        %v6349 = vld [vmem:[#allocation3 + $0xe0] sm:$0xff]
        %v6350 = vld [vmem:[#allocation3 + $0xe8] sm:$0xff]
        %v6351 = vld [vmem:[#allocation3 + $0xf0] sm:$0xff]
        %v6352 = vld [vmem:[#allocation3 + $0xf8] sm:$0xff]
        %v6353 = vld [vmem:[#allocation3 + $0x100] sm:$0xff]
        %v6354 = vld [vmem:[#allocation3 + $0x108] sm:$0xff]
        %v6355 = vld [vmem:[#allocation3 + $0x110] sm:$0xff]
        %v6356 = vld [vmem:[#allocation3 + $0x118] sm:$0xff]
        %v6357 = vld [vmem:[#allocation3 + $0x120] sm:$0xff]
        %v6358 = vld [vmem:[#allocation3 + $0x128] sm:$0xff]
        %v6359 = vld [vmem:[#allocation3 + $0x130] sm:$0xff]
        %v6360 = vld [vmem:[#allocation3 + $0x138] sm:$0xff]
        %v6361 = vld [vmem:[#allocation3 + $0x140] sm:$0xff]
        %v6362 = vld [vmem:[#allocation3 + $0x148] sm:$0xff]
        %v6363 = vld [vmem:[#allocation3 + $0x150] sm:$0xff]
        %v6364 = vld [vmem:[#allocation3 + $0x158] sm:$0xff]
        %v6365 = vld [vmem:[#allocation3 + $0x160] sm:$0xff]
        %v6366 = vld [vmem:[#allocation3 + $0x168] sm:$0xff]
        %v6367 = vld [vmem:[#allocation3 + $0x170] sm:$0xff]
        %v6368 = vld [vmem:[#allocation3 + $0x178] sm:$0xff]
        %v6369 = vld [vmem:[%s4] sm:$0x1]
        %v6371 = vlaneseq
        %v6372 = vshrl.u32 %v6371, 7
        %v6373 = vsub.s32 0, %v6372
        %v6374 = vrot.slane %v6369, %v6373
        %v6376 = vmax.f32 %v6321, %v6374
        %v6377 = vmax.f32 %v6322, %v6374
        %v6378 = vmax.f32 %v6323, %v6374
        %v6379 = vmax.f32 %v6324, %v6374
        %v6380 = vmax.f32 %v6325, %v6374
        %v6381 = vmax.f32 %v6326, %v6374
        %v6382 = vmax.f32 %v6327, %v6374
        %v6383 = vmax.f32 %v6328, %v6374
        %v6384 = vmax.f32 %v6329, %v6374
        %v6385 = vmax.f32 %v6330, %v6374
        %v6386 = vmax.f32 %v6331, %v6374
        %v6387 = vmax.f32 %v6332, %v6374
        %v6388 = vmax.f32 %v6333, %v6374
        %v6389 = vmax.f32 %v6334, %v6374
        %v6390 = vmax.f32 %v6335, %v6374
        %v6391 = vmax.f32 %v6336, %v6374
        %v6392 = vmax.f32 %v6337, %v6374
        %v6393 = vmax.f32 %v6338, %v6374
        %v6394 = vmax.f32 %v6339, %v6374
        %v6395 = vmax.f32 %v6340, %v6374
        %v6396 = vmax.f32 %v6341, %v6374
        %v6397 = vmax.f32 %v6342, %v6374
        %v6398 = vmax.f32 %v6343, %v6374
        %v6399 = vmax.f32 %v6344, %v6374
        %v6400 = vmax.f32 %v6345, %v6374
        %v6401 = vmax.f32 %v6346, %v6374
        %v6402 = vmax.f32 %v6347, %v6374
        %v6403 = vmax.f32 %v6348, %v6374
        %v6404 = vmax.f32 %v6349, %v6374
        %v6405 = vmax.f32 %v6350, %v6374
        %v6406 = vmax.f32 %v6351, %v6374
        %v6407 = vmax.f32 %v6352, %v6374
        %v6408 = vmax.f32 %v6353, %v6374
        %v6409 = vmax.f32 %v6354, %v6374
        %v6410 = vmax.f32 %v6355, %v6374
        %v6411 = vmax.f32 %v6356, %v6374
        %v6412 = vmax.f32 %v6357, %v6374
        %v6413 = vmax.f32 %v6358, %v6374
        %v6414 = vmax.f32 %v6359, %v6374
        %v6415 = vmax.f32 %v6360, %v6374
        %v6416 = vmax.f32 %v6361, %v6374
        %v6417 = vmax.f32 %v6362, %v6374
        %v6418 = vmax.f32 %v6363, %v6374
        %v6419 = vmax.f32 %v6364, %v6374
        %v6420 = vmax.f32 %v6365, %v6374
        %v6421 = vmax.f32 %v6366, %v6374
        %v6422 = vmax.f32 %v6367, %v6374
        %v6423 = vmax.f32 %v6368, %v6374
        %v6424 = vpack.c.bf16 %v6377, %v6376
        %v6425 = vpack.c.bf16 %v6379, %v6378
        %v6426 = vpack.c.bf16 %v6381, %v6380
        %v6427 = vpack.c.bf16 %v6383, %v6382
        %v6428 = vpack.c.bf16 %v6385, %v6384
        %v6429 = vpack.c.bf16 %v6387, %v6386
        %v6430 = vpack.c.bf16 %v6389, %v6388
        %v6431 = vpack.c.bf16 %v6391, %v6390
        %v6432 = vpack.c.bf16 %v6393, %v6392
        %v6433 = vpack.c.bf16 %v6395, %v6394
        %v6434 = vpack.c.bf16 %v6397, %v6396
        %v6435 = vpack.c.bf16 %v6399, %v6398
        %v6436 = vpack.c.bf16 %v6401, %v6400
        %v6437 = vpack.c.bf16 %v6403, %v6402
        %v6438 = vpack.c.bf16 %v6405, %v6404
        %v6439 = vpack.c.bf16 %v6407, %v6406
        %v6440 = vpack.c.bf16 %v6409, %v6408
        %v6441 = vpack.c.bf16 %v6411, %v6410
        %v6442 = vpack.c.bf16 %v6413, %v6412
        %v6443 = vpack.c.bf16 %v6415, %v6414
        %v6444 = vpack.c.bf16 %v6417, %v6416
        %v6445 = vpack.c.bf16 %v6419, %v6418
        %v6446 = vpack.c.bf16 %v6421, %v6420
        %v6447 = vpack.c.bf16 %v6423, %v6422
        %v6448 = vld [vmem:[#allocation4] sm:$0xf]
        %v6449 = vld [vmem:[#allocation4 + $0x4] sm:$0xf]
        %v6450 = vld [vmem:[#allocation4 + $0x8] sm:$0xf]
        %v6451 = vld [vmem:[#allocation4 + $0xc] sm:$0xf]
        %v6452 = vld [vmem:[#allocation4 + $0x10] sm:$0xf]
        %v6453 = vld [vmem:[#allocation4 + $0x14] sm:$0xf]
        %v6454 = vld [vmem:[#allocation4 + $0x18] sm:$0xf]
        %v6455 = vld [vmem:[#allocation4 + $0x1c] sm:$0xf]
        %v6456 = vld [vmem:[#allocation4 + $0x20] sm:$0xf]
        %v6457 = vld [vmem:[#allocation4 + $0x24] sm:$0xf]
        %v6458 = vld [vmem:[#allocation4 + $0x28] sm:$0xf]
        %v6459 = vld [vmem:[#allocation4 + $0x2c] sm:$0xf]
        %v6460 = vld [vmem:[#allocation4 + $0x30] sm:$0xf]
        %v6461 = vld [vmem:[#allocation4 + $0x34] sm:$0xf]
        %v6462 = vld [vmem:[#allocation4 + $0x38] sm:$0xf]
        %v6463 = vld [vmem:[#allocation4 + $0x3c] sm:$0xf]
        %v6480 = vunpack.c.l.b16 %v6448
        %v6481 = vunpack.c.l.b16 %v6449
        %v6482 = vunpack.c.l.b16 %v6450
        %v6483 = vunpack.c.l.b16 %v6451
        %v6484 = vunpack.c.l.b16 %v6452
        %v6485 = vunpack.c.l.b16 %v6453
        %v6486 = vunpack.c.l.b16 %v6454
        %v6487 = vunpack.c.l.b16 %v6455
        %v6488 = vunpack.c.l.b16 %v6456
        %v6489 = vunpack.c.l.b16 %v6457
        %v6490 = vunpack.c.l.b16 %v6458
        %v6491 = vunpack.c.l.b16 %v6459
        %v6492 = vunpack.c.l.b16 %v6460
        %v6493 = vunpack.c.l.b16 %v6461
        %v6494 = vunpack.c.l.b16 %v6462
        %v6495 = vunpack.c.l.b16 %v6463
        %v6496 = vpack.c.b16 %v6481, %v6480
        %v6497 = vpack.c.b16 %v6483, %v6482
        %v6498 = vpack.c.b16 %v6485, %v6484
        %v6499 = vpack.c.b16 %v6487, %v6486
        %v6500 = vpack.c.b16 %v6489, %v6488
        %v6501 = vpack.c.b16 %v6491, %v6490
        %v6502 = vpack.c.b16 %v6493, %v6492
        %v6503 = vpack.c.b16 %v6495, %v6494
        %6512 = vmatprep.subr.bf16.mxu0 0
        %6513 = vmatpush1.bf16.msra.mxu0 %v6496
        %6514 = vmatprep.subr.bf16.mxu0 0
        %6515 = vmatpush1.bf16.msra.mxu0 %v6497
        %6516 = vmatprep.subr.bf16.mxu0 0
        %6517 = vmatpush1.bf16.msra.mxu0 %v6498
        %6518 = vmatprep.subr.bf16.mxu0 0
        %6519 = vmatpush1.bf16.msra.mxu0 %v6499
        %6520 = vmatprep.subr.bf16.mxu0 0
        %6521 = vmatpush1.bf16.msra.mxu0 %v6500
        %6522 = vmatprep.subr.bf16.mxu0 0
        %6523 = vmatpush1.bf16.msra.mxu0 %v6501
        %6524 = vmatprep.subr.bf16.mxu0 0
        %6525 = vmatpush1.bf16.msra.mxu0 %v6502
        %6526 = vmatprep.subr.bf16.mxu0 0
        %6527 = vmatpush1.bf16.msra.mxu0 %v6503
        %6528 = vmatprep.subr.bf16.mxu0 0
        %6529 = vmatpush1.bf16.msra.mxu0 0
        %6530 = vmatprep.subr.bf16.mxu0 0
        %6531 = vmatpush1.bf16.msra.mxu0 0
        %6532 = vmatprep.subr.bf16.mxu0 0
        %6533 = vmatpush1.bf16.msra.mxu0 0
        %6534 = vmatprep.subr.bf16.mxu0 0
        %6535 = vmatpush1.bf16.msra.mxu0 0
        %6536 = vmatprep.subr.bf16.mxu0 0
        %6537 = vmatpush1.bf16.msra.mxu0 0
        %6538 = vmatprep.subr.bf16.mxu0 0
        %6539 = vmatpush1.bf16.msra.mxu0 0
        %6540 = vmatprep.subr.bf16.mxu0 0
        %6541 = vmatpush1.bf16.msra.mxu0 0
        %6542 = vmatprep.subr.bf16.mxu0 0
        %6543 = vmatpush1.bf16.msra.mxu0 0
        %6544 = vmatprep.mubr.bf16.mxu0 0
        %6545 = vmatmul.mubr.bf16.gmra.mrb[0].mxu0 %v6424
        %v6546 = vpop.f32.mrb[0].mxu0
        %v6547 = vadd.f32 0.0, %v6546
        %v6548 = vpop.f32.mrb[0].mxu0
        %v6549 = vpop.f32.mrb[0].mxu0
        %v6550 = vadd.f32 0.0, %v6549
        %v6551 = vpop.f32.mrb[0].mxu0
        %6552 = vmatprep.mubr.bf16.mxu0 0
        %6553 = vmatmul.mubr.bf16.gmra.mrb[0].mxu0 %v6425
        %v6554 = vpop.f32.mrb[0].mxu0
        %v6555 = vpop.f32.mrb[0].mxu0
        %v6556 = vpop.f32.mrb[0].mxu0
        %v6557 = vadd.f32 0.0, %v6556
        %v6558 = vpop.f32.mrb[0].mxu0
        %6559 = vmatprep.mubr.bf16.mxu0 0
        %6560 = vmatmul.mubr.bf16.gmra.mrb[0].mxu0 %v6426
        %v6561 = vpop.f32.mrb[0].mxu0
        %v6562 = vadd.f32 0.0, %v6561
        %v6563 = vpop.f32.mrb[0].mxu0
        %v6564 = vpop.f32.mrb[0].mxu0
        %v6565 = vpop.f32.mrb[0].mxu0
        %6566 = vmatprep.mubr.bf16.mxu0 0
        %6567 = vmatmul.mubr.bf16.gmra.mrb[0].mxu0 %v6427
        %v6568 = vpop.f32.mrb[0].mxu0
        %v6569 = vadd.f32 0.0, %v6568
        %v6570 = vpop.f32.mrb[0].mxu0
        %v6571 = vpop.f32.mrb[0].mxu0
        %v6572 = vadd.f32 0.0, %v6571
        %v6573 = vpop.f32.mrb[0].mxu0
        %6574 = vmatprep.mubr.bf16.mxu0 0
        %6575 = vmatmul.mubr.bf16.gmra.mrb[0].mxu0 %v6428
        %v6576 = vpop.f32.mrb[0].mxu0
        %v6577 = vpop.f32.mrb[0].mxu0
        %v6578 = vpop.f32.mrb[0].mxu0
        %v6579 = vadd.f32 0.0, %v6578
        %v6580 = vpop.f32.mrb[0].mxu0
        %6581 = vmatprep.mubr.bf16.mxu0 0
        %6582 = vmatmul.mubr.bf16.gmra.mrb[0].mxu0 %v6429
        %v6583 = vpop.f32.mrb[0].mxu0
        %v6584 = vadd.f32 0.0, %v6583
        %v6585 = vpop.f32.mrb[0].mxu0
        %v6586 = vpop.f32.mrb[0].mxu0
        %v6587 = vpop.f32.mrb[0].mxu0
        %6588 = vmatprep.mubr.bf16.mxu0 0
        %6589 = vmatmul.mubr.bf16.gmra.mrb[0].mxu0 %v6430
        %v6590 = vpop.f32.mrb[0].mxu0
        %v6591 = vadd.f32 0.0, %v6590
        %v6592 = vpop.f32.mrb[0].mxu0
        %v6593 = vpop.f32.mrb[0].mxu0
        %v6594 = vadd.f32 0.0, %v6593
        %v6595 = vpop.f32.mrb[0].mxu0
        %6596 = vmatprep.mubr.bf16.mxu0 0
        %6597 = vmatmul.mubr.bf16.gmra.mrb[0].mxu0 %v6431
        %v6598 = vpop.f32.mrb[0].mxu0
        %v6599 = vpop.f32.mrb[0].mxu0
        %v6600 = vpop.f32.mrb[0].mxu0
        %v6601 = vadd.f32 0.0, %v6600
        %v6602 = vpop.f32.mrb[0].mxu0
        %6603 = vmatprep.mubr.bf16.mxu0 0
        %6604 = vmatmul.mubr.bf16.gmra.mrb[0].mxu0 %v6432
        %v6605 = vpop.f32.mrb[0].mxu0
        %v6606 = vadd.f32 0.0, %v6605
        %v6607 = vpop.f32.mrb[0].mxu0
        %v6608 = vpop.f32.mrb[0].mxu0
        %v6609 = vpop.f32.mrb[0].mxu0
        %6610 = vmatprep.mubr.bf16.mxu0 0
        %6611 = vmatmul.mubr.bf16.gmra.mrb[0].mxu0 %v6433
        %v6612 = vpop.f32.mrb[0].mxu0
        %v6613 = vadd.f32 0.0, %v6612
        %v6614 = vpop.f32.mrb[0].mxu0
        %v6615 = vpop.f32.mrb[0].mxu0
        %v6616 = vadd.f32 0.0, %v6615
        %v6617 = vpop.f32.mrb[0].mxu0
        %6618 = vmatprep.mubr.bf16.mxu0 0
        %6619 = vmatmul.mubr.bf16.gmra.mrb[0].mxu0 %v6434
        %v6620 = vpop.f32.mrb[0].mxu0
        %v6621 = vpop.f32.mrb[0].mxu0
        %v6622 = vpop.f32.mrb[0].mxu0
        %v6623 = vadd.f32 0.0, %v6622
        %v6624 = vpop.f32.mrb[0].mxu0
        %6625 = vmatprep.mubr.bf16.mxu0 0
        %6626 = vmatmul.mubr.bf16.gmra.mrb[0].mxu0 %v6435
        %v6627 = vpop.f32.mrb[0].mxu0
        %v6628 = vadd.f32 0.0, %v6627
        %v6629 = vpop.f32.mrb[0].mxu0
        %v6630 = vpop.f32.mrb[0].mxu0
        %v6631 = vpop.f32.mrb[0].mxu0
        %6632 = vmatprep.mubr.bf16.mxu0 0
        %6633 = vmatmul.mubr.bf16.gmra.mrb[0].mxu0 %v6436
        %v6634 = vpop.f32.mrb[0].mxu0
        %v6635 = vadd.f32 0.0, %v6634
        %v6636 = vpop.f32.mrb[0].mxu0
        %v6637 = vpop.f32.mrb[0].mxu0
        %v6638 = vadd.f32 0.0, %v6637
        %v6639 = vpop.f32.mrb[0].mxu0
        %6640 = vmatprep.mubr.bf16.mxu0 0
        %6641 = vmatmul.mubr.bf16.gmra.mrb[0].mxu0 %v6437
        %v6642 = vpop.f32.mrb[0].mxu0
        %v6643 = vpop.f32.mrb[0].mxu0
        %v6644 = vpop.f32.mrb[0].mxu0
        %v6645 = vadd.f32 0.0, %v6644
        %v6646 = vpop.f32.mrb[0].mxu0
        %6647 = vmatprep.mubr.bf16.mxu0 0
        %6648 = vmatmul.mubr.bf16.gmra.mrb[0].mxu0 %v6438
        %v6649 = vpop.f32.mrb[0].mxu0
        %v6650 = vadd.f32 0.0, %v6649
        %v6651 = vpop.f32.mrb[0].mxu0
        %v6652 = vpop.f32.mrb[0].mxu0
        %v6653 = vpop.f32.mrb[0].mxu0
        %6654 = vmatprep.mubr.bf16.mxu0 0
        %6655 = vmatmul.mubr.bf16.gmra.mrb[0].mxu0 %v6439
        %v6656 = vpop.f32.mrb[0].mxu0
        %v6657 = vadd.f32 0.0, %v6656
        %v6658 = vpop.f32.mrb[0].mxu0
        %v6659 = vpop.f32.mrb[0].mxu0
        %v6660 = vadd.f32 0.0, %v6659
        %v6661 = vpop.f32.mrb[0].mxu0
        %6662 = vmatprep.mubr.bf16.mxu0 0
        %6663 = vmatmul.mubr.bf16.gmra.mrb[0].mxu0 %v6440
        %v6664 = vpop.f32.mrb[0].mxu0
        %v6665 = vpop.f32.mrb[0].mxu0
        %v6666 = vpop.f32.mrb[0].mxu0
        %v6667 = vadd.f32 0.0, %v6666
        %v6668 = vpop.f32.mrb[0].mxu0
        %6669 = vmatprep.mubr.bf16.mxu0 0
        %6670 = vmatmul.mubr.bf16.gmra.mrb[0].mxu0 %v6441
        %v6671 = vpop.f32.mrb[0].mxu0
        %v6672 = vadd.f32 0.0, %v6671
        %v6673 = vpop.f32.mrb[0].mxu0
        %v6674 = vpop.f32.mrb[0].mxu0
        %v6675 = vpop.f32.mrb[0].mxu0
        %6676 = vmatprep.mubr.bf16.mxu0 0
        %6677 = vmatmul.mubr.bf16.gmra.mrb[0].mxu0 %v6442
        %v6678 = vpop.f32.mrb[0].mxu0
        %v6679 = vadd.f32 0.0, %v6678
        %v6680 = vpop.f32.mrb[0].mxu0
        %v6681 = vpop.f32.mrb[0].mxu0
        %v6682 = vadd.f32 0.0, %v6681
        %v6683 = vpop.f32.mrb[0].mxu0
        %6684 = vmatprep.mubr.bf16.mxu0 0
        %6685 = vmatmul.mubr.bf16.gmra.mrb[0].mxu0 %v6443
        %v6686 = vpop.f32.mrb[0].mxu0
        %v6687 = vpop.f32.mrb[0].mxu0
        %v6688 = vpop.f32.mrb[0].mxu0
        %v6689 = vadd.f32 0.0, %v6688
        %v6690 = vpop.f32.mrb[0].mxu0
        %6691 = vmatprep.mubr.bf16.mxu0 0
        %6692 = vmatmul.mubr.bf16.gmra.mrb[0].mxu0 %v6444
        %v6693 = vpop.f32.mrb[0].mxu0
        %v6694 = vadd.f32 0.0, %v6693
        %v6695 = vpop.f32.mrb[0].mxu0
        %v6696 = vpop.f32.mrb[0].mxu0
        %v6697 = vpop.f32.mrb[0].mxu0
        %6698 = vmatprep.mubr.bf16.mxu0 0
        %6699 = vmatmul.mubr.bf16.gmra.mrb[0].mxu0 %v6445
        %v6700 = vpop.f32.mrb[0].mxu0
        %v6701 = vadd.f32 0.0, %v6700
        %v6702 = vpop.f32.mrb[0].mxu0
        %v6703 = vpop.f32.mrb[0].mxu0
        %v6704 = vadd.f32 0.0, %v6703
        %v6705 = vpop.f32.mrb[0].mxu0
        %6706 = vmatprep.mubr.bf16.mxu0 0
        %6707 = vmatmul.mubr.bf16.gmra.mrb[0].mxu0 %v6446
        %v6708 = vpop.f32.mrb[0].mxu0
        %v6709 = vpop.f32.mrb[0].mxu0
        %v6710 = vpop.f32.mrb[0].mxu0
        %v6711 = vadd.f32 0.0, %v6710
        %v6712 = vpop.f32.mrb[0].mxu0
        %6713 = vmatprep.mubr.bf16.mxu0 0
        %6714 = vmatmul.mubr.bf16.gmra.mrb[0].mxu0 %v6447
        %v6715 = vpop.f32.mrb[0].mxu0
        %v6716 = vadd.f32 0.0, %v6715
        %v6717 = vpop.f32.mrb[0].mxu0
        %v6718 = vpop.f32.mrb[0].mxu0
        %v6719 = vpop.f32.mrb[0].mxu0
        %6720 = vdwg.mxu0
        %6721 = vst [vmem:[%s259] sm:$0xff] %v6547
        %6722 = vst [vmem:[%s259 + $0x8] sm:$0xff] %v6550
        %6723 = vst [vmem:[%s259 + $0x10] sm:$0xff] %v6557
        %6724 = vst [vmem:[%s259 + $0x18] sm:$0xff] %v6562
        %6725 = vst [vmem:[%s259 + $0x20] sm:$0xff] %v6569
        %6726 = vst [vmem:[%s259 + $0x28] sm:$0xff] %v6572
        %6727 = vst [vmem:[%s259 + $0x30] sm:$0xff] %v6579
        %6728 = vst [vmem:[%s259 + $0x38] sm:$0xff] %v6584
        %6729 = vst [vmem:[%s259 + $0x40] sm:$0xff] %v6591
        %6730 = vst [vmem:[%s259 + $0x48] sm:$0xff] %v6594
        %6731 = vst [vmem:[%s259 + $0x50] sm:$0xff] %v6601
        %6732 = vst [vmem:[%s259 + $0x58] sm:$0xff] %v6606
        %6733 = vst [vmem:[%s259 + $0x60] sm:$0xff] %v6613
        %6734 = vst [vmem:[%s259 + $0x68] sm:$0xff] %v6616
        %6735 = vst [vmem:[%s259 + $0x70] sm:$0xff] %v6623
        %6736 = vst [vmem:[%s259 + $0x78] sm:$0xff] %v6628
        %6737 = vst [vmem:[%s259 + $0x80] sm:$0xff] %v6635
        %6738 = vst [vmem:[%s259 + $0x88] sm:$0xff] %v6638
        %6739 = vst [vmem:[%s259 + $0x90] sm:$0xff] %v6645
        %6740 = vst [vmem:[%s259 + $0x98] sm:$0xff] %v6650
        %6741 = vst [vmem:[%s259 + $0xa0] sm:$0xff] %v6657
        %6742 = vst [vmem:[%s259 + $0xa8] sm:$0xff] %v6660
        %6743 = vst [vmem:[%s259 + $0xb0] sm:$0xff] %v6667
        %6744 = vst [vmem:[%s259 + $0xb8] sm:$0xff] %v6672
        %6745 = vst [vmem:[%s259 + $0xc0] sm:$0xff] %v6679
        %6746 = vst [vmem:[%s259 + $0xc8] sm:$0xff] %v6682
        %6747 = vst [vmem:[%s259 + $0xd0] sm:$0xff] %v6689
        %6748 = vst [vmem:[%s259 + $0xd8] sm:$0xff] %v6694
        %6749 = vst [vmem:[%s259 + $0xe0] sm:$0xff] %v6701
        %6750 = vst [vmem:[%s259 + $0xe8] sm:$0xff] %v6704
        %6751 = vst [vmem:[%s259 + $0xf0] sm:$0xff] %v6711
        %6752 = vst [vmem:[%s259 + $0xf8] sm:$0xff] %v6716
        %s6753 = sand.u32 %s160, 1
        %s6754 = scalar_lea.sflag [#allocation6], %s6753
        %s6755 = sand.u32 %s160, 1
        %s6756 = smul.addr %s6755, 256
        %s6757 = scalar_lea.vmem [#allocation7], %s6756
        // Predicated region
        $region49: #{tpu_custom_call.1} parent=43 // pred_check
          %p6758 = pneg %p170
        $region50: #{tpu_custom_call.1} parent=43 // pred_check_branch
          %6760 = sbr.rel (%p6758) target = $region52
        $region51: #{tpu_custom_call.1} parent=43 // pred_region
          %s6762 = ssub.s32 4096, 4096
          %6763 = vsyncadd %s6754, %s6762
          %s6764 = smul.addr %s21, 32
          %s6765 = smul.addr %s6764, 128
          %s6766 = scalar_lea.hbm %s6, %s6765
          %s6767 = sshll.u32 %s6757, 4
          %s6768 = int_to_ptr.vmem [resolvable:$true] %s6767
          %6773 = dma.vmem_to_hbm [thread:$0]  %s6768, 4096, %s6766, %s6754, 128, 128, 8
        $region52: #{tpu_custom_call.1} parent=43 // pred_fallthru
          _
      $region44: #{tpu_custom_call.1} parent=5 // pred_fallthru
        _
      %p6774 = scmp.le.s32.totalorder 2, %s16
      // Predicated region
      $region53: #{tpu_custom_call.1} parent=5 // pred_check
        %p6775 = pneg %p6774
      $region54: #{tpu_custom_call.1} parent=5 // pred_check_branch
        %6777 = sbr.rel (%p6775) target = $region56
      $region55: #{tpu_custom_call.1} parent=5 // pred_region
        %s6778 = ssub.s32 %s16, 2
        // Predicated region
        $region57: #{tpu_custom_call.1} parent=55 // pred_check
          %p6779 = pneg %p176
        $region58: #{tpu_custom_call.1} parent=55 // pred_check_branch
          %6781 = sbr.rel (%p6779) target = $region60
        $region59: #{tpu_custom_call.1} parent=55 // pred_region
          %s6782 = sand.u32 %s161, 1
          %s6783 = scalar_lea.sflag [#allocation6], %s6782
          %s6784 = sand.u32 %s161, 1
          %s6785 = smul.addr %s6784, 256
          %s6786 = scalar_lea.vmem [#allocation7], %s6785
          %6787 = dma.done %s6783, 4096
        $region60: #{tpu_custom_call.1} parent=55 // pred_fallthru
          _
      $region56: #{tpu_custom_call.1} parent=5 // pred_fallthru
        _
    $region6: #{tpu_custom_call.1} parent=1 // loop_footer
      %s20 = sadd.s32 1, %s16
    $region7: #{tpu_custom_call.1} parent=1 // loop_footer_branch
      %15 = sbr.rel target = $region3
    $region8: #{tpu_custom_call.1} parent=1 // loop_exit
      _
    %6788 = vsyncpa [#allocation5], 1
    %s6789 = scalar_lea.sflag [#allocation5], 1
    %6790 = vsyncpa %s6789, 1
    %6791 = vsyncpa [#allocation6], 1
    %s6792 = scalar_lea.sflag [#allocation6], 1
    %6793 = vsyncpa %s6792, 1

</llo_original>
